<compile_context>
chip_gen: v7x
topology: tpu7x:2x2x1
jax: 0.10.0
libtpu: 0.0.40
codegen_flags: <defaults>
</compile_context>

<pallas_src>
import math
import functools

import jax
import jax.numpy as jnp
from jax.experimental import pallas as pl
from jax.experimental.pallas import tpu as pltpu


_INV_SQRT2 = 0.7071067811865475


# ---------------------------------------------------------------------------
# In-kernel helpers
# ---------------------------------------------------------------------------
def _layernorm(v, g, b, eps=1e-5):
    mu = jnp.mean(v, axis=-1, keepdims=True)
    var = jnp.mean((v - mu) ** 2, axis=-1, keepdims=True)   # biased var (PyTorch LayerNorm)
    return (v - mu) * jax.lax.rsqrt(var + eps) * g + b


def _gelu_exact(v):
    # GELU(approximate='none') = 0.5 * v * (1 + erf(v / sqrt(2)))
    return 0.5 * v * (1.0 + jax.lax.erf(v * _INV_SQRT2))


# ---------------------------------------------------------------------------
# Pallas kernel: one (batch, query-tile) per grid step
# ---------------------------------------------------------------------------
def prenorm_gelu_block_kernel(n_heads, compute_dtype,
                              x_ref,
                              ln1_g, ln1_b, ln2_g, ln2_b,
                              w_qkv, b_qkv, wo, bo, w1, b1, w2, b2,
                              o_ref,
                              q_scr, k_scr, v_scr):
    qi = pl.program_id(1)
    S = x_ref.shape[1]
    D = x_ref.shape[2]
    TQ = o_ref.shape[1]
    hd = D // n_heads
    scale = 1.0 / math.sqrt(hd)

    def mm(a, b):
        # MXU matmul; optional bf16 inputs, always fp32 accumulation.
        return jnp.dot(a.astype(compute_dtype), b.astype(compute_dtype),
                       preferred_element_type=jnp.float32)

    # ---- once per batch element: full-sequence LN1 + fused QKV projection ----
    @pl.when(qi == 0)
    def _():
        h_full = _layernorm(x_ref[0], ln1_g[0], ln1_b[0])          # (S, D)
        qkv = mm(h_full, w_qkv[...]) + b_qkv[0]                    # (S, 3D), one MXU call
        q_scr[...] = qkv[:, 0 * D:1 * D]
        k_scr[...] = qkv[:, 1 * D:2 * D]
        v_scr[...] = qkv[:, 2 * D:3 * D]

    # ---- per query tile ----
    row0 = pl.multiple_of(qi * TQ, TQ)
    x_t = x_ref[0, pl.ds(row0, TQ), :]                             # (TQ, D) residual input
    q_t = q_scr[pl.ds(row0, TQ), :]                                # (TQ, D)
    k_all = k_scr[...]                                             # (S, D)
    v_all = v_scr[...]                                             # (S, D)
    wo_m = wo[...]                                                 # (D, D)

    # attention: per-head softmax, accumulate each head straight into the out-proj
    acc = jnp.zeros((TQ, D), jnp.float32)
    for i in range(n_heads):
        sl = slice(i * hd, (i + 1) * hd)
        qh = q_t[:, sl]                                            # (TQ, hd)
        kh = k_all[:, sl]                                          # (S, hd)
        vh = v_all[:, sl]                                          # (S, hd)
        s = jax.lax.dot_general(qh.astype(compute_dtype), kh.astype(compute_dtype),
                                (((1,), (1,)), ((), ())),
                                preferred_element_type=jnp.float32) * scale   # (TQ, S)
        s = s - jnp.max(s, axis=-1, keepdims=True)
        p = jnp.exp(s)
        l = jnp.sum(p, axis=-1, keepdims=True)
        # fold 1/l after PV (cheaper: (TQ, hd) instead of (TQ, S)); EUP reciprocal.
        ph = mm(p, vh) * pl.reciprocal(l, approx=True)             # (TQ, hd)
        acc = acc + mm(ph, wo_m[sl, :])                            # (TQ, D)
    attn = acc + bo[0]

    x1 = x_t + attn                                                # first residual

    # ---- FFN branch ----
    h2 = _layernorm(x1, ln2_g[0], ln2_b[0])
    f = mm(h2, w1[...]) + b1[0]                                    # (TQ, 4D)
    f = _gelu_exact(f)
    f = mm(f, w2[...]) + b2[0]                                     # (TQ, D)

    o_ref[0] = x1 + f                                              # second residual


# ---------------------------------------------------------------------------
# Wrapper: parameter fusion/transposition, BlockSpecs, grid
# ---------------------------------------------------------------------------
def prenorm_gelu_block(x, params, n_heads, *, q_tile=128, compute_dtype=jnp.float32):
    B, S, D = x.shape
    assert D % n_heads == 0, "d_model must be divisible by n_heads"
    tq = min(q_tile, S)
    assert S % tq == 0 and tq % 8 == 0, "query tile must divide S and be a multiple of 8"
    nq = S // tq

    (ln1_g, ln1_b, ln2_g, ln2_b,
     in_proj_w, in_proj_b, out_proj_w, out_proj_b,
     w1, b1, w2, b2) = params

    # PyTorch Linear computes x @ W.T + b; pre-transpose so the kernel does x @ W.
    # Keep the packed QKV projection fused as a single (D, 3D) weight.
    w_qkv = in_proj_w.T                    # (D, 3D)
    b_qkv = in_proj_b[None, :]             # (1, 3D)
    wo_t = out_proj_w.T                    # (D, D)
    bo_ = out_proj_b[None, :]              # (1, D)
    w1_t = w1.T                            # (D, 4D)
    b1_ = b1[None, :]                      # (1, 4D)
    w2_t = w2.T                            # (4D, D)
    b2_ = b2[None, :]                      # (1, D)

    param_args = (ln1_g[None, :], ln1_b[None, :], ln2_g[None, :], ln2_b[None, :],
                  w_qkv, b_qkv, wo_t, bo_, w1_t, b1_, w2_t, b2_)

    kernel = functools.partial(prenorm_gelu_block_kernel, n_heads, compute_dtype)

    def run(single_buffer_weights):
        def weight_spec(a):
            # Whole (small) parameter resident in VMEM; same block for every grid step.
            if single_buffer_weights:
                return pl.BlockSpec(a.shape, lambda b, qi: (0, 0),
                                    pipeline_mode=pl.Buffered(1))
            return pl.BlockSpec(a.shape, lambda b, qi: (0, 0))

        in_specs = ([pl.BlockSpec((1, S, D), lambda b, qi: (b, 0, 0))] +
                    [weight_spec(a) for a in param_args])
        out_specs = pl.BlockSpec((1, tq, D), lambda b, qi: (b, qi, 0))

        call = pl.pallas_call(
            kernel,
            out_shape=jax.ShapeDtypeStruct((B, S, D), jnp.float32),
            grid=(B, nq),
            in_specs=in_specs,
            out_specs=out_specs,
            scratch_shapes=[pltpu.VMEM((S, D), jnp.float32),   # Q cache
                            pltpu.VMEM((S, D), jnp.float32),   # K cache
                            pltpu.VMEM((S, D), jnp.float32)],  # V cache
            compiler_params=pltpu.CompilerParams(
                # batch axis sharded across TensorCores; qi axis carries the Q/K/V scratch
                dimension_semantics=("parallel", "arbitrary"),
                vmem_limit_bytes=64 * 1024 * 1024),
        )
        return jax.block_until_ready(call(x, *param_args))

    try:
        return run(single_buffer_weights=True)
    except Exception:
        # pl.Buffered(1) not supported in this JAX version; fall back to default buffering.
        return run(single_buffer_weights=False)


# ---------------------------------------------------------------------------
# Pure-JAX fp32 reference (same math, no Pallas) for correctness check
# ---------------------------------------------------------------------------
def reference(x, params, n_heads):
    (ln1_g, ln1_b, ln2_g, ln2_b,
     in_proj_w, in_proj_b, out_proj_w, out_proj_b,
     w1, b1, w2, b2) = params
    B, S, D = x.shape
    hd = D // n_heads

    def ln(v, g, b):
        mu = jnp.mean(v, axis=-1, keepdims=True)
        var = jnp.mean((v - mu) ** 2, axis=-1, keepdims=True)
        return (v - mu) / jnp.sqrt(var + 1e-5) * g + b

    h = ln(x, ln1_g, ln1_b)
    qkv = jnp.einsum('bsd,ed->bse', h, in_proj_w) + in_proj_b
    q, k, v = jnp.split(qkv, 3, axis=-1)
    q = q.reshape(B, S, n_heads, hd).transpose(0, 2, 1, 3)
    k = k.reshape(B, S, n_heads, hd).transpose(0, 2, 1, 3)
    v = v.reshape(B, S, n_heads, hd).transpose(0, 2, 1, 3)
    s = jnp.einsum('bhqd,bhkd->bhqk', q, k) / math.sqrt(hd)
    p = jax.nn.softmax(s, axis=-1)
    a = jnp.einsum('bhqk,bhkd->bhqd', p, v).transpose(0, 2, 1, 3).reshape(B, S, D)
    a = jnp.einsum('bsd,ed->bse', a, out_proj_w) + out_proj_b
    x = x + a
    h2 = ln(x, ln2_g, ln2_b)
    f = jnp.einsum('bsd,ed->bse', h2, w1) + b1
    f = 0.5 * f * (1.0 + jax.lax.erf(f / math.sqrt(2.0)))
    f = jnp.einsum('bse,de->bsd', f, w2) + b2
    return x + f


# ---------------------------------------------------------------------------
if __name__ == "__main__":
    # Small but lane-dense shapes: D multiple of 128, S multiple of the query tile.
    B, S, D, H = 2, 128, 128, 4
    D_FF = 4 * D

    key = jax.random.PRNGKey(0)
    k_in, k_out, k_w1, k_w2, k_x = jax.random.split(key, 5)

    # LayerNorm params: PyTorch default init (ones / zeros)
    ln1_g = jnp.ones((D,), jnp.float32)
    ln1_b = jnp.zeros((D,), jnp.float32)
    ln2_g = jnp.ones((D,), jnp.float32)
    ln2_b = jnp.zeros((D,), jnp.float32)

    # MultiheadAttention packed in_proj: xavier_uniform (PyTorch default), zero bias
    limit = math.sqrt(6.0 / (3 * D + D))
    in_proj_w = jax.random.uniform(k_in, (3 * D, D), jnp.float32, -limit, limit)
    in_proj_b = jnp.zeros((3 * D,), jnp.float32)

    # out_proj + FFN Linears: he_normal_scaled(scale=1.1) -> std = 1.1/sqrt(fan_in), zero bias
    out_proj_w = jax.random.normal(k_out, (D, D), jnp.float32) * (1.1 / math.sqrt(D))
    out_proj_b = jnp.zeros((D,), jnp.float32)
    w1 = jax.random.normal(k_w1, (D_FF, D), jnp.float32) * (1.1 / math.sqrt(D))
    b1 = jnp.zeros((D_FF,), jnp.float32)
    w2 = jax.random.normal(k_w2, (D, D_FF), jnp.float32) * (1.1 / math.sqrt(D_FF))
    b2 = jnp.zeros((D,), jnp.float32)

    params = (ln1_g, ln1_b, ln2_g, ln2_b,
              in_proj_w, in_proj_b, out_proj_w, out_proj_b,
              w1, b1, w2, b2)

    x = jax.random.normal(k_x, (B, S, D), jnp.float32)

    # fp32 compute: matches PyTorch numerics (approx reciprocal in softmax only)
    out = prenorm_gelu_block(x, params, H, q_tile=64, compute_dtype=jnp.float32)
    ref = reference(x, params, H)
    assert out.shape == (B, S, D)
    assert jnp.allclose(out, ref, atol=2e-3, rtol=2e-3), "Pallas kernel mismatch vs JAX reference"

    # bf16-input / fp32-accumulate throughput path (v6e/v7x MXU); numerics intentionally
    # differ from the fp32 reference, so only sanity-check it here.
    out_bf16 = prenorm_gelu_block(x, params, H, q_tile=64, compute_dtype=jnp.bfloat16)
    assert out_bf16.shape == (B, S, D)
    assert bool(jnp.isfinite(out_bf16).all())

    print("KERNEL_OK")
</pallas_src>

<mosaic_0001>
module attributes {stable_mosaic.version = 11 : i64} {
  func.func @prenorm_gelu_block_kernel(%arg0: i32, %arg1: i32, %arg2: memref<1x128x128xf32, #tpu.memory_space<vmem>>, %arg3: memref<1x128xf32, #tpu.memory_space<vmem>>, %arg4: memref<1x128xf32, #tpu.memory_space<vmem>>, %arg5: memref<1x128xf32, #tpu.memory_space<vmem>>, %arg6: memref<1x128xf32, #tpu.memory_space<vmem>>, %arg7: memref<128x384xf32, #tpu.memory_space<vmem>>, %arg8: memref<1x384xf32, #tpu.memory_space<vmem>>, %arg9: memref<128x128xf32, #tpu.memory_space<vmem>>, %arg10: memref<1x128xf32, #tpu.memory_space<vmem>>, %arg11: memref<128x512xf32, #tpu.memory_space<vmem>>, %arg12: memref<1x512xf32, #tpu.memory_space<vmem>>, %arg13: memref<512x128xf32, #tpu.memory_space<vmem>>, %arg14: memref<1x128xf32, #tpu.memory_space<vmem>>, %arg15: memref<1x64x128xf32, #tpu.memory_space<vmem>>, %arg16: memref<128x128xf32, #tpu.memory_space<vmem>>, %arg17: memref<128x128xf32, #tpu.memory_space<vmem>>, %arg18: memref<128x128xf32, #tpu.memory_space<vmem>>) attributes {dimension_semantics = [#tpu.dimension_semantics<parallel>, #tpu.dimension_semantics<arbitrary>], iteration_bounds = array<i64: 2, 2>, scalar_prefetch = 0 : i64, scratch_operands = 3 : i64, tpu.core_type = #tpu.core_type<tc>, window_params = [{transform_indices = @transform_0, window_bounds = array<i64: 1, 128, 128>}, {pipeline_mode = #tpu.pipeline_mode<synchronous>, transform_indices = @transform_1, window_bounds = array<i64: 1, 128>}, {pipeline_mode = #tpu.pipeline_mode<synchronous>, transform_indices = @transform_2, window_bounds = array<i64: 1, 128>}, {pipeline_mode = #tpu.pipeline_mode<synchronous>, transform_indices = @transform_3, window_bounds = array<i64: 1, 128>}, {pipeline_mode = #tpu.pipeline_mode<synchronous>, transform_indices = @transform_4, window_bounds = array<i64: 1, 128>}, {pipeline_mode = #tpu.pipeline_mode<synchronous>, transform_indices = @transform_5, window_bounds = array<i64: 128, 384>}, {pipeline_mode = #tpu.pipeline_mode<synchronous>, transform_indices = @transform_6, window_bounds = array<i64: 1, 384>}, {pipeline_mode = #tpu.pipeline_mode<synchronous>, transform_indices = @transform_7, window_bounds = array<i64: 128, 128>}, {pipeline_mode = #tpu.pipeline_mode<synchronous>, transform_indices = @transform_8, window_bounds = array<i64: 1, 128>}, {pipeline_mode = #tpu.pipeline_mode<synchronous>, transform_indices = @transform_9, window_bounds = array<i64: 128, 512>}, {pipeline_mode = #tpu.pipeline_mode<synchronous>, transform_indices = @transform_10, window_bounds = array<i64: 1, 512>}, {pipeline_mode = #tpu.pipeline_mode<synchronous>, transform_indices = @transform_11, window_bounds = array<i64: 512, 128>}, {pipeline_mode = #tpu.pipeline_mode<synchronous>, transform_indices = @transform_12, window_bounds = array<i64: 1, 128>}, {transform_indices = @transform_13, window_bounds = array<i64: 1, 64, 128>}]} {
    %c0_i32 = arith.constant 0 : i32
    %0 = arith.cmpi eq, %arg1, %c0_i32 : i32
    %1 = arith.extui %0 : i1 to i32
    %c0_i32_0 = arith.constant 0 : i32
    %2 = arith.cmpi ne, %1, %c0_i32_0 : i32
    scf.if %2 {
      %c0_60 = arith.constant 0 : index
      %c0_61 = arith.constant 0 : index
      %c0_62 = arith.constant 0 : index
      %154 = vector.load %arg2[%c0_60, %c0_61, %c0_62] : memref<1x128x128xf32, #tpu.memory_space<vmem>>, vector<1x128x128xf32>
      %155 = vector.shape_cast %154 : vector<1x128x128xf32> to vector<128x128xf32>
      %c0_63 = arith.constant 0 : index
      %c0_64 = arith.constant 0 : index
      %156 = vector.load %arg3[%c0_63, %c0_64] : memref<1x128xf32, #tpu.memory_space<vmem>>, vector<1x128xf32>
      %157 = vector.shape_cast %156 : vector<1x128xf32> to vector<128xf32>
      %c0_65 = arith.constant 0 : index
      %c0_66 = arith.constant 0 : index
      %158 = vector.load %arg4[%c0_65, %c0_66] : memref<1x128xf32, #tpu.memory_space<vmem>>, vector<1x128xf32>
      %159 = vector.shape_cast %158 : vector<1x128xf32> to vector<128xf32>
      %cst_67 = arith.constant dense<0.000000e+00> : vector<128xf32>
      %160 = vector.multi_reduction <add>, %155, %cst_67 [1] : vector<128x128xf32> to vector<128xf32>
      %161 = vector.shape_cast %160 : vector<128xf32> to vector<128x1xf32>
      %cst_68 = arith.constant 1.280000e+02 : f32
      %162 = vector.broadcast %cst_68 : f32 to vector<128x1xf32>
      %163 = arith.divf %161, %162 : vector<128x1xf32>
      %164 = vector.broadcast %163 : vector<128x1xf32> to vector<128x128xf32>
      %165 = arith.subf %155, %164 : vector<128x128xf32>
      %166 = arith.mulf %165, %165 : vector<128x128xf32>
      %cst_69 = arith.constant dense<0.000000e+00> : vector<128xf32>
      %167 = vector.multi_reduction <add>, %166, %cst_69 [1] : vector<128x128xf32> to vector<128xf32>
      %168 = vector.shape_cast %167 : vector<128xf32> to vector<128x1xf32>
      %cst_70 = arith.constant 1.280000e+02 : f32
      %169 = vector.broadcast %cst_70 : f32 to vector<128x1xf32>
      %170 = arith.divf %168, %169 : vector<128x1xf32>
      %171 = vector.broadcast %163 : vector<128x1xf32> to vector<128x128xf32>
      %172 = arith.subf %155, %171 : vector<128x128xf32>
      %cst_71 = arith.constant 9.99999974E-6 : f32
      %173 = vector.broadcast %cst_71 : f32 to vector<128x1xf32>
      %174 = arith.addf %170, %173 : vector<128x1xf32>
      %175 = math.rsqrt %174 : vector<128x1xf32>
      %176 = vector.broadcast %175 : vector<128x1xf32> to vector<128x128xf32>
      %177 = arith.mulf %172, %176 : vector<128x128xf32>
      %178 = vector.shape_cast %157 : vector<128xf32> to vector<1x128xf32>
      %179 = vector.broadcast %178 : vector<1x128xf32> to vector<128x128xf32>
      %180 = arith.mulf %177, %179 : vector<128x128xf32>
      %181 = vector.shape_cast %159 : vector<128xf32> to vector<1x128xf32>
      %182 = vector.broadcast %181 : vector<1x128xf32> to vector<128x128xf32>
      %183 = arith.addf %180, %182 : vector<128x128xf32>
      %c0_72 = arith.constant 0 : index
      %c0_73 = arith.constant 0 : index
      %184 = vector.load %arg7[%c0_72, %c0_73] : memref<128x384xf32, #tpu.memory_space<vmem>>, vector<128x384xf32>
      %cst_74 = arith.constant dense<0.000000e+00> : vector<128x384xf32>
      %185 = tpu.matmul %183, %184, %cst_74 {dimension_numbers = #tpu.dot_dimension_numbers<[1], [0], [0], [1], [0, 0, 1, 1], [], []>} : vector<128x128xf32>, vector<128x384xf32>, vector<128x384xf32> -> vector<128x384xf32>
      %c0_75 = arith.constant 0 : index
      %c0_76 = arith.constant 0 : index
      %186 = vector.load %arg8[%c0_75, %c0_76] : memref<1x384xf32, #tpu.memory_space<vmem>>, vector<1x384xf32>
      %187 = vector.shape_cast %186 : vector<1x384xf32> to vector<384xf32>
      %188 = vector.shape_cast %187 : vector<384xf32> to vector<1x384xf32>
      %189 = vector.broadcast %188 : vector<1x384xf32> to vector<128x384xf32>
      %190 = arith.addf %185, %189 : vector<128x384xf32>
      %191 = vector.extract_strided_slice %190 {offsets = [0, 0], sizes = [128, 128], strides = [1, 1]} : vector<128x384xf32> to vector<128x128xf32>
      %c0_77 = arith.constant 0 : index
      %c0_78 = arith.constant 0 : index
      %192 = vector.load %arg16[%c0_77, %c0_78] : memref<128x128xf32, #tpu.memory_space<vmem>>, vector<128x128xf32>
      tpu.vector_store %arg16[%c0_77, %c0_78], %191 {strides = array<i32>} : memref<128x128xf32, #tpu.memory_space<vmem>>, vector<128x128xf32>,
      %193 = vector.extract_strided_slice %190 {offsets = [0, 128], sizes = [128, 128], strides = [1, 1]} : vector<128x384xf32> to vector<128x128xf32>
      %c0_79 = arith.constant 0 : index
      %c0_80 = arith.constant 0 : index
      %194 = vector.load %arg17[%c0_79, %c0_80] : memref<128x128xf32, #tpu.memory_space<vmem>>, vector<128x128xf32>
      tpu.vector_store %arg17[%c0_79, %c0_80], %193 {strides = array<i32>} : memref<128x128xf32, #tpu.memory_space<vmem>>, vector<128x128xf32>,
      %195 = vector.extract_strided_slice %190 {offsets = [0, 256], sizes = [128, 128], strides = [1, 1]} : vector<128x384xf32> to vector<128x128xf32>
      %c0_81 = arith.constant 0 : index
      %c0_82 = arith.constant 0 : index
      %196 = vector.load %arg18[%c0_81, %c0_82] : memref<128x128xf32, #tpu.memory_space<vmem>>, vector<128x128xf32>
      tpu.vector_store %arg18[%c0_81, %c0_82], %195 {strides = array<i32>} : memref<128x128xf32, #tpu.memory_space<vmem>>, vector<128x128xf32>,
    } else {
    }
    %c64_i32 = arith.constant 64 : i32
    %3 = arith.muli %arg1, %c64_i32 : i32
    %4 = tpu.assume_multiple %3, 64 : i32
    %c0 = arith.constant 0 : index
    %5 = arith.index_cast %4 : i32 to index
    %c0_1 = arith.constant 0 : index
    %6 = vector.load %arg2[%c0, %5, %c0_1] : memref<1x128x128xf32, #tpu.memory_space<vmem>>, vector<1x64x128xf32>
    %7 = vector.shape_cast %6 : vector<1x64x128xf32> to vector<64x128xf32>
    %8 = arith.index_cast %4 : i32 to index
    %c0_2 = arith.constant 0 : index
    %9 = vector.load %arg16[%8, %c0_2] : memref<128x128xf32, #tpu.memory_space<vmem>>, vector<64x128xf32>
    %c0_3 = arith.constant 0 : index
    %c0_4 = arith.constant 0 : index
    %10 = vector.load %arg17[%c0_3, %c0_4] : memref<128x128xf32, #tpu.memory_space<vmem>>, vector<128x128xf32>
    %c0_5 = arith.constant 0 : index
    %c0_6 = arith.constant 0 : index
    %11 = vector.load %arg18[%c0_5, %c0_6] : memref<128x128xf32, #tpu.memory_space<vmem>>, vector<128x128xf32>
    %c0_7 = arith.constant 0 : index
    %c0_8 = arith.constant 0 : index
    %12 = vector.load %arg9[%c0_7, %c0_8] : memref<128x128xf32, #tpu.memory_space<vmem>>, vector<128x128xf32>
    %cst = arith.constant 0.000000e+00 : f32
    %13 = vector.broadcast %cst : f32 to vector<64x128xf32>
    %14 = vector.extract_strided_slice %9 {offsets = [0, 0], sizes = [64, 32], strides = [1, 1]} : vector<64x128xf32> to vector<64x32xf32>
    %15 = vector.extract_strided_slice %10 {offsets = [0, 0], sizes = [128, 32], strides = [1, 1]} : vector<128x128xf32> to vector<128x32xf32>
    %16 = vector.extract_strided_slice %11 {offsets = [0, 0], sizes = [128, 32], strides = [1, 1]} : vector<128x128xf32> to vector<128x32xf32>
    %cst_9 = arith.constant dense<0.000000e+00> : vector<64x128xf32>
    %17 = tpu.matmul %14, %15, %cst_9 {dimension_numbers = #tpu.dot_dimension_numbers<[1], [1], [0], [0], [0, 0, 1, 0], [], []>} : vector<64x32xf32>, vector<128x32xf32>, vector<64x128xf32> -> vector<64x128xf32>
    %cst_10 = arith.constant 0.176776692 : f32
    %18 = vector.broadcast %cst_10 : f32 to vector<64x128xf32>
    %19 = arith.mulf %17, %18 : vector<64x128xf32>
    %cst_11 = arith.constant dense<0xFF800000> : vector<64xf32>
    %20 = vector.multi_reduction <maximumf>, %19, %cst_11 [1] : vector<64x128xf32> to vector<64xf32>
    %21 = vector.shape_cast %20 : vector<64xf32> to vector<64x1xf32>
    %22 = vector.broadcast %21 : vector<64x1xf32> to vector<64x128xf32>
    %23 = arith.subf %19, %22 : vector<64x128xf32>
    %24 = math.exp %23 : vector<64x128xf32>
    %cst_12 = arith.constant dense<0.000000e+00> : vector<64xf32>
    %25 = vector.multi_reduction <add>, %24, %cst_12 [1] : vector<64x128xf32> to vector<64xf32>
    %26 = vector.shape_cast %25 : vector<64xf32> to vector<64x1xf32>
    %cst_13 = arith.constant dense<0.000000e+00> : vector<64x32xf32>
    %27 = tpu.matmul %24, %16, %cst_13 {dimension_numbers = #tpu.dot_dimension_numbers<[1], [0], [0], [1], [0, 0, 1, 1], [], []>} : vector<64x128xf32>, vector<128x32xf32>, vector<64x32xf32> -> vector<64x32xf32>
    %28 = tpu.reciprocal %26 {approx = true} : vector<64x1xf32> -> vector<64x1xf32>
    %29 = vector.broadcast %28 : vector<64x1xf32> to vector<64x32xf32>
    %30 = arith.mulf %27, %29 : vector<64x32xf32>
    %31 = vector.extract_strided_slice %12 {offsets = [0, 0], sizes = [32, 128], strides = [1, 1]} : vector<128x128xf32> to vector<32x128xf32>
    %cst_14 = arith.constant dense<0.000000e+00> : vector<64x128xf32>
    %32 = tpu.matmul %30, %31, %cst_14 {dimension_numbers = #tpu.dot_dimension_numbers<[1], [0], [0], [1], [0, 0, 1, 1], [], []>} : vector<64x32xf32>, vector<32x128xf32>, vector<64x128xf32> -> vector<64x128xf32>
    %33 = arith.addf %13, %32 : vector<64x128xf32>
    %34 = vector.extract_strided_slice %9 {offsets = [0, 32], sizes = [64, 32], strides = [1, 1]} : vector<64x128xf32> to vector<64x32xf32>
    %35 = vector.extract_strided_slice %10 {offsets = [0, 32], sizes = [128, 32], strides = [1, 1]} : vector<128x128xf32> to vector<128x32xf32>
    %36 = vector.extract_strided_slice %11 {offsets = [0, 32], sizes = [128, 32], strides = [1, 1]} : vector<128x128xf32> to vector<128x32xf32>
    %cst_15 = arith.constant dense<0.000000e+00> : vector<64x128xf32>
    %37 = tpu.matmul %34, %35, %cst_15 {dimension_numbers = #tpu.dot_dimension_numbers<[1], [1], [0], [0], [0, 0, 1, 0], [], []>} : vector<64x32xf32>, vector<128x32xf32>, vector<64x128xf32> -> vector<64x128xf32>
    %cst_16 = arith.constant 0.176776692 : f32
    %38 = vector.broadcast %cst_16 : f32 to vector<64x128xf32>
    %39 = arith.mulf %37, %38 : vector<64x128xf32>
    %cst_17 = arith.constant dense<0xFF800000> : vector<64xf32>
    %40 = vector.multi_reduction <maximumf>, %39, %cst_17 [1] : vector<64x128xf32> to vector<64xf32>
    %41 = vector.shape_cast %40 : vector<64xf32> to vector<64x1xf32>
    %42 = vector.broadcast %41 : vector<64x1xf32> to vector<64x128xf32>
    %43 = arith.subf %39, %42 : vector<64x128xf32>
    %44 = math.exp %43 : vector<64x128xf32>
    %cst_18 = arith.constant dense<0.000000e+00> : vector<64xf32>
    %45 = vector.multi_reduction <add>, %44, %cst_18 [1] : vector<64x128xf32> to vector<64xf32>
    %46 = vector.shape_cast %45 : vector<64xf32> to vector<64x1xf32>
    %cst_19 = arith.constant dense<0.000000e+00> : vector<64x32xf32>
    %47 = tpu.matmul %44, %36, %cst_19 {dimension_numbers = #tpu.dot_dimension_numbers<[1], [0], [0], [1], [0, 0, 1, 1], [], []>} : vector<64x128xf32>, vector<128x32xf32>, vector<64x32xf32> -> vector<64x32xf32>
    %48 = tpu.reciprocal %46 {approx = true} : vector<64x1xf32> -> vector<64x1xf32>
    %49 = vector.broadcast %48 : vector<64x1xf32> to vector<64x32xf32>
    %50 = arith.mulf %47, %49 : vector<64x32xf32>
    %51 = vector.extract_strided_slice %12 {offsets = [32, 0], sizes = [32, 128], strides = [1, 1]} : vector<128x128xf32> to vector<32x128xf32>
    %cst_20 = arith.constant dense<0.000000e+00> : vector<64x128xf32>
    %52 = tpu.matmul %50, %51, %cst_20 {dimension_numbers = #tpu.dot_dimension_numbers<[1], [0], [0], [1], [0, 0, 1, 1], [], []>} : vector<64x32xf32>, vector<32x128xf32>, vector<64x128xf32> -> vector<64x128xf32>
    %53 = arith.addf %33, %52 : vector<64x128xf32>
    %54 = vector.extract_strided_slice %9 {offsets = [0, 64], sizes = [64, 32], strides = [1, 1]} : vector<64x128xf32> to vector<64x32xf32>
    %55 = vector.extract_strided_slice %10 {offsets = [0, 64], sizes = [128, 32], strides = [1, 1]} : vector<128x128xf32> to vector<128x32xf32>
    %56 = vector.extract_strided_slice %11 {offsets = [0, 64], sizes = [128, 32], strides = [1, 1]} : vector<128x128xf32> to vector<128x32xf32>
    %cst_21 = arith.constant dense<0.000000e+00> : vector<64x128xf32>
    %57 = tpu.matmul %54, %55, %cst_21 {dimension_numbers = #tpu.dot_dimension_numbers<[1], [1], [0], [0], [0, 0, 1, 0], [], []>} : vector<64x32xf32>, vector<128x32xf32>, vector<64x128xf32> -> vector<64x128xf32>
    %cst_22 = arith.constant 0.176776692 : f32
    %58 = vector.broadcast %cst_22 : f32 to vector<64x128xf32>
    %59 = arith.mulf %57, %58 : vector<64x128xf32>
    %cst_23 = arith.constant dense<0xFF800000> : vector<64xf32>
    %60 = vector.multi_reduction <maximumf>, %59, %cst_23 [1] : vector<64x128xf32> to vector<64xf32>
    %61 = vector.shape_cast %60 : vector<64xf32> to vector<64x1xf32>
    %62 = vector.broadcast %61 : vector<64x1xf32> to vector<64x128xf32>
    %63 = arith.subf %59, %62 : vector<64x128xf32>
    %64 = math.exp %63 : vector<64x128xf32>
    %cst_24 = arith.constant dense<0.000000e+00> : vector<64xf32>
    %65 = vector.multi_reduction <add>, %64, %cst_24 [1] : vector<64x128xf32> to vector<64xf32>
    %66 = vector.shape_cast %65 : vector<64xf32> to vector<64x1xf32>
    %cst_25 = arith.constant dense<0.000000e+00> : vector<64x32xf32>
    %67 = tpu.matmul %64, %56, %cst_25 {dimension_numbers = #tpu.dot_dimension_numbers<[1], [0], [0], [1], [0, 0, 1, 1], [], []>} : vector<64x128xf32>, vector<128x32xf32>, vector<64x32xf32> -> vector<64x32xf32>
    %68 = tpu.reciprocal %66 {approx = true} : vector<64x1xf32> -> vector<64x1xf32>
    %69 = vector.broadcast %68 : vector<64x1xf32> to vector<64x32xf32>
    %70 = arith.mulf %67, %69 : vector<64x32xf32>
    %71 = vector.extract_strided_slice %12 {offsets = [64, 0], sizes = [32, 128], strides = [1, 1]} : vector<128x128xf32> to vector<32x128xf32>
    %cst_26 = arith.constant dense<0.000000e+00> : vector<64x128xf32>
    %72 = tpu.matmul %70, %71, %cst_26 {dimension_numbers = #tpu.dot_dimension_numbers<[1], [0], [0], [1], [0, 0, 1, 1], [], []>} : vector<64x32xf32>, vector<32x128xf32>, vector<64x128xf32> -> vector<64x128xf32>
    %73 = arith.addf %53, %72 : vector<64x128xf32>
    %74 = vector.extract_strided_slice %9 {offsets = [0, 96], sizes = [64, 32], strides = [1, 1]} : vector<64x128xf32> to vector<64x32xf32>
    %75 = vector.extract_strided_slice %10 {offsets = [0, 96], sizes = [128, 32], strides = [1, 1]} : vector<128x128xf32> to vector<128x32xf32>
    %76 = vector.extract_strided_slice %11 {offsets = [0, 96], sizes = [128, 32], strides = [1, 1]} : vector<128x128xf32> to vector<128x32xf32>
    %cst_27 = arith.constant dense<0.000000e+00> : vector<64x128xf32>
    %77 = tpu.matmul %74, %75, %cst_27 {dimension_numbers = #tpu.dot_dimension_numbers<[1], [1], [0], [0], [0, 0, 1, 0], [], []>} : vector<64x32xf32>, vector<128x32xf32>, vector<64x128xf32> -> vector<64x128xf32>
    %cst_28 = arith.constant 0.176776692 : f32
    %78 = vector.broadcast %cst_28 : f32 to vector<64x128xf32>
    %79 = arith.mulf %77, %78 : vector<64x128xf32>
    %cst_29 = arith.constant dense<0xFF800000> : vector<64xf32>
    %80 = vector.multi_reduction <maximumf>, %79, %cst_29 [1] : vector<64x128xf32> to vector<64xf32>
    %81 = vector.shape_cast %80 : vector<64xf32> to vector<64x1xf32>
    %82 = vector.broadcast %81 : vector<64x1xf32> to vector<64x128xf32>
    %83 = arith.subf %79, %82 : vector<64x128xf32>
    %84 = math.exp %83 : vector<64x128xf32>
    %cst_30 = arith.constant dense<0.000000e+00> : vector<64xf32>
    %85 = vector.multi_reduction <add>, %84, %cst_30 [1] : vector<64x128xf32> to vector<64xf32>
    %86 = vector.shape_cast %85 : vector<64xf32> to vector<64x1xf32>
    %cst_31 = arith.constant dense<0.000000e+00> : vector<64x32xf32>
    %87 = tpu.matmul %84, %76, %cst_31 {dimension_numbers = #tpu.dot_dimension_numbers<[1], [0], [0], [1], [0, 0, 1, 1], [], []>} : vector<64x128xf32>, vector<128x32xf32>, vector<64x32xf32> -> vector<64x32xf32>
    %88 = tpu.reciprocal %86 {approx = true} : vector<64x1xf32> -> vector<64x1xf32>
    %89 = vector.broadcast %88 : vector<64x1xf32> to vector<64x32xf32>
    %90 = arith.mulf %87, %89 : vector<64x32xf32>
    %91 = vector.extract_strided_slice %12 {offsets = [96, 0], sizes = [32, 128], strides = [1, 1]} : vector<128x128xf32> to vector<32x128xf32>
    %cst_32 = arith.constant dense<0.000000e+00> : vector<64x128xf32>
    %92 = tpu.matmul %90, %91, %cst_32 {dimension_numbers = #tpu.dot_dimension_numbers<[1], [0], [0], [1], [0, 0, 1, 1], [], []>} : vector<64x32xf32>, vector<32x128xf32>, vector<64x128xf32> -> vector<64x128xf32>
    %93 = arith.addf %73, %92 : vector<64x128xf32>
    %c0_33 = arith.constant 0 : index
    %c0_34 = arith.constant 0 : index
    %94 = vector.load %arg10[%c0_33, %c0_34] : memref<1x128xf32, #tpu.memory_space<vmem>>, vector<1x128xf32>
    %95 = vector.shape_cast %94 : vector<1x128xf32> to vector<128xf32>
    %96 = vector.shape_cast %95 : vector<128xf32> to vector<1x128xf32>
    %97 = vector.broadcast %96 : vector<1x128xf32> to vector<64x128xf32>
    %98 = arith.addf %93, %97 : vector<64x128xf32>
    %99 = arith.addf %7, %98 : vector<64x128xf32>
    %c0_35 = arith.constant 0 : index
    %c0_36 = arith.constant 0 : index
    %100 = vector.load %arg5[%c0_35, %c0_36] : memref<1x128xf32, #tpu.memory_space<vmem>>, vector<1x128xf32>
    %101 = vector.shape_cast %100 : vector<1x128xf32> to vector<128xf32>
    %c0_37 = arith.constant 0 : index
    %c0_38 = arith.constant 0 : index
    %102 = vector.load %arg6[%c0_37, %c0_38] : memref<1x128xf32, #tpu.memory_space<vmem>>, vector<1x128xf32>
    %103 = vector.shape_cast %102 : vector<1x128xf32> to vector<128xf32>
    %cst_39 = arith.constant dense<0.000000e+00> : vector<64xf32>
    %104 = vector.multi_reduction <add>, %99, %cst_39 [1] : vector<64x128xf32> to vector<64xf32>
    %105 = vector.shape_cast %104 : vector<64xf32> to vector<64x1xf32>
    %cst_40 = arith.constant 1.280000e+02 : f32
    %106 = vector.broadcast %cst_40 : f32 to vector<64x1xf32>
    %107 = arith.divf %105, %106 : vector<64x1xf32>
    %108 = vector.broadcast %107 : vector<64x1xf32> to vector<64x128xf32>
    %109 = arith.subf %99, %108 : vector<64x128xf32>
    %110 = arith.mulf %109, %109 : vector<64x128xf32>
    %cst_41 = arith.constant dense<0.000000e+00> : vector<64xf32>
    %111 = vector.multi_reduction <add>, %110, %cst_41 [1] : vector<64x128xf32> to vector<64xf32>
    %112 = vector.shape_cast %111 : vector<64xf32> to vector<64x1xf32>
    %cst_42 = arith.constant 1.280000e+02 : f32
    %113 = vector.broadcast %cst_42 : f32 to vector<64x1xf32>
    %114 = arith.divf %112, %113 : vector<64x1xf32>
    %115 = vector.broadcast %107 : vector<64x1xf32> to vector<64x128xf32>
    %116 = arith.subf %99, %115 : vector<64x128xf32>
    %cst_43 = arith.constant 9.99999974E-6 : f32
    %117 = vector.broadcast %cst_43 : f32 to vector<64x1xf32>
    %118 = arith.addf %114, %117 : vector<64x1xf32>
    %119 = math.rsqrt %118 : vector<64x1xf32>
    %120 = vector.broadcast %119 : vector<64x1xf32> to vector<64x128xf32>
    %121 = arith.mulf %116, %120 : vector<64x128xf32>
    %122 = vector.shape_cast %101 : vector<128xf32> to vector<1x128xf32>
    %123 = vector.broadcast %122 : vector<1x128xf32> to vector<64x128xf32>
    %124 = arith.mulf %121, %123 : vector<64x128xf32>
    %125 = vector.shape_cast %103 : vector<128xf32> to vector<1x128xf32>
    %126 = vector.broadcast %125 : vector<1x128xf32> to vector<64x128xf32>
    %127 = arith.addf %124, %126 : vector<64x128xf32>
    %c0_44 = arith.constant 0 : index
    %c0_45 = arith.constant 0 : index
    %128 = vector.load %arg11[%c0_44, %c0_45] : memref<128x512xf32, #tpu.memory_space<vmem>>, vector<128x512xf32>
    %cst_46 = arith.constant dense<0.000000e+00> : vector<64x512xf32>
    %129 = tpu.matmul %127, %128, %cst_46 {dimension_numbers = #tpu.dot_dimension_numbers<[1], [0], [0], [1], [0, 0, 1, 1], [], []>} : vector<64x128xf32>, vector<128x512xf32>, vector<64x512xf32> -> vector<64x512xf32>
    %c0_47 = arith.constant 0 : index
    %c0_48 = arith.constant 0 : index
    %130 = vector.load %arg12[%c0_47, %c0_48] : memref<1x512xf32, #tpu.memory_space<vmem>>, vector<1x512xf32>
    %131 = vector.shape_cast %130 : vector<1x512xf32> to vector<512xf32>
    %132 = vector.shape_cast %131 : vector<512xf32> to vector<1x512xf32>
    %133 = vector.broadcast %132 : vector<1x512xf32> to vector<64x512xf32>
    %134 = arith.addf %129, %133 : vector<64x512xf32>
    %cst_49 = arith.constant 5.000000e-01 : f32
    %135 = vector.broadcast %cst_49 : f32 to vector<64x512xf32>
    %136 = arith.mulf %135, %134 : vector<64x512xf32>
    %cst_50 = arith.constant 0.707106769 : f32
    %137 = vector.broadcast %cst_50 : f32 to vector<64x512xf32>
    %138 = arith.mulf %134, %137 : vector<64x512xf32>
    %139 = math.erf %138 : vector<64x512xf32>
    %cst_51 = arith.constant 1.000000e+00 : f32
    %140 = vector.broadcast %cst_51 : f32 to vector<64x512xf32>
    %141 = arith.addf %140, %139 : vector<64x512xf32>
    %142 = arith.mulf %136, %141 : vector<64x512xf32>
    %c0_52 = arith.constant 0 : index
    %c0_53 = arith.constant 0 : index
    %143 = vector.load %arg13[%c0_52, %c0_53] : memref<512x128xf32, #tpu.memory_space<vmem>>, vector<512x128xf32>
    %cst_54 = arith.constant dense<0.000000e+00> : vector<64x128xf32>
    %144 = tpu.matmul %142, %143, %cst_54 {dimension_numbers = #tpu.dot_dimension_numbers<[1], [0], [0], [1], [0, 0, 1, 1], [], []>} : vector<64x512xf32>, vector<512x128xf32>, vector<64x128xf32> -> vector<64x128xf32>
    %c0_55 = arith.constant 0 : index
    %c0_56 = arith.constant 0 : index
    %145 = vector.load %arg14[%c0_55, %c0_56] : memref<1x128xf32, #tpu.memory_space<vmem>>, vector<1x128xf32>
    %146 = vector.shape_cast %145 : vector<1x128xf32> to vector<128xf32>
    %147 = vector.shape_cast %146 : vector<128xf32> to vector<1x128xf32>
    %148 = vector.broadcast %147 : vector<1x128xf32> to vector<64x128xf32>
    %149 = arith.addf %144, %148 : vector<64x128xf32>
    %150 = arith.addf %99, %149 : vector<64x128xf32>
    %c0_57 = arith.constant 0 : index
    %c0_58 = arith.constant 0 : index
    %c0_59 = arith.constant 0 : index
    %151 = vector.load %arg15[%c0_57, %c0_58, %c0_59] : memref<1x64x128xf32, #tpu.memory_space<vmem>>, vector<1x64x128xf32>
    %152 = vector.shape_cast %151 : vector<1x64x128xf32> to vector<64x128xf32>
    %153 = vector.shape_cast %150 : vector<64x128xf32> to vector<1x64x128xf32>
    tpu.vector_store %arg15[%c0_57, %c0_58, %c0_59], %153 {strides = array<i32>} : memref<1x64x128xf32, #tpu.memory_space<vmem>>, vector<1x64x128xf32>,
    return
  }
  func.func @transform_0(%arg0: i32, %arg1: i32) -> (i32, i32, i32) {
    %c0_i32 = arith.constant 0 : i32
    %c0_i32_0 = arith.constant 0 : i32
    %c0_i32_1 = arith.constant 0 : i32
    return %arg0, %c0_i32, %c0_i32_0 : i32, i32, i32
  }
  func.func @transform_1(%arg0: i32, %arg1: i32) -> (i32, i32) {
    %c0_i32 = arith.constant 0 : i32
    %c0_i32_0 = arith.constant 0 : i32
    %c0_i32_1 = arith.constant 0 : i32
    return %c0_i32, %c0_i32_0 : i32, i32
  }
  func.func @transform_2(%arg0: i32, %arg1: i32) -> (i32, i32) {
    %c0_i32 = arith.constant 0 : i32
    %c0_i32_0 = arith.constant 0 : i32
    %c0_i32_1 = arith.constant 0 : i32
    return %c0_i32, %c0_i32_0 : i32, i32
  }
  func.func @transform_3(%arg0: i32, %arg1: i32) -> (i32, i32) {
    %c0_i32 = arith.constant 0 : i32
    %c0_i32_0 = arith.constant 0 : i32
    %c0_i32_1 = arith.constant 0 : i32
    return %c0_i32, %c0_i32_0 : i32, i32
  }
  func.func @transform_4(%arg0: i32, %arg1: i32) -> (i32, i32) {
    %c0_i32 = arith.constant 0 : i32
    %c0_i32_0 = arith.constant 0 : i32
    %c0_i32_1 = arith.constant 0 : i32
    return %c0_i32, %c0_i32_0 : i32, i32
  }
  func.func @transform_5(%arg0: i32, %arg1: i32) -> (i32, i32) {
    %c0_i32 = arith.constant 0 : i32
    %c0_i32_0 = arith.constant 0 : i32
    %c0_i32_1 = arith.constant 0 : i32
    return %c0_i32, %c0_i32_0 : i32, i32
  }
  func.func @transform_6(%arg0: i32, %arg1: i32) -> (i32, i32) {
    %c0_i32 = arith.constant 0 : i32
    %c0_i32_0 = arith.constant 0 : i32
    %c0_i32_1 = arith.constant 0 : i32
    return %c0_i32, %c0_i32_0 : i32, i32
  }
  func.func @transform_7(%arg0: i32, %arg1: i32) -> (i32, i32) {
    %c0_i32 = arith.constant 0 : i32
    %c0_i32_0 = arith.constant 0 : i32
    %c0_i32_1 = arith.constant 0 : i32
    return %c0_i32, %c0_i32_0 : i32, i32
  }
  func.func @transform_8(%arg0: i32, %arg1: i32) -> (i32, i32) {
    %c0_i32 = arith.constant 0 : i32
    %c0_i32_0 = arith.constant 0 : i32
    %c0_i32_1 = arith.constant 0 : i32
    return %c0_i32, %c0_i32_0 : i32, i32
  }
  func.func @transform_9(%arg0: i32, %arg1: i32) -> (i32, i32) {
    %c0_i32 = arith.constant 0 : i32
    %c0_i32_0 = arith.constant 0 : i32
    %c0_i32_1 = arith.constant 0 : i32
    return %c0_i32, %c0_i32_0 : i32, i32
  }
  func.func @transform_10(%arg0: i32, %arg1: i32) -> (i32, i32) {
    %c0_i32 = arith.constant 0 : i32
    %c0_i32_0 = arith.constant 0 : i32
    %c0_i32_1 = arith.constant 0 : i32
    return %c0_i32, %c0_i32_0 : i32, i32
  }
  func.func @transform_11(%arg0: i32, %arg1: i32) -> (i32, i32) {
    %c0_i32 = arith.constant 0 : i32
    %c0_i32_0 = arith.constant 0 : i32
    %c0_i32_1 = arith.constant 0 : i32
    return %c0_i32, %c0_i32_0 : i32, i32
  }
  func.func @transform_12(%arg0: i32, %arg1: i32) -> (i32, i32) {
    %c0_i32 = arith.constant 0 : i32
    %c0_i32_0 = arith.constant 0 : i32
    %c0_i32_1 = arith.constant 0 : i32
    return %c0_i32, %c0_i32_0 : i32, i32
  }
  func.func @transform_13(%arg0: i32, %arg1: i32) -> (i32, i32, i32) {
    %c0_i32 = arith.constant 0 : i32
    %c0_i32_0 = arith.constant 0 : i32
    return %arg0, %arg1, %c0_i32 : i32, i32, i32
  }
}

module attributes {stable_mosaic.version = 11 : i64} {
  func.func @prenorm_gelu_block_kernel(%arg0: i32, %arg1: i32, %arg2: memref<1x128x128xf32, #tpu.memory_space<vmem>>, %arg3: memref<1x128xf32, #tpu.memory_space<vmem>>, %arg4: memref<1x128xf32, #tpu.memory_space<vmem>>, %arg5: memref<1x128xf32, #tpu.memory_space<vmem>>, %arg6: memref<1x128xf32, #tpu.memory_space<vmem>>, %arg7: memref<128x384xf32, #tpu.memory_space<vmem>>, %arg8: memref<1x384xf32, #tpu.memory_space<vmem>>, %arg9: memref<128x128xf32, #tpu.memory_space<vmem>>, %arg10: memref<1x128xf32, #tpu.memory_space<vmem>>, %arg11: memref<128x512xf32, #tpu.memory_space<vmem>>, %arg12: memref<1x512xf32, #tpu.memory_space<vmem>>, %arg13: memref<512x128xf32, #tpu.memory_space<vmem>>, %arg14: memref<1x128xf32, #tpu.memory_space<vmem>>, %arg15: memref<1x64x128xf32, #tpu.memory_space<vmem>>, %arg16: memref<128x128xf32, #tpu.memory_space<vmem>>, %arg17: memref<128x128xf32, #tpu.memory_space<vmem>>, %arg18: memref<128x128xf32, #tpu.memory_space<vmem>>) attributes {dimension_semantics = [#tpu.dimension_semantics<parallel>, #tpu.dimension_semantics<arbitrary>], iteration_bounds = array<i64: 2, 2>, scalar_prefetch = 0 : i64, scratch_operands = 3 : i64, tpu.core_type = #tpu.core_type<tc>, window_params = [{transform_indices = @transform_0, window_bounds = array<i64: 1, 128, 128>}, {pipeline_mode = #tpu.pipeline_mode<synchronous>, transform_indices = @transform_1, window_bounds = array<i64: 1, 128>}, {pipeline_mode = #tpu.pipeline_mode<synchronous>, transform_indices = @transform_2, window_bounds = array<i64: 1, 128>}, {pipeline_mode = #tpu.pipeline_mode<synchronous>, transform_indices = @transform_3, window_bounds = array<i64: 1, 128>}, {pipeline_mode = #tpu.pipeline_mode<synchronous>, transform_indices = @transform_4, window_bounds = array<i64: 1, 128>}, {pipeline_mode = #tpu.pipeline_mode<synchronous>, transform_indices = @transform_5, window_bounds = array<i64: 128, 384>}, {pipeline_mode = #tpu.pipeline_mode<synchronous>, transform_indices = @transform_6, window_bounds = array<i64: 1, 384>}, {pipeline_mode = #tpu.pipeline_mode<synchronous>, transform_indices = @transform_7, window_bounds = array<i64: 128, 128>}, {pipeline_mode = #tpu.pipeline_mode<synchronous>, transform_indices = @transform_8, window_bounds = array<i64: 1, 128>}, {pipeline_mode = #tpu.pipeline_mode<synchronous>, transform_indices = @transform_9, window_bounds = array<i64: 128, 512>}, {pipeline_mode = #tpu.pipeline_mode<synchronous>, transform_indices = @transform_10, window_bounds = array<i64: 1, 512>}, {pipeline_mode = #tpu.pipeline_mode<synchronous>, transform_indices = @transform_11, window_bounds = array<i64: 512, 128>}, {pipeline_mode = #tpu.pipeline_mode<synchronous>, transform_indices = @transform_12, window_bounds = array<i64: 1, 128>}, {transform_indices = @transform_13, window_bounds = array<i64: 1, 64, 128>}]} {
    %c0_i32 = arith.constant 0 : i32
    %0 = arith.cmpi eq, %arg1, %c0_i32 : i32
    %1 = arith.extui %0 : i1 to i32
    %c0_i32_0 = arith.constant 0 : i32
    %2 = arith.cmpi ne, %1, %c0_i32_0 : i32
    scf.if %2 {
      %c0_60 = arith.constant 0 : index
      %c0_61 = arith.constant 0 : index
      %c0_62 = arith.constant 0 : index
      %154 = vector.load %arg2[%c0_60, %c0_61, %c0_62] : memref<1x128x128xf32, #tpu.memory_space<vmem>>, vector<1x128x128xf32>
      %155 = vector.shape_cast %154 : vector<1x128x128xf32> to vector<128x128xf32>
      %c0_63 = arith.constant 0 : index
      %c0_64 = arith.constant 0 : index
      %156 = vector.load %arg3[%c0_63, %c0_64] : memref<1x128xf32, #tpu.memory_space<vmem>>, vector<1x128xf32>
      %157 = vector.shape_cast %156 : vector<1x128xf32> to vector<128xf32>
      %c0_65 = arith.constant 0 : index
      %c0_66 = arith.constant 0 : index
      %158 = vector.load %arg4[%c0_65, %c0_66] : memref<1x128xf32, #tpu.memory_space<vmem>>, vector<1x128xf32>
      %159 = vector.shape_cast %158 : vector<1x128xf32> to vector<128xf32>
      %cst_67 = arith.constant dense<0.000000e+00> : vector<128xf32>
      %160 = vector.multi_reduction <add>, %155, %cst_67 [1] : vector<128x128xf32> to vector<128xf32>
      %161 = vector.shape_cast %160 : vector<128xf32> to vector<128x1xf32>
      %cst_68 = arith.constant 1.280000e+02 : f32
      %162 = vector.broadcast %cst_68 : f32 to vector<128x1xf32>
      %163 = arith.divf %161, %162 : vector<128x1xf32>
      %164 = vector.broadcast %163 : vector<128x1xf32> to vector<128x128xf32>
      %165 = arith.subf %155, %164 : vector<128x128xf32>
      %166 = arith.mulf %165, %165 : vector<128x128xf32>
      %cst_69 = arith.constant dense<0.000000e+00> : vector<128xf32>
      %167 = vector.multi_reduction <add>, %166, %cst_69 [1] : vector<128x128xf32> to vector<128xf32>
      %168 = vector.shape_cast %167 : vector<128xf32> to vector<128x1xf32>
      %cst_70 = arith.constant 1.280000e+02 : f32
      %169 = vector.broadcast %cst_70 : f32 to vector<128x1xf32>
      %170 = arith.divf %168, %169 : vector<128x1xf32>
      %171 = vector.broadcast %163 : vector<128x1xf32> to vector<128x128xf32>
      %172 = arith.subf %155, %171 : vector<128x128xf32>
      %cst_71 = arith.constant 9.99999974E-6 : f32
      %173 = vector.broadcast %cst_71 : f32 to vector<128x1xf32>
      %174 = arith.addf %170, %173 : vector<128x1xf32>
      %175 = math.rsqrt %174 : vector<128x1xf32>
      %176 = vector.broadcast %175 : vector<128x1xf32> to vector<128x128xf32>
      %177 = arith.mulf %172, %176 : vector<128x128xf32>
      %178 = vector.shape_cast %157 : vector<128xf32> to vector<1x128xf32>
      %179 = vector.broadcast %178 : vector<1x128xf32> to vector<128x128xf32>
      %180 = arith.mulf %177, %179 : vector<128x128xf32>
      %181 = vector.shape_cast %159 : vector<128xf32> to vector<1x128xf32>
      %182 = vector.broadcast %181 : vector<1x128xf32> to vector<128x128xf32>
      %183 = arith.addf %180, %182 : vector<128x128xf32>
      %c0_72 = arith.constant 0 : index
      %c0_73 = arith.constant 0 : index
      %184 = vector.load %arg7[%c0_72, %c0_73] : memref<128x384xf32, #tpu.memory_space<vmem>>, vector<128x384xf32>
      %cst_74 = arith.constant dense<0.000000e+00> : vector<128x384xf32>
      %185 = tpu.matmul %183, %184, %cst_74 {dimension_numbers = #tpu.dot_dimension_numbers<[1], [0], [0], [1], [0, 0, 1, 1], [], []>} : vector<128x128xf32>, vector<128x384xf32>, vector<128x384xf32> -> vector<128x384xf32>
      %c0_75 = arith.constant 0 : index
      %c0_76 = arith.constant 0 : index
      %186 = vector.load %arg8[%c0_75, %c0_76] : memref<1x384xf32, #tpu.memory_space<vmem>>, vector<1x384xf32>
      %187 = vector.shape_cast %186 : vector<1x384xf32> to vector<384xf32>
      %188 = vector.shape_cast %187 : vector<384xf32> to vector<1x384xf32>
      %189 = vector.broadcast %188 : vector<1x384xf32> to vector<128x384xf32>
      %190 = arith.addf %185, %189 : vector<128x384xf32>
      %191 = vector.extract_strided_slice %190 {offsets = [0, 0], sizes = [128, 128], strides = [1, 1]} : vector<128x384xf32> to vector<128x128xf32>
      %c0_77 = arith.constant 0 : index
      %c0_78 = arith.constant 0 : index
      %192 = vector.load %arg16[%c0_77, %c0_78] : memref<128x128xf32, #tpu.memory_space<vmem>>, vector<128x128xf32>
      tpu.vector_store %arg16[%c0_77, %c0_78], %191 {strides = array<i32>} : memref<128x128xf32, #tpu.memory_space<vmem>>, vector<128x128xf32>,
      %193 = vector.extract_strided_slice %190 {offsets = [0, 128], sizes = [128, 128], strides = [1, 1]} : vector<128x384xf32> to vector<128x128xf32>
      %c0_79 = arith.constant 0 : index
      %c0_80 = arith.constant 0 : index
      %194 = vector.load %arg17[%c0_79, %c0_80] : memref<128x128xf32, #tpu.memory_space<vmem>>, vector<128x128xf32>
      tpu.vector_store %arg17[%c0_79, %c0_80], %193 {strides = array<i32>} : memref<128x128xf32, #tpu.memory_space<vmem>>, vector<128x128xf32>,
      %195 = vector.extract_strided_slice %190 {offsets = [0, 256], sizes = [128, 128], strides = [1, 1]} : vector<128x384xf32> to vector<128x128xf32>
      %c0_81 = arith.constant 0 : index
      %c0_82 = arith.constant 0 : index
      %196 = vector.load %arg18[%c0_81, %c0_82] : memref<128x128xf32, #tpu.memory_space<vmem>>, vector<128x128xf32>
      tpu.vector_store %arg18[%c0_81, %c0_82], %195 {strides = array<i32>} : memref<128x128xf32, #tpu.memory_space<vmem>>, vector<128x128xf32>,
    } else {
    }
    %c64_i32 = arith.constant 64 : i32
    %3 = arith.muli %arg1, %c64_i32 : i32
    %4 = tpu.assume_multiple %3, 64 : i32
    %c0 = arith.constant 0 : index
    %5 = arith.index_cast %4 : i32 to index
    %c0_1 = arith.constant 0 : index
    %6 = vector.load %arg2[%c0, %5, %c0_1] : memref<1x128x128xf32, #tpu.memory_space<vmem>>, vector<1x64x128xf32>
    %7 = vector.shape_cast %6 : vector<1x64x128xf32> to vector<64x128xf32>
    %8 = arith.index_cast %4 : i32 to index
    %c0_2 = arith.constant 0 : index
    %9 = vector.load %arg16[%8, %c0_2] : memref<128x128xf32, #tpu.memory_space<vmem>>, vector<64x128xf32>
    %c0_3 = arith.constant 0 : index
    %c0_4 = arith.constant 0 : index
    %10 = vector.load %arg17[%c0_3, %c0_4] : memref<128x128xf32, #tpu.memory_space<vmem>>, vector<128x128xf32>
    %c0_5 = arith.constant 0 : index
    %c0_6 = arith.constant 0 : index
    %11 = vector.load %arg18[%c0_5, %c0_6] : memref<128x128xf32, #tpu.memory_space<vmem>>, vector<128x128xf32>
    %c0_7 = arith.constant 0 : index
    %c0_8 = arith.constant 0 : index
    %12 = vector.load %arg9[%c0_7, %c0_8] : memref<128x128xf32, #tpu.memory_space<vmem>>, vector<128x128xf32>
    %cst = arith.constant 0.000000e+00 : f32
    %13 = vector.broadcast %cst : f32 to vector<64x128xf32>
    %14 = vector.extract_strided_slice %9 {offsets = [0, 0], sizes = [64, 32], strides = [1, 1]} : vector<64x128xf32> to vector<64x32xf32>
    %15 = vector.extract_strided_slice %10 {offsets = [0, 0], sizes = [128, 32], strides = [1, 1]} : vector<128x128xf32> to vector<128x32xf32>
    %16 = vector.extract_strided_slice %11 {offsets = [0, 0], sizes = [128, 32], strides = [1, 1]} : vector<128x128xf32> to vector<128x32xf32>
    %cst_9 = arith.constant dense<0.000000e+00> : vector<64x128xf32>
    %17 = tpu.matmul %14, %15, %cst_9 {dimension_numbers = #tpu.dot_dimension_numbers<[1], [1], [0], [0], [0, 0, 1, 0], [], []>} : vector<64x32xf32>, vector<128x32xf32>, vector<64x128xf32> -> vector<64x128xf32>
    %cst_10 = arith.constant 0.176776692 : f32
    %18 = vector.broadcast %cst_10 : f32 to vector<64x128xf32>
    %19 = arith.mulf %17, %18 : vector<64x128xf32>
    %cst_11 = arith.constant dense<0xFF800000> : vector<64xf32>
    %20 = vector.multi_reduction <maximumf>, %19, %cst_11 [1] : vector<64x128xf32> to vector<64xf32>
    %21 = vector.shape_cast %20 : vector<64xf32> to vector<64x1xf32>
    %22 = vector.broadcast %21 : vector<64x1xf32> to vector<64x128xf32>
    %23 = arith.subf %19, %22 : vector<64x128xf32>
    %24 = math.exp %23 : vector<64x128xf32>
    %cst_12 = arith.constant dense<0.000000e+00> : vector<64xf32>
    %25 = vector.multi_reduction <add>, %24, %cst_12 [1] : vector<64x128xf32> to vector<64xf32>
    %26 = vector.shape_cast %25 : vector<64xf32> to vector<64x1xf32>
    %cst_13 = arith.constant dense<0.000000e+00> : vector<64x32xf32>
    %27 = tpu.matmul %24, %16, %cst_13 {dimension_numbers = #tpu.dot_dimension_numbers<[1], [0], [0], [1], [0, 0, 1, 1], [], []>} : vector<64x128xf32>, vector<128x32xf32>, vector<64x32xf32> -> vector<64x32xf32>
    %28 = tpu.reciprocal %26 {approx = true} : vector<64x1xf32> -> vector<64x1xf32>
    %29 = vector.broadcast %28 : vector<64x1xf32> to vector<64x32xf32>
    %30 = arith.mulf %27, %29 : vector<64x32xf32>
    %31 = vector.extract_strided_slice %12 {offsets = [0, 0], sizes = [32, 128], strides = [1, 1]} : vector<128x128xf32> to vector<32x128xf32>
    %cst_14 = arith.constant dense<0.000000e+00> : vector<64x128xf32>
    %32 = tpu.matmul %30, %31, %cst_14 {dimension_numbers = #tpu.dot_dimension_numbers<[1], [0], [0], [1], [0, 0, 1, 1], [], []>} : vector<64x32xf32>, vector<32x128xf32>, vector<64x128xf32> -> vector<64x128xf32>
    %33 = arith.addf %13, %32 : vector<64x128xf32>
    %34 = vector.extract_strided_slice %9 {offsets = [0, 32], sizes = [64, 32], strides = [1, 1]} : vector<64x128xf32> to vector<64x32xf32>
    %35 = vector.extract_strided_slice %10 {offsets = [0, 32], sizes = [128, 32], strides = [1, 1]} : vector<128x128xf32> to vector<128x32xf32>
    %36 = vector.extract_strided_slice %11 {offsets = [0, 32], sizes = [128, 32], strides = [1, 1]} : vector<128x128xf32> to vector<128x32xf32>
    %cst_15 = arith.constant dense<0.000000e+00> : vector<64x128xf32>
    %37 = tpu.matmul %34, %35, %cst_15 {dimension_numbers = #tpu.dot_dimension_numbers<[1], [1], [0], [0], [0, 0, 1, 0], [], []>} : vector<64x32xf32>, vector<128x32xf32>, vector<64x128xf32> -> vector<64x128xf32>
    %cst_16 = arith.constant 0.176776692 : f32
    %38 = vector.broadcast %cst_16 : f32 to vector<64x128xf32>
    %39 = arith.mulf %37, %38 : vector<64x128xf32>
    %cst_17 = arith.constant dense<0xFF800000> : vector<64xf32>
    %40 = vector.multi_reduction <maximumf>, %39, %cst_17 [1] : vector<64x128xf32> to vector<64xf32>
    %41 = vector.shape_cast %40 : vector<64xf32> to vector<64x1xf32>
    %42 = vector.broadcast %41 : vector<64x1xf32> to vector<64x128xf32>
    %43 = arith.subf %39, %42 : vector<64x128xf32>
    %44 = math.exp %43 : vector<64x128xf32>
    %cst_18 = arith.constant dense<0.000000e+00> : vector<64xf32>
    %45 = vector.multi_reduction <add>, %44, %cst_18 [1] : vector<64x128xf32> to vector<64xf32>
    %46 = vector.shape_cast %45 : vector<64xf32> to vector<64x1xf32>
    %cst_19 = arith.constant dense<0.000000e+00> : vector<64x32xf32>
    %47 = tpu.matmul %44, %36, %cst_19 {dimension_numbers = #tpu.dot_dimension_numbers<[1], [0], [0], [1], [0, 0, 1, 1], [], []>} : vector<64x128xf32>, vector<128x32xf32>, vector<64x32xf32> -> vector<64x32xf32>
    %48 = tpu.reciprocal %46 {approx = true} : vector<64x1xf32> -> vector<64x1xf32>
    %49 = vector.broadcast %48 : vector<64x1xf32> to vector<64x32xf32>
    %50 = arith.mulf %47, %49 : vector<64x32xf32>
    %51 = vector.extract_strided_slice %12 {offsets = [32, 0], sizes = [32, 128], strides = [1, 1]} : vector<128x128xf32> to vector<32x128xf32>
    %cst_20 = arith.constant dense<0.000000e+00> : vector<64x128xf32>
    %52 = tpu.matmul %50, %51, %cst_20 {dimension_numbers = #tpu.dot_dimension_numbers<[1], [0], [0], [1], [0, 0, 1, 1], [], []>} : vector<64x32xf32>, vector<32x128xf32>, vector<64x128xf32> -> vector<64x128xf32>
    %53 = arith.addf %33, %52 : vector<64x128xf32>
    %54 = vector.extract_strided_slice %9 {offsets = [0, 64], sizes = [64, 32], strides = [1, 1]} : vector<64x128xf32> to vector<64x32xf32>
    %55 = vector.extract_strided_slice %10 {offsets = [0, 64], sizes = [128, 32], strides = [1, 1]} : vector<128x128xf32> to vector<128x32xf32>
    %56 = vector.extract_strided_slice %11 {offsets = [0, 64], sizes = [128, 32], strides = [1, 1]} : vector<128x128xf32> to vector<128x32xf32>
    %cst_21 = arith.constant dense<0.000000e+00> : vector<64x128xf32>
    %57 = tpu.matmul %54, %55, %cst_21 {dimension_numbers = #tpu.dot_dimension_numbers<[1], [1], [0], [0], [0, 0, 1, 0], [], []>} : vector<64x32xf32>, vector<128x32xf32>, vector<64x128xf32> -> vector<64x128xf32>
    %cst_22 = arith.constant 0.176776692 : f32
    %58 = vector.broadcast %cst_22 : f32 to vector<64x128xf32>
    %59 = arith.mulf %57, %58 : vector<64x128xf32>
    %cst_23 = arith.constant dense<0xFF800000> : vector<64xf32>
    %60 = vector.multi_reduction <maximumf>, %59, %cst_23 [1] : vector<64x128xf32> to vector<64xf32>
    %61 = vector.shape_cast %60 : vector<64xf32> to vector<64x1xf32>
    %62 = vector.broadcast %61 : vector<64x1xf32> to vector<64x128xf32>
    %63 = arith.subf %59, %62 : vector<64x128xf32>
    %64 = math.exp %63 : vector<64x128xf32>
    %cst_24 = arith.constant dense<0.000000e+00> : vector<64xf32>
    %65 = vector.multi_reduction <add>, %64, %cst_24 [1] : vector<64x128xf32> to vector<64xf32>
    %66 = vector.shape_cast %65 : vector<64xf32> to vector<64x1xf32>
    %cst_25 = arith.constant dense<0.000000e+00> : vector<64x32xf32>
    %67 = tpu.matmul %64, %56, %cst_25 {dimension_numbers = #tpu.dot_dimension_numbers<[1], [0], [0], [1], [0, 0, 1, 1], [], []>} : vector<64x128xf32>, vector<128x32xf32>, vector<64x32xf32> -> vector<64x32xf32>
    %68 = tpu.reciprocal %66 {approx = true} : vector<64x1xf32> -> vector<64x1xf32>
    %69 = vector.broadcast %68 : vector<64x1xf32> to vector<64x32xf32>
    %70 = arith.mulf %67, %69 : vector<64x32xf32>
    %71 = vector.extract_strided_slice %12 {offsets = [64, 0], sizes = [32, 128], strides = [1, 1]} : vector<128x128xf32> to vector<32x128xf32>
    %cst_26 = arith.constant dense<0.000000e+00> : vector<64x128xf32>
    %72 = tpu.matmul %70, %71, %cst_26 {dimension_numbers = #tpu.dot_dimension_numbers<[1], [0], [0], [1], [0, 0, 1, 1], [], []>} : vector<64x32xf32>, vector<32x128xf32>, vector<64x128xf32> -> vector<64x128xf32>
    %73 = arith.addf %53, %72 : vector<64x128xf32>
    %74 = vector.extract_strided_slice %9 {offsets = [0, 96], sizes = [64, 32], strides = [1, 1]} : vector<64x128xf32> to vector<64x32xf32>
    %75 = vector.extract_strided_slice %10 {offsets = [0, 96], sizes = [128, 32], strides = [1, 1]} : vector<128x128xf32> to vector<128x32xf32>
    %76 = vector.extract_strided_slice %11 {offsets = [0, 96], sizes = [128, 32], strides = [1, 1]} : vector<128x128xf32> to vector<128x32xf32>
    %cst_27 = arith.constant dense<0.000000e+00> : vector<64x128xf32>
    %77 = tpu.matmul %74, %75, %cst_27 {dimension_numbers = #tpu.dot_dimension_numbers<[1], [1], [0], [0], [0, 0, 1, 0], [], []>} : vector<64x32xf32>, vector<128x32xf32>, vector<64x128xf32> -> vector<64x128xf32>
    %cst_28 = arith.constant 0.176776692 : f32
    %78 = vector.broadcast %cst_28 : f32 to vector<64x128xf32>
    %79 = arith.mulf %77, %78 : vector<64x128xf32>
    %cst_29 = arith.constant dense<0xFF800000> : vector<64xf32>
    %80 = vector.multi_reduction <maximumf>, %79, %cst_29 [1] : vector<64x128xf32> to vector<64xf32>
    %81 = vector.shape_cast %80 : vector<64xf32> to vector<64x1xf32>
    %82 = vector.broadcast %81 : vector<64x1xf32> to vector<64x128xf32>
    %83 = arith.subf %79, %82 : vector<64x128xf32>
    %84 = math.exp %83 : vector<64x128xf32>
    %cst_30 = arith.constant dense<0.000000e+00> : vector<64xf32>
    %85 = vector.multi_reduction <add>, %84, %cst_30 [1] : vector<64x128xf32> to vector<64xf32>
    %86 = vector.shape_cast %85 : vector<64xf32> to vector<64x1xf32>
    %cst_31 = arith.constant dense<0.000000e+00> : vector<64x32xf32>
    %87 = tpu.matmul %84, %76, %cst_31 {dimension_numbers = #tpu.dot_dimension_numbers<[1], [0], [0], [1], [0, 0, 1, 1], [], []>} : vector<64x128xf32>, vector<128x32xf32>, vector<64x32xf32> -> vector<64x32xf32>
    %88 = tpu.reciprocal %86 {approx = true} : vector<64x1xf32> -> vector<64x1xf32>
    %89 = vector.broadcast %88 : vector<64x1xf32> to vector<64x32xf32>
    %90 = arith.mulf %87, %89 : vector<64x32xf32>
    %91 = vector.extract_strided_slice %12 {offsets = [96, 0], sizes = [32, 128], strides = [1, 1]} : vector<128x128xf32> to vector<32x128xf32>
    %cst_32 = arith.constant dense<0.000000e+00> : vector<64x128xf32>
    %92 = tpu.matmul %90, %91, %cst_32 {dimension_numbers = #tpu.dot_dimension_numbers<[1], [0], [0], [1], [0, 0, 1, 1], [], []>} : vector<64x32xf32>, vector<32x128xf32>, vector<64x128xf32> -> vector<64x128xf32>
    %93 = arith.addf %73, %92 : vector<64x128xf32>
    %c0_33 = arith.constant 0 : index
    %c0_34 = arith.constant 0 : index
    %94 = vector.load %arg10[%c0_33, %c0_34] : memref<1x128xf32, #tpu.memory_space<vmem>>, vector<1x128xf32>
    %95 = vector.shape_cast %94 : vector<1x128xf32> to vector<128xf32>
    %96 = vector.shape_cast %95 : vector<128xf32> to vector<1x128xf32>
    %97 = vector.broadcast %96 : vector<1x128xf32> to vector<64x128xf32>
    %98 = arith.addf %93, %97 : vector<64x128xf32>
    %99 = arith.addf %7, %98 : vector<64x128xf32>
    %c0_35 = arith.constant 0 : index
    %c0_36 = arith.constant 0 : index
    %100 = vector.load %arg5[%c0_35, %c0_36] : memref<1x128xf32, #tpu.memory_space<vmem>>, vector<1x128xf32>
    %101 = vector.shape_cast %100 : vector<1x128xf32> to vector<128xf32>
    %c0_37 = arith.constant 0 : index
    %c0_38 = arith.constant 0 : index
    %102 = vector.load %arg6[%c0_37, %c0_38] : memref<1x128xf32, #tpu.memory_space<vmem>>, vector<1x128xf32>
    %103 = vector.shape_cast %102 : vector<1x128xf32> to vector<128xf32>
    %cst_39 = arith.constant dense<0.000000e+00> : vector<64xf32>
    %104 = vector.multi_reduction <add>, %99, %cst_39 [1] : vector<64x128xf32> to vector<64xf32>
    %105 = vector.shape_cast %104 : vector<64xf32> to vector<64x1xf32>
    %cst_40 = arith.constant 1.280000e+02 : f32
    %106 = vector.broadcast %cst_40 : f32 to vector<64x1xf32>
    %107 = arith.divf %105, %106 : vector<64x1xf32>
    %108 = vector.broadcast %107 : vector<64x1xf32> to vector<64x128xf32>
    %109 = arith.subf %99, %108 : vector<64x128xf32>
    %110 = arith.mulf %109, %109 : vector<64x128xf32>
    %cst_41 = arith.constant dense<0.000000e+00> : vector<64xf32>
    %111 = vector.multi_reduction <add>, %110, %cst_41 [1] : vector<64x128xf32> to vector<64xf32>
    %112 = vector.shape_cast %111 : vector<64xf32> to vector<64x1xf32>
    %cst_42 = arith.constant 1.280000e+02 : f32
    %113 = vector.broadcast %cst_42 : f32 to vector<64x1xf32>
    %114 = arith.divf %112, %113 : vector<64x1xf32>
    %115 = vector.broadcast %107 : vector<64x1xf32> to vector<64x128xf32>
    %116 = arith.subf %99, %115 : vector<64x128xf32>
    %cst_43 = arith.constant 9.99999974E-6 : f32
    %117 = vector.broadcast %cst_43 : f32 to vector<64x1xf32>
    %118 = arith.addf %114, %117 : vector<64x1xf32>
    %119 = math.rsqrt %118 : vector<64x1xf32>
    %120 = vector.broadcast %119 : vector<64x1xf32> to vector<64x128xf32>
    %121 = arith.mulf %116, %120 : vector<64x128xf32>
    %122 = vector.shape_cast %101 : vector<128xf32> to vector<1x128xf32>
    %123 = vector.broadcast %122 : vector<1x128xf32> to vector<64x128xf32>
    %124 = arith.mulf %121, %123 : vector<64x128xf32>
    %125 = vector.shape_cast %103 : vector<128xf32> to vector<1x128xf32>
    %126 = vector.broadcast %125 : vector<1x128xf32> to vector<64x128xf32>
    %127 = arith.addf %124, %126 : vector<64x128xf32>
    %c0_44 = arith.constant 0 : index
    %c0_45 = arith.constant 0 : index
    %128 = vector.load %arg11[%c0_44, %c0_45] : memref<128x512xf32, #tpu.memory_space<vmem>>, vector<128x512xf32>
    %cst_46 = arith.constant dense<0.000000e+00> : vector<64x512xf32>
    %129 = tpu.matmul %127, %128, %cst_46 {dimension_numbers = #tpu.dot_dimension_numbers<[1], [0], [0], [1], [0, 0, 1, 1], [], []>} : vector<64x128xf32>, vector<128x512xf32>, vector<64x512xf32> -> vector<64x512xf32>
    %c0_47 = arith.constant 0 : index
    %c0_48 = arith.constant 0 : index
    %130 = vector.load %arg12[%c0_47, %c0_48] : memref<1x512xf32, #tpu.memory_space<vmem>>, vector<1x512xf32>
    %131 = vector.shape_cast %130 : vector<1x512xf32> to vector<512xf32>
    %132 = vector.shape_cast %131 : vector<512xf32> to vector<1x512xf32>
    %133 = vector.broadcast %132 : vector<1x512xf32> to vector<64x512xf32>
    %134 = arith.addf %129, %133 : vector<64x512xf32>
    %cst_49 = arith.constant 5.000000e-01 : f32
    %135 = vector.broadcast %cst_49 : f32 to vector<64x512xf32>
    %136 = arith.mulf %135, %134 : vector<64x512xf32>
    %cst_50 = arith.constant 0.707106769 : f32
    %137 = vector.broadcast %cst_50 : f32 to vector<64x512xf32>
    %138 = arith.mulf %134, %137 : vector<64x512xf32>
    %139 = math.erf %138 : vector<64x512xf32>
    %cst_51 = arith.constant 1.000000e+00 : f32
    %140 = vector.broadcast %cst_51 : f32 to vector<64x512xf32>
    %141 = arith.addf %140, %139 : vector<64x512xf32>
    %142 = arith.mulf %136, %141 : vector<64x512xf32>
    %c0_52 = arith.constant 0 : index
    %c0_53 = arith.constant 0 : index
    %143 = vector.load %arg13[%c0_52, %c0_53] : memref<512x128xf32, #tpu.memory_space<vmem>>, vector<512x128xf32>
    %cst_54 = arith.constant dense<0.000000e+00> : vector<64x128xf32>
    %144 = tpu.matmul %142, %143, %cst_54 {dimension_numbers = #tpu.dot_dimension_numbers<[1], [0], [0], [1], [0, 0, 1, 1], [], []>} : vector<64x512xf32>, vector<512x128xf32>, vector<64x128xf32> -> vector<64x128xf32>
    %c0_55 = arith.constant 0 : index
    %c0_56 = arith.constant 0 : index
    %145 = vector.load %arg14[%c0_55, %c0_56] : memref<1x128xf32, #tpu.memory_space<vmem>>, vector<1x128xf32>
    %146 = vector.shape_cast %145 : vector<1x128xf32> to vector<128xf32>
    %147 = vector.shape_cast %146 : vector<128xf32> to vector<1x128xf32>
    %148 = vector.broadcast %147 : vector<1x128xf32> to vector<64x128xf32>
    %149 = arith.addf %144, %148 : vector<64x128xf32>
    %150 = arith.addf %99, %149 : vector<64x128xf32>
    %c0_57 = arith.constant 0 : index
    %c0_58 = arith.constant 0 : index
    %c0_59 = arith.constant 0 : index
    %151 = vector.load %arg15[%c0_57, %c0_58, %c0_59] : memref<1x64x128xf32, #tpu.memory_space<vmem>>, vector<1x64x128xf32>
    %152 = vector.shape_cast %151 : vector<1x64x128xf32> to vector<64x128xf32>
    %153 = vector.shape_cast %150 : vector<64x128xf32> to vector<1x64x128xf32>
    tpu.vector_store %arg15[%c0_57, %c0_58, %c0_59], %153 {strides = array<i32>} : memref<1x64x128xf32, #tpu.memory_space<vmem>>, vector<1x64x128xf32>,
    return
  }
  func.func @transform_0(%arg0: i32, %arg1: i32) -> (i32, i32, i32) {
    %c0_i32 = arith.constant 0 : i32
    %c0_i32_0 = arith.constant 0 : i32
    %c0_i32_1 = arith.constant 0 : i32
    return %arg0, %c0_i32, %c0_i32_0 : i32, i32, i32
  }
  func.func @transform_1(%arg0: i32, %arg1: i32) -> (i32, i32) {
    %c0_i32 = arith.constant 0 : i32
    %c0_i32_0 = arith.constant 0 : i32
    %c0_i32_1 = arith.constant 0 : i32
    return %c0_i32, %c0_i32_0 : i32, i32
  }
  func.func @transform_2(%arg0: i32, %arg1: i32) -> (i32, i32) {
    %c0_i32 = arith.constant 0 : i32
    %c0_i32_0 = arith.constant 0 : i32
    %c0_i32_1 = arith.constant 0 : i32
    return %c0_i32, %c0_i32_0 : i32, i32
  }
  func.func @transform_3(%arg0: i32, %arg1: i32) -> (i32, i32) {
    %c0_i32 = arith.constant 0 : i32
    %c0_i32_0 = arith.constant 0 : i32
    %c0_i32_1 = arith.constant 0 : i32
    return %c0_i32, %c0_i32_0 : i32, i32
  }
  func.func @transform_4(%arg0: i32, %arg1: i32) -> (i32, i32) {
    %c0_i32 = arith.constant 0 : i32
    %c0_i32_0 = arith.constant 0 : i32
    %c0_i32_1 = arith.constant 0 : i32
    return %c0_i32, %c0_i32_0 : i32, i32
  }
  func.func @transform_5(%arg0: i32, %arg1: i32) -> (i32, i32) {
    %c0_i32 = arith.constant 0 : i32
    %c0_i32_0 = arith.constant 0 : i32
    %c0_i32_1 = arith.constant 0 : i32
    return %c0_i32, %c0_i32_0 : i32, i32
  }
  func.func @transform_6(%arg0: i32, %arg1: i32) -> (i32, i32) {
    %c0_i32 = arith.constant 0 : i32
    %c0_i32_0 = arith.constant 0 : i32
    %c0_i32_1 = arith.constant 0 : i32
    return %c0_i32, %c0_i32_0 : i32, i32
  }
  func.func @transform_7(%arg0: i32, %arg1: i32) -> (i32, i32) {
    %c0_i32 = arith.constant 0 : i32
    %c0_i32_0 = arith.constant 0 : i32
    %c0_i32_1 = arith.constant 0 : i32
    return %c0_i32, %c0_i32_0 : i32, i32
  }
  func.func @transform_8(%arg0: i32, %arg1: i32) -> (i32, i32) {
    %c0_i32 = arith.constant 0 : i32
    %c0_i32_0 = arith.constant 0 : i32
    %c0_i32_1 = arith.constant 0 : i32
    return %c0_i32, %c0_i32_0 : i32, i32
  }
  func.func @transform_9(%arg0: i32, %arg1: i32) -> (i32, i32) {
    %c0_i32 = arith.constant 0 : i32
    %c0_i32_0 = arith.constant 0 : i32
    %c0_i32_1 = arith.constant 0 : i32
    return %c0_i32, %c0_i32_0 : i32, i32
  }
  func.func @transform_10(%arg0: i32, %arg1: i32) -> (i32, i32) {
    %c0_i32 = arith.constant 0 : i32
    %c0_i32_0 = arith.constant 0 : i32
    %c0_i32_1 = arith.constant 0 : i32
    return %c0_i32, %c0_i32_0 : i32, i32
  }
  func.func @transform_11(%arg0: i32, %arg1: i32) -> (i32, i32) {
    %c0_i32 = arith.constant 0 : i32
    %c0_i32_0 = arith.constant 0 : i32
    %c0_i32_1 = arith.constant 0 : i32
    return %c0_i32, %c0_i32_0 : i32, i32
  }
  func.func @transform_12(%arg0: i32, %arg1: i32) -> (i32, i32) {
    %c0_i32 = arith.constant 0 : i32
    %c0_i32_0 = arith.constant 0 : i32
    %c0_i32_1 = arith.constant 0 : i32
    return %c0_i32, %c0_i32_0 : i32, i32
  }
  func.func @transform_13(%arg0: i32, %arg1: i32) -> (i32, i32, i32) {
    %c0_i32 = arith.constant 0 : i32
    %c0_i32_0 = arith.constant 0 : i32
    return %arg0, %arg1, %c0_i32 : i32, i32, i32
  }
}

</mosaic_0001>

<llo_original>
// kernel: tpu_custom_call.1
$region0: #{tpu_custom_call.1}
  #allocation0 [shape = 'u32[]', space=smem, size = 0x4, offset = 0x4, fixed_abs, tag = 'smem constant byte address 0x4 - core index']
  #allocation1 [shape = 'u32[144,128]{1,0:T(1,128)}', space=vmem, size = 0x12000, scoped, tag = 'internal scratch']
  #allocation2 [shape = 'f32[128,128]{1,0:T(8,128)}', space=vmem, size = 0x10000, scoped, tag = 'scratch operand']
  #allocation3 [shape = 'f32[128,128]{1,0:T(8,128)}', space=vmem, size = 0x10000, scoped, tag = 'scratch operand']
  #allocation4 [shape = 'f32[128,128]{1,0:T(8,128)}', space=vmem, size = 0x10000, scoped, tag = 'scratch operand']
  %s0 = inlined_call_operand.hbm [shape: f32[2,128,128], index: 0, kind: input, shape index: {}]
  %s1 = inlined_call_operand.hbm [shape: f32[1,128], index: 1, kind: input, shape index: {}]
  %s2 = inlined_call_operand.hbm [shape: f32[1,128], index: 2, kind: input, shape index: {}]
  %s3 = inlined_call_operand.hbm [shape: f32[1,128], index: 3, kind: input, shape index: {}]
  %s4 = inlined_call_operand.hbm [shape: f32[1,128], index: 4, kind: input, shape index: {}]
  %s5 = inlined_call_operand.hbm [shape: f32[128,384], index: 5, kind: input, shape index: {}]
  %s6 = inlined_call_operand.hbm [shape: f32[1,384], index: 6, kind: input, shape index: {}]
  %s7 = inlined_call_operand.hbm [shape: f32[128,128], index: 7, kind: input, shape index: {}]
  %s8 = inlined_call_operand.hbm [shape: f32[1,128], index: 8, kind: input, shape index: {}]
  %s9 = inlined_call_operand.hbm [shape: f32[128,512], index: 9, kind: input, shape index: {}]
  %s10 = inlined_call_operand.hbm [shape: f32[1,512], index: 10, kind: input, shape index: {}]
  %s11 = inlined_call_operand.hbm [shape: f32[512,128], index: 11, kind: input, shape index: {}]
  %s12 = inlined_call_operand.hbm [shape: f32[1,128], index: 12, kind: input, shape index: {}]
  %s13 = inlined_call_operand.hbm [shape: f32[2,128,128], index: 13, kind: output, shape index: {}]
  %s14 = sld [smem:[#allocation0]]
  $region141: #{tpu_custom_call.1} parent=0
    _
  %s16 = ssub.s32 1, %s14
  %s17 = scalar_select 0, %s16, %s14
  $region1: #{tpu_custom_call.1} parent=0
    #allocation5 [shape = 'u8[131072]{0}', space=vmem, size = 0x20000, scoped, tag = 'input window, operand 0']
    #allocation6 [shape = 's32[2]{0}', space=sflag, size = 0x8, scoped, tag = 'scoped memory for tpu_custom_call.1']
    #allocation7 [shape = 's32[2]{0}', space=sflag, size = 0x8, scoped, tag = 'scoped memory for tpu_custom_call.1']
    #allocation8 [shape = 'u8[512]{0}', space=vmem, size = 0x400, scoped, tag = 'input window, operand 1, single buffered']
    #allocation9 [shape = 's32[1]{0}', space=sflag, size = 0x4, scoped, tag = 'scoped memory for tpu_custom_call.1']
    #allocation10 [shape = 'u8[512]{0}', space=vmem, size = 0x400, scoped, tag = 'input window, operand 2, single buffered']
    #allocation11 [shape = 'u8[512]{0}', space=vmem, size = 0x400, scoped, tag = 'input window, operand 3, single buffered']
    #allocation12 [shape = 's32[1]{0}', space=sflag, size = 0x4, scoped, tag = 'scoped memory for tpu_custom_call.1']
    #allocation13 [shape = 'u8[512]{0}', space=vmem, size = 0x400, scoped, tag = 'input window, operand 4, single buffered']
    #allocation14 [shape = 'u8[196608]{0}', space=vmem, size = 0x30000, scoped, tag = 'input window, operand 5, single buffered']
    #allocation15 [shape = 's32[1]{0}', space=sflag, size = 0x4, scoped, tag = 'scoped memory for tpu_custom_call.1']
    #allocation16 [shape = 'u8[1536]{0}', space=vmem, size = 0x800, scoped, tag = 'input window, operand 6, single buffered']
    #allocation17 [shape = 'u8[65536]{0}', space=vmem, size = 0x10000, scoped, tag = 'input window, operand 7, single buffered']
    #allocation18 [shape = 's32[1]{0}', space=sflag, size = 0x4, scoped, tag = 'scoped memory for tpu_custom_call.1']
    #allocation19 [shape = 'u8[512]{0}', space=vmem, size = 0x400, scoped, tag = 'input window, operand 8, single buffered']
    #allocation20 [shape = 'u8[262144]{0}', space=vmem, size = 0x40000, scoped, tag = 'input window, operand 9, single buffered']
    #allocation21 [shape = 's32[1]{0}', space=sflag, size = 0x4, scoped, tag = 'scoped memory for tpu_custom_call.1']
    #allocation22 [shape = 'u8[2048]{0}', space=vmem, size = 0x800, scoped, tag = 'input window, operand 10, single buffered']
    #allocation23 [shape = 'u8[262144]{0}', space=vmem, size = 0x40000, scoped, tag = 'input window, operand 11, single buffered']
    #allocation24 [shape = 's32[1]{0}', space=sflag, size = 0x4, scoped, tag = 'scoped memory for tpu_custom_call.1']
    #allocation25 [shape = 'u8[512]{0}', space=vmem, size = 0x400, scoped, tag = 'input window, operand 12, single buffered']
    #allocation26 [shape = 'u8[65536]{0}', space=vmem, size = 0x10000, scoped, tag = 'output window, operand 0']
    %18 = vsyncpa [#allocation6], 0
    %s19 = scalar_lea.sflag [#allocation6], 1
    %20 = vsyncpa %s19, 0
    %21 = vsyncpa [#allocation9], 0
    %22 = vsyncpa [#allocation12], 0
    %23 = vsyncpa [#allocation15], 0
    %24 = vsyncpa [#allocation18], 0
    %25 = vsyncpa [#allocation21], 0
    %26 = vsyncpa [#allocation24], 0
    %27 = vsyncpa [#allocation7], 0
    %s28 = scalar_lea.sflag [#allocation7], 1
    %29 = vsyncpa %s28, 0
    loop: start=0, step=1, limit=6
    $region2: #{tpu_custom_call.1} parent=1 // loop_pre_header
      _
    $region3: #{tpu_custom_call.1} parent=1 // loop_header
      %s31 = sphi 0, %s35
      %p32 = scmp.ge.s32.totalorder %s31, 6
      %s38 = sphi 0, %s50
      %s39 = sphi 0, %s46
      %s40 = sphi 0, %s38
      %s41 = sphi 0, %s39
      %s42 = sphi 0, %s40
      %s43 = sphi 0, %s41
      %s53 = sphi 0, %s55
      %s56 = sphi 0, %s53
      %s57 = sphi 0, %s56
      %s73 = sphi 0, %s57
      %s77 = sphi 0, %s77
      %s79 = sphi 0, %s77
      %s80 = sphi 0, %s79
      %s94 = sphi 0, %s80
      %s98 = sphi 0, %s98
      %s100 = sphi 0, %s98
      %s101 = sphi 0, %s100
      %s115 = sphi 0, %s101
      %s119 = sphi 0, %s119
      %s121 = sphi 0, %s119
      %s122 = sphi 0, %s121
      %s136 = sphi 0, %s122
      %s140 = sphi 0, %s140
      %s142 = sphi 0, %s140
      %s143 = sphi 0, %s142
      %s157 = sphi 0, %s143
      %s161 = sphi 0, %s161
      %s163 = sphi 0, %s161
      %s164 = sphi 0, %s163
      %s178 = sphi 0, %s164
      %s182 = sphi 0, %s182
      %s184 = sphi 0, %s182
      %s185 = sphi 0, %s184
      %s199 = sphi 0, %s185
      %s203 = sphi 0, %s203
      %s205 = sphi 0, %s203
      %s206 = sphi 0, %s205
      %s220 = sphi 0, %s206
      %s224 = sphi 0, %s224
      %s226 = sphi 0, %s224
      %s227 = sphi 0, %s226
      %s241 = sphi 0, %s227
      %s245 = sphi 0, %s245
      %s247 = sphi 0, %s245
      %s248 = sphi 0, %s247
      %s262 = sphi 0, %s248
      %s266 = sphi 0, %s266
      %s268 = sphi 0, %s266
      %s269 = sphi 0, %s268
      %s283 = sphi 0, %s269
      %s287 = sphi 0, %s287
      %s289 = sphi 0, %s287
      %s290 = sphi 0, %s289
      %s304 = sphi 0, %s290
      %s308 = sphi 0, %s308
      %s310 = sphi 0, %s308
      %s311 = sphi 0, %s310
      %s325 = sphi 0, %s311
      %s333 = sphi 0, %s335
      %s336 = sphi 0, %s333
      %s337 = sphi 0, %s336
      %s353 = sphi 0, %s337
    $region4: #{tpu_custom_call.1} parent=1 // loop_header_branch
      %34 = sbr.rel (%p32) target = $region8
    $region5: #{tpu_custom_call.1} parent=1 // loop_body
      %s36 = ssub.s32 %s31, 1
      %s37 = ssub.s32 %s31, 2
      %s44 = sadd.s32 1, %s39
      %p45 = scmp.ge.s32.totalorder %s44, 2
      %s46 = scalar_select %p45, 0, %s44
      %s47 = sadd.s32 1, %s38
      %s48 = scalar_select %p45, %s47, %s38
      %p49 = scmp.ge.s32.totalorder %s48, 2
      %s50 = scalar_select %p49, 0, %s48
      %s51 = ssub.s32 %s38, %s50
      %p52 = scmp.eq.s32.totalorder %s51, 0
      %s54 = sadd.s32 %s53, 1
      %s55 = scalar_select %p52, %s53, %s54
      %p58 = pneg %p52
      %p59 = scmp.eq.s32.totalorder %s31, 3
      %p60 = por %p58, %p59
      %p61 = scmp.ne.s32.totalorder %s53, %s56
      %p62 = scmp.eq.s32.totalorder %s31, 0
      %p63 = por %p61, %p62
      %p64 = scmp.ne.s32.totalorder %s53, %s56
      %p65 = scmp.eq.s32.totalorder %s36, 3
      %p66 = por %p64, %p65
      %p67 = scmp.ne.s32.totalorder %s56, %s57
      %p68 = scmp.eq.s32.totalorder %s36, 0
      %p69 = por %p67, %p68
      %p70 = scmp.ne.s32.totalorder %s56, %s57
      %p71 = scmp.eq.s32.totalorder %s37, 3
      %p72 = por %p70, %p71
      %p74 = scmp.ne.s32.totalorder %s57, %s73
      %p75 = scmp.eq.s32.totalorder %s37, 0
      %p76 = por %p74, %p75
      %s78 = sadd.s32 %s77, 1
      %p81 = scmp.eq.s32.totalorder %s31, 3
      %p82 = scmp.ne.s32.totalorder %s77, %s79
      %p83 = scmp.eq.s32.totalorder %s31, 0
      %p84 = por %p82, %p83
      %p85 = scmp.ne.s32.totalorder %s77, %s79
      %p86 = scmp.eq.s32.totalorder %s36, 3
      %p87 = por %p85, %p86
      %p88 = scmp.ne.s32.totalorder %s79, %s80
      %p89 = scmp.eq.s32.totalorder %s36, 0
      %p90 = por %p88, %p89
      %p91 = scmp.ne.s32.totalorder %s79, %s80
      %p92 = scmp.eq.s32.totalorder %s37, 3
      %p93 = por %p91, %p92
      %p95 = scmp.ne.s32.totalorder %s80, %s94
      %p96 = scmp.eq.s32.totalorder %s37, 0
      %p97 = por %p95, %p96
      %s99 = sadd.s32 %s98, 1
      %p102 = scmp.eq.s32.totalorder %s31, 3
      %p103 = scmp.ne.s32.totalorder %s98, %s100
      %p104 = scmp.eq.s32.totalorder %s31, 0
      %p105 = por %p103, %p104
      %p106 = scmp.ne.s32.totalorder %s98, %s100
      %p107 = scmp.eq.s32.totalorder %s36, 3
      %p108 = por %p106, %p107
      %p109 = scmp.ne.s32.totalorder %s100, %s101
      %p110 = scmp.eq.s32.totalorder %s36, 0
      %p111 = por %p109, %p110
      %p112 = scmp.ne.s32.totalorder %s100, %s101
      %p113 = scmp.eq.s32.totalorder %s37, 3
      %p114 = por %p112, %p113
      %p116 = scmp.ne.s32.totalorder %s101, %s115
      %p117 = scmp.eq.s32.totalorder %s37, 0
      %p118 = por %p116, %p117
      %s120 = sadd.s32 %s119, 1
      %p123 = scmp.eq.s32.totalorder %s31, 3
      %p124 = scmp.ne.s32.totalorder %s119, %s121
      %p125 = scmp.eq.s32.totalorder %s31, 0
      %p126 = por %p124, %p125
      %p127 = scmp.ne.s32.totalorder %s119, %s121
      %p128 = scmp.eq.s32.totalorder %s36, 3
      %p129 = por %p127, %p128
      %p130 = scmp.ne.s32.totalorder %s121, %s122
      %p131 = scmp.eq.s32.totalorder %s36, 0
      %p132 = por %p130, %p131
      %p133 = scmp.ne.s32.totalorder %s121, %s122
      %p134 = scmp.eq.s32.totalorder %s37, 3
      %p135 = por %p133, %p134
      %p137 = scmp.ne.s32.totalorder %s122, %s136
      %p138 = scmp.eq.s32.totalorder %s37, 0
      %p139 = por %p137, %p138
      %s141 = sadd.s32 %s140, 1
      %p144 = scmp.eq.s32.totalorder %s31, 3
      %p145 = scmp.ne.s32.totalorder %s140, %s142
      %p146 = scmp.eq.s32.totalorder %s31, 0
      %p147 = por %p145, %p146
      %p148 = scmp.ne.s32.totalorder %s140, %s142
      %p149 = scmp.eq.s32.totalorder %s36, 3
      %p150 = por %p148, %p149
      %p151 = scmp.ne.s32.totalorder %s142, %s143
      %p152 = scmp.eq.s32.totalorder %s36, 0
      %p153 = por %p151, %p152
      %p154 = scmp.ne.s32.totalorder %s142, %s143
      %p155 = scmp.eq.s32.totalorder %s37, 3
      %p156 = por %p154, %p155
      %p158 = scmp.ne.s32.totalorder %s143, %s157
      %p159 = scmp.eq.s32.totalorder %s37, 0
      %p160 = por %p158, %p159
      %s162 = sadd.s32 %s161, 1
      %p165 = scmp.eq.s32.totalorder %s31, 3
      %p166 = scmp.ne.s32.totalorder %s161, %s163
      %p167 = scmp.eq.s32.totalorder %s31, 0
      %p168 = por %p166, %p167
      %p169 = scmp.ne.s32.totalorder %s161, %s163
      %p170 = scmp.eq.s32.totalorder %s36, 3
      %p171 = por %p169, %p170
      %p172 = scmp.ne.s32.totalorder %s163, %s164
      %p173 = scmp.eq.s32.totalorder %s36, 0
      %p174 = por %p172, %p173
      %p175 = scmp.ne.s32.totalorder %s163, %s164
      %p176 = scmp.eq.s32.totalorder %s37, 3
      %p177 = por %p175, %p176
      %p179 = scmp.ne.s32.totalorder %s164, %s178
      %p180 = scmp.eq.s32.totalorder %s37, 0
      %p181 = por %p179, %p180
      %s183 = sadd.s32 %s182, 1
      %p186 = scmp.eq.s32.totalorder %s31, 3
      %p187 = scmp.ne.s32.totalorder %s182, %s184
      %p188 = scmp.eq.s32.totalorder %s31, 0
      %p189 = por %p187, %p188
      %p190 = scmp.ne.s32.totalorder %s182, %s184
      %p191 = scmp.eq.s32.totalorder %s36, 3
      %p192 = por %p190, %p191
      %p193 = scmp.ne.s32.totalorder %s184, %s185
      %p194 = scmp.eq.s32.totalorder %s36, 0
      %p195 = por %p193, %p194
      %p196 = scmp.ne.s32.totalorder %s184, %s185
      %p197 = scmp.eq.s32.totalorder %s37, 3
      %p198 = por %p196, %p197
      %p200 = scmp.ne.s32.totalorder %s185, %s199
      %p201 = scmp.eq.s32.totalorder %s37, 0
      %p202 = por %p200, %p201
      %s204 = sadd.s32 %s203, 1
      %p207 = scmp.eq.s32.totalorder %s31, 3
      %p208 = scmp.ne.s32.totalorder %s203, %s205
      %p209 = scmp.eq.s32.totalorder %s31, 0
      %p210 = por %p208, %p209
      %p211 = scmp.ne.s32.totalorder %s203, %s205
      %p212 = scmp.eq.s32.totalorder %s36, 3
      %p213 = por %p211, %p212
      %p214 = scmp.ne.s32.totalorder %s205, %s206
      %p215 = scmp.eq.s32.totalorder %s36, 0
      %p216 = por %p214, %p215
      %p217 = scmp.ne.s32.totalorder %s205, %s206
      %p218 = scmp.eq.s32.totalorder %s37, 3
      %p219 = por %p217, %p218
      %p221 = scmp.ne.s32.totalorder %s206, %s220
      %p222 = scmp.eq.s32.totalorder %s37, 0
      %p223 = por %p221, %p222
      %s225 = sadd.s32 %s224, 1
      %p228 = scmp.eq.s32.totalorder %s31, 3
      %p229 = scmp.ne.s32.totalorder %s224, %s226
      %p230 = scmp.eq.s32.totalorder %s31, 0
      %p231 = por %p229, %p230
      %p232 = scmp.ne.s32.totalorder %s224, %s226
      %p233 = scmp.eq.s32.totalorder %s36, 3
      %p234 = por %p232, %p233
      %p235 = scmp.ne.s32.totalorder %s226, %s227
      %p236 = scmp.eq.s32.totalorder %s36, 0
      %p237 = por %p235, %p236
      %p238 = scmp.ne.s32.totalorder %s226, %s227
      %p239 = scmp.eq.s32.totalorder %s37, 3
      %p240 = por %p238, %p239
      %p242 = scmp.ne.s32.totalorder %s227, %s241
      %p243 = scmp.eq.s32.totalorder %s37, 0
      %p244 = por %p242, %p243
      %s246 = sadd.s32 %s245, 1
      %p249 = scmp.eq.s32.totalorder %s31, 3
      %p250 = scmp.ne.s32.totalorder %s245, %s247
      %p251 = scmp.eq.s32.totalorder %s31, 0
      %p252 = por %p250, %p251
      %p253 = scmp.ne.s32.totalorder %s245, %s247
      %p254 = scmp.eq.s32.totalorder %s36, 3
      %p255 = por %p253, %p254
      %p256 = scmp.ne.s32.totalorder %s247, %s248
      %p257 = scmp.eq.s32.totalorder %s36, 0
      %p258 = por %p256, %p257
      %p259 = scmp.ne.s32.totalorder %s247, %s248
      %p260 = scmp.eq.s32.totalorder %s37, 3
      %p261 = por %p259, %p260
      %p263 = scmp.ne.s32.totalorder %s248, %s262
      %p264 = scmp.eq.s32.totalorder %s37, 0
      %p265 = por %p263, %p264
      %s267 = sadd.s32 %s266, 1
      %p270 = scmp.eq.s32.totalorder %s31, 3
      %p271 = scmp.ne.s32.totalorder %s266, %s268
      %p272 = scmp.eq.s32.totalorder %s31, 0
      %p273 = por %p271, %p272
      %p274 = scmp.ne.s32.totalorder %s266, %s268
      %p275 = scmp.eq.s32.totalorder %s36, 3
      %p276 = por %p274, %p275
      %p277 = scmp.ne.s32.totalorder %s268, %s269
      %p278 = scmp.eq.s32.totalorder %s36, 0
      %p279 = por %p277, %p278
      %p280 = scmp.ne.s32.totalorder %s268, %s269
      %p281 = scmp.eq.s32.totalorder %s37, 3
      %p282 = por %p280, %p281
      %p284 = scmp.ne.s32.totalorder %s269, %s283
      %p285 = scmp.eq.s32.totalorder %s37, 0
      %p286 = por %p284, %p285
      %s288 = sadd.s32 %s287, 1
      %p291 = scmp.eq.s32.totalorder %s31, 3
      %p292 = scmp.ne.s32.totalorder %s287, %s289
      %p293 = scmp.eq.s32.totalorder %s31, 0
      %p294 = por %p292, %p293
      %p295 = scmp.ne.s32.totalorder %s287, %s289
      %p296 = scmp.eq.s32.totalorder %s36, 3
      %p297 = por %p295, %p296
      %p298 = scmp.ne.s32.totalorder %s289, %s290
      %p299 = scmp.eq.s32.totalorder %s36, 0
      %p300 = por %p298, %p299
      %p301 = scmp.ne.s32.totalorder %s289, %s290
      %p302 = scmp.eq.s32.totalorder %s37, 3
      %p303 = por %p301, %p302
      %p305 = scmp.ne.s32.totalorder %s290, %s304
      %p306 = scmp.eq.s32.totalorder %s37, 0
      %p307 = por %p305, %p306
      %s309 = sadd.s32 %s308, 1
      %p312 = scmp.eq.s32.totalorder %s31, 3
      %p313 = scmp.ne.s32.totalorder %s308, %s310
      %p314 = scmp.eq.s32.totalorder %s31, 0
      %p315 = por %p313, %p314
      %p316 = scmp.ne.s32.totalorder %s308, %s310
      %p317 = scmp.eq.s32.totalorder %s36, 3
      %p318 = por %p316, %p317
      %p319 = scmp.ne.s32.totalorder %s310, %s311
      %p320 = scmp.eq.s32.totalorder %s36, 0
      %p321 = por %p319, %p320
      %p322 = scmp.ne.s32.totalorder %s310, %s311
      %p323 = scmp.eq.s32.totalorder %s37, 3
      %p324 = por %p322, %p323
      %p326 = scmp.ne.s32.totalorder %s311, %s325
      %p327 = scmp.eq.s32.totalorder %s37, 0
      %p328 = por %p326, %p327
      %s329 = ssub.s32 %s38, %s50
      %s330 = ssub.s32 %s39, %s46
      %s331 = sor.u32 %s329, %s330
      %p332 = scmp.eq.s32.totalorder %s331, 0
      %s334 = sadd.s32 %s333, 1
      %s335 = scalar_select %p332, %s333, %s334
      %p338 = pneg %p332
      %p339 = scmp.eq.s32.totalorder %s31, 3
      %p340 = por %p338, %p339
      %p341 = scmp.ne.s32.totalorder %s333, %s336
      %p342 = scmp.eq.s32.totalorder %s31, 0
      %p343 = por %p341, %p342
      %p344 = scmp.ne.s32.totalorder %s333, %s336
      %p345 = scmp.eq.s32.totalorder %s36, 3
      %p346 = por %p344, %p345
      %p347 = scmp.ne.s32.totalorder %s336, %s337
      %p348 = scmp.eq.s32.totalorder %s36, 0
      %p349 = por %p347, %p348
      %p350 = scmp.ne.s32.totalorder %s336, %s337
      %p351 = scmp.eq.s32.totalorder %s37, 3
      %p352 = por %p350, %p351
      %p354 = scmp.ne.s32.totalorder %s337, %s353
      %p355 = scmp.eq.s32.totalorder %s37, 0
      %p356 = por %p354, %p355
      %p357 = scmp.le.s32.totalorder 1, %s31
      %p358 = scmp.lt.s32.totalorder %s31, 5
      %p359 = pnand %p357, %p358
      %p360 = pneg %p359
      // Predicated region
      $region9: #{tpu_custom_call.1} parent=5 // pred_check
        _
      $region10: #{tpu_custom_call.1} parent=5 // pred_check_branch
        %362 = sbr.rel (%p359) target = $region12
      $region11: #{tpu_custom_call.1} parent=5 // pred_region
        %s363 = ssub.s32 %s31, 1
        // Predicated region
        $region13: #{tpu_custom_call.1} parent=11 // pred_check
          %p364 = pneg %p90
        $region14: #{tpu_custom_call.1} parent=11 // pred_check_branch
          %366 = sbr.rel (%p364) target = $region16
        $region15: #{tpu_custom_call.1} parent=11 // pred_region
          %s368 = ssub.s32 16, 16
          %369 = vsyncadd [#allocation9], %s368
          %s371 = sshll.u32 [#allocation8], 4
          %s372 = int_to_ptr.vmem [resolvable:$true] %s371
          %374 = dma.hbm_to_vmem [thread:$0]  %s1, 16, %s372, [#allocation9]
        $region16: #{tpu_custom_call.1} parent=11 // pred_fallthru
          _
        // Predicated region
        $region17: #{tpu_custom_call.1} parent=11 // pred_check
          %p375 = pneg %p111
        $region18: #{tpu_custom_call.1} parent=11 // pred_check_branch
          %377 = sbr.rel (%p375) target = $region20
        $region19: #{tpu_custom_call.1} parent=11 // pred_region
          %s379 = ssub.s32 16, 16
          %380 = vsyncadd [#allocation9], %s379
          %s382 = sshll.u32 [#allocation10], 4
          %s383 = int_to_ptr.vmem [resolvable:$true] %s382
          %385 = dma.hbm_to_vmem [thread:$0]  %s2, 16, %s383, [#allocation9]
        $region20: #{tpu_custom_call.1} parent=11 // pred_fallthru
          _
        // Predicated region
        $region21: #{tpu_custom_call.1} parent=11 // pred_check
          %p386 = pneg %p132
        $region22: #{tpu_custom_call.1} parent=11 // pred_check_branch
          %388 = sbr.rel (%p386) target = $region24
        $region23: #{tpu_custom_call.1} parent=11 // pred_region
          %s390 = ssub.s32 16, 16
          %391 = vsyncadd [#allocation12], %s390
          %s393 = sshll.u32 [#allocation11], 4
          %s394 = int_to_ptr.vmem [resolvable:$true] %s393
          %396 = dma.hbm_to_vmem [thread:$0]  %s3, 16, %s394, [#allocation12]
        $region24: #{tpu_custom_call.1} parent=11 // pred_fallthru
          _
        // Predicated region
        $region25: #{tpu_custom_call.1} parent=11 // pred_check
          %p397 = pneg %p153
        $region26: #{tpu_custom_call.1} parent=11 // pred_check_branch
          %399 = sbr.rel (%p397) target = $region28
        $region27: #{tpu_custom_call.1} parent=11 // pred_region
          %s401 = ssub.s32 16, 16
          %402 = vsyncadd [#allocation12], %s401
          %s404 = sshll.u32 [#allocation13], 4
          %s405 = int_to_ptr.vmem [resolvable:$true] %s404
          %407 = dma.hbm_to_vmem [thread:$0]  %s4, 16, %s405, [#allocation12]
        $region28: #{tpu_custom_call.1} parent=11 // pred_fallthru
          _
        // Predicated region
        $region29: #{tpu_custom_call.1} parent=11 // pred_check
          %p408 = pneg %p174
        $region30: #{tpu_custom_call.1} parent=11 // pred_check_branch
          %410 = sbr.rel (%p408) target = $region32
        $region31: #{tpu_custom_call.1} parent=11 // pred_region
          %s412 = ssub.s32 6144, 6144
          %413 = vsyncadd [#allocation15], %s412
          %s414 = sshll.u32 [#allocation14], 4
          %s415 = int_to_ptr.vmem [resolvable:$true] %s414
          %420 = dma.hbm_to_vmem [thread:$0]  %s5, 6144, %s415, [#allocation15], 384, 384, 24
        $region32: #{tpu_custom_call.1} parent=11 // pred_fallthru
          _
        // Predicated region
        $region33: #{tpu_custom_call.1} parent=11 // pred_check
          %p421 = pneg %p195
        $region34: #{tpu_custom_call.1} parent=11 // pred_check_branch
          %423 = sbr.rel (%p421) target = $region36
        $region35: #{tpu_custom_call.1} parent=11 // pred_region
          %s425 = ssub.s32 48, 48
          %426 = vsyncadd [#allocation15], %s425
          %s428 = sshll.u32 [#allocation16], 4
          %s429 = int_to_ptr.vmem [resolvable:$true] %s428
          %431 = dma.hbm_to_vmem [thread:$0]  %s6, 48, %s429, [#allocation15]
        $region36: #{tpu_custom_call.1} parent=11 // pred_fallthru
          _
        // Predicated region
        $region37: #{tpu_custom_call.1} parent=11 // pred_check
          %p432 = pneg %p216
        $region38: #{tpu_custom_call.1} parent=11 // pred_check_branch
          %434 = sbr.rel (%p432) target = $region40
        $region39: #{tpu_custom_call.1} parent=11 // pred_region
          %s436 = ssub.s32 2048, 2048
          %437 = vsyncadd [#allocation18], %s436
          %s438 = sshll.u32 [#allocation17], 4
          %s439 = int_to_ptr.vmem [resolvable:$true] %s438
          %444 = dma.hbm_to_vmem [thread:$0]  %s7, 2048, %s439, [#allocation18], 128, 128, 8
        $region40: #{tpu_custom_call.1} parent=11 // pred_fallthru
          _
        // Predicated region
        $region41: #{tpu_custom_call.1} parent=11 // pred_check
          %p445 = pneg %p237
        $region42: #{tpu_custom_call.1} parent=11 // pred_check_branch
          %447 = sbr.rel (%p445) target = $region44
        $region43: #{tpu_custom_call.1} parent=11 // pred_region
          %s449 = ssub.s32 16, 16
          %450 = vsyncadd [#allocation18], %s449
          %s452 = sshll.u32 [#allocation19], 4
          %s453 = int_to_ptr.vmem [resolvable:$true] %s452
          %455 = dma.hbm_to_vmem [thread:$0]  %s8, 16, %s453, [#allocation18]
        $region44: #{tpu_custom_call.1} parent=11 // pred_fallthru
          _
        // Predicated region
        $region45: #{tpu_custom_call.1} parent=11 // pred_check
          %p456 = pneg %p258
        $region46: #{tpu_custom_call.1} parent=11 // pred_check_branch
          %458 = sbr.rel (%p456) target = $region48
        $region47: #{tpu_custom_call.1} parent=11 // pred_region
          %s460 = ssub.s32 8192, 8192
          %461 = vsyncadd [#allocation21], %s460
          %s462 = sshll.u32 [#allocation20], 4
          %s463 = int_to_ptr.vmem [resolvable:$true] %s462
          %468 = dma.hbm_to_vmem [thread:$0]  %s9, 8192, %s463, [#allocation21], 512, 512, 32
        $region48: #{tpu_custom_call.1} parent=11 // pred_fallthru
          _
        // Predicated region
        $region49: #{tpu_custom_call.1} parent=11 // pred_check
          %p469 = pneg %p279
        $region50: #{tpu_custom_call.1} parent=11 // pred_check_branch
          %471 = sbr.rel (%p469) target = $region52
        $region51: #{tpu_custom_call.1} parent=11 // pred_region
          %s473 = ssub.s32 64, 64
          %474 = vsyncadd [#allocation21], %s473
          %s476 = sshll.u32 [#allocation22], 4
          %s477 = int_to_ptr.vmem [resolvable:$true] %s476
          %479 = dma.hbm_to_vmem [thread:$0]  %s10, 64, %s477, [#allocation21]
        $region52: #{tpu_custom_call.1} parent=11 // pred_fallthru
          _
        // Predicated region
        $region53: #{tpu_custom_call.1} parent=11 // pred_check
          %p480 = pneg %p300
        $region54: #{tpu_custom_call.1} parent=11 // pred_check_branch
          %482 = sbr.rel (%p480) target = $region56
        $region55: #{tpu_custom_call.1} parent=11 // pred_region
          %s484 = ssub.s32 8192, 8192
          %485 = vsyncadd [#allocation24], %s484
          %s486 = sshll.u32 [#allocation23], 4
          %s487 = int_to_ptr.vmem [resolvable:$true] %s486
          %492 = dma.hbm_to_vmem [thread:$0]  %s11, 8192, %s487, [#allocation24], 128, 128, 8
        $region56: #{tpu_custom_call.1} parent=11 // pred_fallthru
          _
        // Predicated region
        $region57: #{tpu_custom_call.1} parent=11 // pred_check
          %p493 = pneg %p321
        $region58: #{tpu_custom_call.1} parent=11 // pred_check_branch
          %495 = sbr.rel (%p493) target = $region60
        $region59: #{tpu_custom_call.1} parent=11 // pred_region
          %s497 = ssub.s32 16, 16
          %498 = vsyncadd [#allocation24], %s497
          %s500 = sshll.u32 [#allocation25], 4
          %s501 = int_to_ptr.vmem [resolvable:$true] %s500
          %503 = dma.hbm_to_vmem [thread:$0]  %s12, 16, %s501, [#allocation24]
        $region60: #{tpu_custom_call.1} parent=11 // pred_fallthru
          _
      $region12: #{tpu_custom_call.1} parent=5 // pred_fallthru
        _
      %p504 = scmp.lt.s32.totalorder %s31, 4
      // Predicated region
      $region61: #{tpu_custom_call.1} parent=5 // pred_check
        %p505 = pneg %p504
      $region62: #{tpu_custom_call.1} parent=5 // pred_check_branch
        %507 = sbr.rel (%p505) target = $region64
      $region63: #{tpu_custom_call.1} parent=5 // pred_region
        // Predicated region
        $region65: #{tpu_custom_call.1} parent=63 // pred_check
          %p508 = pneg %p63
        $region66: #{tpu_custom_call.1} parent=63 // pred_check_branch
          %510 = sbr.rel (%p508) target = $region68
        $region67: #{tpu_custom_call.1} parent=63 // pred_region
          %s511 = sand.u32 %s53, 1
          %s512 = scalar_lea.sflag [#allocation6], %s511
          %s513 = sand.u32 %s53, 1
          %s514 = smul.addr %s513, 128
          %s515 = scalar_lea.vmem [#allocation5], %s514
          %s517 = ssub.s32 2048, 2048
          %518 = vsyncadd %s512, %s517
          %s519 = smul.addr %s38, 16
          %s520 = smul.addr %s519, 128
          %s521 = scalar_lea.hbm %s0, %s520
          %s522 = sshll.u32 %s515, 4
          %s523 = int_to_ptr.vmem [resolvable:$true] %s522
          %528 = dma.hbm_to_vmem [thread:$0]  %s521, 2048, %s523, %s512, 128, 128, 8
        $region68: #{tpu_custom_call.1} parent=63 // pred_fallthru
          _
      $region64: #{tpu_custom_call.1} parent=5 // pred_fallthru
        _
      %p529 = scmp.le.s32.totalorder 1, %s31
      %p530 = scmp.lt.s32.totalorder %s31, 5
      %p531 = pnand %p529, %p530
      %p532 = pneg %p531
      // Predicated region
      $region69: #{tpu_custom_call.1} parent=5 // pred_check
        _
      $region70: #{tpu_custom_call.1} parent=5 // pred_check_branch
        %534 = sbr.rel (%p531) target = $region72
      $region71: #{tpu_custom_call.1} parent=5 // pred_region
        %s535 = ssub.s32 %s31, 1
        %s536 = sand.u32 %s56, 1
        %s537 = scalar_lea.sflag [#allocation6], %s536
        %s538 = sand.u32 %s56, 1
        %s539 = smul.addr %s538, 128
        %s540 = scalar_lea.vmem [#allocation5], %s539
        // Predicated region
        $region73: #{tpu_custom_call.1} parent=71 // pred_check
          %p541 = pneg %p69
        $region74: #{tpu_custom_call.1} parent=71 // pred_check_branch
          %543 = sbr.rel (%p541) target = $region76
        $region75: #{tpu_custom_call.1} parent=71 // pred_region
          %544 = dma.done %s537, 2048
        $region76: #{tpu_custom_call.1} parent=71 // pred_fallthru
          _
        // Predicated region
        $region77: #{tpu_custom_call.1} parent=71 // pred_check
          %p545 = pneg %p90
        $region78: #{tpu_custom_call.1} parent=71 // pred_check_branch
          %547 = sbr.rel (%p545) target = $region80
        $region79: #{tpu_custom_call.1} parent=71 // pred_region
          %548 = dma.done [#allocation9], 16
        $region80: #{tpu_custom_call.1} parent=71 // pred_fallthru
          _
        // Predicated region
        $region81: #{tpu_custom_call.1} parent=71 // pred_check
          %p549 = pneg %p111
        $region82: #{tpu_custom_call.1} parent=71 // pred_check_branch
          %551 = sbr.rel (%p549) target = $region84
        $region83: #{tpu_custom_call.1} parent=71 // pred_region
          %552 = dma.done [#allocation9], 16
        $region84: #{tpu_custom_call.1} parent=71 // pred_fallthru
          _
        // Predicated region
        $region85: #{tpu_custom_call.1} parent=71 // pred_check
          %p553 = pneg %p132
        $region86: #{tpu_custom_call.1} parent=71 // pred_check_branch
          %555 = sbr.rel (%p553) target = $region88
        $region87: #{tpu_custom_call.1} parent=71 // pred_region
          %556 = dma.done [#allocation12], 16
        $region88: #{tpu_custom_call.1} parent=71 // pred_fallthru
          _
        // Predicated region
        $region89: #{tpu_custom_call.1} parent=71 // pred_check
          %p557 = pneg %p153
        $region90: #{tpu_custom_call.1} parent=71 // pred_check_branch
          %559 = sbr.rel (%p557) target = $region92
        $region91: #{tpu_custom_call.1} parent=71 // pred_region
          %560 = dma.done [#allocation12], 16
        $region92: #{tpu_custom_call.1} parent=71 // pred_fallthru
          _
        // Predicated region
        $region93: #{tpu_custom_call.1} parent=71 // pred_check
          %p561 = pneg %p174
        $region94: #{tpu_custom_call.1} parent=71 // pred_check_branch
          %563 = sbr.rel (%p561) target = $region96
        $region95: #{tpu_custom_call.1} parent=71 // pred_region
          %564 = dma.done [#allocation15], 6144
        $region96: #{tpu_custom_call.1} parent=71 // pred_fallthru
          _
        // Predicated region
        $region97: #{tpu_custom_call.1} parent=71 // pred_check
          %p565 = pneg %p195
        $region98: #{tpu_custom_call.1} parent=71 // pred_check_branch
          %567 = sbr.rel (%p565) target = $region100
        $region99: #{tpu_custom_call.1} parent=71 // pred_region
          %568 = dma.done [#allocation15], 48
        $region100: #{tpu_custom_call.1} parent=71 // pred_fallthru
          _
        // Predicated region
        $region101: #{tpu_custom_call.1} parent=71 // pred_check
          %p569 = pneg %p216
        $region102: #{tpu_custom_call.1} parent=71 // pred_check_branch
          %571 = sbr.rel (%p569) target = $region104
        $region103: #{tpu_custom_call.1} parent=71 // pred_region
          %572 = dma.done [#allocation18], 2048
        $region104: #{tpu_custom_call.1} parent=71 // pred_fallthru
          _
        // Predicated region
        $region105: #{tpu_custom_call.1} parent=71 // pred_check
          %p573 = pneg %p237
        $region106: #{tpu_custom_call.1} parent=71 // pred_check_branch
          %575 = sbr.rel (%p573) target = $region108
        $region107: #{tpu_custom_call.1} parent=71 // pred_region
          %576 = dma.done [#allocation18], 16
        $region108: #{tpu_custom_call.1} parent=71 // pred_fallthru
          _
        // Predicated region
        $region109: #{tpu_custom_call.1} parent=71 // pred_check
          %p577 = pneg %p258
        $region110: #{tpu_custom_call.1} parent=71 // pred_check_branch
          %579 = sbr.rel (%p577) target = $region112
        $region111: #{tpu_custom_call.1} parent=71 // pred_region
          %580 = dma.done [#allocation21], 8192
        $region112: #{tpu_custom_call.1} parent=71 // pred_fallthru
          _
        // Predicated region
        $region113: #{tpu_custom_call.1} parent=71 // pred_check
          %p581 = pneg %p279
        $region114: #{tpu_custom_call.1} parent=71 // pred_check_branch
          %583 = sbr.rel (%p581) target = $region116
        $region115: #{tpu_custom_call.1} parent=71 // pred_region
          %584 = dma.done [#allocation21], 64
        $region116: #{tpu_custom_call.1} parent=71 // pred_fallthru
          _
        // Predicated region
        $region117: #{tpu_custom_call.1} parent=71 // pred_check
          %p585 = pneg %p300
        $region118: #{tpu_custom_call.1} parent=71 // pred_check_branch
          %587 = sbr.rel (%p585) target = $region120
        $region119: #{tpu_custom_call.1} parent=71 // pred_region
          %588 = dma.done [#allocation24], 8192
        $region120: #{tpu_custom_call.1} parent=71 // pred_fallthru
          _
        // Predicated region
        $region121: #{tpu_custom_call.1} parent=71 // pred_check
          %p589 = pneg %p321
        $region122: #{tpu_custom_call.1} parent=71 // pred_check_branch
          %591 = sbr.rel (%p589) target = $region124
        $region123: #{tpu_custom_call.1} parent=71 // pred_region
          %592 = dma.done [#allocation24], 16
        $region124: #{tpu_custom_call.1} parent=71 // pred_fallthru
          _
        %s593 = sand.u32 %s56, 1
        %s594 = scalar_lea.sflag [#allocation6], %s593
        %s595 = sand.u32 %s56, 1
        %s596 = smul.addr %s595, 128
        %s597 = scalar_lea.vmem [#allocation5], %s596
        %p598 = pneg %p69
        %p599 = pneg %p66
        %p600 = pneg %p90
        %p601 = pneg %p87
        %p602 = pneg %p111
        %p603 = pneg %p108
        %p604 = pneg %p132
        %p605 = pneg %p129
        %p606 = pneg %p153
        %p607 = pneg %p150
        %p608 = pneg %p174
        %p609 = pneg %p171
        %p610 = pneg %p195
        %p611 = pneg %p192
        %p612 = pneg %p216
        %p613 = pneg %p213
        %p614 = pneg %p237
        %p615 = pneg %p234
        %p616 = pneg %p258
        %p617 = pneg %p255
        %p618 = pneg %p279
        %p619 = pneg %p276
        %p620 = pneg %p300
        %p621 = pneg %p297
        %p622 = pneg %p321
        %p623 = pneg %p318
        %p624 = pneg %p349
        %p625 = pneg %p346
        %s626 = sand.u32 %s336, 1
        %s627 = scalar_lea.sflag [#allocation7], %s626
        %s628 = sand.u32 %s336, 1
        %s629 = smul.addr %s628, 64
        %s630 = scalar_lea.vmem [#allocation26], %s629
        %s631 = smul.u32 8, %s41
        %p632 = scmp.eq.s32.totalorder %s41, 0
        // Predicated region
        $region125: #{tpu_custom_call.1} parent=71 // pred_check
          %p633 = pneg %p632
        $region126: #{tpu_custom_call.1} parent=71 // pred_check_branch
          %635 = sbr.rel (%p633) target = $region128
        $region127: #{tpu_custom_call.1} parent=71 // pred_region
          %v636 = vld [vmem:[%s540] sm:$0xff]
          %v637 = vld [vmem:[%s540 + $0x8] sm:$0xff]
          %v638 = vld [vmem:[%s540 + $0x10] sm:$0xff]
          %v639 = vld [vmem:[%s540 + $0x18] sm:$0xff]
          %v640 = vld [vmem:[%s540 + $0x20] sm:$0xff]
          %v641 = vld [vmem:[%s540 + $0x28] sm:$0xff]
          %v642 = vld [vmem:[%s540 + $0x30] sm:$0xff]
          %v643 = vld [vmem:[%s540 + $0x38] sm:$0xff]
          %v644 = vld [vmem:[%s540 + $0x40] sm:$0xff]
          %v645 = vld [vmem:[%s540 + $0x48] sm:$0xff]
          %v646 = vld [vmem:[%s540 + $0x50] sm:$0xff]
          %v647 = vld [vmem:[%s540 + $0x58] sm:$0xff]
          %v648 = vld [vmem:[%s540 + $0x60] sm:$0xff]
          %v649 = vld [vmem:[%s540 + $0x68] sm:$0xff]
          %v650 = vld [vmem:[%s540 + $0x70] sm:$0xff]
          %v651 = vld [vmem:[%s540 + $0x78] sm:$0xff]
          %v652 = vld [vmem:[#allocation8] sm:$0x1]
          %v653 = vld [vmem:[#allocation10] sm:$0x1]
          %654 = vadd.xlane.f32.xlu0 %v636
          %v655 = vpop.xlane.xlu0 %654
          %656 = vadd.xlane.f32.xlu0 %v637
          %v657 = vpop.xlane.xlu0 %656
          %658 = vadd.xlane.f32.xlu0 %v638
          %v659 = vpop.xlane.xlu0 %658
          %660 = vadd.xlane.f32.xlu0 %v639
          %v661 = vpop.xlane.xlu0 %660
          %662 = vadd.xlane.f32.xlu0 %v640
          %v663 = vpop.xlane.xlu0 %662
          %664 = vadd.xlane.f32.xlu0 %v641
          %v665 = vpop.xlane.xlu0 %664
          %666 = vadd.xlane.f32.xlu0 %v642
          %v667 = vpop.xlane.xlu0 %666
          %668 = vadd.xlane.f32.xlu0 %v643
          %v669 = vpop.xlane.xlu0 %668
          %670 = vadd.xlane.f32.xlu0 %v644
          %v671 = vpop.xlane.xlu0 %670
          %672 = vadd.xlane.f32.xlu0 %v645
          %v673 = vpop.xlane.xlu0 %672
          %674 = vadd.xlane.f32.xlu0 %v646
          %v675 = vpop.xlane.xlu0 %674
          %676 = vadd.xlane.f32.xlu0 %v647
          %v677 = vpop.xlane.xlu0 %676
          %678 = vadd.xlane.f32.xlu0 %v648
          %v679 = vpop.xlane.xlu0 %678
          %680 = vadd.xlane.f32.xlu0 %v649
          %v681 = vpop.xlane.xlu0 %680
          %682 = vadd.xlane.f32.xlu0 %v650
          %v683 = vpop.xlane.xlu0 %682
          %684 = vadd.xlane.f32.xlu0 %v651
          %v685 = vpop.xlane.xlu0 %684
          %v686 = vrcp.pop 128.0
          %v687 = vmul.f32 %v655, %v686
          %v688 = vmul.f32 %v657, %v686
          %v689 = vmul.f32 %v659, %v686
          %v690 = vmul.f32 %v661, %v686
          %v691 = vmul.f32 %v663, %v686
          %v692 = vmul.f32 %v665, %v686
          %v693 = vmul.f32 %v667, %v686
          %v694 = vmul.f32 %v669, %v686
          %v695 = vmul.f32 %v671, %v686
          %v696 = vmul.f32 %v673, %v686
          %v697 = vmul.f32 %v675, %v686
          %v698 = vmul.f32 %v677, %v686
          %v699 = vmul.f32 %v679, %v686
          %v700 = vmul.f32 %v681, %v686
          %v701 = vmul.f32 %v683, %v686
          %v702 = vmul.f32 %v685, %v686
          %v703 = vsub.f32 %v636, %v687
          %v704 = vsub.f32 %v637, %v688
          %v705 = vsub.f32 %v638, %v689
          %v706 = vsub.f32 %v639, %v690
          %v707 = vsub.f32 %v640, %v691
          %v708 = vsub.f32 %v641, %v692
          %v709 = vsub.f32 %v642, %v693
          %v710 = vsub.f32 %v643, %v694
          %v711 = vsub.f32 %v644, %v695
          %v712 = vsub.f32 %v645, %v696
          %v713 = vsub.f32 %v646, %v697
          %v714 = vsub.f32 %v647, %v698
          %v715 = vsub.f32 %v648, %v699
          %v716 = vsub.f32 %v649, %v700
          %v717 = vsub.f32 %v650, %v701
          %v718 = vsub.f32 %v651, %v702
          %v719 = vmul.f32 %v703, %v703
          %v720 = vmul.f32 %v704, %v704
          %v721 = vmul.f32 %v705, %v705
          %v722 = vmul.f32 %v706, %v706
          %v723 = vmul.f32 %v707, %v707
          %v724 = vmul.f32 %v708, %v708
          %v725 = vmul.f32 %v709, %v709
          %v726 = vmul.f32 %v710, %v710
          %v727 = vmul.f32 %v711, %v711
          %v728 = vmul.f32 %v712, %v712
          %v729 = vmul.f32 %v713, %v713
          %v730 = vmul.f32 %v714, %v714
          %v731 = vmul.f32 %v715, %v715
          %v732 = vmul.f32 %v716, %v716
          %v733 = vmul.f32 %v717, %v717
          %v734 = vmul.f32 %v718, %v718
          %735 = vadd.xlane.f32.xlu0 %v719
          %v736 = vpop.xlane.xlu0 %735
          %737 = vadd.xlane.f32.xlu0 %v720
          %v738 = vpop.xlane.xlu0 %737
          %739 = vadd.xlane.f32.xlu0 %v721
          %v740 = vpop.xlane.xlu0 %739
          %741 = vadd.xlane.f32.xlu0 %v722
          %v742 = vpop.xlane.xlu0 %741
          %743 = vadd.xlane.f32.xlu0 %v723
          %v744 = vpop.xlane.xlu0 %743
          %745 = vadd.xlane.f32.xlu0 %v724
          %v746 = vpop.xlane.xlu0 %745
          %747 = vadd.xlane.f32.xlu0 %v725
          %v748 = vpop.xlane.xlu0 %747
          %749 = vadd.xlane.f32.xlu0 %v726
          %v750 = vpop.xlane.xlu0 %749
          %751 = vadd.xlane.f32.xlu0 %v727
          %v752 = vpop.xlane.xlu0 %751
          %753 = vadd.xlane.f32.xlu0 %v728
          %v754 = vpop.xlane.xlu0 %753
          %755 = vadd.xlane.f32.xlu0 %v729
          %v756 = vpop.xlane.xlu0 %755
          %757 = vadd.xlane.f32.xlu0 %v730
          %v758 = vpop.xlane.xlu0 %757
          %759 = vadd.xlane.f32.xlu0 %v731
          %v760 = vpop.xlane.xlu0 %759
          %761 = vadd.xlane.f32.xlu0 %v732
          %v762 = vpop.xlane.xlu0 %761
          %763 = vadd.xlane.f32.xlu0 %v733
          %v764 = vpop.xlane.xlu0 %763
          %765 = vadd.xlane.f32.xlu0 %v734
          %v766 = vpop.xlane.xlu0 %765
          %v767 = vmul.f32 %v736, %v686
          %v768 = vmul.f32 %v738, %v686
          %v769 = vmul.f32 %v740, %v686
          %v770 = vmul.f32 %v742, %v686
          %v771 = vmul.f32 %v744, %v686
          %v772 = vmul.f32 %v746, %v686
          %v773 = vmul.f32 %v748, %v686
          %v774 = vmul.f32 %v750, %v686
          %v775 = vmul.f32 %v752, %v686
          %v776 = vmul.f32 %v754, %v686
          %v777 = vmul.f32 %v756, %v686
          %v778 = vmul.f32 %v758, %v686
          %v779 = vmul.f32 %v760, %v686
          %v780 = vmul.f32 %v762, %v686
          %v781 = vmul.f32 %v764, %v686
          %v782 = vmul.f32 %v766, %v686
          %v783 = vadd.f32 %v767, 1e-05
          %v784 = vadd.f32 %v768, 1e-05
          %v785 = vadd.f32 %v769, 1e-05
          %v786 = vadd.f32 %v770, 1e-05
          %v787 = vadd.f32 %v771, 1e-05
          %v788 = vadd.f32 %v772, 1e-05
          %v789 = vadd.f32 %v773, 1e-05
          %v790 = vadd.f32 %v774, 1e-05
          %v791 = vadd.f32 %v775, 1e-05
          %v792 = vadd.f32 %v776, 1e-05
          %v793 = vadd.f32 %v777, 1e-05
          %v794 = vadd.f32 %v778, 1e-05
          %v795 = vadd.f32 %v779, 1e-05
          %v796 = vadd.f32 %v780, 1e-05
          %v797 = vadd.f32 %v781, 1e-05
          %v798 = vadd.f32 %v782, 1e-05
          %v799 = vrsqrt.pop %v783
          %v800 = vrsqrt.pop %v784
          %v801 = vrsqrt.pop %v785
          %v802 = vrsqrt.pop %v786
          %v803 = vrsqrt.pop %v787
          %v804 = vrsqrt.pop %v788
          %v805 = vrsqrt.pop %v789
          %v806 = vrsqrt.pop %v790
          %v807 = vrsqrt.pop %v791
          %v808 = vrsqrt.pop %v792
          %v809 = vrsqrt.pop %v793
          %v810 = vrsqrt.pop %v794
          %v811 = vrsqrt.pop %v795
          %v812 = vrsqrt.pop %v796
          %v813 = vrsqrt.pop %v797
          %v814 = vrsqrt.pop %v798
          %v815 = vmul.f32 %v703, %v799
          %v816 = vmul.f32 %v704, %v800
          %v817 = vmul.f32 %v705, %v801
          %v818 = vmul.f32 %v706, %v802
          %v819 = vmul.f32 %v707, %v803
          %v820 = vmul.f32 %v708, %v804
          %v821 = vmul.f32 %v709, %v805
          %v822 = vmul.f32 %v710, %v806
          %v823 = vmul.f32 %v711, %v807
          %v824 = vmul.f32 %v712, %v808
          %v825 = vmul.f32 %v713, %v809
          %v826 = vmul.f32 %v714, %v810
          %v827 = vmul.f32 %v715, %v811
          %v828 = vmul.f32 %v716, %v812
          %v829 = vmul.f32 %v717, %v813
          %v830 = vmul.f32 %v718, %v814
          %v832 = vlaneseq
          %v833 = vshrl.u32 %v832, 7
          %v834 = vsub.s32 0, %v833
          %v835 = vrot.slane %v652, %v834
          %v837 = vmul.f32 %v815, %v835
          %v838 = vmul.f32 %v816, %v835
          %v839 = vmul.f32 %v817, %v835
          %v840 = vmul.f32 %v818, %v835
          %v841 = vmul.f32 %v819, %v835
          %v842 = vmul.f32 %v820, %v835
          %v843 = vmul.f32 %v821, %v835
          %v844 = vmul.f32 %v822, %v835
          %v845 = vmul.f32 %v823, %v835
          %v846 = vmul.f32 %v824, %v835
          %v847 = vmul.f32 %v825, %v835
          %v848 = vmul.f32 %v826, %v835
          %v849 = vmul.f32 %v827, %v835
          %v850 = vmul.f32 %v828, %v835
          %v851 = vmul.f32 %v829, %v835
          %v852 = vmul.f32 %v830, %v835
          %v854 = vlaneseq
          %v855 = vshrl.u32 %v854, 7
          %v856 = vsub.s32 0, %v855
          %v857 = vrot.slane %v653, %v856
          %v859 = vadd.f32 %v837, %v857
          %v860 = vadd.f32 %v838, %v857
          %v861 = vadd.f32 %v839, %v857
          %v862 = vadd.f32 %v840, %v857
          %v863 = vadd.f32 %v841, %v857
          %v864 = vadd.f32 %v842, %v857
          %v865 = vadd.f32 %v843, %v857
          %v866 = vadd.f32 %v844, %v857
          %v867 = vadd.f32 %v845, %v857
          %v868 = vadd.f32 %v846, %v857
          %v869 = vadd.f32 %v847, %v857
          %v870 = vadd.f32 %v848, %v857
          %v871 = vadd.f32 %v849, %v857
          %v872 = vadd.f32 %v850, %v857
          %v873 = vadd.f32 %v851, %v857
          %v874 = vadd.f32 %v852, %v857
          %v875 = vld [vmem:[#allocation14] sm:$0xff]
          %v876 = vld [vmem:[#allocation14 + $0x8] sm:$0xff]
          %v877 = vld [vmem:[#allocation14 + $0x10] sm:$0xff]
          %v878 = vld [vmem:[#allocation14 + $0x18] sm:$0xff]
          %v879 = vld [vmem:[#allocation14 + $0x20] sm:$0xff]
          %v880 = vld [vmem:[#allocation14 + $0x28] sm:$0xff]
          %v881 = vld [vmem:[#allocation14 + $0x30] sm:$0xff]
          %v882 = vld [vmem:[#allocation14 + $0x38] sm:$0xff]
          %v883 = vld [vmem:[#allocation14 + $0x40] sm:$0xff]
          %v884 = vld [vmem:[#allocation14 + $0x48] sm:$0xff]
          %v885 = vld [vmem:[#allocation14 + $0x50] sm:$0xff]
          %v886 = vld [vmem:[#allocation14 + $0x58] sm:$0xff]
          %v887 = vld [vmem:[#allocation14 + $0x60] sm:$0xff]
          %v888 = vld [vmem:[#allocation14 + $0x68] sm:$0xff]
          %v889 = vld [vmem:[#allocation14 + $0x70] sm:$0xff]
          %v890 = vld [vmem:[#allocation14 + $0x78] sm:$0xff]
          %v891 = vld [vmem:[#allocation14 + $0x80] sm:$0xff]
          %v892 = vld [vmem:[#allocation14 + $0x88] sm:$0xff]
          %v893 = vld [vmem:[#allocation14 + $0x90] sm:$0xff]
          %v894 = vld [vmem:[#allocation14 + $0x98] sm:$0xff]
          %v895 = vld [vmem:[#allocation14 + $0xa0] sm:$0xff]
          %v896 = vld [vmem:[#allocation14 + $0xa8] sm:$0xff]
          %v897 = vld [vmem:[#allocation14 + $0xb0] sm:$0xff]
          %v898 = vld [vmem:[#allocation14 + $0xb8] sm:$0xff]
          %v899 = vld [vmem:[#allocation14 + $0xc0] sm:$0xff]
          %v900 = vld [vmem:[#allocation14 + $0xc8] sm:$0xff]
          %v901 = vld [vmem:[#allocation14 + $0xd0] sm:$0xff]
          %v902 = vld [vmem:[#allocation14 + $0xd8] sm:$0xff]
          %v903 = vld [vmem:[#allocation14 + $0xe0] sm:$0xff]
          %v904 = vld [vmem:[#allocation14 + $0xe8] sm:$0xff]
          %v905 = vld [vmem:[#allocation14 + $0xf0] sm:$0xff]
          %v906 = vld [vmem:[#allocation14 + $0xf8] sm:$0xff]
          %v907 = vld [vmem:[#allocation14 + $0x100] sm:$0xff]
          %v908 = vld [vmem:[#allocation14 + $0x108] sm:$0xff]
          %v909 = vld [vmem:[#allocation14 + $0x110] sm:$0xff]
          %v910 = vld [vmem:[#allocation14 + $0x118] sm:$0xff]
          %v911 = vld [vmem:[#allocation14 + $0x120] sm:$0xff]
          %v912 = vld [vmem:[#allocation14 + $0x128] sm:$0xff]
          %v913 = vld [vmem:[#allocation14 + $0x130] sm:$0xff]
          %v914 = vld [vmem:[#allocation14 + $0x138] sm:$0xff]
          %v915 = vld [vmem:[#allocation14 + $0x140] sm:$0xff]
          %v916 = vld [vmem:[#allocation14 + $0x148] sm:$0xff]
          %v917 = vld [vmem:[#allocation14 + $0x150] sm:$0xff]
          %v918 = vld [vmem:[#allocation14 + $0x158] sm:$0xff]
          %v919 = vld [vmem:[#allocation14 + $0x160] sm:$0xff]
          %v920 = vld [vmem:[#allocation14 + $0x168] sm:$0xff]
          %v921 = vld [vmem:[#allocation14 + $0x170] sm:$0xff]
          %v922 = vld [vmem:[#allocation14 + $0x178] sm:$0xff]
          %v923 = vld [vmem:[#allocation16] sm:$0x7]
          %v925 = vlaneseq
          %v926 = vshrl.u32 %v925, 7
          %v927 = vsub.s32 0, %v926
          %v928 = vrot.slane %v923, %v927
          %v929 = vlaneseq
          %v930 = vshrl.u32 %v929, 7
          %v931 = vsub.s32 1, %v930
          %v932 = vrot.slane %v923, %v931
          %v933 = vlaneseq
          %v934 = vshrl.u32 %v933, 7
          %v935 = vsub.s32 2, %v934
          %v936 = vrot.slane %v923, %v935
          %940 = vmatprep.subr.mxu0 %v876
          %941 = vmatpush1.msra.mxu0 %v875
          %942 = vmatprep.subr.mxu0 %v879
          %943 = vmatpush1.msra.mxu0 %v878
          %944 = vmatprep.subr.mxu0 %v882
          %945 = vmatpush1.msra.mxu0 %v881
          %946 = vmatprep.subr.mxu0 %v885
          %947 = vmatpush1.msra.mxu0 %v884
          %948 = vmatprep.subr.mxu0 %v888
          %949 = vmatpush1.msra.mxu0 %v887
          %950 = vmatprep.subr.mxu0 %v891
          %951 = vmatpush1.msra.mxu0 %v890
          %952 = vmatprep.subr.mxu0 %v894
          %953 = vmatpush1.msra.mxu0 %v893
          %954 = vmatprep.subr.mxu0 %v897
          %955 = vmatpush1.msra.mxu0 %v896
          %956 = vmatprep.subr.mxu0 %v900
          %957 = vmatpush1.msra.mxu0 %v899
          %958 = vmatprep.subr.mxu0 %v903
          %959 = vmatpush1.msra.mxu0 %v902
          %960 = vmatprep.subr.mxu0 %v906
          %961 = vmatpush1.msra.mxu0 %v905
          %962 = vmatprep.subr.mxu0 %v909
          %963 = vmatpush1.msra.mxu0 %v908
          %964 = vmatprep.subr.mxu0 %v912
          %965 = vmatpush1.msra.mxu0 %v911
          %966 = vmatprep.subr.mxu0 %v915
          %967 = vmatpush1.msra.mxu0 %v914
          %968 = vmatprep.subr.mxu0 %v918
          %969 = vmatpush1.msra.mxu0 %v917
          %970 = vmatprep.subr.mxu0 %v921
          %971 = vmatpush1.msra.mxu0 %v920
          %972 = vmatprep.subr.mxu0 0.0
          %973 = vmatpush1.msra.mxu0 0.0
          %974 = vmatprep.subr.mxu0 0.0
          %975 = vmatpush1.msra.mxu0 0.0
          %976 = vmatprep.subr.mxu0 0.0
          %977 = vmatpush1.msra.mxu0 0.0
          %978 = vmatprep.subr.mxu0 0.0
          %979 = vmatpush1.msra.mxu0 0.0
          %980 = vmatprep.subr.mxu0 0.0
          %981 = vmatpush1.msra.mxu0 0.0
          %982 = vmatprep.subr.mxu0 0.0
          %983 = vmatpush1.msra.mxu0 0.0
          %984 = vmatprep.subr.mxu0 0.0
          %985 = vmatpush1.msra.mxu0 0.0
          %986 = vmatprep.subr.mxu0 0.0
          %987 = vmatpush1.msra.mxu0 0.0
          %988 = vmatprep.subr.mxu0 0.0
          %989 = vmatpush1.msra.mxu0 0.0
          %990 = vmatprep.subr.mxu0 0.0
          %991 = vmatpush1.msra.mxu0 0.0
          %992 = vmatprep.subr.mxu0 0.0
          %993 = vmatpush1.msra.mxu0 0.0
          %994 = vmatprep.subr.mxu0 0.0
          %995 = vmatpush1.msra.mxu0 0.0
          %996 = vmatprep.subr.mxu0 0.0
          %997 = vmatpush1.msra.mxu0 0.0
          %998 = vmatprep.subr.mxu0 0.0
          %999 = vmatpush1.msra.mxu0 0.0
          %1000 = vmatprep.subr.mxu0 0.0
          %1001 = vmatpush1.msra.mxu0 0.0
          %1002 = vmatprep.subr.mxu0 0.0
          %1003 = vmatpush1.msra.mxu0 0.0
          %1004 = vmatprep.mubr.f32.mxu0 0.0
          %1005 = vmatmul.mubr.f32.gmra.mrb[0].mxu0 %v859
          %v1006 = vpop.f32.mrb[0].mxu0
          %v1007 = vadd.f32 %v928, %v1006
          %v1008 = vpop.f32.mrb[0].mxu0
          %v1009 = vadd.f32 %v932, %v1008
          %1010 = vmatprep.mubr.f32.mxu0 0.0
          %1011 = vmatmul.mubr.f32.gmra.mrb[0].mxu0 %v860
          %v1012 = vpop.f32.mrb[0].mxu0
          %v1013 = vadd.f32 %v928, %v1012
          %v1014 = vpop.f32.mrb[0].mxu0
          %v1015 = vadd.f32 %v932, %v1014
          %1016 = vmatprep.mubr.f32.mxu0 0.0
          %1017 = vmatmul.mubr.f32.gmra.mrb[0].mxu0 %v861
          %v1018 = vpop.f32.mrb[0].mxu0
          %v1019 = vadd.f32 %v928, %v1018
          %v1020 = vpop.f32.mrb[0].mxu0
          %v1021 = vadd.f32 %v932, %v1020
          %1022 = vmatprep.mubr.f32.mxu0 0.0
          %1023 = vmatmul.mubr.f32.gmra.mrb[0].mxu0 %v862
          %v1024 = vpop.f32.mrb[0].mxu0
          %v1025 = vadd.f32 %v928, %v1024
          %v1026 = vpop.f32.mrb[0].mxu0
          %v1027 = vadd.f32 %v932, %v1026
          %1028 = vmatprep.mubr.f32.mxu0 0.0
          %1029 = vmatmul.mubr.f32.gmra.mrb[0].mxu0 %v863
          %v1030 = vpop.f32.mrb[0].mxu0
          %v1031 = vadd.f32 %v928, %v1030
          %v1032 = vpop.f32.mrb[0].mxu0
          %v1033 = vadd.f32 %v932, %v1032
          %1034 = vmatprep.mubr.f32.mxu0 0.0
          %1035 = vmatmul.mubr.f32.gmra.mrb[0].mxu0 %v864
          %v1036 = vpop.f32.mrb[0].mxu0
          %v1037 = vadd.f32 %v928, %v1036
          %v1038 = vpop.f32.mrb[0].mxu0
          %v1039 = vadd.f32 %v932, %v1038
          %1040 = vmatprep.mubr.f32.mxu0 0.0
          %1041 = vmatmul.mubr.f32.gmra.mrb[0].mxu0 %v865
          %v1042 = vpop.f32.mrb[0].mxu0
          %v1043 = vadd.f32 %v928, %v1042
          %v1044 = vpop.f32.mrb[0].mxu0
          %v1045 = vadd.f32 %v932, %v1044
          %1046 = vmatprep.mubr.f32.mxu0 0.0
          %1047 = vmatmul.mubr.f32.gmra.mrb[0].mxu0 %v866
          %v1048 = vpop.f32.mrb[0].mxu0
          %v1049 = vadd.f32 %v928, %v1048
          %v1050 = vpop.f32.mrb[0].mxu0
          %v1051 = vadd.f32 %v932, %v1050
          %1052 = vmatprep.mubr.f32.mxu0 0.0
          %1053 = vmatmul.mubr.f32.gmra.mrb[0].mxu0 %v867
          %v1054 = vpop.f32.mrb[0].mxu0
          %v1055 = vadd.f32 %v928, %v1054
          %v1056 = vpop.f32.mrb[0].mxu0
          %v1057 = vadd.f32 %v932, %v1056
          %1058 = vmatprep.mubr.f32.mxu0 0.0
          %1059 = vmatmul.mubr.f32.gmra.mrb[0].mxu0 %v868
          %v1060 = vpop.f32.mrb[0].mxu0
          %v1061 = vadd.f32 %v928, %v1060
          %v1062 = vpop.f32.mrb[0].mxu0
          %v1063 = vadd.f32 %v932, %v1062
          %1064 = vmatprep.mubr.f32.mxu0 0.0
          %1065 = vmatmul.mubr.f32.gmra.mrb[0].mxu0 %v869
          %v1066 = vpop.f32.mrb[0].mxu0
          %v1067 = vadd.f32 %v928, %v1066
          %v1068 = vpop.f32.mrb[0].mxu0
          %v1069 = vadd.f32 %v932, %v1068
          %1070 = vmatprep.mubr.f32.mxu0 0.0
          %1071 = vmatmul.mubr.f32.gmra.mrb[0].mxu0 %v870
          %v1072 = vpop.f32.mrb[0].mxu0
          %v1073 = vadd.f32 %v928, %v1072
          %v1074 = vpop.f32.mrb[0].mxu0
          %v1075 = vadd.f32 %v932, %v1074
          %1076 = vmatprep.mubr.f32.mxu0 0.0
          %1077 = vmatmul.mubr.f32.gmra.mrb[0].mxu0 %v871
          %v1078 = vpop.f32.mrb[0].mxu0
          %v1079 = vadd.f32 %v928, %v1078
          %v1080 = vpop.f32.mrb[0].mxu0
          %v1081 = vadd.f32 %v932, %v1080
          %1082 = vmatprep.mubr.f32.mxu0 0.0
          %1083 = vmatmul.mubr.f32.gmra.mrb[0].mxu0 %v872
          %v1084 = vpop.f32.mrb[0].mxu0
          %v1085 = vadd.f32 %v928, %v1084
          %v1086 = vpop.f32.mrb[0].mxu0
          %v1087 = vadd.f32 %v932, %v1086
          %1088 = vmatprep.mubr.f32.mxu0 0.0
          %1089 = vmatmul.mubr.f32.gmra.mrb[0].mxu0 %v873
          %v1090 = vpop.f32.mrb[0].mxu0
          %v1091 = vadd.f32 %v928, %v1090
          %v1092 = vpop.f32.mrb[0].mxu0
          %v1093 = vadd.f32 %v932, %v1092
          %1094 = vmatprep.mubr.f32.mxu0 0.0
          %1095 = vmatmul.mubr.f32.gmra.mrb[0].mxu0 %v874
          %v1096 = vpop.f32.mrb[0].mxu0
          %v1097 = vadd.f32 %v928, %v1096
          %v1098 = vpop.f32.mrb[0].mxu0
          %v1099 = vadd.f32 %v932, %v1098
          %1100 = vdwg.mxu0
          %1101 = vmatprep.subr.mxu0 0.0
          %1102 = vmatpush1.msra.mxu0 %v877
          %1103 = vmatprep.subr.mxu0 0.0
          %1104 = vmatpush1.msra.mxu0 %v880
          %1105 = vmatprep.subr.mxu0 0.0
          %1106 = vmatpush1.msra.mxu0 %v883
          %1107 = vmatprep.subr.mxu0 0.0
          %1108 = vmatpush1.msra.mxu0 %v886
          %1109 = vmatprep.subr.mxu0 0.0
          %1110 = vmatpush1.msra.mxu0 %v889
          %1111 = vmatprep.subr.mxu0 0.0
          %1112 = vmatpush1.msra.mxu0 %v892
          %1113 = vmatprep.subr.mxu0 0.0
          %1114 = vmatpush1.msra.mxu0 %v895
          %1115 = vmatprep.subr.mxu0 0.0
          %1116 = vmatpush1.msra.mxu0 %v898
          %1117 = vmatprep.subr.mxu0 0.0
          %1118 = vmatpush1.msra.mxu0 %v901
          %1119 = vmatprep.subr.mxu0 0.0
          %1120 = vmatpush1.msra.mxu0 %v904
          %1121 = vmatprep.subr.mxu0 0.0
          %1122 = vmatpush1.msra.mxu0 %v907
          %1123 = vmatprep.subr.mxu0 0.0
          %1124 = vmatpush1.msra.mxu0 %v910
          %1125 = vmatprep.subr.mxu0 0.0
          %1126 = vmatpush1.msra.mxu0 %v913
          %1127 = vmatprep.subr.mxu0 0.0
          %1128 = vmatpush1.msra.mxu0 %v916
          %1129 = vmatprep.subr.mxu0 0.0
          %1130 = vmatpush1.msra.mxu0 %v919
          %1131 = vmatprep.subr.mxu0 0.0
          %1132 = vmatpush1.msra.mxu0 %v922
          %1133 = vmatprep.subr.mxu0 0.0
          %1134 = vmatpush1.msra.mxu0 0.0
          %1135 = vmatprep.subr.mxu0 0.0
          %1136 = vmatpush1.msra.mxu0 0.0
          %1137 = vmatprep.subr.mxu0 0.0
          %1138 = vmatpush1.msra.mxu0 0.0
          %1139 = vmatprep.subr.mxu0 0.0
          %1140 = vmatpush1.msra.mxu0 0.0
          %1141 = vmatprep.subr.mxu0 0.0
          %1142 = vmatpush1.msra.mxu0 0.0
          %1143 = vmatprep.subr.mxu0 0.0
          %1144 = vmatpush1.msra.mxu0 0.0
          %1145 = vmatprep.subr.mxu0 0.0
          %1146 = vmatpush1.msra.mxu0 0.0
          %1147 = vmatprep.subr.mxu0 0.0
          %1148 = vmatpush1.msra.mxu0 0.0
          %1149 = vmatprep.subr.mxu0 0.0
          %1150 = vmatpush1.msra.mxu0 0.0
          %1151 = vmatprep.subr.mxu0 0.0
          %1152 = vmatpush1.msra.mxu0 0.0
          %1153 = vmatprep.subr.mxu0 0.0
          %1154 = vmatpush1.msra.mxu0 0.0
          %1155 = vmatprep.subr.mxu0 0.0
          %1156 = vmatpush1.msra.mxu0 0.0
          %1157 = vmatprep.subr.mxu0 0.0
          %1158 = vmatpush1.msra.mxu0 0.0
          %1159 = vmatprep.subr.mxu0 0.0
          %1160 = vmatpush1.msra.mxu0 0.0
          %1161 = vmatprep.subr.mxu0 0.0
          %1162 = vmatpush1.msra.mxu0 0.0
          %1163 = vmatprep.subr.mxu0 0.0
          %1164 = vmatpush1.msra.mxu0 0.0
          %1165 = vmatprep.mubr.f32.mxu0 0.0
          %1166 = vmatmul.mubr.f32.gmra.mrb[0].mxu0 %v859
          %v1167 = vpop.f32.mrb[0].mxu0
          %v1168 = vadd.f32 %v936, %v1167
          %v1169 = vpop.f32.mrb[0].mxu0
          %1170 = vmatprep.mubr.f32.mxu0 0.0
          %1171 = vmatmul.mubr.f32.gmra.mrb[0].mxu0 %v860
          %v1172 = vpop.f32.mrb[0].mxu0
          %v1173 = vadd.f32 %v936, %v1172
          %v1174 = vpop.f32.mrb[0].mxu0
          %1175 = vmatprep.mubr.f32.mxu0 0.0
          %1176 = vmatmul.mubr.f32.gmra.mrb[0].mxu0 %v861
          %v1177 = vpop.f32.mrb[0].mxu0
          %v1178 = vadd.f32 %v936, %v1177
          %v1179 = vpop.f32.mrb[0].mxu0
          %1180 = vmatprep.mubr.f32.mxu0 0.0
          %1181 = vmatmul.mubr.f32.gmra.mrb[0].mxu0 %v862
          %v1182 = vpop.f32.mrb[0].mxu0
          %v1183 = vadd.f32 %v936, %v1182
          %v1184 = vpop.f32.mrb[0].mxu0
          %1185 = vmatprep.mubr.f32.mxu0 0.0
          %1186 = vmatmul.mubr.f32.gmra.mrb[0].mxu0 %v863
          %v1187 = vpop.f32.mrb[0].mxu0
          %v1188 = vadd.f32 %v936, %v1187
          %v1189 = vpop.f32.mrb[0].mxu0
          %1190 = vmatprep.mubr.f32.mxu0 0.0
          %1191 = vmatmul.mubr.f32.gmra.mrb[0].mxu0 %v864
          %v1192 = vpop.f32.mrb[0].mxu0
          %v1193 = vadd.f32 %v936, %v1192
          %v1194 = vpop.f32.mrb[0].mxu0
          %1195 = vmatprep.mubr.f32.mxu0 0.0
          %1196 = vmatmul.mubr.f32.gmra.mrb[0].mxu0 %v865
          %v1197 = vpop.f32.mrb[0].mxu0
          %v1198 = vadd.f32 %v936, %v1197
          %v1199 = vpop.f32.mrb[0].mxu0
          %1200 = vmatprep.mubr.f32.mxu0 0.0
          %1201 = vmatmul.mubr.f32.gmra.mrb[0].mxu0 %v866
          %v1202 = vpop.f32.mrb[0].mxu0
          %v1203 = vadd.f32 %v936, %v1202
          %v1204 = vpop.f32.mrb[0].mxu0
          %1205 = vmatprep.mubr.f32.mxu0 0.0
          %1206 = vmatmul.mubr.f32.gmra.mrb[0].mxu0 %v867
          %v1207 = vpop.f32.mrb[0].mxu0
          %v1208 = vadd.f32 %v936, %v1207
          %v1209 = vpop.f32.mrb[0].mxu0
          %1210 = vmatprep.mubr.f32.mxu0 0.0
          %1211 = vmatmul.mubr.f32.gmra.mrb[0].mxu0 %v868
          %v1212 = vpop.f32.mrb[0].mxu0
          %v1213 = vadd.f32 %v936, %v1212
          %v1214 = vpop.f32.mrb[0].mxu0
          %1215 = vmatprep.mubr.f32.mxu0 0.0
          %1216 = vmatmul.mubr.f32.gmra.mrb[0].mxu0 %v869
          %v1217 = vpop.f32.mrb[0].mxu0
          %v1218 = vadd.f32 %v936, %v1217
          %v1219 = vpop.f32.mrb[0].mxu0
          %1220 = vmatprep.mubr.f32.mxu0 0.0
          %1221 = vmatmul.mubr.f32.gmra.mrb[0].mxu0 %v870
          %v1222 = vpop.f32.mrb[0].mxu0
          %v1223 = vadd.f32 %v936, %v1222
          %v1224 = vpop.f32.mrb[0].mxu0
          %1225 = vmatprep.mubr.f32.mxu0 0.0
          %1226 = vmatmul.mubr.f32.gmra.mrb[0].mxu0 %v871
          %v1227 = vpop.f32.mrb[0].mxu0
          %v1228 = vadd.f32 %v936, %v1227
          %v1229 = vpop.f32.mrb[0].mxu0
          %1230 = vmatprep.mubr.f32.mxu0 0.0
          %1231 = vmatmul.mubr.f32.gmra.mrb[0].mxu0 %v872
          %v1232 = vpop.f32.mrb[0].mxu0
          %v1233 = vadd.f32 %v936, %v1232
          %v1234 = vpop.f32.mrb[0].mxu0
          %1235 = vmatprep.mubr.f32.mxu0 0.0
          %1236 = vmatmul.mubr.f32.gmra.mrb[0].mxu0 %v873
          %v1237 = vpop.f32.mrb[0].mxu0
          %v1238 = vadd.f32 %v936, %v1237
          %v1239 = vpop.f32.mrb[0].mxu0
          %1240 = vmatprep.mubr.f32.mxu0 0.0
          %1241 = vmatmul.mubr.f32.gmra.mrb[0].mxu0 %v874
          %v1242 = vpop.f32.mrb[0].mxu0
          %v1243 = vadd.f32 %v936, %v1242
          %v1244 = vpop.f32.mrb[0].mxu0
          %1245 = vdwg.mxu0
          %1246 = vst [vmem:[#allocation2] sm:$0xff] %v1007
          %1247 = vst [vmem:[#allocation2 + $0x8] sm:$0xff] %v1013
          %1248 = vst [vmem:[#allocation2 + $0x10] sm:$0xff] %v1019
          %1249 = vst [vmem:[#allocation2 + $0x18] sm:$0xff] %v1025
          %1250 = vst [vmem:[#allocation2 + $0x20] sm:$0xff] %v1031
          %1251 = vst [vmem:[#allocation2 + $0x28] sm:$0xff] %v1037
          %1252 = vst [vmem:[#allocation2 + $0x30] sm:$0xff] %v1043
          %1253 = vst [vmem:[#allocation2 + $0x38] sm:$0xff] %v1049
          %1254 = vst [vmem:[#allocation2 + $0x40] sm:$0xff] %v1055
          %1255 = vst [vmem:[#allocation2 + $0x48] sm:$0xff] %v1061
          %1256 = vst [vmem:[#allocation2 + $0x50] sm:$0xff] %v1067
          %1257 = vst [vmem:[#allocation2 + $0x58] sm:$0xff] %v1073
          %1258 = vst [vmem:[#allocation2 + $0x60] sm:$0xff] %v1079
          %1259 = vst [vmem:[#allocation2 + $0x68] sm:$0xff] %v1085
          %1260 = vst [vmem:[#allocation2 + $0x70] sm:$0xff] %v1091
          %1261 = vst [vmem:[#allocation2 + $0x78] sm:$0xff] %v1097
          %1262 = vst [vmem:[#allocation3] sm:$0xff] %v1009
          %1263 = vst [vmem:[#allocation3 + $0x8] sm:$0xff] %v1015
          %1264 = vst [vmem:[#allocation3 + $0x10] sm:$0xff] %v1021
          %1265 = vst [vmem:[#allocation3 + $0x18] sm:$0xff] %v1027
          %1266 = vst [vmem:[#allocation3 + $0x20] sm:$0xff] %v1033
          %1267 = vst [vmem:[#allocation3 + $0x28] sm:$0xff] %v1039
          %1268 = vst [vmem:[#allocation3 + $0x30] sm:$0xff] %v1045
          %1269 = vst [vmem:[#allocation3 + $0x38] sm:$0xff] %v1051
          %1270 = vst [vmem:[#allocation3 + $0x40] sm:$0xff] %v1057
          %1271 = vst [vmem:[#allocation3 + $0x48] sm:$0xff] %v1063
          %1272 = vst [vmem:[#allocation3 + $0x50] sm:$0xff] %v1069
          %1273 = vst [vmem:[#allocation3 + $0x58] sm:$0xff] %v1075
          %1274 = vst [vmem:[#allocation3 + $0x60] sm:$0xff] %v1081
          %1275 = vst [vmem:[#allocation3 + $0x68] sm:$0xff] %v1087
          %1276 = vst [vmem:[#allocation3 + $0x70] sm:$0xff] %v1093
          %1277 = vst [vmem:[#allocation3 + $0x78] sm:$0xff] %v1099
          %1278 = vst [vmem:[#allocation4] sm:$0xff] %v1168
          %1279 = vst [vmem:[#allocation4 + $0x8] sm:$0xff] %v1173
          %1280 = vst [vmem:[#allocation4 + $0x10] sm:$0xff] %v1178
          %1281 = vst [vmem:[#allocation4 + $0x18] sm:$0xff] %v1183
          %1282 = vst [vmem:[#allocation4 + $0x20] sm:$0xff] %v1188
          %1283 = vst [vmem:[#allocation4 + $0x28] sm:$0xff] %v1193
          %1284 = vst [vmem:[#allocation4 + $0x30] sm:$0xff] %v1198
          %1285 = vst [vmem:[#allocation4 + $0x38] sm:$0xff] %v1203
          %1286 = vst [vmem:[#allocation4 + $0x40] sm:$0xff] %v1208
          %1287 = vst [vmem:[#allocation4 + $0x48] sm:$0xff] %v1213
          %1288 = vst [vmem:[#allocation4 + $0x50] sm:$0xff] %v1218
          %1289 = vst [vmem:[#allocation4 + $0x58] sm:$0xff] %v1223
          %1290 = vst [vmem:[#allocation4 + $0x60] sm:$0xff] %v1228
          %1291 = vst [vmem:[#allocation4 + $0x68] sm:$0xff] %v1233
          %1292 = vst [vmem:[#allocation4 + $0x70] sm:$0xff] %v1238
          %1293 = vst [vmem:[#allocation4 + $0x78] sm:$0xff] %v1243
        $region128: #{tpu_custom_call.1} parent=71 // pred_fallthru
          _
        %s1294 = smul.u32 %s41, 64
        %s1295 = scalar_lea.vmem %s540, %s1294 [#allocation5]
        %v1296 = vld [vmem:[%s1295] sm:$0xff]
        %v1297 = vld [vmem:[%s1295 + $0x8] sm:$0xff]
        %v1298 = vld [vmem:[%s1295 + $0x10] sm:$0xff]
        %v1299 = vld [vmem:[%s1295 + $0x18] sm:$0xff]
        %v1300 = vld [vmem:[%s1295 + $0x20] sm:$0xff]
        %v1301 = vld [vmem:[%s1295 + $0x28] sm:$0xff]
        %v1302 = vld [vmem:[%s1295 + $0x30] sm:$0xff]
        %v1303 = vld [vmem:[%s1295 + $0x38] sm:$0xff]
        %s1304 = scalar_lea.vmem [#allocation2], %s1294
        %v1305 = vld [vmem:[%s1304] sm:$0xff]
        %v1306 = vld [vmem:[%s1304 + $0x8] sm:$0xff]
        %v1307 = vld [vmem:[%s1304 + $0x10] sm:$0xff]
        %v1308 = vld [vmem:[%s1304 + $0x18] sm:$0xff]
        %v1309 = vld [vmem:[%s1304 + $0x20] sm:$0xff]
        %v1310 = vld [vmem:[%s1304 + $0x28] sm:$0xff]
        %v1311 = vld [vmem:[%s1304 + $0x30] sm:$0xff]
        %v1312 = vld [vmem:[%s1304 + $0x38] sm:$0xff]
        %v1313 = vld [vmem:[#allocation3] sm:$0xff]
        %v1314 = vld [vmem:[#allocation3 + $0x8] sm:$0xff]
        %v1315 = vld [vmem:[#allocation3 + $0x10] sm:$0xff]
        %v1316 = vld [vmem:[#allocation3 + $0x18] sm:$0xff]
        %v1317 = vld [vmem:[#allocation3 + $0x20] sm:$0xff]
        %v1318 = vld [vmem:[#allocation3 + $0x28] sm:$0xff]
        %v1319 = vld [vmem:[#allocation3 + $0x30] sm:$0xff]
        %v1320 = vld [vmem:[#allocation3 + $0x38] sm:$0xff]
        %v1321 = vld [vmem:[#allocation3 + $0x40] sm:$0xff]
        %v1322 = vld [vmem:[#allocation3 + $0x48] sm:$0xff]
        %v1323 = vld [vmem:[#allocation3 + $0x50] sm:$0xff]
        %v1324 = vld [vmem:[#allocation3 + $0x58] sm:$0xff]
        %v1325 = vld [vmem:[#allocation3 + $0x60] sm:$0xff]
        %v1326 = vld [vmem:[#allocation3 + $0x68] sm:$0xff]
        %v1327 = vld [vmem:[#allocation3 + $0x70] sm:$0xff]
        %v1328 = vld [vmem:[#allocation3 + $0x78] sm:$0xff]
        %v1329 = vld [vmem:[#allocation4] sm:$0xff]
        %v1330 = vld [vmem:[#allocation4 + $0x8] sm:$0xff]
        %v1331 = vld [vmem:[#allocation4 + $0x10] sm:$0xff]
        %v1332 = vld [vmem:[#allocation4 + $0x18] sm:$0xff]
        %v1333 = vld [vmem:[#allocation4 + $0x20] sm:$0xff]
        %v1334 = vld [vmem:[#allocation4 + $0x28] sm:$0xff]
        %v1335 = vld [vmem:[#allocation4 + $0x30] sm:$0xff]
        %v1336 = vld [vmem:[#allocation4 + $0x38] sm:$0xff]
        %v1337 = vld [vmem:[#allocation4 + $0x40] sm:$0xff]
        %v1338 = vld [vmem:[#allocation4 + $0x48] sm:$0xff]
        %v1339 = vld [vmem:[#allocation4 + $0x50] sm:$0xff]
        %v1340 = vld [vmem:[#allocation4 + $0x58] sm:$0xff]
        %v1341 = vld [vmem:[#allocation4 + $0x60] sm:$0xff]
        %v1342 = vld [vmem:[#allocation4 + $0x68] sm:$0xff]
        %v1343 = vld [vmem:[#allocation4 + $0x70] sm:$0xff]
        %v1344 = vld [vmem:[#allocation4 + $0x78] sm:$0xff]
        %v1345 = vld [vmem:[#allocation17] sm:$0xff]
        %v1346 = vld [vmem:[#allocation17 + $0x8] sm:$0xff]
        %v1347 = vld [vmem:[#allocation17 + $0x10] sm:$0xff]
        %v1348 = vld [vmem:[#allocation17 + $0x18] sm:$0xff]
        %v1349 = vld [vmem:[#allocation17 + $0x20] sm:$0xff]
        %v1350 = vld [vmem:[#allocation17 + $0x28] sm:$0xff]
        %v1351 = vld [vmem:[#allocation17 + $0x30] sm:$0xff]
        %v1352 = vld [vmem:[#allocation17 + $0x38] sm:$0xff]
        %v1353 = vld [vmem:[#allocation17 + $0x40] sm:$0xff]
        %v1354 = vld [vmem:[#allocation17 + $0x48] sm:$0xff]
        %v1355 = vld [vmem:[#allocation17 + $0x50] sm:$0xff]
        %v1356 = vld [vmem:[#allocation17 + $0x58] sm:$0xff]
        %v1357 = vld [vmem:[#allocation17 + $0x60] sm:$0xff]
        %v1358 = vld [vmem:[#allocation17 + $0x68] sm:$0xff]
        %v1359 = vld [vmem:[#allocation17 + $0x70] sm:$0xff]
        %v1360 = vld [vmem:[#allocation17 + $0x78] sm:$0xff]
        %vm1361 = vcmask 261120
        %v1363 = vsel %vm1361, %v1305, 0
        %v1366 = vsel %vm1361, %v1306, 0
        %v1369 = vsel %vm1361, %v1307, 0
        %v1372 = vsel %vm1361, %v1308, 0
        %v1375 = vsel %vm1361, %v1309, 0
        %v1378 = vsel %vm1361, %v1310, 0
        %v1381 = vsel %vm1361, %v1311, 0
        %v1384 = vsel %vm1361, %v1312, 0
        %v1387 = vsel %vm1361, %v1313, 0
        %v1390 = vsel %vm1361, %v1314, 0
        %v1393 = vsel %vm1361, %v1315, 0
        %v1396 = vsel %vm1361, %v1316, 0
        %v1399 = vsel %vm1361, %v1317, 0
        %v1402 = vsel %vm1361, %v1318, 0
        %v1405 = vsel %vm1361, %v1319, 0
        %v1408 = vsel %vm1361, %v1320, 0
        %v1411 = vsel %vm1361, %v1321, 0
        %v1414 = vsel %vm1361, %v1322, 0
        %v1417 = vsel %vm1361, %v1323, 0
        %v1420 = vsel %vm1361, %v1324, 0
        %v1423 = vsel %vm1361, %v1325, 0
        %v1426 = vsel %vm1361, %v1326, 0
        %v1429 = vsel %vm1361, %v1327, 0
        %v1432 = vsel %vm1361, %v1328, 0
        %1434 = vmatprep.subr.mxu0 0.0
        %1435 = vmatpush1.xpose.msra.mxu0 %v1387
        %1436 = vmatprep.subr.mxu0 0.0
        %1437 = vmatpush1.xpose.msra.mxu0 %v1390
        %1438 = vmatprep.subr.mxu0 0.0
        %1439 = vmatpush1.xpose.msra.mxu0 %v1393
        %1440 = vmatprep.subr.mxu0 0.0
        %1441 = vmatpush1.xpose.msra.mxu0 %v1396
        %1442 = vmatprep.subr.mxu0 0.0
        %1443 = vmatpush1.xpose.msra.mxu0 %v1399
        %1444 = vmatprep.subr.mxu0 0.0
        %1445 = vmatpush1.xpose.msra.mxu0 %v1402
        %1446 = vmatprep.subr.mxu0 0.0
        %1447 = vmatpush1.xpose.msra.mxu0 %v1405
        %1448 = vmatprep.subr.mxu0 0.0
        %1449 = vmatpush1.xpose.msra.mxu0 %v1408
        %1450 = vmatprep.subr.mxu0 0.0
        %1451 = vmatpush1.xpose.msra.mxu0 %v1411
        %1452 = vmatprep.subr.mxu0 0.0
        %1453 = vmatpush1.xpose.msra.mxu0 %v1414
        %1454 = vmatprep.subr.mxu0 0.0
        %1455 = vmatpush1.xpose.msra.mxu0 %v1417
        %1456 = vmatprep.subr.mxu0 0.0
        %1457 = vmatpush1.xpose.msra.mxu0 %v1420
        %1458 = vmatprep.subr.mxu0 0.0
        %1459 = vmatpush1.xpose.msra.mxu0 %v1423
        %1460 = vmatprep.subr.mxu0 0.0
        %1461 = vmatpush1.xpose.msra.mxu0 %v1426
        %1462 = vmatprep.subr.mxu0 0.0
        %1463 = vmatpush1.xpose.msra.mxu0 %v1429
        %1464 = vmatprep.subr.mxu0 0.0
        %1465 = vmatpush1.xpose.msra.mxu0 %v1432
        %1466 = vmatprep.subr.mxu0 0.0
        %1467 = vmatpush1.xpose.msra.mxu0 0.0
        %1468 = vmatprep.subr.mxu0 0.0
        %1469 = vmatpush1.xpose.msra.mxu0 0.0
        %1470 = vmatprep.subr.mxu0 0.0
        %1471 = vmatpush1.xpose.msra.mxu0 0.0
        %1472 = vmatprep.subr.mxu0 0.0
        %1473 = vmatpush1.xpose.msra.mxu0 0.0
        %1474 = vmatprep.subr.mxu0 0.0
        %1475 = vmatpush1.xpose.msra.mxu0 0.0
        %1476 = vmatprep.subr.mxu0 0.0
        %1477 = vmatpush1.xpose.msra.mxu0 0.0
        %1478 = vmatprep.subr.mxu0 0.0
        %1479 = vmatpush1.xpose.msra.mxu0 0.0
        %1480 = vmatprep.subr.mxu0 0.0
        %1481 = vmatpush1.xpose.msra.mxu0 0.0
        %1482 = vmatprep.subr.mxu0 0.0
        %1483 = vmatpush1.xpose.msra.mxu0 0.0
        %1484 = vmatprep.subr.mxu0 0.0
        %1485 = vmatpush1.xpose.msra.mxu0 0.0
        %1486 = vmatprep.subr.mxu0 0.0
        %1487 = vmatpush1.xpose.msra.mxu0 0.0
        %1488 = vmatprep.subr.mxu0 0.0
        %1489 = vmatpush1.xpose.msra.mxu0 0.0
        %1490 = vmatprep.subr.mxu0 0.0
        %1491 = vmatpush1.xpose.msra.mxu0 0.0
        %1492 = vmatprep.subr.mxu0 0.0
        %1493 = vmatpush1.xpose.msra.mxu0 0.0
        %1494 = vmatprep.subr.mxu0 0.0
        %1495 = vmatpush1.xpose.msra.mxu0 0.0
        %1496 = vmatprep.subr.mxu0 0.0
        %1497 = vmatpush1.xpose.msra.mxu0 0.0
        %1498 = vmatprep.mubr.f32.mxu0 0.0
        %1499 = vmatmul.mubr.f32.gmra.mrb[0].mxu0 %v1363
        %v1500 = vpop.f32.mrb[0].mxu0
        %v1501 = vadd.f32 0.0, %v1500
        %v1502 = vpop.f32.mrb[0].mxu0
        %1503 = vmatprep.mubr.f32.mxu0 0.0
        %1504 = vmatmul.mubr.f32.gmra.mrb[0].mxu0 %v1366
        %v1505 = vpop.f32.mrb[0].mxu0
        %v1506 = vadd.f32 0.0, %v1505
        %v1507 = vpop.f32.mrb[0].mxu0
        %1508 = vmatprep.mubr.f32.mxu0 0.0
        %1509 = vmatmul.mubr.f32.gmra.mrb[0].mxu0 %v1369
        %v1510 = vpop.f32.mrb[0].mxu0
        %v1511 = vadd.f32 0.0, %v1510
        %v1512 = vpop.f32.mrb[0].mxu0
        %1513 = vmatprep.mubr.f32.mxu0 0.0
        %1514 = vmatmul.mubr.f32.gmra.mrb[0].mxu0 %v1372
        %v1515 = vpop.f32.mrb[0].mxu0
        %v1516 = vadd.f32 0.0, %v1515
        %v1517 = vpop.f32.mrb[0].mxu0
        %1518 = vmatprep.mubr.f32.mxu0 0.0
        %1519 = vmatmul.mubr.f32.gmra.mrb[0].mxu0 %v1375
        %v1520 = vpop.f32.mrb[0].mxu0
        %v1521 = vadd.f32 0.0, %v1520
        %v1522 = vpop.f32.mrb[0].mxu0
        %1523 = vmatprep.mubr.f32.mxu0 0.0
        %1524 = vmatmul.mubr.f32.gmra.mrb[0].mxu0 %v1378
        %v1525 = vpop.f32.mrb[0].mxu0
        %v1526 = vadd.f32 0.0, %v1525
        %v1527 = vpop.f32.mrb[0].mxu0
        %1528 = vmatprep.mubr.f32.mxu0 0.0
        %1529 = vmatmul.mubr.f32.gmra.mrb[0].mxu0 %v1381
        %v1530 = vpop.f32.mrb[0].mxu0
        %v1531 = vadd.f32 0.0, %v1530
        %v1532 = vpop.f32.mrb[0].mxu0
        %1533 = vmatprep.mubr.f32.mxu0 0.0
        %1534 = vmatmul.mubr.f32.gmra.mrb[0].mxu0 %v1384
        %v1535 = vpop.f32.mrb[0].mxu0
        %v1536 = vadd.f32 0.0, %v1535
        %v1537 = vpop.f32.mrb[0].mxu0
        %1538 = vdwg.mxu0
        %v1539 = vmul.f32 %v1501, 0.17677669
        %v1540 = vmul.f32 %v1506, 0.17677669
        %v1541 = vmul.f32 %v1511, 0.17677669
        %v1542 = vmul.f32 %v1516, 0.17677669
        %v1543 = vmul.f32 %v1521, 0.17677669
        %v1544 = vmul.f32 %v1526, 0.17677669
        %v1545 = vmul.f32 %v1531, 0.17677669
        %v1546 = vmul.f32 %v1536, 0.17677669
        %1547 = vmax.xlane.f32.xlu0 %v1539
        %v1548 = vpop.xlane.xlu0 %1547
        %1549 = vmax.xlane.f32.xlu0 %v1540
        %v1550 = vpop.xlane.xlu0 %1549
        %1551 = vmax.xlane.f32.xlu0 %v1541
        %v1552 = vpop.xlane.xlu0 %1551
        %1553 = vmax.xlane.f32.xlu0 %v1542
        %v1554 = vpop.xlane.xlu0 %1553
        %1555 = vmax.xlane.f32.xlu0 %v1543
        %v1556 = vpop.xlane.xlu0 %1555
        %1557 = vmax.xlane.f32.xlu0 %v1544
        %v1558 = vpop.xlane.xlu0 %1557
        %1559 = vmax.xlane.f32.xlu0 %v1545
        %v1560 = vpop.xlane.xlu0 %1559
        %1561 = vmax.xlane.f32.xlu0 %v1546
        %v1562 = vpop.xlane.xlu0 %1561
        %v1563 = vsub.f32 %v1539, %v1548
        %v1564 = vsub.f32 %v1540, %v1550
        %v1565 = vsub.f32 %v1541, %v1552
        %v1566 = vsub.f32 %v1542, %v1554
        %v1567 = vsub.f32 %v1543, %v1556
        %v1568 = vsub.f32 %v1544, %v1558
        %v1569 = vsub.f32 %v1545, %v1560
        %v1570 = vsub.f32 %v1546, %v1562
        %v1571 = vmul.f32 %v1563, 1.442695
        %v1572 = vpow.pop %v1571
        %v1573 = vmul.f32 %v1564, 1.442695
        %v1574 = vpow.pop %v1573
        %v1575 = vmul.f32 %v1565, 1.442695
        %v1576 = vpow.pop %v1575
        %v1577 = vmul.f32 %v1566, 1.442695
        %v1578 = vpow.pop %v1577
        %v1579 = vmul.f32 %v1567, 1.442695
        %v1580 = vpow.pop %v1579
        %v1581 = vmul.f32 %v1568, 1.442695
        %v1582 = vpow.pop %v1581
        %v1583 = vmul.f32 %v1569, 1.442695
        %v1584 = vpow.pop %v1583
        %v1585 = vmul.f32 %v1570, 1.442695
        %v1586 = vpow.pop %v1585
        %1587 = vadd.xlane.f32.xlu0 %v1572
        %v1588 = vpop.xlane.xlu0 %1587
        %1589 = vadd.xlane.f32.xlu0 %v1574
        %v1590 = vpop.xlane.xlu0 %1589
        %1591 = vadd.xlane.f32.xlu0 %v1576
        %v1592 = vpop.xlane.xlu0 %1591
        %1593 = vadd.xlane.f32.xlu0 %v1578
        %v1594 = vpop.xlane.xlu0 %1593
        %1595 = vadd.xlane.f32.xlu0 %v1580
        %v1596 = vpop.xlane.xlu0 %1595
        %1597 = vadd.xlane.f32.xlu0 %v1582
        %v1598 = vpop.xlane.xlu0 %1597
        %1599 = vadd.xlane.f32.xlu0 %v1584
        %v1600 = vpop.xlane.xlu0 %1599
        %1601 = vadd.xlane.f32.xlu0 %v1586
        %v1602 = vpop.xlane.xlu0 %1601
        %1603 = vmatprep.subr.mxu0 0.0
        %1604 = vmatpush1.msra.mxu0 %v1329
        %1605 = vmatprep.subr.mxu0 0.0
        %1606 = vmatpush1.msra.mxu0 %v1330
        %1607 = vmatprep.subr.mxu0 0.0
        %1608 = vmatpush1.msra.mxu0 %v1331
        %1609 = vmatprep.subr.mxu0 0.0
        %1610 = vmatpush1.msra.mxu0 %v1332
        %1611 = vmatprep.subr.mxu0 0.0
        %1612 = vmatpush1.msra.mxu0 %v1333
        %1613 = vmatprep.subr.mxu0 0.0
        %1614 = vmatpush1.msra.mxu0 %v1334
        %1615 = vmatprep.subr.mxu0 0.0
        %1616 = vmatpush1.msra.mxu0 %v1335
        %1617 = vmatprep.subr.mxu0 0.0
        %1618 = vmatpush1.msra.mxu0 %v1336
        %1619 = vmatprep.subr.mxu0 0.0
        %1620 = vmatpush1.msra.mxu0 %v1337
        %1621 = vmatprep.subr.mxu0 0.0
        %1622 = vmatpush1.msra.mxu0 %v1338
        %1623 = vmatprep.subr.mxu0 0.0
        %1624 = vmatpush1.msra.mxu0 %v1339
        %1625 = vmatprep.subr.mxu0 0.0
        %1626 = vmatpush1.msra.mxu0 %v1340
        %1627 = vmatprep.subr.mxu0 0.0
        %1628 = vmatpush1.msra.mxu0 %v1341
        %1629 = vmatprep.subr.mxu0 0.0
        %1630 = vmatpush1.msra.mxu0 %v1342
        %1631 = vmatprep.subr.mxu0 0.0
        %1632 = vmatpush1.msra.mxu0 %v1343
        %1633 = vmatprep.subr.mxu0 0.0
        %1634 = vmatpush1.msra.mxu0 %v1344
        %1635 = vmatprep.subr.mxu0 0.0
        %1636 = vmatpush1.msra.mxu0 0.0
        %1637 = vmatprep.subr.mxu0 0.0
        %1638 = vmatpush1.msra.mxu0 0.0
        %1639 = vmatprep.subr.mxu0 0.0
        %1640 = vmatpush1.msra.mxu0 0.0
        %1641 = vmatprep.subr.mxu0 0.0
        %1642 = vmatpush1.msra.mxu0 0.0
        %1643 = vmatprep.subr.mxu0 0.0
        %1644 = vmatpush1.msra.mxu0 0.0
        %1645 = vmatprep.subr.mxu0 0.0
        %1646 = vmatpush1.msra.mxu0 0.0
        %1647 = vmatprep.subr.mxu0 0.0
        %1648 = vmatpush1.msra.mxu0 0.0
        %1649 = vmatprep.subr.mxu0 0.0
        %1650 = vmatpush1.msra.mxu0 0.0
        %1651 = vmatprep.subr.mxu0 0.0
        %1652 = vmatpush1.msra.mxu0 0.0
        %1653 = vmatprep.subr.mxu0 0.0
        %1654 = vmatpush1.msra.mxu0 0.0
        %1655 = vmatprep.subr.mxu0 0.0
        %1656 = vmatpush1.msra.mxu0 0.0
        %1657 = vmatprep.subr.mxu0 0.0
        %1658 = vmatpush1.msra.mxu0 0.0
        %1659 = vmatprep.subr.mxu0 0.0
        %1660 = vmatpush1.msra.mxu0 0.0
        %1661 = vmatprep.subr.mxu0 0.0
        %1662 = vmatpush1.msra.mxu0 0.0
        %1663 = vmatprep.subr.mxu0 0.0
        %1664 = vmatpush1.msra.mxu0 0.0
        %1665 = vmatprep.subr.mxu0 0.0
        %1666 = vmatpush1.msra.mxu0 0.0
        %1667 = vmatprep.mubr.f32.mxu0 0.0
        %1668 = vmatmul.mubr.f32.gmra.mrb[0].mxu0 %v1572
        %v1669 = vpop.f32.mrb[0].mxu0
        %v1670 = vadd.f32 0.0, %v1669
        %v1671 = vpop.f32.mrb[0].mxu0
        %1672 = vmatprep.mubr.f32.mxu0 0.0
        %1673 = vmatmul.mubr.f32.gmra.mrb[0].mxu0 %v1574
        %v1674 = vpop.f32.mrb[0].mxu0
        %v1675 = vadd.f32 0.0, %v1674
        %v1676 = vpop.f32.mrb[0].mxu0
        %1677 = vmatprep.mubr.f32.mxu0 0.0
        %1678 = vmatmul.mubr.f32.gmra.mrb[0].mxu0 %v1576
        %v1679 = vpop.f32.mrb[0].mxu0
        %v1680 = vadd.f32 0.0, %v1679
        %v1681 = vpop.f32.mrb[0].mxu0
        %1682 = vmatprep.mubr.f32.mxu0 0.0
        %1683 = vmatmul.mubr.f32.gmra.mrb[0].mxu0 %v1578
        %v1684 = vpop.f32.mrb[0].mxu0
        %v1685 = vadd.f32 0.0, %v1684
        %v1686 = vpop.f32.mrb[0].mxu0
        %1687 = vmatprep.mubr.f32.mxu0 0.0
        %1688 = vmatmul.mubr.f32.gmra.mrb[0].mxu0 %v1580
        %v1689 = vpop.f32.mrb[0].mxu0
        %v1690 = vadd.f32 0.0, %v1689
        %v1691 = vpop.f32.mrb[0].mxu0
        %1692 = vmatprep.mubr.f32.mxu0 0.0
        %1693 = vmatmul.mubr.f32.gmra.mrb[0].mxu0 %v1582
        %v1694 = vpop.f32.mrb[0].mxu0
        %v1695 = vadd.f32 0.0, %v1694
        %v1696 = vpop.f32.mrb[0].mxu0
        %1697 = vmatprep.mubr.f32.mxu0 0.0
        %1698 = vmatmul.mubr.f32.gmra.mrb[0].mxu0 %v1584
        %v1699 = vpop.f32.mrb[0].mxu0
        %v1700 = vadd.f32 0.0, %v1699
        %v1701 = vpop.f32.mrb[0].mxu0
        %1702 = vmatprep.mubr.f32.mxu0 0.0
        %1703 = vmatmul.mubr.f32.gmra.mrb[0].mxu0 %v1586
        %v1704 = vpop.f32.mrb[0].mxu0
        %v1705 = vadd.f32 0.0, %v1704
        %v1706 = vpop.f32.mrb[0].mxu0
        %1707 = vdwg.mxu0
        %v1708 = vrcp.pop %v1588
        %v1709 = vrcp.pop %v1590
        %v1710 = vrcp.pop %v1592
        %v1711 = vrcp.pop %v1594
        %v1712 = vrcp.pop %v1596
        %v1713 = vrcp.pop %v1598
        %v1714 = vrcp.pop %v1600
        %v1715 = vrcp.pop %v1602
        %v1716 = vmul.f32 %v1670, %v1708
        %v1717 = vmul.f32 %v1675, %v1709
        %v1718 = vmul.f32 %v1680, %v1710
        %v1719 = vmul.f32 %v1685, %v1711
        %v1720 = vmul.f32 %v1690, %v1712
        %v1721 = vmul.f32 %v1695, %v1713
        %v1722 = vmul.f32 %v1700, %v1714
        %v1723 = vmul.f32 %v1705, %v1715
        %1724 = vrot.lane.b32.xlu0 %v1305, 96
        %v1725 = vpop.permute.xlu0 %1724
        %1726 = vrot.lane.b32.xlu0 %v1306, 96
        %v1727 = vpop.permute.xlu0 %1726
        %1728 = vrot.lane.b32.xlu0 %v1307, 96
        %v1729 = vpop.permute.xlu0 %1728
        %1730 = vrot.lane.b32.xlu0 %v1308, 96
        %v1731 = vpop.permute.xlu0 %1730
        %1732 = vrot.lane.b32.xlu0 %v1309, 96
        %v1733 = vpop.permute.xlu0 %1732
        %1734 = vrot.lane.b32.xlu0 %v1310, 96
        %v1735 = vpop.permute.xlu0 %1734
        %1736 = vrot.lane.b32.xlu0 %v1311, 96
        %v1737 = vpop.permute.xlu0 %1736
        %1738 = vrot.lane.b32.xlu0 %v1312, 96
        %v1739 = vpop.permute.xlu0 %1738
        %1740 = vrot.lane.b32.xlu0 %v1313, 96
        %v1741 = vpop.permute.xlu0 %1740
        %1742 = vrot.lane.b32.xlu0 %v1314, 96
        %v1743 = vpop.permute.xlu0 %1742
        %1744 = vrot.lane.b32.xlu0 %v1315, 96
        %v1745 = vpop.permute.xlu0 %1744
        %1746 = vrot.lane.b32.xlu0 %v1316, 96
        %v1747 = vpop.permute.xlu0 %1746
        %1748 = vrot.lane.b32.xlu0 %v1317, 96
        %v1749 = vpop.permute.xlu0 %1748
        %1750 = vrot.lane.b32.xlu0 %v1318, 96
        %v1751 = vpop.permute.xlu0 %1750
        %1752 = vrot.lane.b32.xlu0 %v1319, 96
        %v1753 = vpop.permute.xlu0 %1752
        %1754 = vrot.lane.b32.xlu0 %v1320, 96
        %v1755 = vpop.permute.xlu0 %1754
        %1756 = vrot.lane.b32.xlu0 %v1321, 96
        %v1757 = vpop.permute.xlu0 %1756
        %1758 = vrot.lane.b32.xlu0 %v1322, 96
        %v1759 = vpop.permute.xlu0 %1758
        %1760 = vrot.lane.b32.xlu0 %v1323, 96
        %v1761 = vpop.permute.xlu0 %1760
        %1762 = vrot.lane.b32.xlu0 %v1324, 96
        %v1763 = vpop.permute.xlu0 %1762
        %1764 = vrot.lane.b32.xlu0 %v1325, 96
        %v1765 = vpop.permute.xlu0 %1764
        %1766 = vrot.lane.b32.xlu0 %v1326, 96
        %v1767 = vpop.permute.xlu0 %1766
        %1768 = vrot.lane.b32.xlu0 %v1327, 96
        %v1769 = vpop.permute.xlu0 %1768
        %1770 = vrot.lane.b32.xlu0 %v1328, 96
        %v1771 = vpop.permute.xlu0 %1770
        %v1772 = vsel %vm1361, %v1725, 0
        %v1774 = vsel %vm1361, %v1727, 0
        %v1776 = vsel %vm1361, %v1729, 0
        %v1778 = vsel %vm1361, %v1731, 0
        %v1780 = vsel %vm1361, %v1733, 0
        %v1782 = vsel %vm1361, %v1735, 0
        %v1784 = vsel %vm1361, %v1737, 0
        %v1786 = vsel %vm1361, %v1739, 0
        %v1788 = vsel %vm1361, %v1741, 0
        %v1790 = vsel %vm1361, %v1743, 0
        %v1792 = vsel %vm1361, %v1745, 0
        %v1794 = vsel %vm1361, %v1747, 0
        %v1796 = vsel %vm1361, %v1749, 0
        %v1798 = vsel %vm1361, %v1751, 0
        %v1800 = vsel %vm1361, %v1753, 0
        %v1802 = vsel %vm1361, %v1755, 0
        %v1804 = vsel %vm1361, %v1757, 0
        %v1806 = vsel %vm1361, %v1759, 0
        %v1808 = vsel %vm1361, %v1761, 0
        %v1810 = vsel %vm1361, %v1763, 0
        %v1812 = vsel %vm1361, %v1765, 0
        %v1814 = vsel %vm1361, %v1767, 0
        %v1816 = vsel %vm1361, %v1769, 0
        %v1818 = vsel %vm1361, %v1771, 0
        %1820 = vmatprep.subr.mxu0 0.0
        %1821 = vmatpush1.xpose.msra.mxu0 %v1788
        %1822 = vmatprep.subr.mxu0 0.0
        %1823 = vmatpush1.xpose.msra.mxu0 %v1790
        %1824 = vmatprep.subr.mxu0 0.0
        %1825 = vmatpush1.xpose.msra.mxu0 %v1792
        %1826 = vmatprep.subr.mxu0 0.0
        %1827 = vmatpush1.xpose.msra.mxu0 %v1794
        %1828 = vmatprep.subr.mxu0 0.0
        %1829 = vmatpush1.xpose.msra.mxu0 %v1796
        %1830 = vmatprep.subr.mxu0 0.0
        %1831 = vmatpush1.xpose.msra.mxu0 %v1798
        %1832 = vmatprep.subr.mxu0 0.0
        %1833 = vmatpush1.xpose.msra.mxu0 %v1800
        %1834 = vmatprep.subr.mxu0 0.0
        %1835 = vmatpush1.xpose.msra.mxu0 %v1802
        %1836 = vmatprep.subr.mxu0 0.0
        %1837 = vmatpush1.xpose.msra.mxu0 %v1804
        %1838 = vmatprep.subr.mxu0 0.0
        %1839 = vmatpush1.xpose.msra.mxu0 %v1806
        %1840 = vmatprep.subr.mxu0 0.0
        %1841 = vmatpush1.xpose.msra.mxu0 %v1808
        %1842 = vmatprep.subr.mxu0 0.0
        %1843 = vmatpush1.xpose.msra.mxu0 %v1810
        %1844 = vmatprep.subr.mxu0 0.0
        %1845 = vmatpush1.xpose.msra.mxu0 %v1812
        %1846 = vmatprep.subr.mxu0 0.0
        %1847 = vmatpush1.xpose.msra.mxu0 %v1814
        %1848 = vmatprep.subr.mxu0 0.0
        %1849 = vmatpush1.xpose.msra.mxu0 %v1816
        %1850 = vmatprep.subr.mxu0 0.0
        %1851 = vmatpush1.xpose.msra.mxu0 %v1818
        %1852 = vmatprep.subr.mxu0 0.0
        %1853 = vmatpush1.xpose.msra.mxu0 0.0
        %1854 = vmatprep.subr.mxu0 0.0
        %1855 = vmatpush1.xpose.msra.mxu0 0.0
        %1856 = vmatprep.subr.mxu0 0.0
        %1857 = vmatpush1.xpose.msra.mxu0 0.0
        %1858 = vmatprep.subr.mxu0 0.0
        %1859 = vmatpush1.xpose.msra.mxu0 0.0
        %1860 = vmatprep.subr.mxu0 0.0
        %1861 = vmatpush1.xpose.msra.mxu0 0.0
        %1862 = vmatprep.subr.mxu0 0.0
        %1863 = vmatpush1.xpose.msra.mxu0 0.0
        %1864 = vmatprep.subr.mxu0 0.0
        %1865 = vmatpush1.xpose.msra.mxu0 0.0
        %1866 = vmatprep.subr.mxu0 0.0
        %1867 = vmatpush1.xpose.msra.mxu0 0.0
        %1868 = vmatprep.subr.mxu0 0.0
        %1869 = vmatpush1.xpose.msra.mxu0 0.0
        %1870 = vmatprep.subr.mxu0 0.0
        %1871 = vmatpush1.xpose.msra.mxu0 0.0
        %1872 = vmatprep.subr.mxu0 0.0
        %1873 = vmatpush1.xpose.msra.mxu0 0.0
        %1874 = vmatprep.subr.mxu0 0.0
        %1875 = vmatpush1.xpose.msra.mxu0 0.0
        %1876 = vmatprep.subr.mxu0 0.0
        %1877 = vmatpush1.xpose.msra.mxu0 0.0
        %1878 = vmatprep.subr.mxu0 0.0
        %1879 = vmatpush1.xpose.msra.mxu0 0.0
        %1880 = vmatprep.subr.mxu0 0.0
        %1881 = vmatpush1.xpose.msra.mxu0 0.0
        %1882 = vmatprep.subr.mxu0 0.0
        %1883 = vmatpush1.xpose.msra.mxu0 0.0
        %1884 = vmatprep.mubr.f32.mxu0 0.0
        %1885 = vmatmul.mubr.f32.gmra.mrb[0].mxu0 %v1772
        %v1886 = vpop.f32.mrb[0].mxu0
        %v1887 = vadd.f32 0.0, %v1886
        %v1888 = vpop.f32.mrb[0].mxu0
        %1889 = vmatprep.mubr.f32.mxu0 0.0
        %1890 = vmatmul.mubr.f32.gmra.mrb[0].mxu0 %v1774
        %v1891 = vpop.f32.mrb[0].mxu0
        %v1892 = vadd.f32 0.0, %v1891
        %v1893 = vpop.f32.mrb[0].mxu0
        %1894 = vmatprep.mubr.f32.mxu0 0.0
        %1895 = vmatmul.mubr.f32.gmra.mrb[0].mxu0 %v1776
        %v1896 = vpop.f32.mrb[0].mxu0
        %v1897 = vadd.f32 0.0, %v1896
        %v1898 = vpop.f32.mrb[0].mxu0
        %1899 = vmatprep.mubr.f32.mxu0 0.0
        %1900 = vmatmul.mubr.f32.gmra.mrb[0].mxu0 %v1778
        %v1901 = vpop.f32.mrb[0].mxu0
        %v1902 = vadd.f32 0.0, %v1901
        %v1903 = vpop.f32.mrb[0].mxu0
        %1904 = vmatprep.mubr.f32.mxu0 0.0
        %1905 = vmatmul.mubr.f32.gmra.mrb[0].mxu0 %v1780
        %v1906 = vpop.f32.mrb[0].mxu0
        %v1907 = vadd.f32 0.0, %v1906
        %v1908 = vpop.f32.mrb[0].mxu0
        %1909 = vmatprep.mubr.f32.mxu0 0.0
        %1910 = vmatmul.mubr.f32.gmra.mrb[0].mxu0 %v1782
        %v1911 = vpop.f32.mrb[0].mxu0
        %v1912 = vadd.f32 0.0, %v1911
        %v1913 = vpop.f32.mrb[0].mxu0
        %1914 = vmatprep.mubr.f32.mxu0 0.0
        %1915 = vmatmul.mubr.f32.gmra.mrb[0].mxu0 %v1784
        %v1916 = vpop.f32.mrb[0].mxu0
        %v1917 = vadd.f32 0.0, %v1916
        %v1918 = vpop.f32.mrb[0].mxu0
        %1919 = vmatprep.mubr.f32.mxu0 0.0
        %1920 = vmatmul.mubr.f32.gmra.mrb[0].mxu0 %v1786
        %v1921 = vpop.f32.mrb[0].mxu0
        %v1922 = vadd.f32 0.0, %v1921
        %v1923 = vpop.f32.mrb[0].mxu0
        %1924 = vdwg.mxu0
        %v1925 = vmul.f32 %v1887, 0.17677669
        %v1926 = vmul.f32 %v1892, 0.17677669
        %v1927 = vmul.f32 %v1897, 0.17677669
        %v1928 = vmul.f32 %v1902, 0.17677669
        %v1929 = vmul.f32 %v1907, 0.17677669
        %v1930 = vmul.f32 %v1912, 0.17677669
        %v1931 = vmul.f32 %v1917, 0.17677669
        %v1932 = vmul.f32 %v1922, 0.17677669
        %1933 = vmax.xlane.f32.xlu0 %v1925
        %v1934 = vpop.xlane.xlu0 %1933
        %1935 = vmax.xlane.f32.xlu0 %v1926
        %v1936 = vpop.xlane.xlu0 %1935
        %1937 = vmax.xlane.f32.xlu0 %v1927
        %v1938 = vpop.xlane.xlu0 %1937
        %1939 = vmax.xlane.f32.xlu0 %v1928
        %v1940 = vpop.xlane.xlu0 %1939
        %1941 = vmax.xlane.f32.xlu0 %v1929
        %v1942 = vpop.xlane.xlu0 %1941
        %1943 = vmax.xlane.f32.xlu0 %v1930
        %v1944 = vpop.xlane.xlu0 %1943
        %1945 = vmax.xlane.f32.xlu0 %v1931
        %v1946 = vpop.xlane.xlu0 %1945
        %1947 = vmax.xlane.f32.xlu0 %v1932
        %v1948 = vpop.xlane.xlu0 %1947
        %v1949 = vsub.f32 %v1925, %v1934
        %v1950 = vsub.f32 %v1926, %v1936
        %v1951 = vsub.f32 %v1927, %v1938
        %v1952 = vsub.f32 %v1928, %v1940
        %v1953 = vsub.f32 %v1929, %v1942
        %v1954 = vsub.f32 %v1930, %v1944
        %v1955 = vsub.f32 %v1931, %v1946
        %v1956 = vsub.f32 %v1932, %v1948
        %v1957 = vmul.f32 %v1949, 1.442695
        %v1958 = vpow.pop %v1957
        %v1959 = vmul.f32 %v1950, 1.442695
        %v1960 = vpow.pop %v1959
        %v1961 = vmul.f32 %v1951, 1.442695
        %v1962 = vpow.pop %v1961
        %v1963 = vmul.f32 %v1952, 1.442695
        %v1964 = vpow.pop %v1963
        %v1965 = vmul.f32 %v1953, 1.442695
        %v1966 = vpow.pop %v1965
        %v1967 = vmul.f32 %v1954, 1.442695
        %v1968 = vpow.pop %v1967
        %v1969 = vmul.f32 %v1955, 1.442695
        %v1970 = vpow.pop %v1969
        %v1971 = vmul.f32 %v1956, 1.442695
        %v1972 = vpow.pop %v1971
        %1973 = vadd.xlane.f32.xlu0 %v1958
        %v1974 = vpop.xlane.xlu0 %1973
        %1975 = vadd.xlane.f32.xlu0 %v1960
        %v1976 = vpop.xlane.xlu0 %1975
        %1977 = vadd.xlane.f32.xlu0 %v1962
        %v1978 = vpop.xlane.xlu0 %1977
        %1979 = vadd.xlane.f32.xlu0 %v1964
        %v1980 = vpop.xlane.xlu0 %1979
        %1981 = vadd.xlane.f32.xlu0 %v1966
        %v1982 = vpop.xlane.xlu0 %1981
        %1983 = vadd.xlane.f32.xlu0 %v1968
        %v1984 = vpop.xlane.xlu0 %1983
        %1985 = vadd.xlane.f32.xlu0 %v1970
        %v1986 = vpop.xlane.xlu0 %1985
        %1987 = vadd.xlane.f32.xlu0 %v1972
        %v1988 = vpop.xlane.xlu0 %1987
        %2005 = vrot.lane.b32.xlu0 %v1329, 96
        %v2006 = vpop.permute.xlu0 %2005
        %2007 = vrot.lane.b32.xlu0 %v1330, 96
        %v2008 = vpop.permute.xlu0 %2007
        %2009 = vrot.lane.b32.xlu0 %v1331, 96
        %v2010 = vpop.permute.xlu0 %2009
        %2011 = vrot.lane.b32.xlu0 %v1332, 96
        %v2012 = vpop.permute.xlu0 %2011
        %2013 = vrot.lane.b32.xlu0 %v1333, 96
        %v2014 = vpop.permute.xlu0 %2013
        %2015 = vrot.lane.b32.xlu0 %v1334, 96
        %v2016 = vpop.permute.xlu0 %2015
        %2017 = vrot.lane.b32.xlu0 %v1335, 96
        %v2018 = vpop.permute.xlu0 %2017
        %2019 = vrot.lane.b32.xlu0 %v1336, 96
        %v2020 = vpop.permute.xlu0 %2019
        %2021 = vrot.lane.b32.xlu0 %v1337, 96
        %v2022 = vpop.permute.xlu0 %2021
        %2023 = vrot.lane.b32.xlu0 %v1338, 96
        %v2024 = vpop.permute.xlu0 %2023
        %2025 = vrot.lane.b32.xlu0 %v1339, 96
        %v2026 = vpop.permute.xlu0 %2025
        %2027 = vrot.lane.b32.xlu0 %v1340, 96
        %v2028 = vpop.permute.xlu0 %2027
        %2029 = vrot.lane.b32.xlu0 %v1341, 96
        %v2030 = vpop.permute.xlu0 %2029
        %2031 = vrot.lane.b32.xlu0 %v1342, 96
        %v2032 = vpop.permute.xlu0 %2031
        %2033 = vrot.lane.b32.xlu0 %v1343, 96
        %v2034 = vpop.permute.xlu0 %2033
        %2035 = vrot.lane.b32.xlu0 %v1344, 96
        %v2036 = vpop.permute.xlu0 %2035
        %2053 = vmatprep.subr.mxu0 0.0
        %2054 = vmatpush1.msra.mxu0 %v2006
        %2055 = vmatprep.subr.mxu0 0.0
        %2056 = vmatpush1.msra.mxu0 %v2008
        %2057 = vmatprep.subr.mxu0 0.0
        %2058 = vmatpush1.msra.mxu0 %v2010
        %2059 = vmatprep.subr.mxu0 0.0
        %2060 = vmatpush1.msra.mxu0 %v2012
        %2061 = vmatprep.subr.mxu0 0.0
        %2062 = vmatpush1.msra.mxu0 %v2014
        %2063 = vmatprep.subr.mxu0 0.0
        %2064 = vmatpush1.msra.mxu0 %v2016
        %2065 = vmatprep.subr.mxu0 0.0
        %2066 = vmatpush1.msra.mxu0 %v2018
        %2067 = vmatprep.subr.mxu0 0.0
        %2068 = vmatpush1.msra.mxu0 %v2020
        %2069 = vmatprep.subr.mxu0 0.0
        %2070 = vmatpush1.msra.mxu0 %v2022
        %2071 = vmatprep.subr.mxu0 0.0
        %2072 = vmatpush1.msra.mxu0 %v2024
        %2073 = vmatprep.subr.mxu0 0.0
        %2074 = vmatpush1.msra.mxu0 %v2026
        %2075 = vmatprep.subr.mxu0 0.0
        %2076 = vmatpush1.msra.mxu0 %v2028
        %2077 = vmatprep.subr.mxu0 0.0
        %2078 = vmatpush1.msra.mxu0 %v2030
        %2079 = vmatprep.subr.mxu0 0.0
        %2080 = vmatpush1.msra.mxu0 %v2032
        %2081 = vmatprep.subr.mxu0 0.0
        %2082 = vmatpush1.msra.mxu0 %v2034
        %2083 = vmatprep.subr.mxu0 0.0
        %2084 = vmatpush1.msra.mxu0 %v2036
        %2085 = vmatprep.subr.mxu0 0.0
        %2086 = vmatpush1.msra.mxu0 0.0
        %2087 = vmatprep.subr.mxu0 0.0
        %2088 = vmatpush1.msra.mxu0 0.0
        %2089 = vmatprep.subr.mxu0 0.0
        %2090 = vmatpush1.msra.mxu0 0.0
        %2091 = vmatprep.subr.mxu0 0.0
        %2092 = vmatpush1.msra.mxu0 0.0
        %2093 = vmatprep.subr.mxu0 0.0
        %2094 = vmatpush1.msra.mxu0 0.0
        %2095 = vmatprep.subr.mxu0 0.0
        %2096 = vmatpush1.msra.mxu0 0.0
        %2097 = vmatprep.subr.mxu0 0.0
        %2098 = vmatpush1.msra.mxu0 0.0
        %2099 = vmatprep.subr.mxu0 0.0
        %2100 = vmatpush1.msra.mxu0 0.0
        %2101 = vmatprep.subr.mxu0 0.0
        %2102 = vmatpush1.msra.mxu0 0.0
        %2103 = vmatprep.subr.mxu0 0.0
        %2104 = vmatpush1.msra.mxu0 0.0
        %2105 = vmatprep.subr.mxu0 0.0
        %2106 = vmatpush1.msra.mxu0 0.0
        %2107 = vmatprep.subr.mxu0 0.0
        %2108 = vmatpush1.msra.mxu0 0.0
        %2109 = vmatprep.subr.mxu0 0.0
        %2110 = vmatpush1.msra.mxu0 0.0
        %2111 = vmatprep.subr.mxu0 0.0
        %2112 = vmatpush1.msra.mxu0 0.0
        %2113 = vmatprep.subr.mxu0 0.0
        %2114 = vmatpush1.msra.mxu0 0.0
        %2115 = vmatprep.subr.mxu0 0.0
        %2116 = vmatpush1.msra.mxu0 0.0
        %2117 = vmatprep.mubr.f32.mxu0 0.0
        %2118 = vmatmul.mubr.f32.gmra.mrb[0].mxu0 %v1958
        %v2119 = vpop.f32.mrb[0].mxu0
        %v2120 = vadd.f32 0.0, %v2119
        %v2121 = vpop.f32.mrb[0].mxu0
        %2122 = vmatprep.mubr.f32.mxu0 0.0
        %2123 = vmatmul.mubr.f32.gmra.mrb[0].mxu0 %v1960
        %v2124 = vpop.f32.mrb[0].mxu0
        %v2125 = vadd.f32 0.0, %v2124
        %v2126 = vpop.f32.mrb[0].mxu0
        %2127 = vmatprep.mubr.f32.mxu0 0.0
        %2128 = vmatmul.mubr.f32.gmra.mrb[0].mxu0 %v1962
        %v2129 = vpop.f32.mrb[0].mxu0
        %v2130 = vadd.f32 0.0, %v2129
        %v2131 = vpop.f32.mrb[0].mxu0
        %2132 = vmatprep.mubr.f32.mxu0 0.0
        %2133 = vmatmul.mubr.f32.gmra.mrb[0].mxu0 %v1964
        %v2134 = vpop.f32.mrb[0].mxu0
        %v2135 = vadd.f32 0.0, %v2134
        %v2136 = vpop.f32.mrb[0].mxu0
        %2137 = vmatprep.mubr.f32.mxu0 0.0
        %2138 = vmatmul.mubr.f32.gmra.mrb[0].mxu0 %v1966
        %v2139 = vpop.f32.mrb[0].mxu0
        %v2140 = vadd.f32 0.0, %v2139
        %v2141 = vpop.f32.mrb[0].mxu0
        %2142 = vmatprep.mubr.f32.mxu0 0.0
        %2143 = vmatmul.mubr.f32.gmra.mrb[0].mxu0 %v1968
        %v2144 = vpop.f32.mrb[0].mxu0
        %v2145 = vadd.f32 0.0, %v2144
        %v2146 = vpop.f32.mrb[0].mxu0
        %2147 = vmatprep.mubr.f32.mxu0 0.0
        %2148 = vmatmul.mubr.f32.gmra.mrb[0].mxu0 %v1970
        %v2149 = vpop.f32.mrb[0].mxu0
        %v2150 = vadd.f32 0.0, %v2149
        %v2151 = vpop.f32.mrb[0].mxu0
        %2152 = vmatprep.mubr.f32.mxu0 0.0
        %2153 = vmatmul.mubr.f32.gmra.mrb[0].mxu0 %v1972
        %v2154 = vpop.f32.mrb[0].mxu0
        %v2155 = vadd.f32 0.0, %v2154
        %v2156 = vpop.f32.mrb[0].mxu0
        %2157 = vdwg.mxu0
        %v2158 = vrcp.pop %v1974
        %v2159 = vrcp.pop %v1976
        %v2160 = vrcp.pop %v1978
        %v2161 = vrcp.pop %v1980
        %v2162 = vrcp.pop %v1982
        %v2163 = vrcp.pop %v1984
        %v2164 = vrcp.pop %v1986
        %v2165 = vrcp.pop %v1988
        %v2166 = vmul.f32 %v2120, %v2158
        %v2167 = vmul.f32 %v2125, %v2159
        %v2168 = vmul.f32 %v2130, %v2160
        %v2169 = vmul.f32 %v2135, %v2161
        %v2170 = vmul.f32 %v2140, %v2162
        %v2171 = vmul.f32 %v2145, %v2163
        %v2172 = vmul.f32 %v2150, %v2164
        %v2173 = vmul.f32 %v2155, %v2165
        %v2175 = vsel %vm1361, %v2166, 0
        %v2178 = vsel %vm1361, %v2167, 0
        %v2181 = vsel %vm1361, %v2168, 0
        %v2184 = vsel %vm1361, %v2169, 0
        %v2187 = vsel %vm1361, %v2170, 0
        %v2190 = vsel %vm1361, %v2171, 0
        %v2193 = vsel %vm1361, %v2172, 0
        %v2196 = vsel %vm1361, %v2173, 0
        %2198 = vmatprep.subr.mxu0 0.0
        %2199 = vmatpush1.msra.mxu0 %v1349
        %2200 = vmatprep.subr.mxu0 0.0
        %2201 = vmatpush1.msra.mxu0 %v1350
        %2202 = vmatprep.subr.mxu0 0.0
        %2203 = vmatpush1.msra.mxu0 %v1351
        %2204 = vmatprep.subr.mxu0 0.0
        %2205 = vmatpush1.msra.mxu0 %v1352
        %2206 = vmatprep.subr.mxu0 0.0
        %2207 = vmatpush1.msra.mxu0 0.0
        %2208 = vmatprep.subr.mxu0 0.0
        %2209 = vmatpush1.msra.mxu0 0.0
        %2210 = vmatprep.subr.mxu0 0.0
        %2211 = vmatpush1.msra.mxu0 0.0
        %2212 = vmatprep.subr.mxu0 0.0
        %2213 = vmatpush1.msra.mxu0 0.0
        %2214 = vmatprep.subr.mxu0 0.0
        %2215 = vmatpush1.msra.mxu0 0.0
        %2216 = vmatprep.subr.mxu0 0.0
        %2217 = vmatpush1.msra.mxu0 0.0
        %2218 = vmatprep.subr.mxu0 0.0
        %2219 = vmatpush1.msra.mxu0 0.0
        %2220 = vmatprep.subr.mxu0 0.0
        %2221 = vmatpush1.msra.mxu0 0.0
        %2222 = vmatprep.subr.mxu0 0.0
        %2223 = vmatpush1.msra.mxu0 0.0
        %2224 = vmatprep.subr.mxu0 0.0
        %2225 = vmatpush1.msra.mxu0 0.0
        %2226 = vmatprep.subr.mxu0 0.0
        %2227 = vmatpush1.msra.mxu0 0.0
        %2228 = vmatprep.subr.mxu0 0.0
        %2229 = vmatpush1.msra.mxu0 0.0
        %2230 = vmatprep.subr.mxu0 0.0
        %2231 = vmatpush1.msra.mxu0 0.0
        %2232 = vmatprep.subr.mxu0 0.0
        %2233 = vmatpush1.msra.mxu0 0.0
        %2234 = vmatprep.subr.mxu0 0.0
        %2235 = vmatpush1.msra.mxu0 0.0
        %2236 = vmatprep.subr.mxu0 0.0
        %2237 = vmatpush1.msra.mxu0 0.0
        %2238 = vmatprep.subr.mxu0 0.0
        %2239 = vmatpush1.msra.mxu0 0.0
        %2240 = vmatprep.subr.mxu0 0.0
        %2241 = vmatpush1.msra.mxu0 0.0
        %2242 = vmatprep.subr.mxu0 0.0
        %2243 = vmatpush1.msra.mxu0 0.0
        %2244 = vmatprep.subr.mxu0 0.0
        %2245 = vmatpush1.msra.mxu0 0.0
        %2246 = vmatprep.subr.mxu0 0.0
        %2247 = vmatpush1.msra.mxu0 0.0
        %2248 = vmatprep.subr.mxu0 0.0
        %2249 = vmatpush1.msra.mxu0 0.0
        %2250 = vmatprep.subr.mxu0 0.0
        %2251 = vmatpush1.msra.mxu0 0.0
        %2252 = vmatprep.subr.mxu0 0.0
        %2253 = vmatpush1.msra.mxu0 0.0
        %2254 = vmatprep.subr.mxu0 0.0
        %2255 = vmatpush1.msra.mxu0 0.0
        %2256 = vmatprep.subr.mxu0 0.0
        %2257 = vmatpush1.msra.mxu0 0.0
        %2258 = vmatprep.subr.mxu0 0.0
        %2259 = vmatpush1.msra.mxu0 0.0
        %2260 = vmatprep.subr.mxu0 0.0
        %2261 = vmatpush1.msra.mxu0 0.0
        %2262 = vmatprep.mubr.f32.mxu0 0.0
        %2263 = vmatmul.mubr.f32.gmra.mrb[0].mxu0 %v2175
        %v2264 = vpop.f32.mrb[0].mxu0
        %v2265 = vadd.f32 0.0, %v2264
        %v2266 = vpop.f32.mrb[0].mxu0
        %2267 = vmatprep.mubr.f32.mxu0 0.0
        %2268 = vmatmul.mubr.f32.gmra.mrb[0].mxu0 %v2178
        %v2269 = vpop.f32.mrb[0].mxu0
        %v2270 = vadd.f32 0.0, %v2269
        %v2271 = vpop.f32.mrb[0].mxu0
        %2272 = vmatprep.mubr.f32.mxu0 0.0
        %2273 = vmatmul.mubr.f32.gmra.mrb[0].mxu0 %v2181
        %v2274 = vpop.f32.mrb[0].mxu0
        %v2275 = vadd.f32 0.0, %v2274
        %v2276 = vpop.f32.mrb[0].mxu0
        %2277 = vmatprep.mubr.f32.mxu0 0.0
        %2278 = vmatmul.mubr.f32.gmra.mrb[0].mxu0 %v2184
        %v2279 = vpop.f32.mrb[0].mxu0
        %v2280 = vadd.f32 0.0, %v2279
        %v2281 = vpop.f32.mrb[0].mxu0
        %2282 = vmatprep.mubr.f32.mxu0 0.0
        %2283 = vmatmul.mubr.f32.gmra.mrb[0].mxu0 %v2187
        %v2284 = vpop.f32.mrb[0].mxu0
        %v2285 = vadd.f32 0.0, %v2284
        %v2286 = vpop.f32.mrb[0].mxu0
        %2287 = vmatprep.mubr.f32.mxu0 0.0
        %2288 = vmatmul.mubr.f32.gmra.mrb[0].mxu0 %v2190
        %v2289 = vpop.f32.mrb[0].mxu0
        %v2290 = vadd.f32 0.0, %v2289
        %v2291 = vpop.f32.mrb[0].mxu0
        %2292 = vmatprep.mubr.f32.mxu0 0.0
        %2293 = vmatmul.mubr.f32.gmra.mrb[0].mxu0 %v2193
        %v2294 = vpop.f32.mrb[0].mxu0
        %v2295 = vadd.f32 0.0, %v2294
        %v2296 = vpop.f32.mrb[0].mxu0
        %2297 = vmatprep.mubr.f32.mxu0 0.0
        %2298 = vmatmul.mubr.f32.gmra.mrb[0].mxu0 %v2196
        %v2299 = vpop.f32.mrb[0].mxu0
        %v2300 = vadd.f32 0.0, %v2299
        %v2301 = vpop.f32.mrb[0].mxu0
        %2302 = vdwg.mxu0
        %v2304 = vsel %vm1361, %v1716, 0
        %v2307 = vsel %vm1361, %v1717, 0
        %v2310 = vsel %vm1361, %v1718, 0
        %v2313 = vsel %vm1361, %v1719, 0
        %v2316 = vsel %vm1361, %v1720, 0
        %v2319 = vsel %vm1361, %v1721, 0
        %v2322 = vsel %vm1361, %v1722, 0
        %v2325 = vsel %vm1361, %v1723, 0
        %2327 = vmatprep.subr.mxu0 0.0
        %2328 = vmatpush1.msra.mxu0 %v1345
        %2329 = vmatprep.subr.mxu0 0.0
        %2330 = vmatpush1.msra.mxu0 %v1346
        %2331 = vmatprep.subr.mxu0 0.0
        %2332 = vmatpush1.msra.mxu0 %v1347
        %2333 = vmatprep.subr.mxu0 0.0
        %2334 = vmatpush1.msra.mxu0 %v1348
        %2335 = vmatprep.subr.mxu0 0.0
        %2336 = vmatpush1.msra.mxu0 0.0
        %2337 = vmatprep.subr.mxu0 0.0
        %2338 = vmatpush1.msra.mxu0 0.0
        %2339 = vmatprep.subr.mxu0 0.0
        %2340 = vmatpush1.msra.mxu0 0.0
        %2341 = vmatprep.subr.mxu0 0.0
        %2342 = vmatpush1.msra.mxu0 0.0
        %2343 = vmatprep.subr.mxu0 0.0
        %2344 = vmatpush1.msra.mxu0 0.0
        %2345 = vmatprep.subr.mxu0 0.0
        %2346 = vmatpush1.msra.mxu0 0.0
        %2347 = vmatprep.subr.mxu0 0.0
        %2348 = vmatpush1.msra.mxu0 0.0
        %2349 = vmatprep.subr.mxu0 0.0
        %2350 = vmatpush1.msra.mxu0 0.0
        %2351 = vmatprep.subr.mxu0 0.0
        %2352 = vmatpush1.msra.mxu0 0.0
        %2353 = vmatprep.subr.mxu0 0.0
        %2354 = vmatpush1.msra.mxu0 0.0
        %2355 = vmatprep.subr.mxu0 0.0
        %2356 = vmatpush1.msra.mxu0 0.0
        %2357 = vmatprep.subr.mxu0 0.0
        %2358 = vmatpush1.msra.mxu0 0.0
        %2359 = vmatprep.subr.mxu0 0.0
        %2360 = vmatpush1.msra.mxu0 0.0
        %2361 = vmatprep.subr.mxu0 0.0
        %2362 = vmatpush1.msra.mxu0 0.0
        %2363 = vmatprep.subr.mxu0 0.0
        %2364 = vmatpush1.msra.mxu0 0.0
        %2365 = vmatprep.subr.mxu0 0.0
        %2366 = vmatpush1.msra.mxu0 0.0
        %2367 = vmatprep.subr.mxu0 0.0
        %2368 = vmatpush1.msra.mxu0 0.0
        %2369 = vmatprep.subr.mxu0 0.0
        %2370 = vmatpush1.msra.mxu0 0.0
        %2371 = vmatprep.subr.mxu0 0.0
        %2372 = vmatpush1.msra.mxu0 0.0
        %2373 = vmatprep.subr.mxu0 0.0
        %2374 = vmatpush1.msra.mxu0 0.0
        %2375 = vmatprep.subr.mxu0 0.0
        %2376 = vmatpush1.msra.mxu0 0.0
        %2377 = vmatprep.subr.mxu0 0.0
        %2378 = vmatpush1.msra.mxu0 0.0
        %2379 = vmatprep.subr.mxu0 0.0
        %2380 = vmatpush1.msra.mxu0 0.0
        %2381 = vmatprep.subr.mxu0 0.0
        %2382 = vmatpush1.msra.mxu0 0.0
        %2383 = vmatprep.subr.mxu0 0.0
        %2384 = vmatpush1.msra.mxu0 0.0
        %2385 = vmatprep.subr.mxu0 0.0
        %2386 = vmatpush1.msra.mxu0 0.0
        %2387 = vmatprep.subr.mxu0 0.0
        %2388 = vmatpush1.msra.mxu0 0.0
        %2389 = vmatprep.subr.mxu0 0.0
        %2390 = vmatpush1.msra.mxu0 0.0
        %2391 = vmatprep.mubr.f32.mxu0 0.0
        %2392 = vmatmul.mubr.f32.gmra.mrb[0].mxu0 %v2304
        %v2393 = vpop.f32.mrb[0].mxu0
        %v2394 = vadd.f32 %v2265, %v2393
        %v2395 = vpop.f32.mrb[0].mxu0
        %2396 = vmatprep.mubr.f32.mxu0 0.0
        %2397 = vmatmul.mubr.f32.gmra.mrb[0].mxu0 %v2307
        %v2398 = vpop.f32.mrb[0].mxu0
        %v2399 = vadd.f32 %v2270, %v2398
        %v2400 = vpop.f32.mrb[0].mxu0
        %2401 = vmatprep.mubr.f32.mxu0 0.0
        %2402 = vmatmul.mubr.f32.gmra.mrb[0].mxu0 %v2310
        %v2403 = vpop.f32.mrb[0].mxu0
        %v2404 = vadd.f32 %v2275, %v2403
        %v2405 = vpop.f32.mrb[0].mxu0
        %2406 = vmatprep.mubr.f32.mxu0 0.0
        %2407 = vmatmul.mubr.f32.gmra.mrb[0].mxu0 %v2313
        %v2408 = vpop.f32.mrb[0].mxu0
        %v2409 = vadd.f32 %v2280, %v2408
        %v2410 = vpop.f32.mrb[0].mxu0
        %2411 = vmatprep.mubr.f32.mxu0 0.0
        %2412 = vmatmul.mubr.f32.gmra.mrb[0].mxu0 %v2316
        %v2413 = vpop.f32.mrb[0].mxu0
        %v2414 = vadd.f32 %v2285, %v2413
        %v2415 = vpop.f32.mrb[0].mxu0
        %2416 = vmatprep.mubr.f32.mxu0 0.0
        %2417 = vmatmul.mubr.f32.gmra.mrb[0].mxu0 %v2319
        %v2418 = vpop.f32.mrb[0].mxu0
        %v2419 = vadd.f32 %v2290, %v2418
        %v2420 = vpop.f32.mrb[0].mxu0
        %2421 = vmatprep.mubr.f32.mxu0 0.0
        %2422 = vmatmul.mubr.f32.gmra.mrb[0].mxu0 %v2322
        %v2423 = vpop.f32.mrb[0].mxu0
        %v2424 = vadd.f32 %v2295, %v2423
        %v2425 = vpop.f32.mrb[0].mxu0
        %2426 = vmatprep.mubr.f32.mxu0 0.0
        %2427 = vmatmul.mubr.f32.gmra.mrb[0].mxu0 %v2325
        %v2428 = vpop.f32.mrb[0].mxu0
        %v2429 = vadd.f32 %v2300, %v2428
        %v2430 = vpop.f32.mrb[0].mxu0
        %2431 = vdwg.mxu0
        %2432 = vrot.lane.b32.xlu0 %v1305, 64
        %v2433 = vpop.permute.xlu0 %2432
        %2434 = vrot.lane.b32.xlu0 %v1306, 64
        %v2435 = vpop.permute.xlu0 %2434
        %2436 = vrot.lane.b32.xlu0 %v1307, 64
        %v2437 = vpop.permute.xlu0 %2436
        %2438 = vrot.lane.b32.xlu0 %v1308, 64
        %v2439 = vpop.permute.xlu0 %2438
        %2440 = vrot.lane.b32.xlu0 %v1309, 64
        %v2441 = vpop.permute.xlu0 %2440
        %2442 = vrot.lane.b32.xlu0 %v1310, 64
        %v2443 = vpop.permute.xlu0 %2442
        %2444 = vrot.lane.b32.xlu0 %v1311, 64
        %v2445 = vpop.permute.xlu0 %2444
        %2446 = vrot.lane.b32.xlu0 %v1312, 64
        %v2447 = vpop.permute.xlu0 %2446
        %2448 = vrot.lane.b32.xlu0 %v1313, 64
        %v2449 = vpop.permute.xlu0 %2448
        %2450 = vrot.lane.b32.xlu0 %v1314, 64
        %v2451 = vpop.permute.xlu0 %2450
        %2452 = vrot.lane.b32.xlu0 %v1315, 64
        %v2453 = vpop.permute.xlu0 %2452
        %2454 = vrot.lane.b32.xlu0 %v1316, 64
        %v2455 = vpop.permute.xlu0 %2454
        %2456 = vrot.lane.b32.xlu0 %v1317, 64
        %v2457 = vpop.permute.xlu0 %2456
        %2458 = vrot.lane.b32.xlu0 %v1318, 64
        %v2459 = vpop.permute.xlu0 %2458
        %2460 = vrot.lane.b32.xlu0 %v1319, 64
        %v2461 = vpop.permute.xlu0 %2460
        %2462 = vrot.lane.b32.xlu0 %v1320, 64
        %v2463 = vpop.permute.xlu0 %2462
        %2464 = vrot.lane.b32.xlu0 %v1321, 64
        %v2465 = vpop.permute.xlu0 %2464
        %2466 = vrot.lane.b32.xlu0 %v1322, 64
        %v2467 = vpop.permute.xlu0 %2466
        %2468 = vrot.lane.b32.xlu0 %v1323, 64
        %v2469 = vpop.permute.xlu0 %2468
        %2470 = vrot.lane.b32.xlu0 %v1324, 64
        %v2471 = vpop.permute.xlu0 %2470
        %2472 = vrot.lane.b32.xlu0 %v1325, 64
        %v2473 = vpop.permute.xlu0 %2472
        %2474 = vrot.lane.b32.xlu0 %v1326, 64
        %v2475 = vpop.permute.xlu0 %2474
        %2476 = vrot.lane.b32.xlu0 %v1327, 64
        %v2477 = vpop.permute.xlu0 %2476
        %2478 = vrot.lane.b32.xlu0 %v1328, 64
        %v2479 = vpop.permute.xlu0 %2478
        %v2480 = vsel %vm1361, %v2433, 0
        %v2482 = vsel %vm1361, %v2435, 0
        %v2484 = vsel %vm1361, %v2437, 0
        %v2486 = vsel %vm1361, %v2439, 0
        %v2488 = vsel %vm1361, %v2441, 0
        %v2490 = vsel %vm1361, %v2443, 0
        %v2492 = vsel %vm1361, %v2445, 0
        %v2494 = vsel %vm1361, %v2447, 0
        %v2496 = vsel %vm1361, %v2449, 0
        %v2498 = vsel %vm1361, %v2451, 0
        %v2500 = vsel %vm1361, %v2453, 0
        %v2502 = vsel %vm1361, %v2455, 0
        %v2504 = vsel %vm1361, %v2457, 0
        %v2506 = vsel %vm1361, %v2459, 0
        %v2508 = vsel %vm1361, %v2461, 0
        %v2510 = vsel %vm1361, %v2463, 0
        %v2512 = vsel %vm1361, %v2465, 0
        %v2514 = vsel %vm1361, %v2467, 0
        %v2516 = vsel %vm1361, %v2469, 0
        %v2518 = vsel %vm1361, %v2471, 0
        %v2520 = vsel %vm1361, %v2473, 0
        %v2522 = vsel %vm1361, %v2475, 0
        %v2524 = vsel %vm1361, %v2477, 0
        %v2526 = vsel %vm1361, %v2479, 0
        %2528 = vmatprep.subr.mxu0 0.0
        %2529 = vmatpush1.xpose.msra.mxu0 %v2496
        %2530 = vmatprep.subr.mxu0 0.0
        %2531 = vmatpush1.xpose.msra.mxu0 %v2498
        %2532 = vmatprep.subr.mxu0 0.0
        %2533 = vmatpush1.xpose.msra.mxu0 %v2500
        %2534 = vmatprep.subr.mxu0 0.0
        %2535 = vmatpush1.xpose.msra.mxu0 %v2502
        %2536 = vmatprep.subr.mxu0 0.0
        %2537 = vmatpush1.xpose.msra.mxu0 %v2504
        %2538 = vmatprep.subr.mxu0 0.0
        %2539 = vmatpush1.xpose.msra.mxu0 %v2506
        %2540 = vmatprep.subr.mxu0 0.0
        %2541 = vmatpush1.xpose.msra.mxu0 %v2508
        %2542 = vmatprep.subr.mxu0 0.0
        %2543 = vmatpush1.xpose.msra.mxu0 %v2510
        %2544 = vmatprep.subr.mxu0 0.0
        %2545 = vmatpush1.xpose.msra.mxu0 %v2512
        %2546 = vmatprep.subr.mxu0 0.0
        %2547 = vmatpush1.xpose.msra.mxu0 %v2514
        %2548 = vmatprep.subr.mxu0 0.0
        %2549 = vmatpush1.xpose.msra.mxu0 %v2516
        %2550 = vmatprep.subr.mxu0 0.0
        %2551 = vmatpush1.xpose.msra.mxu0 %v2518
        %2552 = vmatprep.subr.mxu0 0.0
        %2553 = vmatpush1.xpose.msra.mxu0 %v2520
        %2554 = vmatprep.subr.mxu0 0.0
        %2555 = vmatpush1.xpose.msra.mxu0 %v2522
        %2556 = vmatprep.subr.mxu0 0.0
        %2557 = vmatpush1.xpose.msra.mxu0 %v2524
        %2558 = vmatprep.subr.mxu0 0.0
        %2559 = vmatpush1.xpose.msra.mxu0 %v2526
        %2560 = vmatprep.subr.mxu0 0.0
        %2561 = vmatpush1.xpose.msra.mxu0 0.0
        %2562 = vmatprep.subr.mxu0 0.0
        %2563 = vmatpush1.xpose.msra.mxu0 0.0
        %2564 = vmatprep.subr.mxu0 0.0
        %2565 = vmatpush1.xpose.msra.mxu0 0.0
        %2566 = vmatprep.subr.mxu0 0.0
        %2567 = vmatpush1.xpose.msra.mxu0 0.0
        %2568 = vmatprep.subr.mxu0 0.0
        %2569 = vmatpush1.xpose.msra.mxu0 0.0
        %2570 = vmatprep.subr.mxu0 0.0
        %2571 = vmatpush1.xpose.msra.mxu0 0.0
        %2572 = vmatprep.subr.mxu0 0.0
        %2573 = vmatpush1.xpose.msra.mxu0 0.0
        %2574 = vmatprep.subr.mxu0 0.0
        %2575 = vmatpush1.xpose.msra.mxu0 0.0
        %2576 = vmatprep.subr.mxu0 0.0
        %2577 = vmatpush1.xpose.msra.mxu0 0.0
        %2578 = vmatprep.subr.mxu0 0.0
        %2579 = vmatpush1.xpose.msra.mxu0 0.0
        %2580 = vmatprep.subr.mxu0 0.0
        %2581 = vmatpush1.xpose.msra.mxu0 0.0
        %2582 = vmatprep.subr.mxu0 0.0
        %2583 = vmatpush1.xpose.msra.mxu0 0.0
        %2584 = vmatprep.subr.mxu0 0.0
        %2585 = vmatpush1.xpose.msra.mxu0 0.0
        %2586 = vmatprep.subr.mxu0 0.0
        %2587 = vmatpush1.xpose.msra.mxu0 0.0
        %2588 = vmatprep.subr.mxu0 0.0
        %2589 = vmatpush1.xpose.msra.mxu0 0.0
        %2590 = vmatprep.subr.mxu0 0.0
        %2591 = vmatpush1.xpose.msra.mxu0 0.0
        %2592 = vmatprep.mubr.f32.mxu0 0.0
        %2593 = vmatmul.mubr.f32.gmra.mrb[0].mxu0 %v2480
        %v2594 = vpop.f32.mrb[0].mxu0
        %v2595 = vadd.f32 0.0, %v2594
        %v2596 = vpop.f32.mrb[0].mxu0
        %2597 = vmatprep.mubr.f32.mxu0 0.0
        %2598 = vmatmul.mubr.f32.gmra.mrb[0].mxu0 %v2482
        %v2599 = vpop.f32.mrb[0].mxu0
        %v2600 = vadd.f32 0.0, %v2599
        %v2601 = vpop.f32.mrb[0].mxu0
        %2602 = vmatprep.mubr.f32.mxu0 0.0
        %2603 = vmatmul.mubr.f32.gmra.mrb[0].mxu0 %v2484
        %v2604 = vpop.f32.mrb[0].mxu0
        %v2605 = vadd.f32 0.0, %v2604
        %v2606 = vpop.f32.mrb[0].mxu0
        %2607 = vmatprep.mubr.f32.mxu0 0.0
        %2608 = vmatmul.mubr.f32.gmra.mrb[0].mxu0 %v2486
        %v2609 = vpop.f32.mrb[0].mxu0
        %v2610 = vadd.f32 0.0, %v2609
        %v2611 = vpop.f32.mrb[0].mxu0
        %2612 = vmatprep.mubr.f32.mxu0 0.0
        %2613 = vmatmul.mubr.f32.gmra.mrb[0].mxu0 %v2488
        %v2614 = vpop.f32.mrb[0].mxu0
        %v2615 = vadd.f32 0.0, %v2614
        %v2616 = vpop.f32.mrb[0].mxu0
        %2617 = vmatprep.mubr.f32.mxu0 0.0
        %2618 = vmatmul.mubr.f32.gmra.mrb[0].mxu0 %v2490
        %v2619 = vpop.f32.mrb[0].mxu0
        %v2620 = vadd.f32 0.0, %v2619
        %v2621 = vpop.f32.mrb[0].mxu0
        %2622 = vmatprep.mubr.f32.mxu0 0.0
        %2623 = vmatmul.mubr.f32.gmra.mrb[0].mxu0 %v2492
        %v2624 = vpop.f32.mrb[0].mxu0
        %v2625 = vadd.f32 0.0, %v2624
        %v2626 = vpop.f32.mrb[0].mxu0
        %2627 = vmatprep.mubr.f32.mxu0 0.0
        %2628 = vmatmul.mubr.f32.gmra.mrb[0].mxu0 %v2494
        %v2629 = vpop.f32.mrb[0].mxu0
        %v2630 = vadd.f32 0.0, %v2629
        %v2631 = vpop.f32.mrb[0].mxu0
        %2632 = vdwg.mxu0
        %v2633 = vmul.f32 %v2595, 0.17677669
        %v2634 = vmul.f32 %v2600, 0.17677669
        %v2635 = vmul.f32 %v2605, 0.17677669
        %v2636 = vmul.f32 %v2610, 0.17677669
        %v2637 = vmul.f32 %v2615, 0.17677669
        %v2638 = vmul.f32 %v2620, 0.17677669
        %v2639 = vmul.f32 %v2625, 0.17677669
        %v2640 = vmul.f32 %v2630, 0.17677669
        %2641 = vmax.xlane.f32.xlu0 %v2633
        %v2642 = vpop.xlane.xlu0 %2641
        %2643 = vmax.xlane.f32.xlu0 %v2634
        %v2644 = vpop.xlane.xlu0 %2643
        %2645 = vmax.xlane.f32.xlu0 %v2635
        %v2646 = vpop.xlane.xlu0 %2645
        %2647 = vmax.xlane.f32.xlu0 %v2636
        %v2648 = vpop.xlane.xlu0 %2647
        %2649 = vmax.xlane.f32.xlu0 %v2637
        %v2650 = vpop.xlane.xlu0 %2649
        %2651 = vmax.xlane.f32.xlu0 %v2638
        %v2652 = vpop.xlane.xlu0 %2651
        %2653 = vmax.xlane.f32.xlu0 %v2639
        %v2654 = vpop.xlane.xlu0 %2653
        %2655 = vmax.xlane.f32.xlu0 %v2640
        %v2656 = vpop.xlane.xlu0 %2655
        %v2657 = vsub.f32 %v2633, %v2642
        %v2658 = vsub.f32 %v2634, %v2644
        %v2659 = vsub.f32 %v2635, %v2646
        %v2660 = vsub.f32 %v2636, %v2648
        %v2661 = vsub.f32 %v2637, %v2650
        %v2662 = vsub.f32 %v2638, %v2652
        %v2663 = vsub.f32 %v2639, %v2654
        %v2664 = vsub.f32 %v2640, %v2656
        %v2665 = vmul.f32 %v2657, 1.442695
        %v2666 = vpow.pop %v2665
        %v2667 = vmul.f32 %v2658, 1.442695
        %v2668 = vpow.pop %v2667
        %v2669 = vmul.f32 %v2659, 1.442695
        %v2670 = vpow.pop %v2669
        %v2671 = vmul.f32 %v2660, 1.442695
        %v2672 = vpow.pop %v2671
        %v2673 = vmul.f32 %v2661, 1.442695
        %v2674 = vpow.pop %v2673
        %v2675 = vmul.f32 %v2662, 1.442695
        %v2676 = vpow.pop %v2675
        %v2677 = vmul.f32 %v2663, 1.442695
        %v2678 = vpow.pop %v2677
        %v2679 = vmul.f32 %v2664, 1.442695
        %v2680 = vpow.pop %v2679
        %2681 = vadd.xlane.f32.xlu0 %v2666
        %v2682 = vpop.xlane.xlu0 %2681
        %2683 = vadd.xlane.f32.xlu0 %v2668
        %v2684 = vpop.xlane.xlu0 %2683
        %2685 = vadd.xlane.f32.xlu0 %v2670
        %v2686 = vpop.xlane.xlu0 %2685
        %2687 = vadd.xlane.f32.xlu0 %v2672
        %v2688 = vpop.xlane.xlu0 %2687
        %2689 = vadd.xlane.f32.xlu0 %v2674
        %v2690 = vpop.xlane.xlu0 %2689
        %2691 = vadd.xlane.f32.xlu0 %v2676
        %v2692 = vpop.xlane.xlu0 %2691
        %2693 = vadd.xlane.f32.xlu0 %v2678
        %v2694 = vpop.xlane.xlu0 %2693
        %2695 = vadd.xlane.f32.xlu0 %v2680
        %v2696 = vpop.xlane.xlu0 %2695
        %2697 = vrot.lane.b32.xlu0 %v1329, 64
        %v2698 = vpop.permute.xlu0 %2697
        %2699 = vrot.lane.b32.xlu0 %v1330, 64
        %v2700 = vpop.permute.xlu0 %2699
        %2701 = vrot.lane.b32.xlu0 %v1331, 64
        %v2702 = vpop.permute.xlu0 %2701
        %2703 = vrot.lane.b32.xlu0 %v1332, 64
        %v2704 = vpop.permute.xlu0 %2703
        %2705 = vrot.lane.b32.xlu0 %v1333, 64
        %v2706 = vpop.permute.xlu0 %2705
        %2707 = vrot.lane.b32.xlu0 %v1334, 64
        %v2708 = vpop.permute.xlu0 %2707
        %2709 = vrot.lane.b32.xlu0 %v1335, 64
        %v2710 = vpop.permute.xlu0 %2709
        %2711 = vrot.lane.b32.xlu0 %v1336, 64
        %v2712 = vpop.permute.xlu0 %2711
        %2713 = vrot.lane.b32.xlu0 %v1337, 64
        %v2714 = vpop.permute.xlu0 %2713
        %2715 = vrot.lane.b32.xlu0 %v1338, 64
        %v2716 = vpop.permute.xlu0 %2715
        %2717 = vrot.lane.b32.xlu0 %v1339, 64
        %v2718 = vpop.permute.xlu0 %2717
        %2719 = vrot.lane.b32.xlu0 %v1340, 64
        %v2720 = vpop.permute.xlu0 %2719
        %2721 = vrot.lane.b32.xlu0 %v1341, 64
        %v2722 = vpop.permute.xlu0 %2721
        %2723 = vrot.lane.b32.xlu0 %v1342, 64
        %v2724 = vpop.permute.xlu0 %2723
        %2725 = vrot.lane.b32.xlu0 %v1343, 64
        %v2726 = vpop.permute.xlu0 %2725
        %2727 = vrot.lane.b32.xlu0 %v1344, 64
        %v2728 = vpop.permute.xlu0 %2727
        %2745 = vmatprep.subr.mxu0 0.0
        %2746 = vmatpush1.msra.mxu0 %v2698
        %2747 = vmatprep.subr.mxu0 0.0
        %2748 = vmatpush1.msra.mxu0 %v2700
        %2749 = vmatprep.subr.mxu0 0.0
        %2750 = vmatpush1.msra.mxu0 %v2702
        %2751 = vmatprep.subr.mxu0 0.0
        %2752 = vmatpush1.msra.mxu0 %v2704
        %2753 = vmatprep.subr.mxu0 0.0
        %2754 = vmatpush1.msra.mxu0 %v2706
        %2755 = vmatprep.subr.mxu0 0.0
        %2756 = vmatpush1.msra.mxu0 %v2708
        %2757 = vmatprep.subr.mxu0 0.0
        %2758 = vmatpush1.msra.mxu0 %v2710
        %2759 = vmatprep.subr.mxu0 0.0
        %2760 = vmatpush1.msra.mxu0 %v2712
        %2761 = vmatprep.subr.mxu0 0.0
        %2762 = vmatpush1.msra.mxu0 %v2714
        %2763 = vmatprep.subr.mxu0 0.0
        %2764 = vmatpush1.msra.mxu0 %v2716
        %2765 = vmatprep.subr.mxu0 0.0
        %2766 = vmatpush1.msra.mxu0 %v2718
        %2767 = vmatprep.subr.mxu0 0.0
        %2768 = vmatpush1.msra.mxu0 %v2720
        %2769 = vmatprep.subr.mxu0 0.0
        %2770 = vmatpush1.msra.mxu0 %v2722
        %2771 = vmatprep.subr.mxu0 0.0
        %2772 = vmatpush1.msra.mxu0 %v2724
        %2773 = vmatprep.subr.mxu0 0.0
        %2774 = vmatpush1.msra.mxu0 %v2726
        %2775 = vmatprep.subr.mxu0 0.0
        %2776 = vmatpush1.msra.mxu0 %v2728
        %2777 = vmatprep.subr.mxu0 0.0
        %2778 = vmatpush1.msra.mxu0 0.0
        %2779 = vmatprep.subr.mxu0 0.0
        %2780 = vmatpush1.msra.mxu0 0.0
        %2781 = vmatprep.subr.mxu0 0.0
        %2782 = vmatpush1.msra.mxu0 0.0
        %2783 = vmatprep.subr.mxu0 0.0
        %2784 = vmatpush1.msra.mxu0 0.0
        %2785 = vmatprep.subr.mxu0 0.0
        %2786 = vmatpush1.msra.mxu0 0.0
        %2787 = vmatprep.subr.mxu0 0.0
        %2788 = vmatpush1.msra.mxu0 0.0
        %2789 = vmatprep.subr.mxu0 0.0
        %2790 = vmatpush1.msra.mxu0 0.0
        %2791 = vmatprep.subr.mxu0 0.0
        %2792 = vmatpush1.msra.mxu0 0.0
        %2793 = vmatprep.subr.mxu0 0.0
        %2794 = vmatpush1.msra.mxu0 0.0
        %2795 = vmatprep.subr.mxu0 0.0
        %2796 = vmatpush1.msra.mxu0 0.0
        %2797 = vmatprep.subr.mxu0 0.0
        %2798 = vmatpush1.msra.mxu0 0.0
        %2799 = vmatprep.subr.mxu0 0.0
        %2800 = vmatpush1.msra.mxu0 0.0
        %2801 = vmatprep.subr.mxu0 0.0
        %2802 = vmatpush1.msra.mxu0 0.0
        %2803 = vmatprep.subr.mxu0 0.0
        %2804 = vmatpush1.msra.mxu0 0.0
        %2805 = vmatprep.subr.mxu0 0.0
        %2806 = vmatpush1.msra.mxu0 0.0
        %2807 = vmatprep.subr.mxu0 0.0
        %2808 = vmatpush1.msra.mxu0 0.0
        %2809 = vmatprep.mubr.f32.mxu0 0.0
        %2810 = vmatmul.mubr.f32.gmra.mrb[0].mxu0 %v2666
        %v2811 = vpop.f32.mrb[0].mxu0
        %v2812 = vadd.f32 0.0, %v2811
        %v2813 = vpop.f32.mrb[0].mxu0
        %2814 = vmatprep.mubr.f32.mxu0 0.0
        %2815 = vmatmul.mubr.f32.gmra.mrb[0].mxu0 %v2668
        %v2816 = vpop.f32.mrb[0].mxu0
        %v2817 = vadd.f32 0.0, %v2816
        %v2818 = vpop.f32.mrb[0].mxu0
        %2819 = vmatprep.mubr.f32.mxu0 0.0
        %2820 = vmatmul.mubr.f32.gmra.mrb[0].mxu0 %v2670
        %v2821 = vpop.f32.mrb[0].mxu0
        %v2822 = vadd.f32 0.0, %v2821
        %v2823 = vpop.f32.mrb[0].mxu0
        %2824 = vmatprep.mubr.f32.mxu0 0.0
        %2825 = vmatmul.mubr.f32.gmra.mrb[0].mxu0 %v2672
        %v2826 = vpop.f32.mrb[0].mxu0
        %v2827 = vadd.f32 0.0, %v2826
        %v2828 = vpop.f32.mrb[0].mxu0
        %2829 = vmatprep.mubr.f32.mxu0 0.0
        %2830 = vmatmul.mubr.f32.gmra.mrb[0].mxu0 %v2674
        %v2831 = vpop.f32.mrb[0].mxu0
        %v2832 = vadd.f32 0.0, %v2831
        %v2833 = vpop.f32.mrb[0].mxu0
        %2834 = vmatprep.mubr.f32.mxu0 0.0
        %2835 = vmatmul.mubr.f32.gmra.mrb[0].mxu0 %v2676
        %v2836 = vpop.f32.mrb[0].mxu0
        %v2837 = vadd.f32 0.0, %v2836
        %v2838 = vpop.f32.mrb[0].mxu0
        %2839 = vmatprep.mubr.f32.mxu0 0.0
        %2840 = vmatmul.mubr.f32.gmra.mrb[0].mxu0 %v2678
        %v2841 = vpop.f32.mrb[0].mxu0
        %v2842 = vadd.f32 0.0, %v2841
        %v2843 = vpop.f32.mrb[0].mxu0
        %2844 = vmatprep.mubr.f32.mxu0 0.0
        %2845 = vmatmul.mubr.f32.gmra.mrb[0].mxu0 %v2680
        %v2846 = vpop.f32.mrb[0].mxu0
        %v2847 = vadd.f32 0.0, %v2846
        %v2848 = vpop.f32.mrb[0].mxu0
        %2849 = vdwg.mxu0
        %v2850 = vrcp.pop %v2682
        %v2851 = vrcp.pop %v2684
        %v2852 = vrcp.pop %v2686
        %v2853 = vrcp.pop %v2688
        %v2854 = vrcp.pop %v2690
        %v2855 = vrcp.pop %v2692
        %v2856 = vrcp.pop %v2694
        %v2857 = vrcp.pop %v2696
        %v2858 = vmul.f32 %v2812, %v2850
        %v2859 = vmul.f32 %v2817, %v2851
        %v2860 = vmul.f32 %v2822, %v2852
        %v2861 = vmul.f32 %v2827, %v2853
        %v2862 = vmul.f32 %v2832, %v2854
        %v2863 = vmul.f32 %v2837, %v2855
        %v2864 = vmul.f32 %v2842, %v2856
        %v2865 = vmul.f32 %v2847, %v2857
        %v2867 = vsel %vm1361, %v2858, 0
        %v2870 = vsel %vm1361, %v2859, 0
        %v2873 = vsel %vm1361, %v2860, 0
        %v2876 = vsel %vm1361, %v2861, 0
        %v2879 = vsel %vm1361, %v2862, 0
        %v2882 = vsel %vm1361, %v2863, 0
        %v2885 = vsel %vm1361, %v2864, 0
        %v2888 = vsel %vm1361, %v2865, 0
        %2890 = vmatprep.subr.mxu0 0.0
        %2891 = vmatpush1.msra.mxu0 %v1353
        %2892 = vmatprep.subr.mxu0 0.0
        %2893 = vmatpush1.msra.mxu0 %v1354
        %2894 = vmatprep.subr.mxu0 0.0
        %2895 = vmatpush1.msra.mxu0 %v1355
        %2896 = vmatprep.subr.mxu0 0.0
        %2897 = vmatpush1.msra.mxu0 %v1356
        %2898 = vmatprep.subr.mxu0 0.0
        %2899 = vmatpush1.msra.mxu0 0.0
        %2900 = vmatprep.subr.mxu0 0.0
        %2901 = vmatpush1.msra.mxu0 0.0
        %2902 = vmatprep.subr.mxu0 0.0
        %2903 = vmatpush1.msra.mxu0 0.0
        %2904 = vmatprep.subr.mxu0 0.0
        %2905 = vmatpush1.msra.mxu0 0.0
        %2906 = vmatprep.subr.mxu0 0.0
        %2907 = vmatpush1.msra.mxu0 0.0
        %2908 = vmatprep.subr.mxu0 0.0
        %2909 = vmatpush1.msra.mxu0 0.0
        %2910 = vmatprep.subr.mxu0 0.0
        %2911 = vmatpush1.msra.mxu0 0.0
        %2912 = vmatprep.subr.mxu0 0.0
        %2913 = vmatpush1.msra.mxu0 0.0
        %2914 = vmatprep.subr.mxu0 0.0
        %2915 = vmatpush1.msra.mxu0 0.0
        %2916 = vmatprep.subr.mxu0 0.0
        %2917 = vmatpush1.msra.mxu0 0.0
        %2918 = vmatprep.subr.mxu0 0.0
        %2919 = vmatpush1.msra.mxu0 0.0
        %2920 = vmatprep.subr.mxu0 0.0
        %2921 = vmatpush1.msra.mxu0 0.0
        %2922 = vmatprep.subr.mxu0 0.0
        %2923 = vmatpush1.msra.mxu0 0.0
        %2924 = vmatprep.subr.mxu0 0.0
        %2925 = vmatpush1.msra.mxu0 0.0
        %2926 = vmatprep.subr.mxu0 0.0
        %2927 = vmatpush1.msra.mxu0 0.0
        %2928 = vmatprep.subr.mxu0 0.0
        %2929 = vmatpush1.msra.mxu0 0.0
        %2930 = vmatprep.subr.mxu0 0.0
        %2931 = vmatpush1.msra.mxu0 0.0
        %2932 = vmatprep.subr.mxu0 0.0
        %2933 = vmatpush1.msra.mxu0 0.0
        %2934 = vmatprep.subr.mxu0 0.0
        %2935 = vmatpush1.msra.mxu0 0.0
        %2936 = vmatprep.subr.mxu0 0.0
        %2937 = vmatpush1.msra.mxu0 0.0
        %2938 = vmatprep.subr.mxu0 0.0
        %2939 = vmatpush1.msra.mxu0 0.0
        %2940 = vmatprep.subr.mxu0 0.0
        %2941 = vmatpush1.msra.mxu0 0.0
        %2942 = vmatprep.subr.mxu0 0.0
        %2943 = vmatpush1.msra.mxu0 0.0
        %2944 = vmatprep.subr.mxu0 0.0
        %2945 = vmatpush1.msra.mxu0 0.0
        %2946 = vmatprep.subr.mxu0 0.0
        %2947 = vmatpush1.msra.mxu0 0.0
        %2948 = vmatprep.subr.mxu0 0.0
        %2949 = vmatpush1.msra.mxu0 0.0
        %2950 = vmatprep.subr.mxu0 0.0
        %2951 = vmatpush1.msra.mxu0 0.0
        %2952 = vmatprep.subr.mxu0 0.0
        %2953 = vmatpush1.msra.mxu0 0.0
        %2954 = vmatprep.mubr.f32.mxu0 0.0
        %2955 = vmatmul.mubr.f32.gmra.mrb[0].mxu0 %v2867
        %v2956 = vpop.f32.mrb[0].mxu0
        %v2957 = vadd.f32 0.0, %v2956
        %v2958 = vpop.f32.mrb[0].mxu0
        %2959 = vmatprep.mubr.f32.mxu0 0.0
        %2960 = vmatmul.mubr.f32.gmra.mrb[0].mxu0 %v2870
        %v2961 = vpop.f32.mrb[0].mxu0
        %v2962 = vadd.f32 0.0, %v2961
        %v2963 = vpop.f32.mrb[0].mxu0
        %2964 = vmatprep.mubr.f32.mxu0 0.0
        %2965 = vmatmul.mubr.f32.gmra.mrb[0].mxu0 %v2873
        %v2966 = vpop.f32.mrb[0].mxu0
        %v2967 = vadd.f32 0.0, %v2966
        %v2968 = vpop.f32.mrb[0].mxu0
        %2969 = vmatprep.mubr.f32.mxu0 0.0
        %2970 = vmatmul.mubr.f32.gmra.mrb[0].mxu0 %v2876
        %v2971 = vpop.f32.mrb[0].mxu0
        %v2972 = vadd.f32 0.0, %v2971
        %v2973 = vpop.f32.mrb[0].mxu0
        %2974 = vmatprep.mubr.f32.mxu0 0.0
        %2975 = vmatmul.mubr.f32.gmra.mrb[0].mxu0 %v2879
        %v2976 = vpop.f32.mrb[0].mxu0
        %v2977 = vadd.f32 0.0, %v2976
        %v2978 = vpop.f32.mrb[0].mxu0
        %2979 = vmatprep.mubr.f32.mxu0 0.0
        %2980 = vmatmul.mubr.f32.gmra.mrb[0].mxu0 %v2882
        %v2981 = vpop.f32.mrb[0].mxu0
        %v2982 = vadd.f32 0.0, %v2981
        %v2983 = vpop.f32.mrb[0].mxu0
        %2984 = vmatprep.mubr.f32.mxu0 0.0
        %2985 = vmatmul.mubr.f32.gmra.mrb[0].mxu0 %v2885
        %v2986 = vpop.f32.mrb[0].mxu0
        %v2987 = vadd.f32 0.0, %v2986
        %v2988 = vpop.f32.mrb[0].mxu0
        %2989 = vmatprep.mubr.f32.mxu0 0.0
        %2990 = vmatmul.mubr.f32.gmra.mrb[0].mxu0 %v2888
        %v2991 = vpop.f32.mrb[0].mxu0
        %v2992 = vadd.f32 0.0, %v2991
        %v2993 = vpop.f32.mrb[0].mxu0
        %2994 = vdwg.mxu0
        %v2995 = vadd.f32 %v2394, %v2957
        %v2996 = vadd.f32 %v2399, %v2962
        %v2997 = vadd.f32 %v2404, %v2967
        %v2998 = vadd.f32 %v2409, %v2972
        %v2999 = vadd.f32 %v2414, %v2977
        %v3000 = vadd.f32 %v2419, %v2982
        %v3001 = vadd.f32 %v2424, %v2987
        %v3002 = vadd.f32 %v2429, %v2992
        %3003 = vrot.lane.b32.xlu0 %v1305, 32
        %v3004 = vpop.permute.xlu0 %3003
        %3005 = vrot.lane.b32.xlu0 %v1306, 32
        %v3006 = vpop.permute.xlu0 %3005
        %3007 = vrot.lane.b32.xlu0 %v1307, 32
        %v3008 = vpop.permute.xlu0 %3007
        %3009 = vrot.lane.b32.xlu0 %v1308, 32
        %v3010 = vpop.permute.xlu0 %3009
        %3011 = vrot.lane.b32.xlu0 %v1309, 32
        %v3012 = vpop.permute.xlu0 %3011
        %3013 = vrot.lane.b32.xlu0 %v1310, 32
        %v3014 = vpop.permute.xlu0 %3013
        %3015 = vrot.lane.b32.xlu0 %v1311, 32
        %v3016 = vpop.permute.xlu0 %3015
        %3017 = vrot.lane.b32.xlu0 %v1312, 32
        %v3018 = vpop.permute.xlu0 %3017
        %3019 = vrot.lane.b32.xlu0 %v1313, 32
        %v3020 = vpop.permute.xlu0 %3019
        %3021 = vrot.lane.b32.xlu0 %v1314, 32
        %v3022 = vpop.permute.xlu0 %3021
        %3023 = vrot.lane.b32.xlu0 %v1315, 32
        %v3024 = vpop.permute.xlu0 %3023
        %3025 = vrot.lane.b32.xlu0 %v1316, 32
        %v3026 = vpop.permute.xlu0 %3025
        %3027 = vrot.lane.b32.xlu0 %v1317, 32
        %v3028 = vpop.permute.xlu0 %3027
        %3029 = vrot.lane.b32.xlu0 %v1318, 32
        %v3030 = vpop.permute.xlu0 %3029
        %3031 = vrot.lane.b32.xlu0 %v1319, 32
        %v3032 = vpop.permute.xlu0 %3031
        %3033 = vrot.lane.b32.xlu0 %v1320, 32
        %v3034 = vpop.permute.xlu0 %3033
        %3035 = vrot.lane.b32.xlu0 %v1321, 32
        %v3036 = vpop.permute.xlu0 %3035
        %3037 = vrot.lane.b32.xlu0 %v1322, 32
        %v3038 = vpop.permute.xlu0 %3037
        %3039 = vrot.lane.b32.xlu0 %v1323, 32
        %v3040 = vpop.permute.xlu0 %3039
        %3041 = vrot.lane.b32.xlu0 %v1324, 32
        %v3042 = vpop.permute.xlu0 %3041
        %3043 = vrot.lane.b32.xlu0 %v1325, 32
        %v3044 = vpop.permute.xlu0 %3043
        %3045 = vrot.lane.b32.xlu0 %v1326, 32
        %v3046 = vpop.permute.xlu0 %3045
        %3047 = vrot.lane.b32.xlu0 %v1327, 32
        %v3048 = vpop.permute.xlu0 %3047
        %3049 = vrot.lane.b32.xlu0 %v1328, 32
        %v3050 = vpop.permute.xlu0 %3049
        %v3051 = vsel %vm1361, %v3004, 0
        %v3053 = vsel %vm1361, %v3006, 0
        %v3055 = vsel %vm1361, %v3008, 0
        %v3057 = vsel %vm1361, %v3010, 0
        %v3059 = vsel %vm1361, %v3012, 0
        %v3061 = vsel %vm1361, %v3014, 0
        %v3063 = vsel %vm1361, %v3016, 0
        %v3065 = vsel %vm1361, %v3018, 0
        %v3067 = vsel %vm1361, %v3020, 0
        %v3069 = vsel %vm1361, %v3022, 0
        %v3071 = vsel %vm1361, %v3024, 0
        %v3073 = vsel %vm1361, %v3026, 0
        %v3075 = vsel %vm1361, %v3028, 0
        %v3077 = vsel %vm1361, %v3030, 0
        %v3079 = vsel %vm1361, %v3032, 0
        %v3081 = vsel %vm1361, %v3034, 0
        %v3083 = vsel %vm1361, %v3036, 0
        %v3085 = vsel %vm1361, %v3038, 0
        %v3087 = vsel %vm1361, %v3040, 0
        %v3089 = vsel %vm1361, %v3042, 0
        %v3091 = vsel %vm1361, %v3044, 0
        %v3093 = vsel %vm1361, %v3046, 0
        %v3095 = vsel %vm1361, %v3048, 0
        %v3097 = vsel %vm1361, %v3050, 0
        %3099 = vmatprep.subr.mxu0 0.0
        %3100 = vmatpush1.xpose.msra.mxu0 %v3067
        %3101 = vmatprep.subr.mxu0 0.0
        %3102 = vmatpush1.xpose.msra.mxu0 %v3069
        %3103 = vmatprep.subr.mxu0 0.0
        %3104 = vmatpush1.xpose.msra.mxu0 %v3071
        %3105 = vmatprep.subr.mxu0 0.0
        %3106 = vmatpush1.xpose.msra.mxu0 %v3073
        %3107 = vmatprep.subr.mxu0 0.0
        %3108 = vmatpush1.xpose.msra.mxu0 %v3075
        %3109 = vmatprep.subr.mxu0 0.0
        %3110 = vmatpush1.xpose.msra.mxu0 %v3077
        %3111 = vmatprep.subr.mxu0 0.0
        %3112 = vmatpush1.xpose.msra.mxu0 %v3079
        %3113 = vmatprep.subr.mxu0 0.0
        %3114 = vmatpush1.xpose.msra.mxu0 %v3081
        %3115 = vmatprep.subr.mxu0 0.0
        %3116 = vmatpush1.xpose.msra.mxu0 %v3083
        %3117 = vmatprep.subr.mxu0 0.0
        %3118 = vmatpush1.xpose.msra.mxu0 %v3085
        %3119 = vmatprep.subr.mxu0 0.0
        %3120 = vmatpush1.xpose.msra.mxu0 %v3087
        %3121 = vmatprep.subr.mxu0 0.0
        %3122 = vmatpush1.xpose.msra.mxu0 %v3089
        %3123 = vmatprep.subr.mxu0 0.0
        %3124 = vmatpush1.xpose.msra.mxu0 %v3091
        %3125 = vmatprep.subr.mxu0 0.0
        %3126 = vmatpush1.xpose.msra.mxu0 %v3093
        %3127 = vmatprep.subr.mxu0 0.0
        %3128 = vmatpush1.xpose.msra.mxu0 %v3095
        %3129 = vmatprep.subr.mxu0 0.0
        %3130 = vmatpush1.xpose.msra.mxu0 %v3097
        %3131 = vmatprep.subr.mxu0 0.0
        %3132 = vmatpush1.xpose.msra.mxu0 0.0
        %3133 = vmatprep.subr.mxu0 0.0
        %3134 = vmatpush1.xpose.msra.mxu0 0.0
        %3135 = vmatprep.subr.mxu0 0.0
        %3136 = vmatpush1.xpose.msra.mxu0 0.0
        %3137 = vmatprep.subr.mxu0 0.0
        %3138 = vmatpush1.xpose.msra.mxu0 0.0
        %3139 = vmatprep.subr.mxu0 0.0
        %3140 = vmatpush1.xpose.msra.mxu0 0.0
        %3141 = vmatprep.subr.mxu0 0.0
        %3142 = vmatpush1.xpose.msra.mxu0 0.0
        %3143 = vmatprep.subr.mxu0 0.0
        %3144 = vmatpush1.xpose.msra.mxu0 0.0
        %3145 = vmatprep.subr.mxu0 0.0
        %3146 = vmatpush1.xpose.msra.mxu0 0.0
        %3147 = vmatprep.subr.mxu0 0.0
        %3148 = vmatpush1.xpose.msra.mxu0 0.0
        %3149 = vmatprep.subr.mxu0 0.0
        %3150 = vmatpush1.xpose.msra.mxu0 0.0
        %3151 = vmatprep.subr.mxu0 0.0
        %3152 = vmatpush1.xpose.msra.mxu0 0.0
        %3153 = vmatprep.subr.mxu0 0.0
        %3154 = vmatpush1.xpose.msra.mxu0 0.0
        %3155 = vmatprep.subr.mxu0 0.0
        %3156 = vmatpush1.xpose.msra.mxu0 0.0
        %3157 = vmatprep.subr.mxu0 0.0
        %3158 = vmatpush1.xpose.msra.mxu0 0.0
        %3159 = vmatprep.subr.mxu0 0.0
        %3160 = vmatpush1.xpose.msra.mxu0 0.0
        %3161 = vmatprep.subr.mxu0 0.0
        %3162 = vmatpush1.xpose.msra.mxu0 0.0
        %3163 = vmatprep.mubr.f32.mxu0 0.0
        %3164 = vmatmul.mubr.f32.gmra.mrb[0].mxu0 %v3051
        %v3165 = vpop.f32.mrb[0].mxu0
        %v3166 = vadd.f32 0.0, %v3165
        %v3167 = vpop.f32.mrb[0].mxu0
        %3168 = vmatprep.mubr.f32.mxu0 0.0
        %3169 = vmatmul.mubr.f32.gmra.mrb[0].mxu0 %v3053
        %v3170 = vpop.f32.mrb[0].mxu0
        %v3171 = vadd.f32 0.0, %v3170
        %v3172 = vpop.f32.mrb[0].mxu0
        %3173 = vmatprep.mubr.f32.mxu0 0.0
        %3174 = vmatmul.mubr.f32.gmra.mrb[0].mxu0 %v3055
        %v3175 = vpop.f32.mrb[0].mxu0
        %v3176 = vadd.f32 0.0, %v3175
        %v3177 = vpop.f32.mrb[0].mxu0
        %3178 = vmatprep.mubr.f32.mxu0 0.0
        %3179 = vmatmul.mubr.f32.gmra.mrb[0].mxu0 %v3057
        %v3180 = vpop.f32.mrb[0].mxu0
        %v3181 = vadd.f32 0.0, %v3180
        %v3182 = vpop.f32.mrb[0].mxu0
        %3183 = vmatprep.mubr.f32.mxu0 0.0
        %3184 = vmatmul.mubr.f32.gmra.mrb[0].mxu0 %v3059
        %v3185 = vpop.f32.mrb[0].mxu0
        %v3186 = vadd.f32 0.0, %v3185
        %v3187 = vpop.f32.mrb[0].mxu0
        %3188 = vmatprep.mubr.f32.mxu0 0.0
        %3189 = vmatmul.mubr.f32.gmra.mrb[0].mxu0 %v3061
        %v3190 = vpop.f32.mrb[0].mxu0
        %v3191 = vadd.f32 0.0, %v3190
        %v3192 = vpop.f32.mrb[0].mxu0
        %3193 = vmatprep.mubr.f32.mxu0 0.0
        %3194 = vmatmul.mubr.f32.gmra.mrb[0].mxu0 %v3063
        %v3195 = vpop.f32.mrb[0].mxu0
        %v3196 = vadd.f32 0.0, %v3195
        %v3197 = vpop.f32.mrb[0].mxu0
        %3198 = vmatprep.mubr.f32.mxu0 0.0
        %3199 = vmatmul.mubr.f32.gmra.mrb[0].mxu0 %v3065
        %v3200 = vpop.f32.mrb[0].mxu0
        %v3201 = vadd.f32 0.0, %v3200
        %v3202 = vpop.f32.mrb[0].mxu0
        %3203 = vdwg.mxu0
        %v3204 = vmul.f32 %v3166, 0.17677669
        %v3205 = vmul.f32 %v3171, 0.17677669
        %v3206 = vmul.f32 %v3176, 0.17677669
        %v3207 = vmul.f32 %v3181, 0.17677669
        %v3208 = vmul.f32 %v3186, 0.17677669
        %v3209 = vmul.f32 %v3191, 0.17677669
        %v3210 = vmul.f32 %v3196, 0.17677669
        %v3211 = vmul.f32 %v3201, 0.17677669
        %3212 = vmax.xlane.f32.xlu0 %v3204
        %v3213 = vpop.xlane.xlu0 %3212
        %3214 = vmax.xlane.f32.xlu0 %v3205
        %v3215 = vpop.xlane.xlu0 %3214
        %3216 = vmax.xlane.f32.xlu0 %v3206
        %v3217 = vpop.xlane.xlu0 %3216
        %3218 = vmax.xlane.f32.xlu0 %v3207
        %v3219 = vpop.xlane.xlu0 %3218
        %3220 = vmax.xlane.f32.xlu0 %v3208
        %v3221 = vpop.xlane.xlu0 %3220
        %3222 = vmax.xlane.f32.xlu0 %v3209
        %v3223 = vpop.xlane.xlu0 %3222
        %3224 = vmax.xlane.f32.xlu0 %v3210
        %v3225 = vpop.xlane.xlu0 %3224
        %3226 = vmax.xlane.f32.xlu0 %v3211
        %v3227 = vpop.xlane.xlu0 %3226
        %v3228 = vsub.f32 %v3204, %v3213
        %v3229 = vsub.f32 %v3205, %v3215
        %v3230 = vsub.f32 %v3206, %v3217
        %v3231 = vsub.f32 %v3207, %v3219
        %v3232 = vsub.f32 %v3208, %v3221
        %v3233 = vsub.f32 %v3209, %v3223
        %v3234 = vsub.f32 %v3210, %v3225
        %v3235 = vsub.f32 %v3211, %v3227
        %v3236 = vmul.f32 %v3228, 1.442695
        %v3237 = vpow.pop %v3236
        %v3238 = vmul.f32 %v3229, 1.442695
        %v3239 = vpow.pop %v3238
        %v3240 = vmul.f32 %v3230, 1.442695
        %v3241 = vpow.pop %v3240
        %v3242 = vmul.f32 %v3231, 1.442695
        %v3243 = vpow.pop %v3242
        %v3244 = vmul.f32 %v3232, 1.442695
        %v3245 = vpow.pop %v3244
        %v3246 = vmul.f32 %v3233, 1.442695
        %v3247 = vpow.pop %v3246
        %v3248 = vmul.f32 %v3234, 1.442695
        %v3249 = vpow.pop %v3248
        %v3250 = vmul.f32 %v3235, 1.442695
        %v3251 = vpow.pop %v3250
        %3252 = vadd.xlane.f32.xlu0 %v3237
        %v3253 = vpop.xlane.xlu0 %3252
        %3254 = vadd.xlane.f32.xlu0 %v3239
        %v3255 = vpop.xlane.xlu0 %3254
        %3256 = vadd.xlane.f32.xlu0 %v3241
        %v3257 = vpop.xlane.xlu0 %3256
        %3258 = vadd.xlane.f32.xlu0 %v3243
        %v3259 = vpop.xlane.xlu0 %3258
        %3260 = vadd.xlane.f32.xlu0 %v3245
        %v3261 = vpop.xlane.xlu0 %3260
        %3262 = vadd.xlane.f32.xlu0 %v3247
        %v3263 = vpop.xlane.xlu0 %3262
        %3264 = vadd.xlane.f32.xlu0 %v3249
        %v3265 = vpop.xlane.xlu0 %3264
        %3266 = vadd.xlane.f32.xlu0 %v3251
        %v3267 = vpop.xlane.xlu0 %3266
        %3268 = vrot.lane.b32.xlu0 %v1329, 32
        %v3269 = vpop.permute.xlu0 %3268
        %3270 = vrot.lane.b32.xlu0 %v1330, 32
        %v3271 = vpop.permute.xlu0 %3270
        %3272 = vrot.lane.b32.xlu0 %v1331, 32
        %v3273 = vpop.permute.xlu0 %3272
        %3274 = vrot.lane.b32.xlu0 %v1332, 32
        %v3275 = vpop.permute.xlu0 %3274
        %3276 = vrot.lane.b32.xlu0 %v1333, 32
        %v3277 = vpop.permute.xlu0 %3276
        %3278 = vrot.lane.b32.xlu0 %v1334, 32
        %v3279 = vpop.permute.xlu0 %3278
        %3280 = vrot.lane.b32.xlu0 %v1335, 32
        %v3281 = vpop.permute.xlu0 %3280
        %3282 = vrot.lane.b32.xlu0 %v1336, 32
        %v3283 = vpop.permute.xlu0 %3282
        %3284 = vrot.lane.b32.xlu0 %v1337, 32
        %v3285 = vpop.permute.xlu0 %3284
        %3286 = vrot.lane.b32.xlu0 %v1338, 32
        %v3287 = vpop.permute.xlu0 %3286
        %3288 = vrot.lane.b32.xlu0 %v1339, 32
        %v3289 = vpop.permute.xlu0 %3288
        %3290 = vrot.lane.b32.xlu0 %v1340, 32
        %v3291 = vpop.permute.xlu0 %3290
        %3292 = vrot.lane.b32.xlu0 %v1341, 32
        %v3293 = vpop.permute.xlu0 %3292
        %3294 = vrot.lane.b32.xlu0 %v1342, 32
        %v3295 = vpop.permute.xlu0 %3294
        %3296 = vrot.lane.b32.xlu0 %v1343, 32
        %v3297 = vpop.permute.xlu0 %3296
        %3298 = vrot.lane.b32.xlu0 %v1344, 32
        %v3299 = vpop.permute.xlu0 %3298
        %3316 = vmatprep.subr.mxu0 0.0
        %3317 = vmatpush1.msra.mxu0 %v3269
        %3318 = vmatprep.subr.mxu0 0.0
        %3319 = vmatpush1.msra.mxu0 %v3271
        %3320 = vmatprep.subr.mxu0 0.0
        %3321 = vmatpush1.msra.mxu0 %v3273
        %3322 = vmatprep.subr.mxu0 0.0
        %3323 = vmatpush1.msra.mxu0 %v3275
        %3324 = vmatprep.subr.mxu0 0.0
        %3325 = vmatpush1.msra.mxu0 %v3277
        %3326 = vmatprep.subr.mxu0 0.0
        %3327 = vmatpush1.msra.mxu0 %v3279
        %3328 = vmatprep.subr.mxu0 0.0
        %3329 = vmatpush1.msra.mxu0 %v3281
        %3330 = vmatprep.subr.mxu0 0.0
        %3331 = vmatpush1.msra.mxu0 %v3283
        %3332 = vmatprep.subr.mxu0 0.0
        %3333 = vmatpush1.msra.mxu0 %v3285
        %3334 = vmatprep.subr.mxu0 0.0
        %3335 = vmatpush1.msra.mxu0 %v3287
        %3336 = vmatprep.subr.mxu0 0.0
        %3337 = vmatpush1.msra.mxu0 %v3289
        %3338 = vmatprep.subr.mxu0 0.0
        %3339 = vmatpush1.msra.mxu0 %v3291
        %3340 = vmatprep.subr.mxu0 0.0
        %3341 = vmatpush1.msra.mxu0 %v3293
        %3342 = vmatprep.subr.mxu0 0.0
        %3343 = vmatpush1.msra.mxu0 %v3295
        %3344 = vmatprep.subr.mxu0 0.0
        %3345 = vmatpush1.msra.mxu0 %v3297
        %3346 = vmatprep.subr.mxu0 0.0
        %3347 = vmatpush1.msra.mxu0 %v3299
        %3348 = vmatprep.subr.mxu0 0.0
        %3349 = vmatpush1.msra.mxu0 0.0
        %3350 = vmatprep.subr.mxu0 0.0
        %3351 = vmatpush1.msra.mxu0 0.0
        %3352 = vmatprep.subr.mxu0 0.0
        %3353 = vmatpush1.msra.mxu0 0.0
        %3354 = vmatprep.subr.mxu0 0.0
        %3355 = vmatpush1.msra.mxu0 0.0
        %3356 = vmatprep.subr.mxu0 0.0
        %3357 = vmatpush1.msra.mxu0 0.0
        %3358 = vmatprep.subr.mxu0 0.0
        %3359 = vmatpush1.msra.mxu0 0.0
        %3360 = vmatprep.subr.mxu0 0.0
        %3361 = vmatpush1.msra.mxu0 0.0
        %3362 = vmatprep.subr.mxu0 0.0
        %3363 = vmatpush1.msra.mxu0 0.0
        %3364 = vmatprep.subr.mxu0 0.0
        %3365 = vmatpush1.msra.mxu0 0.0
        %3366 = vmatprep.subr.mxu0 0.0
        %3367 = vmatpush1.msra.mxu0 0.0
        %3368 = vmatprep.subr.mxu0 0.0
        %3369 = vmatpush1.msra.mxu0 0.0
        %3370 = vmatprep.subr.mxu0 0.0
        %3371 = vmatpush1.msra.mxu0 0.0
        %3372 = vmatprep.subr.mxu0 0.0
        %3373 = vmatpush1.msra.mxu0 0.0
        %3374 = vmatprep.subr.mxu0 0.0
        %3375 = vmatpush1.msra.mxu0 0.0
        %3376 = vmatprep.subr.mxu0 0.0
        %3377 = vmatpush1.msra.mxu0 0.0
        %3378 = vmatprep.subr.mxu0 0.0
        %3379 = vmatpush1.msra.mxu0 0.0
        %3380 = vmatprep.mubr.f32.mxu0 0.0
        %3381 = vmatmul.mubr.f32.gmra.mrb[0].mxu0 %v3237
        %v3382 = vpop.f32.mrb[0].mxu0
        %v3383 = vadd.f32 0.0, %v3382
        %v3384 = vpop.f32.mrb[0].mxu0
        %3385 = vmatprep.mubr.f32.mxu0 0.0
        %3386 = vmatmul.mubr.f32.gmra.mrb[0].mxu0 %v3239
        %v3387 = vpop.f32.mrb[0].mxu0
        %v3388 = vadd.f32 0.0, %v3387
        %v3389 = vpop.f32.mrb[0].mxu0
        %3390 = vmatprep.mubr.f32.mxu0 0.0
        %3391 = vmatmul.mubr.f32.gmra.mrb[0].mxu0 %v3241
        %v3392 = vpop.f32.mrb[0].mxu0
        %v3393 = vadd.f32 0.0, %v3392
        %v3394 = vpop.f32.mrb[0].mxu0
        %3395 = vmatprep.mubr.f32.mxu0 0.0
        %3396 = vmatmul.mubr.f32.gmra.mrb[0].mxu0 %v3243
        %v3397 = vpop.f32.mrb[0].mxu0
        %v3398 = vadd.f32 0.0, %v3397
        %v3399 = vpop.f32.mrb[0].mxu0
        %3400 = vmatprep.mubr.f32.mxu0 0.0
        %3401 = vmatmul.mubr.f32.gmra.mrb[0].mxu0 %v3245
        %v3402 = vpop.f32.mrb[0].mxu0
        %v3403 = vadd.f32 0.0, %v3402
        %v3404 = vpop.f32.mrb[0].mxu0
        %3405 = vmatprep.mubr.f32.mxu0 0.0
        %3406 = vmatmul.mubr.f32.gmra.mrb[0].mxu0 %v3247
        %v3407 = vpop.f32.mrb[0].mxu0
        %v3408 = vadd.f32 0.0, %v3407
        %v3409 = vpop.f32.mrb[0].mxu0
        %3410 = vmatprep.mubr.f32.mxu0 0.0
        %3411 = vmatmul.mubr.f32.gmra.mrb[0].mxu0 %v3249
        %v3412 = vpop.f32.mrb[0].mxu0
        %v3413 = vadd.f32 0.0, %v3412
        %v3414 = vpop.f32.mrb[0].mxu0
        %3415 = vmatprep.mubr.f32.mxu0 0.0
        %3416 = vmatmul.mubr.f32.gmra.mrb[0].mxu0 %v3251
        %v3417 = vpop.f32.mrb[0].mxu0
        %v3418 = vadd.f32 0.0, %v3417
        %v3419 = vpop.f32.mrb[0].mxu0
        %3420 = vdwg.mxu0
        %v3421 = vrcp.pop %v3253
        %v3422 = vrcp.pop %v3255
        %v3423 = vrcp.pop %v3257
        %v3424 = vrcp.pop %v3259
        %v3425 = vrcp.pop %v3261
        %v3426 = vrcp.pop %v3263
        %v3427 = vrcp.pop %v3265
        %v3428 = vrcp.pop %v3267
        %v3429 = vmul.f32 %v3383, %v3421
        %v3430 = vmul.f32 %v3388, %v3422
        %v3431 = vmul.f32 %v3393, %v3423
        %v3432 = vmul.f32 %v3398, %v3424
        %v3433 = vmul.f32 %v3403, %v3425
        %v3434 = vmul.f32 %v3408, %v3426
        %v3435 = vmul.f32 %v3413, %v3427
        %v3436 = vmul.f32 %v3418, %v3428
        %v3438 = vsel %vm1361, %v3429, 0
        %v3441 = vsel %vm1361, %v3430, 0
        %v3444 = vsel %vm1361, %v3431, 0
        %v3447 = vsel %vm1361, %v3432, 0
        %v3450 = vsel %vm1361, %v3433, 0
        %v3453 = vsel %vm1361, %v3434, 0
        %v3456 = vsel %vm1361, %v3435, 0
        %v3459 = vsel %vm1361, %v3436, 0
        %3461 = vmatprep.subr.mxu0 0.0
        %3462 = vmatpush1.msra.mxu0 %v1357
        %3463 = vmatprep.subr.mxu0 0.0
        %3464 = vmatpush1.msra.mxu0 %v1358
        %3465 = vmatprep.subr.mxu0 0.0
        %3466 = vmatpush1.msra.mxu0 %v1359
        %3467 = vmatprep.subr.mxu0 0.0
        %3468 = vmatpush1.msra.mxu0 %v1360
        %3469 = vmatprep.subr.mxu0 0.0
        %3470 = vmatpush1.msra.mxu0 0.0
        %3471 = vmatprep.subr.mxu0 0.0
        %3472 = vmatpush1.msra.mxu0 0.0
        %3473 = vmatprep.subr.mxu0 0.0
        %3474 = vmatpush1.msra.mxu0 0.0
        %3475 = vmatprep.subr.mxu0 0.0
        %3476 = vmatpush1.msra.mxu0 0.0
        %3477 = vmatprep.subr.mxu0 0.0
        %3478 = vmatpush1.msra.mxu0 0.0
        %3479 = vmatprep.subr.mxu0 0.0
        %3480 = vmatpush1.msra.mxu0 0.0
        %3481 = vmatprep.subr.mxu0 0.0
        %3482 = vmatpush1.msra.mxu0 0.0
        %3483 = vmatprep.subr.mxu0 0.0
        %3484 = vmatpush1.msra.mxu0 0.0
        %3485 = vmatprep.subr.mxu0 0.0
        %3486 = vmatpush1.msra.mxu0 0.0
        %3487 = vmatprep.subr.mxu0 0.0
        %3488 = vmatpush1.msra.mxu0 0.0
        %3489 = vmatprep.subr.mxu0 0.0
        %3490 = vmatpush1.msra.mxu0 0.0
        %3491 = vmatprep.subr.mxu0 0.0
        %3492 = vmatpush1.msra.mxu0 0.0
        %3493 = vmatprep.subr.mxu0 0.0
        %3494 = vmatpush1.msra.mxu0 0.0
        %3495 = vmatprep.subr.mxu0 0.0
        %3496 = vmatpush1.msra.mxu0 0.0
        %3497 = vmatprep.subr.mxu0 0.0
        %3498 = vmatpush1.msra.mxu0 0.0
        %3499 = vmatprep.subr.mxu0 0.0
        %3500 = vmatpush1.msra.mxu0 0.0
        %3501 = vmatprep.subr.mxu0 0.0
        %3502 = vmatpush1.msra.mxu0 0.0
        %3503 = vmatprep.subr.mxu0 0.0
        %3504 = vmatpush1.msra.mxu0 0.0
        %3505 = vmatprep.subr.mxu0 0.0
        %3506 = vmatpush1.msra.mxu0 0.0
        %3507 = vmatprep.subr.mxu0 0.0
        %3508 = vmatpush1.msra.mxu0 0.0
        %3509 = vmatprep.subr.mxu0 0.0
        %3510 = vmatpush1.msra.mxu0 0.0
        %3511 = vmatprep.subr.mxu0 0.0
        %3512 = vmatpush1.msra.mxu0 0.0
        %3513 = vmatprep.subr.mxu0 0.0
        %3514 = vmatpush1.msra.mxu0 0.0
        %3515 = vmatprep.subr.mxu0 0.0
        %3516 = vmatpush1.msra.mxu0 0.0
        %3517 = vmatprep.subr.mxu0 0.0
        %3518 = vmatpush1.msra.mxu0 0.0
        %3519 = vmatprep.subr.mxu0 0.0
        %3520 = vmatpush1.msra.mxu0 0.0
        %3521 = vmatprep.subr.mxu0 0.0
        %3522 = vmatpush1.msra.mxu0 0.0
        %3523 = vmatprep.subr.mxu0 0.0
        %3524 = vmatpush1.msra.mxu0 0.0
        %3525 = vmatprep.mubr.f32.mxu0 0.0
        %3526 = vmatmul.mubr.f32.gmra.mrb[0].mxu0 %v3438
        %v3527 = vpop.f32.mrb[0].mxu0
        %v3528 = vadd.f32 0.0, %v3527
        %v3529 = vpop.f32.mrb[0].mxu0
        %3530 = vmatprep.mubr.f32.mxu0 0.0
        %3531 = vmatmul.mubr.f32.gmra.mrb[0].mxu0 %v3441
        %v3532 = vpop.f32.mrb[0].mxu0
        %v3533 = vadd.f32 0.0, %v3532
        %v3534 = vpop.f32.mrb[0].mxu0
        %3535 = vmatprep.mubr.f32.mxu0 0.0
        %3536 = vmatmul.mubr.f32.gmra.mrb[0].mxu0 %v3444
        %v3537 = vpop.f32.mrb[0].mxu0
        %v3538 = vadd.f32 0.0, %v3537
        %v3539 = vpop.f32.mrb[0].mxu0
        %3540 = vmatprep.mubr.f32.mxu0 0.0
        %3541 = vmatmul.mubr.f32.gmra.mrb[0].mxu0 %v3447
        %v3542 = vpop.f32.mrb[0].mxu0
        %v3543 = vadd.f32 0.0, %v3542
        %v3544 = vpop.f32.mrb[0].mxu0
        %3545 = vmatprep.mubr.f32.mxu0 0.0
        %3546 = vmatmul.mubr.f32.gmra.mrb[0].mxu0 %v3450
        %v3547 = vpop.f32.mrb[0].mxu0
        %v3548 = vadd.f32 0.0, %v3547
        %v3549 = vpop.f32.mrb[0].mxu0
        %3550 = vmatprep.mubr.f32.mxu0 0.0
        %3551 = vmatmul.mubr.f32.gmra.mrb[0].mxu0 %v3453
        %v3552 = vpop.f32.mrb[0].mxu0
        %v3553 = vadd.f32 0.0, %v3552
        %v3554 = vpop.f32.mrb[0].mxu0
        %3555 = vmatprep.mubr.f32.mxu0 0.0
        %3556 = vmatmul.mubr.f32.gmra.mrb[0].mxu0 %v3456
        %v3557 = vpop.f32.mrb[0].mxu0
        %v3558 = vadd.f32 0.0, %v3557
        %v3559 = vpop.f32.mrb[0].mxu0
        %3560 = vmatprep.mubr.f32.mxu0 0.0
        %3561 = vmatmul.mubr.f32.gmra.mrb[0].mxu0 %v3459
        %v3562 = vpop.f32.mrb[0].mxu0
        %v3563 = vadd.f32 0.0, %v3562
        %v3564 = vpop.f32.mrb[0].mxu0
        %3565 = vdwg.mxu0
        %v3566 = vadd.f32 %v2995, %v3528
        %v3567 = vadd.f32 %v2996, %v3533
        %v3568 = vadd.f32 %v2997, %v3538
        %v3569 = vadd.f32 %v2998, %v3543
        %v3570 = vadd.f32 %v2999, %v3548
        %v3571 = vadd.f32 %v3000, %v3553
        %v3572 = vadd.f32 %v3001, %v3558
        %v3573 = vadd.f32 %v3002, %v3563
        %v3574 = vld [vmem:[#allocation19] sm:$0x1]
        %v3576 = vlaneseq
        %v3577 = vshrl.u32 %v3576, 7
        %v3578 = vsub.s32 0, %v3577
        %v3579 = vrot.slane %v3574, %v3578
        %v3581 = vadd.f32 %v3566, %v3579
        %v3582 = vadd.f32 %v3567, %v3579
        %v3583 = vadd.f32 %v3568, %v3579
        %v3584 = vadd.f32 %v3569, %v3579
        %v3585 = vadd.f32 %v3570, %v3579
        %v3586 = vadd.f32 %v3571, %v3579
        %v3587 = vadd.f32 %v3572, %v3579
        %v3588 = vadd.f32 %v3573, %v3579
        %v3589 = vadd.f32 %v1296, %v3581
        %v3590 = vadd.f32 %v1297, %v3582
        %v3591 = vadd.f32 %v1298, %v3583
        %v3592 = vadd.f32 %v1299, %v3584
        %v3593 = vadd.f32 %v1300, %v3585
        %v3594 = vadd.f32 %v1301, %v3586
        %v3595 = vadd.f32 %v1302, %v3587
        %v3596 = vadd.f32 %v1303, %v3588
        %v3597 = vld [vmem:[#allocation11] sm:$0x1]
        %v3598 = vld [vmem:[#allocation13] sm:$0x1]
        %3599 = vadd.xlane.f32.xlu0 %v3589
        %v3600 = vpop.xlane.xlu0 %3599
        %3601 = vadd.xlane.f32.xlu0 %v3590
        %v3602 = vpop.xlane.xlu0 %3601
        %3603 = vadd.xlane.f32.xlu0 %v3591
        %v3604 = vpop.xlane.xlu0 %3603
        %3605 = vadd.xlane.f32.xlu0 %v3592
        %v3606 = vpop.xlane.xlu0 %3605
        %3607 = vadd.xlane.f32.xlu0 %v3593
        %v3608 = vpop.xlane.xlu0 %3607
        %3609 = vadd.xlane.f32.xlu0 %v3594
        %v3610 = vpop.xlane.xlu0 %3609
        %3611 = vadd.xlane.f32.xlu0 %v3595
        %v3612 = vpop.xlane.xlu0 %3611
        %3613 = vadd.xlane.f32.xlu0 %v3596
        %v3614 = vpop.xlane.xlu0 %3613
        %v3615 = vrcp.pop 128.0
        %v3616 = vmul.f32 %v3600, %v3615
        %v3617 = vmul.f32 %v3602, %v3615
        %v3618 = vmul.f32 %v3604, %v3615
        %v3619 = vmul.f32 %v3606, %v3615
        %v3620 = vmul.f32 %v3608, %v3615
        %v3621 = vmul.f32 %v3610, %v3615
        %v3622 = vmul.f32 %v3612, %v3615
        %v3623 = vmul.f32 %v3614, %v3615
        %v3624 = vsub.f32 %v3589, %v3616
        %v3625 = vsub.f32 %v3590, %v3617
        %v3626 = vsub.f32 %v3591, %v3618
        %v3627 = vsub.f32 %v3592, %v3619
        %v3628 = vsub.f32 %v3593, %v3620
        %v3629 = vsub.f32 %v3594, %v3621
        %v3630 = vsub.f32 %v3595, %v3622
        %v3631 = vsub.f32 %v3596, %v3623
        %v3632 = vmul.f32 %v3624, %v3624
        %v3633 = vmul.f32 %v3625, %v3625
        %v3634 = vmul.f32 %v3626, %v3626
        %v3635 = vmul.f32 %v3627, %v3627
        %v3636 = vmul.f32 %v3628, %v3628
        %v3637 = vmul.f32 %v3629, %v3629
        %v3638 = vmul.f32 %v3630, %v3630
        %v3639 = vmul.f32 %v3631, %v3631
        %3640 = vadd.xlane.f32.xlu0 %v3632
        %v3641 = vpop.xlane.xlu0 %3640
        %3642 = vadd.xlane.f32.xlu0 %v3633
        %v3643 = vpop.xlane.xlu0 %3642
        %3644 = vadd.xlane.f32.xlu0 %v3634
        %v3645 = vpop.xlane.xlu0 %3644
        %3646 = vadd.xlane.f32.xlu0 %v3635
        %v3647 = vpop.xlane.xlu0 %3646
        %3648 = vadd.xlane.f32.xlu0 %v3636
        %v3649 = vpop.xlane.xlu0 %3648
        %3650 = vadd.xlane.f32.xlu0 %v3637
        %v3651 = vpop.xlane.xlu0 %3650
        %3652 = vadd.xlane.f32.xlu0 %v3638
        %v3653 = vpop.xlane.xlu0 %3652
        %3654 = vadd.xlane.f32.xlu0 %v3639
        %v3655 = vpop.xlane.xlu0 %3654
        %v3656 = vmul.f32 %v3641, %v3615
        %v3657 = vmul.f32 %v3643, %v3615
        %v3658 = vmul.f32 %v3645, %v3615
        %v3659 = vmul.f32 %v3647, %v3615
        %v3660 = vmul.f32 %v3649, %v3615
        %v3661 = vmul.f32 %v3651, %v3615
        %v3662 = vmul.f32 %v3653, %v3615
        %v3663 = vmul.f32 %v3655, %v3615
        %v3664 = vadd.f32 %v3656, 1e-05
        %v3665 = vadd.f32 %v3657, 1e-05
        %v3666 = vadd.f32 %v3658, 1e-05
        %v3667 = vadd.f32 %v3659, 1e-05
        %v3668 = vadd.f32 %v3660, 1e-05
        %v3669 = vadd.f32 %v3661, 1e-05
        %v3670 = vadd.f32 %v3662, 1e-05
        %v3671 = vadd.f32 %v3663, 1e-05
        %v3672 = vrsqrt.pop %v3664
        %v3673 = vrsqrt.pop %v3665
        %v3674 = vrsqrt.pop %v3666
        %v3675 = vrsqrt.pop %v3667
        %v3676 = vrsqrt.pop %v3668
        %v3677 = vrsqrt.pop %v3669
        %v3678 = vrsqrt.pop %v3670
        %v3679 = vrsqrt.pop %v3671
        %v3680 = vmul.f32 %v3624, %v3672
        %v3681 = vmul.f32 %v3625, %v3673
        %v3682 = vmul.f32 %v3626, %v3674
        %v3683 = vmul.f32 %v3627, %v3675
        %v3684 = vmul.f32 %v3628, %v3676
        %v3685 = vmul.f32 %v3629, %v3677
        %v3686 = vmul.f32 %v3630, %v3678
        %v3687 = vmul.f32 %v3631, %v3679
        %v3689 = vlaneseq
        %v3690 = vshrl.u32 %v3689, 7
        %v3691 = vsub.s32 0, %v3690
        %v3692 = vrot.slane %v3597, %v3691
        %v3694 = vmul.f32 %v3680, %v3692
        %v3695 = vmul.f32 %v3681, %v3692
        %v3696 = vmul.f32 %v3682, %v3692
        %v3697 = vmul.f32 %v3683, %v3692
        %v3698 = vmul.f32 %v3684, %v3692
        %v3699 = vmul.f32 %v3685, %v3692
        %v3700 = vmul.f32 %v3686, %v3692
        %v3701 = vmul.f32 %v3687, %v3692
        %v3703 = vlaneseq
        %v3704 = vshrl.u32 %v3703, 7
        %v3705 = vsub.s32 0, %v3704
        %v3706 = vrot.slane %v3598, %v3705
        %v3708 = vadd.f32 %v3694, %v3706
        %v3709 = vadd.f32 %v3695, %v3706
        %v3710 = vadd.f32 %v3696, %v3706
        %v3711 = vadd.f32 %v3697, %v3706
        %v3712 = vadd.f32 %v3698, %v3706
        %v3713 = vadd.f32 %v3699, %v3706
        %v3714 = vadd.f32 %v3700, %v3706
        %v3715 = vadd.f32 %v3701, %v3706
        %v3716 = vld [vmem:[#allocation20] sm:$0xff]
        %v3717 = vld [vmem:[#allocation20 + $0x8] sm:$0xff]
        %v3718 = vld [vmem:[#allocation20 + $0x10] sm:$0xff]
        %v3719 = vld [vmem:[#allocation20 + $0x18] sm:$0xff]
        %v3720 = vld [vmem:[#allocation20 + $0x20] sm:$0xff]
        %v3721 = vld [vmem:[#allocation20 + $0x28] sm:$0xff]
        %v3722 = vld [vmem:[#allocation20 + $0x30] sm:$0xff]
        %v3723 = vld [vmem:[#allocation20 + $0x38] sm:$0xff]
        %v3724 = vld [vmem:[#allocation20 + $0x40] sm:$0xff]
        %v3725 = vld [vmem:[#allocation20 + $0x48] sm:$0xff]
        %v3726 = vld [vmem:[#allocation20 + $0x50] sm:$0xff]
        %v3727 = vld [vmem:[#allocation20 + $0x58] sm:$0xff]
        %v3728 = vld [vmem:[#allocation20 + $0x60] sm:$0xff]
        %v3729 = vld [vmem:[#allocation20 + $0x68] sm:$0xff]
        %v3730 = vld [vmem:[#allocation20 + $0x70] sm:$0xff]
        %v3731 = vld [vmem:[#allocation20 + $0x78] sm:$0xff]
        %v3732 = vld [vmem:[#allocation20 + $0x80] sm:$0xff]
        %v3733 = vld [vmem:[#allocation20 + $0x88] sm:$0xff]
        %v3734 = vld [vmem:[#allocation20 + $0x90] sm:$0xff]
        %v3735 = vld [vmem:[#allocation20 + $0x98] sm:$0xff]
        %v3736 = vld [vmem:[#allocation20 + $0xa0] sm:$0xff]
        %v3737 = vld [vmem:[#allocation20 + $0xa8] sm:$0xff]
        %v3738 = vld [vmem:[#allocation20 + $0xb0] sm:$0xff]
        %v3739 = vld [vmem:[#allocation20 + $0xb8] sm:$0xff]
        %v3740 = vld [vmem:[#allocation20 + $0xc0] sm:$0xff]
        %v3741 = vld [vmem:[#allocation20 + $0xc8] sm:$0xff]
        %v3742 = vld [vmem:[#allocation20 + $0xd0] sm:$0xff]
        %v3743 = vld [vmem:[#allocation20 + $0xd8] sm:$0xff]
        %v3744 = vld [vmem:[#allocation20 + $0xe0] sm:$0xff]
        %v3745 = vld [vmem:[#allocation20 + $0xe8] sm:$0xff]
        %v3746 = vld [vmem:[#allocation20 + $0xf0] sm:$0xff]
        %v3747 = vld [vmem:[#allocation20 + $0xf8] sm:$0xff]
        %v3748 = vld [vmem:[#allocation20 + $0x100] sm:$0xff]
        %v3749 = vld [vmem:[#allocation20 + $0x108] sm:$0xff]
        %v3750 = vld [vmem:[#allocation20 + $0x110] sm:$0xff]
        %v3751 = vld [vmem:[#allocation20 + $0x118] sm:$0xff]
        %v3752 = vld [vmem:[#allocation20 + $0x120] sm:$0xff]
        %v3753 = vld [vmem:[#allocation20 + $0x128] sm:$0xff]
        %v3754 = vld [vmem:[#allocation20 + $0x130] sm:$0xff]
        %v3755 = vld [vmem:[#allocation20 + $0x138] sm:$0xff]
        %v3756 = vld [vmem:[#allocation20 + $0x140] sm:$0xff]
        %v3757 = vld [vmem:[#allocation20 + $0x148] sm:$0xff]
        %v3758 = vld [vmem:[#allocation20 + $0x150] sm:$0xff]
        %v3759 = vld [vmem:[#allocation20 + $0x158] sm:$0xff]
        %v3760 = vld [vmem:[#allocation20 + $0x160] sm:$0xff]
        %v3761 = vld [vmem:[#allocation20 + $0x168] sm:$0xff]
        %v3762 = vld [vmem:[#allocation20 + $0x170] sm:$0xff]
        %v3763 = vld [vmem:[#allocation20 + $0x178] sm:$0xff]
        %v3764 = vld [vmem:[#allocation20 + $0x180] sm:$0xff]
        %v3765 = vld [vmem:[#allocation20 + $0x188] sm:$0xff]
        %v3766 = vld [vmem:[#allocation20 + $0x190] sm:$0xff]
        %v3767 = vld [vmem:[#allocation20 + $0x198] sm:$0xff]
        %v3768 = vld [vmem:[#allocation20 + $0x1a0] sm:$0xff]
        %v3769 = vld [vmem:[#allocation20 + $0x1a8] sm:$0xff]
        %v3770 = vld [vmem:[#allocation20 + $0x1b0] sm:$0xff]
        %v3771 = vld [vmem:[#allocation20 + $0x1b8] sm:$0xff]
        %v3772 = vld [vmem:[#allocation20 + $0x1c0] sm:$0xff]
        %v3773 = vld [vmem:[#allocation20 + $0x1c8] sm:$0xff]
        %v3774 = vld [vmem:[#allocation20 + $0x1d0] sm:$0xff]
        %v3775 = vld [vmem:[#allocation20 + $0x1d8] sm:$0xff]
        %v3776 = vld [vmem:[#allocation20 + $0x1e0] sm:$0xff]
        %v3777 = vld [vmem:[#allocation20 + $0x1e8] sm:$0xff]
        %v3778 = vld [vmem:[#allocation20 + $0x1f0] sm:$0xff]
        %v3779 = vld [vmem:[#allocation20 + $0x1f8] sm:$0xff]
        %v3780 = vld [vmem:[#allocation22] sm:$0xf]
        %v3782 = vlaneseq
        %v3783 = vshrl.u32 %v3782, 7
        %v3784 = vsub.s32 0, %v3783
        %v3785 = vrot.slane %v3780, %v3784
        %v3786 = vlaneseq
        %v3787 = vshrl.u32 %v3786, 7
        %v3788 = vsub.s32 1, %v3787
        %v3789 = vrot.slane %v3780, %v3788
        %v3790 = vlaneseq
        %v3791 = vshrl.u32 %v3790, 7
        %v3792 = vsub.s32 2, %v3791
        %v3793 = vrot.slane %v3780, %v3792
        %v3794 = vlaneseq
        %v3795 = vshrl.u32 %v3794, 7
        %v3796 = vsub.s32 3, %v3795
        %v3797 = vrot.slane %v3780, %v3796
        %3802 = vmatprep.subr.mxu0 %v3717
        %3803 = vmatpush1.msra.mxu0 %v3716
        %3804 = vmatprep.subr.mxu0 %v3721
        %3805 = vmatpush1.msra.mxu0 %v3720
        %3806 = vmatprep.subr.mxu0 %v3725
        %3807 = vmatpush1.msra.mxu0 %v3724
        %3808 = vmatprep.subr.mxu0 %v3729
        %3809 = vmatpush1.msra.mxu0 %v3728
        %3810 = vmatprep.subr.mxu0 %v3733
        %3811 = vmatpush1.msra.mxu0 %v3732
        %3812 = vmatprep.subr.mxu0 %v3737
        %3813 = vmatpush1.msra.mxu0 %v3736
        %3814 = vmatprep.subr.mxu0 %v3741
        %3815 = vmatpush1.msra.mxu0 %v3740
        %3816 = vmatprep.subr.mxu0 %v3745
        %3817 = vmatpush1.msra.mxu0 %v3744
        %3818 = vmatprep.subr.mxu0 %v3749
        %3819 = vmatpush1.msra.mxu0 %v3748
        %3820 = vmatprep.subr.mxu0 %v3753
        %3821 = vmatpush1.msra.mxu0 %v3752
        %3822 = vmatprep.subr.mxu0 %v3757
        %3823 = vmatpush1.msra.mxu0 %v3756
        %3824 = vmatprep.subr.mxu0 %v3761
        %3825 = vmatpush1.msra.mxu0 %v3760
        %3826 = vmatprep.subr.mxu0 %v3765
        %3827 = vmatpush1.msra.mxu0 %v3764
        %3828 = vmatprep.subr.mxu0 %v3769
        %3829 = vmatpush1.msra.mxu0 %v3768
        %3830 = vmatprep.subr.mxu0 %v3773
        %3831 = vmatpush1.msra.mxu0 %v3772
        %3832 = vmatprep.subr.mxu0 %v3777
        %3833 = vmatpush1.msra.mxu0 %v3776
        %3834 = vmatprep.subr.mxu0 0.0
        %3835 = vmatpush1.msra.mxu0 0.0
        %3836 = vmatprep.subr.mxu0 0.0
        %3837 = vmatpush1.msra.mxu0 0.0
        %3838 = vmatprep.subr.mxu0 0.0
        %3839 = vmatpush1.msra.mxu0 0.0
        %3840 = vmatprep.subr.mxu0 0.0
        %3841 = vmatpush1.msra.mxu0 0.0
        %3842 = vmatprep.subr.mxu0 0.0
        %3843 = vmatpush1.msra.mxu0 0.0
        %3844 = vmatprep.subr.mxu0 0.0
        %3845 = vmatpush1.msra.mxu0 0.0
        %3846 = vmatprep.subr.mxu0 0.0
        %3847 = vmatpush1.msra.mxu0 0.0
        %3848 = vmatprep.subr.mxu0 0.0
        %3849 = vmatpush1.msra.mxu0 0.0
        %3850 = vmatprep.subr.mxu0 0.0
        %3851 = vmatpush1.msra.mxu0 0.0
        %3852 = vmatprep.subr.mxu0 0.0
        %3853 = vmatpush1.msra.mxu0 0.0
        %3854 = vmatprep.subr.mxu0 0.0
        %3855 = vmatpush1.msra.mxu0 0.0
        %3856 = vmatprep.subr.mxu0 0.0
        %3857 = vmatpush1.msra.mxu0 0.0
        %3858 = vmatprep.subr.mxu0 0.0
        %3859 = vmatpush1.msra.mxu0 0.0
        %3860 = vmatprep.subr.mxu0 0.0
        %3861 = vmatpush1.msra.mxu0 0.0
        %3862 = vmatprep.subr.mxu0 0.0
        %3863 = vmatpush1.msra.mxu0 0.0
        %3864 = vmatprep.subr.mxu0 0.0
        %3865 = vmatpush1.msra.mxu0 0.0
        %3866 = vmatprep.mubr.f32.mxu0 0.0
        %3867 = vmatmul.mubr.f32.gmra.mrb[0].mxu0 %v3708
        %v3868 = vpop.f32.mrb[0].mxu0
        %v3869 = vadd.f32 %v3785, %v3868
        %v3870 = vpop.f32.mrb[0].mxu0
        %v3871 = vadd.f32 %v3789, %v3870
        %3872 = vmatprep.mubr.f32.mxu0 0.0
        %3873 = vmatmul.mubr.f32.gmra.mrb[0].mxu0 %v3709
        %v3874 = vpop.f32.mrb[0].mxu0
        %v3875 = vadd.f32 %v3785, %v3874
        %v3876 = vpop.f32.mrb[0].mxu0
        %v3877 = vadd.f32 %v3789, %v3876
        %3878 = vmatprep.mubr.f32.mxu0 0.0
        %3879 = vmatmul.mubr.f32.gmra.mrb[0].mxu0 %v3710
        %v3880 = vpop.f32.mrb[0].mxu0
        %v3881 = vadd.f32 %v3785, %v3880
        %v3882 = vpop.f32.mrb[0].mxu0
        %v3883 = vadd.f32 %v3789, %v3882
        %3884 = vmatprep.mubr.f32.mxu0 0.0
        %3885 = vmatmul.mubr.f32.gmra.mrb[0].mxu0 %v3711
        %v3886 = vpop.f32.mrb[0].mxu0
        %v3887 = vadd.f32 %v3785, %v3886
        %v3888 = vpop.f32.mrb[0].mxu0
        %v3889 = vadd.f32 %v3789, %v3888
        %3890 = vmatprep.mubr.f32.mxu0 0.0
        %3891 = vmatmul.mubr.f32.gmra.mrb[0].mxu0 %v3712
        %v3892 = vpop.f32.mrb[0].mxu0
        %v3893 = vadd.f32 %v3785, %v3892
        %v3894 = vpop.f32.mrb[0].mxu0
        %v3895 = vadd.f32 %v3789, %v3894
        %3896 = vmatprep.mubr.f32.mxu0 0.0
        %3897 = vmatmul.mubr.f32.gmra.mrb[0].mxu0 %v3713
        %v3898 = vpop.f32.mrb[0].mxu0
        %v3899 = vadd.f32 %v3785, %v3898
        %v3900 = vpop.f32.mrb[0].mxu0
        %v3901 = vadd.f32 %v3789, %v3900
        %3902 = vmatprep.mubr.f32.mxu0 0.0
        %3903 = vmatmul.mubr.f32.gmra.mrb[0].mxu0 %v3714
        %v3904 = vpop.f32.mrb[0].mxu0
        %v3905 = vadd.f32 %v3785, %v3904
        %v3906 = vpop.f32.mrb[0].mxu0
        %v3907 = vadd.f32 %v3789, %v3906
        %3908 = vmatprep.mubr.f32.mxu0 0.0
        %3909 = vmatmul.mubr.f32.gmra.mrb[0].mxu0 %v3715
        %v3910 = vpop.f32.mrb[0].mxu0
        %v3911 = vadd.f32 %v3785, %v3910
        %v3912 = vpop.f32.mrb[0].mxu0
        %v3913 = vadd.f32 %v3789, %v3912
        %3914 = vdwg.mxu0
        %3915 = vmatprep.subr.mxu0 %v3719
        %3916 = vmatpush1.msra.mxu0 %v3718
        %3917 = vmatprep.subr.mxu0 %v3723
        %3918 = vmatpush1.msra.mxu0 %v3722
        %3919 = vmatprep.subr.mxu0 %v3727
        %3920 = vmatpush1.msra.mxu0 %v3726
        %3921 = vmatprep.subr.mxu0 %v3731
        %3922 = vmatpush1.msra.mxu0 %v3730
        %3923 = vmatprep.subr.mxu0 %v3735
        %3924 = vmatpush1.msra.mxu0 %v3734
        %3925 = vmatprep.subr.mxu0 %v3739
        %3926 = vmatpush1.msra.mxu0 %v3738
        %3927 = vmatprep.subr.mxu0 %v3743
        %3928 = vmatpush1.msra.mxu0 %v3742
        %3929 = vmatprep.subr.mxu0 %v3747
        %3930 = vmatpush1.msra.mxu0 %v3746
        %3931 = vmatprep.subr.mxu0 %v3751
        %3932 = vmatpush1.msra.mxu0 %v3750
        %3933 = vmatprep.subr.mxu0 %v3755
        %3934 = vmatpush1.msra.mxu0 %v3754
        %3935 = vmatprep.subr.mxu0 %v3759
        %3936 = vmatpush1.msra.mxu0 %v3758
        %3937 = vmatprep.subr.mxu0 %v3763
        %3938 = vmatpush1.msra.mxu0 %v3762
        %3939 = vmatprep.subr.mxu0 %v3767
        %3940 = vmatpush1.msra.mxu0 %v3766
        %3941 = vmatprep.subr.mxu0 %v3771
        %3942 = vmatpush1.msra.mxu0 %v3770
        %3943 = vmatprep.subr.mxu0 %v3775
        %3944 = vmatpush1.msra.mxu0 %v3774
        %3945 = vmatprep.subr.mxu0 %v3779
        %3946 = vmatpush1.msra.mxu0 %v3778
        %3947 = vmatprep.subr.mxu0 0.0
        %3948 = vmatpush1.msra.mxu0 0.0
        %3949 = vmatprep.subr.mxu0 0.0
        %3950 = vmatpush1.msra.mxu0 0.0
        %3951 = vmatprep.subr.mxu0 0.0
        %3952 = vmatpush1.msra.mxu0 0.0
        %3953 = vmatprep.subr.mxu0 0.0
        %3954 = vmatpush1.msra.mxu0 0.0
        %3955 = vmatprep.subr.mxu0 0.0
        %3956 = vmatpush1.msra.mxu0 0.0
        %3957 = vmatprep.subr.mxu0 0.0
        %3958 = vmatpush1.msra.mxu0 0.0
        %3959 = vmatprep.subr.mxu0 0.0
        %3960 = vmatpush1.msra.mxu0 0.0
        %3961 = vmatprep.subr.mxu0 0.0
        %3962 = vmatpush1.msra.mxu0 0.0
        %3963 = vmatprep.subr.mxu0 0.0
        %3964 = vmatpush1.msra.mxu0 0.0
        %3965 = vmatprep.subr.mxu0 0.0
        %3966 = vmatpush1.msra.mxu0 0.0
        %3967 = vmatprep.subr.mxu0 0.0
        %3968 = vmatpush1.msra.mxu0 0.0
        %3969 = vmatprep.subr.mxu0 0.0
        %3970 = vmatpush1.msra.mxu0 0.0
        %3971 = vmatprep.subr.mxu0 0.0
        %3972 = vmatpush1.msra.mxu0 0.0
        %3973 = vmatprep.subr.mxu0 0.0
        %3974 = vmatpush1.msra.mxu0 0.0
        %3975 = vmatprep.subr.mxu0 0.0
        %3976 = vmatpush1.msra.mxu0 0.0
        %3977 = vmatprep.subr.mxu0 0.0
        %3978 = vmatpush1.msra.mxu0 0.0
        %3979 = vmatprep.mubr.f32.mxu0 0.0
        %3980 = vmatmul.mubr.f32.gmra.mrb[0].mxu0 %v3708
        %v3981 = vpop.f32.mrb[0].mxu0
        %v3982 = vadd.f32 %v3793, %v3981
        %v3983 = vpop.f32.mrb[0].mxu0
        %v3984 = vadd.f32 %v3797, %v3983
        %3985 = vmatprep.mubr.f32.mxu0 0.0
        %3986 = vmatmul.mubr.f32.gmra.mrb[0].mxu0 %v3709
        %v3987 = vpop.f32.mrb[0].mxu0
        %v3988 = vadd.f32 %v3793, %v3987
        %v3989 = vpop.f32.mrb[0].mxu0
        %v3990 = vadd.f32 %v3797, %v3989
        %3991 = vmatprep.mubr.f32.mxu0 0.0
        %3992 = vmatmul.mubr.f32.gmra.mrb[0].mxu0 %v3710
        %v3993 = vpop.f32.mrb[0].mxu0
        %v3994 = vadd.f32 %v3793, %v3993
        %v3995 = vpop.f32.mrb[0].mxu0
        %v3996 = vadd.f32 %v3797, %v3995
        %3997 = vmatprep.mubr.f32.mxu0 0.0
        %3998 = vmatmul.mubr.f32.gmra.mrb[0].mxu0 %v3711
        %v3999 = vpop.f32.mrb[0].mxu0
        %v4000 = vadd.f32 %v3793, %v3999
        %v4001 = vpop.f32.mrb[0].mxu0
        %v4002 = vadd.f32 %v3797, %v4001
        %4003 = vmatprep.mubr.f32.mxu0 0.0
        %4004 = vmatmul.mubr.f32.gmra.mrb[0].mxu0 %v3712
        %v4005 = vpop.f32.mrb[0].mxu0
        %v4006 = vadd.f32 %v3793, %v4005
        %v4007 = vpop.f32.mrb[0].mxu0
        %v4008 = vadd.f32 %v3797, %v4007
        %4009 = vmatprep.mubr.f32.mxu0 0.0
        %4010 = vmatmul.mubr.f32.gmra.mrb[0].mxu0 %v3713
        %v4011 = vpop.f32.mrb[0].mxu0
        %v4012 = vadd.f32 %v3793, %v4011
        %v4013 = vpop.f32.mrb[0].mxu0
        %v4014 = vadd.f32 %v3797, %v4013
        %4015 = vmatprep.mubr.f32.mxu0 0.0
        %4016 = vmatmul.mubr.f32.gmra.mrb[0].mxu0 %v3714
        %v4017 = vpop.f32.mrb[0].mxu0
        %v4018 = vadd.f32 %v3793, %v4017
        %v4019 = vpop.f32.mrb[0].mxu0
        %v4020 = vadd.f32 %v3797, %v4019
        %4021 = vmatprep.mubr.f32.mxu0 0.0
        %4022 = vmatmul.mubr.f32.gmra.mrb[0].mxu0 %v3715
        %v4023 = vpop.f32.mrb[0].mxu0
        %v4024 = vadd.f32 %v3793, %v4023
        %v4025 = vpop.f32.mrb[0].mxu0
        %v4026 = vadd.f32 %v3797, %v4025
        %4027 = vdwg.mxu0
        %v4028 = vmul.f32 %v3869, 0.5
        %v4029 = vmul.f32 %v3871, 0.5
        %v4030 = vmul.f32 %v3982, 0.5
        %v4031 = vmul.f32 %v3984, 0.5
        %v4032 = vmul.f32 %v3875, 0.5
        %v4033 = vmul.f32 %v3877, 0.5
        %v4034 = vmul.f32 %v3988, 0.5
        %v4035 = vmul.f32 %v3990, 0.5
        %v4036 = vmul.f32 %v3881, 0.5
        %v4037 = vmul.f32 %v3883, 0.5
        %v4038 = vmul.f32 %v3994, 0.5
        %v4039 = vmul.f32 %v3996, 0.5
        %v4040 = vmul.f32 %v3887, 0.5
        %v4041 = vmul.f32 %v3889, 0.5
        %v4042 = vmul.f32 %v4000, 0.5
        %v4043 = vmul.f32 %v4002, 0.5
        %v4044 = vmul.f32 %v3893, 0.5
        %v4045 = vmul.f32 %v3895, 0.5
        %v4046 = vmul.f32 %v4006, 0.5
        %v4047 = vmul.f32 %v4008, 0.5
        %v4048 = vmul.f32 %v3899, 0.5
        %v4049 = vmul.f32 %v3901, 0.5
        %v4050 = vmul.f32 %v4012, 0.5
        %v4051 = vmul.f32 %v4014, 0.5
        %v4052 = vmul.f32 %v3905, 0.5
        %v4053 = vmul.f32 %v3907, 0.5
        %v4054 = vmul.f32 %v4018, 0.5
        %v4055 = vmul.f32 %v4020, 0.5
        %v4056 = vmul.f32 %v3911, 0.5
        %v4057 = vmul.f32 %v3913, 0.5
        %v4058 = vmul.f32 %v4024, 0.5
        %v4059 = vmul.f32 %v4026, 0.5
        %v4060 = vmul.f32 %v3869, 0.70710677
        %v4061 = vmul.f32 %v3871, 0.70710677
        %v4062 = vmul.f32 %v3982, 0.70710677
        %v4063 = vmul.f32 %v3984, 0.70710677
        %v4064 = vmul.f32 %v3875, 0.70710677
        %v4065 = vmul.f32 %v3877, 0.70710677
        %v4066 = vmul.f32 %v3988, 0.70710677
        %v4067 = vmul.f32 %v3990, 0.70710677
        %v4068 = vmul.f32 %v3881, 0.70710677
        %v4069 = vmul.f32 %v3883, 0.70710677
        %v4070 = vmul.f32 %v3994, 0.70710677
        %v4071 = vmul.f32 %v3996, 0.70710677
        %v4072 = vmul.f32 %v3887, 0.70710677
        %v4073 = vmul.f32 %v3889, 0.70710677
        %v4074 = vmul.f32 %v4000, 0.70710677
        %v4075 = vmul.f32 %v4002, 0.70710677
        %v4076 = vmul.f32 %v3893, 0.70710677
        %v4077 = vmul.f32 %v3895, 0.70710677
        %v4078 = vmul.f32 %v4006, 0.70710677
        %v4079 = vmul.f32 %v4008, 0.70710677
        %v4080 = vmul.f32 %v3899, 0.70710677
        %v4081 = vmul.f32 %v3901, 0.70710677
        %v4082 = vmul.f32 %v4012, 0.70710677
        %v4083 = vmul.f32 %v4014, 0.70710677
        %v4084 = vmul.f32 %v3905, 0.70710677
        %v4085 = vmul.f32 %v3907, 0.70710677
        %v4086 = vmul.f32 %v4018, 0.70710677
        %v4087 = vmul.f32 %v4020, 0.70710677
        %v4088 = vmul.f32 %v3911, 0.70710677
        %v4089 = vmul.f32 %v3913, 0.70710677
        %v4090 = vmul.f32 %v4024, 0.70710677
        %v4091 = vmul.f32 %v4026, 0.70710677
        %v4092 = verf.f32.pop %v4060
        %v4093 = verf.f32.pop %v4061
        %v4094 = verf.f32.pop %v4062
        %v4095 = verf.f32.pop %v4063
        %v4096 = verf.f32.pop %v4064
        %v4097 = verf.f32.pop %v4065
        %v4098 = verf.f32.pop %v4066
        %v4099 = verf.f32.pop %v4067
        %v4100 = verf.f32.pop %v4068
        %v4101 = verf.f32.pop %v4069
        %v4102 = verf.f32.pop %v4070
        %v4103 = verf.f32.pop %v4071
        %v4104 = verf.f32.pop %v4072
        %v4105 = verf.f32.pop %v4073
        %v4106 = verf.f32.pop %v4074
        %v4107 = verf.f32.pop %v4075
        %v4108 = verf.f32.pop %v4076
        %v4109 = verf.f32.pop %v4077
        %v4110 = verf.f32.pop %v4078
        %v4111 = verf.f32.pop %v4079
        %v4112 = verf.f32.pop %v4080
        %v4113 = verf.f32.pop %v4081
        %v4114 = verf.f32.pop %v4082
        %v4115 = verf.f32.pop %v4083
        %v4116 = verf.f32.pop %v4084
        %v4117 = verf.f32.pop %v4085
        %v4118 = verf.f32.pop %v4086
        %v4119 = verf.f32.pop %v4087
        %v4120 = verf.f32.pop %v4088
        %v4121 = verf.f32.pop %v4089
        %v4122 = verf.f32.pop %v4090
        %v4123 = verf.f32.pop %v4091
        %v4124 = vadd.f32 %v4092, 1.0
        %v4125 = vadd.f32 %v4093, 1.0
        %v4126 = vadd.f32 %v4094, 1.0
        %v4127 = vadd.f32 %v4095, 1.0
        %v4128 = vadd.f32 %v4096, 1.0
        %v4129 = vadd.f32 %v4097, 1.0
        %v4130 = vadd.f32 %v4098, 1.0
        %v4131 = vadd.f32 %v4099, 1.0
        %v4132 = vadd.f32 %v4100, 1.0
        %v4133 = vadd.f32 %v4101, 1.0
        %v4134 = vadd.f32 %v4102, 1.0
        %v4135 = vadd.f32 %v4103, 1.0
        %v4136 = vadd.f32 %v4104, 1.0
        %v4137 = vadd.f32 %v4105, 1.0
        %v4138 = vadd.f32 %v4106, 1.0
        %v4139 = vadd.f32 %v4107, 1.0
        %v4140 = vadd.f32 %v4108, 1.0
        %v4141 = vadd.f32 %v4109, 1.0
        %v4142 = vadd.f32 %v4110, 1.0
        %v4143 = vadd.f32 %v4111, 1.0
        %v4144 = vadd.f32 %v4112, 1.0
        %v4145 = vadd.f32 %v4113, 1.0
        %v4146 = vadd.f32 %v4114, 1.0
        %v4147 = vadd.f32 %v4115, 1.0
        %v4148 = vadd.f32 %v4116, 1.0
        %v4149 = vadd.f32 %v4117, 1.0
        %v4150 = vadd.f32 %v4118, 1.0
        %v4151 = vadd.f32 %v4119, 1.0
        %v4152 = vadd.f32 %v4120, 1.0
        %v4153 = vadd.f32 %v4121, 1.0
        %v4154 = vadd.f32 %v4122, 1.0
        %v4155 = vadd.f32 %v4123, 1.0
        %v4156 = vmul.f32 %v4028, %v4124
        %v4157 = vmul.f32 %v4029, %v4125
        %v4158 = vmul.f32 %v4030, %v4126
        %v4159 = vmul.f32 %v4031, %v4127
        %v4160 = vmul.f32 %v4032, %v4128
        %v4161 = vmul.f32 %v4033, %v4129
        %v4162 = vmul.f32 %v4034, %v4130
        %v4163 = vmul.f32 %v4035, %v4131
        %v4164 = vmul.f32 %v4036, %v4132
        %v4165 = vmul.f32 %v4037, %v4133
        %v4166 = vmul.f32 %v4038, %v4134
        %v4167 = vmul.f32 %v4039, %v4135
        %v4168 = vmul.f32 %v4040, %v4136
        %v4169 = vmul.f32 %v4041, %v4137
        %v4170 = vmul.f32 %v4042, %v4138
        %v4171 = vmul.f32 %v4043, %v4139
        %v4172 = vmul.f32 %v4044, %v4140
        %v4173 = vmul.f32 %v4045, %v4141
        %v4174 = vmul.f32 %v4046, %v4142
        %v4175 = vmul.f32 %v4047, %v4143
        %v4176 = vmul.f32 %v4048, %v4144
        %v4177 = vmul.f32 %v4049, %v4145
        %v4178 = vmul.f32 %v4050, %v4146
        %v4179 = vmul.f32 %v4051, %v4147
        %v4180 = vmul.f32 %v4052, %v4148
        %v4181 = vmul.f32 %v4053, %v4149
        %v4182 = vmul.f32 %v4054, %v4150
        %v4183 = vmul.f32 %v4055, %v4151
        %v4184 = vmul.f32 %v4056, %v4152
        %v4185 = vmul.f32 %v4057, %v4153
        %v4186 = vmul.f32 %v4058, %v4154
        %v4187 = vmul.f32 %v4059, %v4155
        %v4188 = vld [vmem:[#allocation23] sm:$0xff]
        %v4189 = vld [vmem:[#allocation23 + $0x8] sm:$0xff]
        %v4190 = vld [vmem:[#allocation23 + $0x10] sm:$0xff]
        %v4191 = vld [vmem:[#allocation23 + $0x18] sm:$0xff]
        %v4192 = vld [vmem:[#allocation23 + $0x20] sm:$0xff]
        %v4193 = vld [vmem:[#allocation23 + $0x28] sm:$0xff]
        %v4194 = vld [vmem:[#allocation23 + $0x30] sm:$0xff]
        %v4195 = vld [vmem:[#allocation23 + $0x38] sm:$0xff]
        %v4196 = vld [vmem:[#allocation23 + $0x40] sm:$0xff]
        %v4197 = vld [vmem:[#allocation23 + $0x48] sm:$0xff]
        %v4198 = vld [vmem:[#allocation23 + $0x50] sm:$0xff]
        %v4199 = vld [vmem:[#allocation23 + $0x58] sm:$0xff]
        %v4200 = vld [vmem:[#allocation23 + $0x60] sm:$0xff]
        %v4201 = vld [vmem:[#allocation23 + $0x68] sm:$0xff]
        %v4202 = vld [vmem:[#allocation23 + $0x70] sm:$0xff]
        %v4203 = vld [vmem:[#allocation23 + $0x78] sm:$0xff]
        %v4204 = vld [vmem:[#allocation23 + $0x80] sm:$0xff]
        %v4205 = vld [vmem:[#allocation23 + $0x88] sm:$0xff]
        %v4206 = vld [vmem:[#allocation23 + $0x90] sm:$0xff]
        %v4207 = vld [vmem:[#allocation23 + $0x98] sm:$0xff]
        %v4208 = vld [vmem:[#allocation23 + $0xa0] sm:$0xff]
        %v4209 = vld [vmem:[#allocation23 + $0xa8] sm:$0xff]
        %v4210 = vld [vmem:[#allocation23 + $0xb0] sm:$0xff]
        %v4211 = vld [vmem:[#allocation23 + $0xb8] sm:$0xff]
        %v4212 = vld [vmem:[#allocation23 + $0xc0] sm:$0xff]
        %v4213 = vld [vmem:[#allocation23 + $0xc8] sm:$0xff]
        %v4214 = vld [vmem:[#allocation23 + $0xd0] sm:$0xff]
        %v4215 = vld [vmem:[#allocation23 + $0xd8] sm:$0xff]
        %v4216 = vld [vmem:[#allocation23 + $0xe0] sm:$0xff]
        %v4217 = vld [vmem:[#allocation23 + $0xe8] sm:$0xff]
        %v4218 = vld [vmem:[#allocation23 + $0xf0] sm:$0xff]
        %v4219 = vld [vmem:[#allocation23 + $0xf8] sm:$0xff]
        %v4220 = vld [vmem:[#allocation23 + $0x100] sm:$0xff]
        %v4221 = vld [vmem:[#allocation23 + $0x108] sm:$0xff]
        %v4222 = vld [vmem:[#allocation23 + $0x110] sm:$0xff]
        %v4223 = vld [vmem:[#allocation23 + $0x118] sm:$0xff]
        %v4224 = vld [vmem:[#allocation23 + $0x120] sm:$0xff]
        %v4225 = vld [vmem:[#allocation23 + $0x128] sm:$0xff]
        %v4226 = vld [vmem:[#allocation23 + $0x130] sm:$0xff]
        %v4227 = vld [vmem:[#allocation23 + $0x138] sm:$0xff]
        %v4228 = vld [vmem:[#allocation23 + $0x140] sm:$0xff]
        %v4229 = vld [vmem:[#allocation23 + $0x148] sm:$0xff]
        %v4230 = vld [vmem:[#allocation23 + $0x150] sm:$0xff]
        %v4231 = vld [vmem:[#allocation23 + $0x158] sm:$0xff]
        %v4232 = vld [vmem:[#allocation23 + $0x160] sm:$0xff]
        %v4233 = vld [vmem:[#allocation23 + $0x168] sm:$0xff]
        %v4234 = vld [vmem:[#allocation23 + $0x170] sm:$0xff]
        %v4235 = vld [vmem:[#allocation23 + $0x178] sm:$0xff]
        %v4236 = vld [vmem:[#allocation23 + $0x180] sm:$0xff]
        %v4237 = vld [vmem:[#allocation23 + $0x188] sm:$0xff]
        %v4238 = vld [vmem:[#allocation23 + $0x190] sm:$0xff]
        %v4239 = vld [vmem:[#allocation23 + $0x198] sm:$0xff]
        %v4240 = vld [vmem:[#allocation23 + $0x1a0] sm:$0xff]
        %v4241 = vld [vmem:[#allocation23 + $0x1a8] sm:$0xff]
        %v4242 = vld [vmem:[#allocation23 + $0x1b0] sm:$0xff]
        %v4243 = vld [vmem:[#allocation23 + $0x1b8] sm:$0xff]
        %v4244 = vld [vmem:[#allocation23 + $0x1c0] sm:$0xff]
        %v4245 = vld [vmem:[#allocation23 + $0x1c8] sm:$0xff]
        %v4246 = vld [vmem:[#allocation23 + $0x1d0] sm:$0xff]
        %v4247 = vld [vmem:[#allocation23 + $0x1d8] sm:$0xff]
        %v4248 = vld [vmem:[#allocation23 + $0x1e0] sm:$0xff]
        %v4249 = vld [vmem:[#allocation23 + $0x1e8] sm:$0xff]
        %v4250 = vld [vmem:[#allocation23 + $0x1f0] sm:$0xff]
        %v4251 = vld [vmem:[#allocation23 + $0x1f8] sm:$0xff]
        %v4252 = vld [vmem:[#allocation25] sm:$0x1]
        %v4254 = vlaneseq
        %v4255 = vshrl.u32 %v4254, 7
        %v4256 = vsub.s32 0, %v4255
        %v4257 = vrot.slane %v4252, %v4256
        %4259 = vmatprep.subr.mxu0 0.0
        %4260 = vmatpush1.msra.mxu0 %v4188
        %4261 = vmatprep.subr.mxu0 0.0
        %4262 = vmatpush1.msra.mxu0 %v4189
        %4263 = vmatprep.subr.mxu0 0.0
        %4264 = vmatpush1.msra.mxu0 %v4190
        %4265 = vmatprep.subr.mxu0 0.0
        %4266 = vmatpush1.msra.mxu0 %v4191
        %4267 = vmatprep.subr.mxu0 0.0
        %4268 = vmatpush1.msra.mxu0 %v4192
        %4269 = vmatprep.subr.mxu0 0.0
        %4270 = vmatpush1.msra.mxu0 %v4193
        %4271 = vmatprep.subr.mxu0 0.0
        %4272 = vmatpush1.msra.mxu0 %v4194
        %4273 = vmatprep.subr.mxu0 0.0
        %4274 = vmatpush1.msra.mxu0 %v4195
        %4275 = vmatprep.subr.mxu0 0.0
        %4276 = vmatpush1.msra.mxu0 %v4196
        %4277 = vmatprep.subr.mxu0 0.0
        %4278 = vmatpush1.msra.mxu0 %v4197
        %4279 = vmatprep.subr.mxu0 0.0
        %4280 = vmatpush1.msra.mxu0 %v4198
        %4281 = vmatprep.subr.mxu0 0.0
        %4282 = vmatpush1.msra.mxu0 %v4199
        %4283 = vmatprep.subr.mxu0 0.0
        %4284 = vmatpush1.msra.mxu0 %v4200
        %4285 = vmatprep.subr.mxu0 0.0
        %4286 = vmatpush1.msra.mxu0 %v4201
        %4287 = vmatprep.subr.mxu0 0.0
        %4288 = vmatpush1.msra.mxu0 %v4202
        %4289 = vmatprep.subr.mxu0 0.0
        %4290 = vmatpush1.msra.mxu0 %v4203
        %4291 = vmatprep.subr.mxu0 0.0
        %4292 = vmatpush1.msra.mxu0 %v4204
        %4293 = vmatprep.subr.mxu0 0.0
        %4294 = vmatpush1.msra.mxu0 %v4205
        %4295 = vmatprep.subr.mxu0 0.0
        %4296 = vmatpush1.msra.mxu0 %v4206
        %4297 = vmatprep.subr.mxu0 0.0
        %4298 = vmatpush1.msra.mxu0 %v4207
        %4299 = vmatprep.subr.mxu0 0.0
        %4300 = vmatpush1.msra.mxu0 %v4208
        %4301 = vmatprep.subr.mxu0 0.0
        %4302 = vmatpush1.msra.mxu0 %v4209
        %4303 = vmatprep.subr.mxu0 0.0
        %4304 = vmatpush1.msra.mxu0 %v4210
        %4305 = vmatprep.subr.mxu0 0.0
        %4306 = vmatpush1.msra.mxu0 %v4211
        %4307 = vmatprep.subr.mxu0 0.0
        %4308 = vmatpush1.msra.mxu0 %v4212
        %4309 = vmatprep.subr.mxu0 0.0
        %4310 = vmatpush1.msra.mxu0 %v4213
        %4311 = vmatprep.subr.mxu0 0.0
        %4312 = vmatpush1.msra.mxu0 %v4214
        %4313 = vmatprep.subr.mxu0 0.0
        %4314 = vmatpush1.msra.mxu0 %v4215
        %4315 = vmatprep.subr.mxu0 0.0
        %4316 = vmatpush1.msra.mxu0 %v4216
        %4317 = vmatprep.subr.mxu0 0.0
        %4318 = vmatpush1.msra.mxu0 %v4217
        %4319 = vmatprep.subr.mxu0 0.0
        %4320 = vmatpush1.msra.mxu0 %v4218
        %4321 = vmatprep.subr.mxu0 0.0
        %4322 = vmatpush1.msra.mxu0 %v4219
        %4323 = vmatprep.mubr.f32.mxu0 %v4157
        %4324 = vmatmul.mubr.f32.gmra.mrb[0].mxu0 %v4156
        %v4325 = vpop.f32.mrb[0].mxu0
        %v4326 = vadd.f32 %v4257, %v4325
        %v4327 = vpop.f32.mrb[0].mxu0
        %4328 = vmatprep.mubr.f32.mxu0 %v4161
        %4329 = vmatmul.mubr.f32.gmra.mrb[0].mxu0 %v4160
        %v4330 = vpop.f32.mrb[0].mxu0
        %v4331 = vadd.f32 %v4257, %v4330
        %v4332 = vpop.f32.mrb[0].mxu0
        %4333 = vmatprep.mubr.f32.mxu0 %v4165
        %4334 = vmatmul.mubr.f32.gmra.mrb[0].mxu0 %v4164
        %v4335 = vpop.f32.mrb[0].mxu0
        %v4336 = vadd.f32 %v4257, %v4335
        %v4337 = vpop.f32.mrb[0].mxu0
        %4338 = vmatprep.mubr.f32.mxu0 %v4169
        %4339 = vmatmul.mubr.f32.gmra.mrb[0].mxu0 %v4168
        %v4340 = vpop.f32.mrb[0].mxu0
        %v4341 = vadd.f32 %v4257, %v4340
        %v4342 = vpop.f32.mrb[0].mxu0
        %4343 = vmatprep.mubr.f32.mxu0 %v4173
        %4344 = vmatmul.mubr.f32.gmra.mrb[0].mxu0 %v4172
        %v4345 = vpop.f32.mrb[0].mxu0
        %v4346 = vadd.f32 %v4257, %v4345
        %v4347 = vpop.f32.mrb[0].mxu0
        %4348 = vmatprep.mubr.f32.mxu0 %v4177
        %4349 = vmatmul.mubr.f32.gmra.mrb[0].mxu0 %v4176
        %v4350 = vpop.f32.mrb[0].mxu0
        %v4351 = vadd.f32 %v4257, %v4350
        %v4352 = vpop.f32.mrb[0].mxu0
        %4353 = vmatprep.mubr.f32.mxu0 %v4181
        %4354 = vmatmul.mubr.f32.gmra.mrb[0].mxu0 %v4180
        %v4355 = vpop.f32.mrb[0].mxu0
        %v4356 = vadd.f32 %v4257, %v4355
        %v4357 = vpop.f32.mrb[0].mxu0
        %4358 = vmatprep.mubr.f32.mxu0 %v4185
        %4359 = vmatmul.mubr.f32.gmra.mrb[0].mxu0 %v4184
        %v4360 = vpop.f32.mrb[0].mxu0
        %v4361 = vadd.f32 %v4257, %v4360
        %v4362 = vpop.f32.mrb[0].mxu0
        %4363 = vdwg.mxu0
        %4364 = vmatprep.subr.mxu0 0.0
        %4365 = vmatpush1.msra.mxu0 %v4220
        %4366 = vmatprep.subr.mxu0 0.0
        %4367 = vmatpush1.msra.mxu0 %v4221
        %4368 = vmatprep.subr.mxu0 0.0
        %4369 = vmatpush1.msra.mxu0 %v4222
        %4370 = vmatprep.subr.mxu0 0.0
        %4371 = vmatpush1.msra.mxu0 %v4223
        %4372 = vmatprep.subr.mxu0 0.0
        %4373 = vmatpush1.msra.mxu0 %v4224
        %4374 = vmatprep.subr.mxu0 0.0
        %4375 = vmatpush1.msra.mxu0 %v4225
        %4376 = vmatprep.subr.mxu0 0.0
        %4377 = vmatpush1.msra.mxu0 %v4226
        %4378 = vmatprep.subr.mxu0 0.0
        %4379 = vmatpush1.msra.mxu0 %v4227
        %4380 = vmatprep.subr.mxu0 0.0
        %4381 = vmatpush1.msra.mxu0 %v4228
        %4382 = vmatprep.subr.mxu0 0.0
        %4383 = vmatpush1.msra.mxu0 %v4229
        %4384 = vmatprep.subr.mxu0 0.0
        %4385 = vmatpush1.msra.mxu0 %v4230
        %4386 = vmatprep.subr.mxu0 0.0
        %4387 = vmatpush1.msra.mxu0 %v4231
        %4388 = vmatprep.subr.mxu0 0.0
        %4389 = vmatpush1.msra.mxu0 %v4232
        %4390 = vmatprep.subr.mxu0 0.0
        %4391 = vmatpush1.msra.mxu0 %v4233
        %4392 = vmatprep.subr.mxu0 0.0
        %4393 = vmatpush1.msra.mxu0 %v4234
        %4394 = vmatprep.subr.mxu0 0.0
        %4395 = vmatpush1.msra.mxu0 %v4235
        %4396 = vmatprep.subr.mxu0 0.0
        %4397 = vmatpush1.msra.mxu0 %v4236
        %4398 = vmatprep.subr.mxu0 0.0
        %4399 = vmatpush1.msra.mxu0 %v4237
        %4400 = vmatprep.subr.mxu0 0.0
        %4401 = vmatpush1.msra.mxu0 %v4238
        %4402 = vmatprep.subr.mxu0 0.0
        %4403 = vmatpush1.msra.mxu0 %v4239
        %4404 = vmatprep.subr.mxu0 0.0
        %4405 = vmatpush1.msra.mxu0 %v4240
        %4406 = vmatprep.subr.mxu0 0.0
        %4407 = vmatpush1.msra.mxu0 %v4241
        %4408 = vmatprep.subr.mxu0 0.0
        %4409 = vmatpush1.msra.mxu0 %v4242
        %4410 = vmatprep.subr.mxu0 0.0
        %4411 = vmatpush1.msra.mxu0 %v4243
        %4412 = vmatprep.subr.mxu0 0.0
        %4413 = vmatpush1.msra.mxu0 %v4244
        %4414 = vmatprep.subr.mxu0 0.0
        %4415 = vmatpush1.msra.mxu0 %v4245
        %4416 = vmatprep.subr.mxu0 0.0
        %4417 = vmatpush1.msra.mxu0 %v4246
        %4418 = vmatprep.subr.mxu0 0.0
        %4419 = vmatpush1.msra.mxu0 %v4247
        %4420 = vmatprep.subr.mxu0 0.0
        %4421 = vmatpush1.msra.mxu0 %v4248
        %4422 = vmatprep.subr.mxu0 0.0
        %4423 = vmatpush1.msra.mxu0 %v4249
        %4424 = vmatprep.subr.mxu0 0.0
        %4425 = vmatpush1.msra.mxu0 %v4250
        %4426 = vmatprep.subr.mxu0 0.0
        %4427 = vmatpush1.msra.mxu0 %v4251
        %4428 = vmatprep.mubr.f32.mxu0 %v4159
        %4429 = vmatmul.mubr.f32.gmra.mrb[0].mxu0 %v4158
        %v4430 = vpop.f32.mrb[0].mxu0
        %v4431 = vadd.f32 %v4326, %v4430
        %v4432 = vpop.f32.mrb[0].mxu0
        %4433 = vmatprep.mubr.f32.mxu0 %v4163
        %4434 = vmatmul.mubr.f32.gmra.mrb[0].mxu0 %v4162
        %v4435 = vpop.f32.mrb[0].mxu0
        %v4436 = vadd.f32 %v4331, %v4435
        %v4437 = vpop.f32.mrb[0].mxu0
        %4438 = vmatprep.mubr.f32.mxu0 %v4167
        %4439 = vmatmul.mubr.f32.gmra.mrb[0].mxu0 %v4166
        %v4440 = vpop.f32.mrb[0].mxu0
        %v4441 = vadd.f32 %v4336, %v4440
        %v4442 = vpop.f32.mrb[0].mxu0
        %4443 = vmatprep.mubr.f32.mxu0 %v4171
        %4444 = vmatmul.mubr.f32.gmra.mrb[0].mxu0 %v4170
        %v4445 = vpop.f32.mrb[0].mxu0
        %v4446 = vadd.f32 %v4341, %v4445
        %v4447 = vpop.f32.mrb[0].mxu0
        %4448 = vmatprep.mubr.f32.mxu0 %v4175
        %4449 = vmatmul.mubr.f32.gmra.mrb[0].mxu0 %v4174
        %v4450 = vpop.f32.mrb[0].mxu0
        %v4451 = vadd.f32 %v4346, %v4450
        %v4452 = vpop.f32.mrb[0].mxu0
        %4453 = vmatprep.mubr.f32.mxu0 %v4179
        %4454 = vmatmul.mubr.f32.gmra.mrb[0].mxu0 %v4178
        %v4455 = vpop.f32.mrb[0].mxu0
        %v4456 = vadd.f32 %v4351, %v4455
        %v4457 = vpop.f32.mrb[0].mxu0
        %4458 = vmatprep.mubr.f32.mxu0 %v4183
        %4459 = vmatmul.mubr.f32.gmra.mrb[0].mxu0 %v4182
        %v4460 = vpop.f32.mrb[0].mxu0
        %v4461 = vadd.f32 %v4356, %v4460
        %v4462 = vpop.f32.mrb[0].mxu0
        %4463 = vmatprep.mubr.f32.mxu0 %v4187
        %4464 = vmatmul.mubr.f32.gmra.mrb[0].mxu0 %v4186
        %v4465 = vpop.f32.mrb[0].mxu0
        %v4466 = vadd.f32 %v4361, %v4465
        %v4467 = vpop.f32.mrb[0].mxu0
        %4468 = vdwg.mxu0
        %v4469 = vadd.f32 %v3589, %v4431
        %v4470 = vadd.f32 %v3590, %v4436
        %v4471 = vadd.f32 %v3591, %v4441
        %v4472 = vadd.f32 %v3592, %v4446
        %v4473 = vadd.f32 %v3593, %v4451
        %v4474 = vadd.f32 %v3594, %v4456
        %v4475 = vadd.f32 %v3595, %v4461
        %v4476 = vadd.f32 %v3596, %v4466
        %4477 = vst [vmem:[%s630] sm:$0xff] %v4469
        %4478 = vst [vmem:[%s630 + $0x8] sm:$0xff] %v4470
        %4479 = vst [vmem:[%s630 + $0x10] sm:$0xff] %v4471
        %4480 = vst [vmem:[%s630 + $0x18] sm:$0xff] %v4472
        %4481 = vst [vmem:[%s630 + $0x20] sm:$0xff] %v4473
        %4482 = vst [vmem:[%s630 + $0x28] sm:$0xff] %v4474
        %4483 = vst [vmem:[%s630 + $0x30] sm:$0xff] %v4475
        %4484 = vst [vmem:[%s630 + $0x38] sm:$0xff] %v4476
        %s4485 = sand.u32 %s336, 1
        %s4486 = scalar_lea.sflag [#allocation7], %s4485
        %s4487 = sand.u32 %s336, 1
        %s4488 = smul.addr %s4487, 64
        %s4489 = scalar_lea.vmem [#allocation26], %s4488
        // Predicated region
        $region129: #{tpu_custom_call.1} parent=71 // pred_check
          %p4490 = pneg %p346
        $region130: #{tpu_custom_call.1} parent=71 // pred_check_branch
          %4492 = sbr.rel (%p4490) target = $region132
        $region131: #{tpu_custom_call.1} parent=71 // pred_region
          %s4493 = smul.u32 8, %s41
          %s4495 = ssub.s32 1024, 1024
          %4496 = vsyncadd %s4486, %s4495
          %s4497 = smul.addr %s40, 16
          %s4498 = sadd.s32 %s4493, %s4497
          %s4499 = smul.addr %s4498, 128
          %s4500 = scalar_lea.hbm %s13, %s4499
          %s4501 = sshll.u32 %s4489, 4
          %s4502 = int_to_ptr.vmem [resolvable:$true] %s4501
          %4507 = dma.vmem_to_hbm [thread:$0]  %s4502, 1024, %s4500, %s4486, 128, 128, 8
        $region132: #{tpu_custom_call.1} parent=71 // pred_fallthru
          _
      $region72: #{tpu_custom_call.1} parent=5 // pred_fallthru
        _
      %p4508 = scmp.le.s32.totalorder 2, %s31
      // Predicated region
      $region133: #{tpu_custom_call.1} parent=5 // pred_check
        %p4509 = pneg %p4508
      $region134: #{tpu_custom_call.1} parent=5 // pred_check_branch
        %4511 = sbr.rel (%p4509) target = $region136
      $region135: #{tpu_custom_call.1} parent=5 // pred_region
        %s4512 = ssub.s32 %s31, 2
        // Predicated region
        $region137: #{tpu_custom_call.1} parent=135 // pred_check
          %p4513 = pneg %p352
        $region138: #{tpu_custom_call.1} parent=135 // pred_check_branch
          %4515 = sbr.rel (%p4513) target = $region140
        $region139: #{tpu_custom_call.1} parent=135 // pred_region
          %s4516 = sand.u32 %s337, 1
          %s4517 = scalar_lea.sflag [#allocation7], %s4516
          %s4518 = sand.u32 %s337, 1
          %s4519 = smul.addr %s4518, 64
          %s4520 = scalar_lea.vmem [#allocation26], %s4519
          %4521 = dma.done %s4517, 1024
        $region140: #{tpu_custom_call.1} parent=135 // pred_fallthru
          _
      $region136: #{tpu_custom_call.1} parent=5 // pred_fallthru
        _
    $region6: #{tpu_custom_call.1} parent=1 // loop_footer
      %s35 = sadd.s32 1, %s31
    $region7: #{tpu_custom_call.1} parent=1 // loop_footer_branch
      %30 = sbr.rel target = $region3
    $region8: #{tpu_custom_call.1} parent=1 // loop_exit
      _
    %4522 = vsyncpa [#allocation6], 1
    %s4523 = scalar_lea.sflag [#allocation6], 1
    %4524 = vsyncpa %s4523, 1
    %4525 = vsyncpa [#allocation9], 1
    %4526 = vsyncpa [#allocation12], 1
    %4527 = vsyncpa [#allocation15], 1
    %4528 = vsyncpa [#allocation18], 1
    %4529 = vsyncpa [#allocation21], 1
    %4530 = vsyncpa [#allocation24], 1
    %4531 = vsyncpa [#allocation7], 1
    %s4532 = scalar_lea.sflag [#allocation7], 1
    %4533 = vsyncpa %s4532, 1

// kernel: tpu_custom_call.1
$region0: #{tpu_custom_call.1}
  #allocation0 [shape = 'u32[]', space=smem, size = 0x4, offset = 0x4, fixed_abs, tag = 'smem constant byte address 0x4 - core index']
  #allocation1 [shape = 'u32[144,128]{1,0:T(1,128)}', space=vmem, size = 0x12000, scoped, tag = 'internal scratch']
  #allocation2 [shape = 'f32[128,128]{1,0:T(8,128)}', space=vmem, size = 0x10000, scoped, tag = 'scratch operand']
  #allocation3 [shape = 'f32[128,128]{1,0:T(8,128)}', space=vmem, size = 0x10000, scoped, tag = 'scratch operand']
  #allocation4 [shape = 'f32[128,128]{1,0:T(8,128)}', space=vmem, size = 0x10000, scoped, tag = 'scratch operand']
  %s0 = inlined_call_operand.hbm [shape: f32[2,128,128], index: 0, kind: input, shape index: {}]
  %s1 = inlined_call_operand.hbm [shape: f32[1,128], index: 1, kind: input, shape index: {}]
  %s2 = inlined_call_operand.hbm [shape: f32[1,128], index: 2, kind: input, shape index: {}]
  %s3 = inlined_call_operand.hbm [shape: f32[1,128], index: 3, kind: input, shape index: {}]
  %s4 = inlined_call_operand.hbm [shape: f32[1,128], index: 4, kind: input, shape index: {}]
  %s5 = inlined_call_operand.hbm [shape: f32[128,384], index: 5, kind: input, shape index: {}]
  %s6 = inlined_call_operand.hbm [shape: f32[1,384], index: 6, kind: input, shape index: {}]
  %s7 = inlined_call_operand.hbm [shape: f32[128,128], index: 7, kind: input, shape index: {}]
  %s8 = inlined_call_operand.hbm [shape: f32[1,128], index: 8, kind: input, shape index: {}]
  %s9 = inlined_call_operand.hbm [shape: f32[128,512], index: 9, kind: input, shape index: {}]
  %s10 = inlined_call_operand.hbm [shape: f32[1,512], index: 10, kind: input, shape index: {}]
  %s11 = inlined_call_operand.hbm [shape: f32[512,128], index: 11, kind: input, shape index: {}]
  %s12 = inlined_call_operand.hbm [shape: f32[1,128], index: 12, kind: input, shape index: {}]
  %s13 = inlined_call_operand.hbm [shape: f32[2,128,128], index: 13, kind: output, shape index: {}]
  %s14 = sld [smem:[#allocation0]]
  $region141: #{tpu_custom_call.1} parent=0
    _
  %s16 = ssub.s32 1, %s14
  %s17 = scalar_select 0, %s16, %s14
  $region1: #{tpu_custom_call.1} parent=0
    #allocation5 [shape = 'u8[131072]{0}', space=vmem, size = 0x20000, scoped, tag = 'input window, operand 0']
    #allocation6 [shape = 's32[2]{0}', space=sflag, size = 0x8, scoped, tag = 'scoped memory for tpu_custom_call.1']
    #allocation7 [shape = 's32[2]{0}', space=sflag, size = 0x8, scoped, tag = 'scoped memory for tpu_custom_call.1']
    #allocation8 [shape = 'u8[512]{0}', space=vmem, size = 0x400, scoped, tag = 'input window, operand 1, single buffered']
    #allocation9 [shape = 's32[1]{0}', space=sflag, size = 0x4, scoped, tag = 'scoped memory for tpu_custom_call.1']
    #allocation10 [shape = 'u8[512]{0}', space=vmem, size = 0x400, scoped, tag = 'input window, operand 2, single buffered']
    #allocation11 [shape = 'u8[512]{0}', space=vmem, size = 0x400, scoped, tag = 'input window, operand 3, single buffered']
    #allocation12 [shape = 's32[1]{0}', space=sflag, size = 0x4, scoped, tag = 'scoped memory for tpu_custom_call.1']
    #allocation13 [shape = 'u8[512]{0}', space=vmem, size = 0x400, scoped, tag = 'input window, operand 4, single buffered']
    #allocation14 [shape = 'u8[196608]{0}', space=vmem, size = 0x30000, scoped, tag = 'input window, operand 5, single buffered']
    #allocation15 [shape = 's32[1]{0}', space=sflag, size = 0x4, scoped, tag = 'scoped memory for tpu_custom_call.1']
    #allocation16 [shape = 'u8[1536]{0}', space=vmem, size = 0x800, scoped, tag = 'input window, operand 6, single buffered']
    #allocation17 [shape = 'u8[65536]{0}', space=vmem, size = 0x10000, scoped, tag = 'input window, operand 7, single buffered']
    #allocation18 [shape = 's32[1]{0}', space=sflag, size = 0x4, scoped, tag = 'scoped memory for tpu_custom_call.1']
    #allocation19 [shape = 'u8[512]{0}', space=vmem, size = 0x400, scoped, tag = 'input window, operand 8, single buffered']
    #allocation20 [shape = 'u8[262144]{0}', space=vmem, size = 0x40000, scoped, tag = 'input window, operand 9, single buffered']
    #allocation21 [shape = 's32[1]{0}', space=sflag, size = 0x4, scoped, tag = 'scoped memory for tpu_custom_call.1']
    #allocation22 [shape = 'u8[2048]{0}', space=vmem, size = 0x800, scoped, tag = 'input window, operand 10, single buffered']
    #allocation23 [shape = 'u8[262144]{0}', space=vmem, size = 0x40000, scoped, tag = 'input window, operand 11, single buffered']
    #allocation24 [shape = 's32[1]{0}', space=sflag, size = 0x4, scoped, tag = 'scoped memory for tpu_custom_call.1']
    #allocation25 [shape = 'u8[512]{0}', space=vmem, size = 0x400, scoped, tag = 'input window, operand 12, single buffered']
    #allocation26 [shape = 'u8[65536]{0}', space=vmem, size = 0x10000, scoped, tag = 'output window, operand 0']
    %18 = vsyncpa [#allocation6], 0
    %s19 = scalar_lea.sflag [#allocation6], 1
    %20 = vsyncpa %s19, 0
    %21 = vsyncpa [#allocation9], 0
    %22 = vsyncpa [#allocation12], 0
    %23 = vsyncpa [#allocation15], 0
    %24 = vsyncpa [#allocation18], 0
    %25 = vsyncpa [#allocation21], 0
    %26 = vsyncpa [#allocation24], 0
    %27 = vsyncpa [#allocation7], 0
    %s28 = scalar_lea.sflag [#allocation7], 1
    %29 = vsyncpa %s28, 0
    loop: start=0, step=1, limit=6
    $region2: #{tpu_custom_call.1} parent=1 // loop_pre_header
      _
    $region3: #{tpu_custom_call.1} parent=1 // loop_header
      %s31 = sphi 0, %s35
      %p32 = scmp.ge.s32.totalorder %s31, 6
      %s38 = sphi 0, %s50
      %s39 = sphi 0, %s46
      %s40 = sphi 0, %s38
      %s41 = sphi 0, %s39
      %s42 = sphi 0, %s40
      %s43 = sphi 0, %s41
      %s53 = sphi 0, %s55
      %s56 = sphi 0, %s53
      %s57 = sphi 0, %s56
      %s73 = sphi 0, %s57
      %s77 = sphi 0, %s77
      %s79 = sphi 0, %s77
      %s80 = sphi 0, %s79
      %s94 = sphi 0, %s80
      %s98 = sphi 0, %s98
      %s100 = sphi 0, %s98
      %s101 = sphi 0, %s100
      %s115 = sphi 0, %s101
      %s119 = sphi 0, %s119
      %s121 = sphi 0, %s119
      %s122 = sphi 0, %s121
      %s136 = sphi 0, %s122
      %s140 = sphi 0, %s140
      %s142 = sphi 0, %s140
      %s143 = sphi 0, %s142
      %s157 = sphi 0, %s143
      %s161 = sphi 0, %s161
      %s163 = sphi 0, %s161
      %s164 = sphi 0, %s163
      %s178 = sphi 0, %s164
      %s182 = sphi 0, %s182
      %s184 = sphi 0, %s182
      %s185 = sphi 0, %s184
      %s199 = sphi 0, %s185
      %s203 = sphi 0, %s203
      %s205 = sphi 0, %s203
      %s206 = sphi 0, %s205
      %s220 = sphi 0, %s206
      %s224 = sphi 0, %s224
      %s226 = sphi 0, %s224
      %s227 = sphi 0, %s226
      %s241 = sphi 0, %s227
      %s245 = sphi 0, %s245
      %s247 = sphi 0, %s245
      %s248 = sphi 0, %s247
      %s262 = sphi 0, %s248
      %s266 = sphi 0, %s266
      %s268 = sphi 0, %s266
      %s269 = sphi 0, %s268
      %s283 = sphi 0, %s269
      %s287 = sphi 0, %s287
      %s289 = sphi 0, %s287
      %s290 = sphi 0, %s289
      %s304 = sphi 0, %s290
      %s308 = sphi 0, %s308
      %s310 = sphi 0, %s308
      %s311 = sphi 0, %s310
      %s325 = sphi 0, %s311
      %s333 = sphi 0, %s335
      %s336 = sphi 0, %s333
      %s337 = sphi 0, %s336
      %s353 = sphi 0, %s337
    $region4: #{tpu_custom_call.1} parent=1 // loop_header_branch
      %34 = sbr.rel (%p32) target = $region8
    $region5: #{tpu_custom_call.1} parent=1 // loop_body
      %s36 = ssub.s32 %s31, 1
      %s37 = ssub.s32 %s31, 2
      %s44 = sadd.s32 1, %s39
      %p45 = scmp.ge.s32.totalorder %s44, 2
      %s46 = scalar_select %p45, 0, %s44
      %s47 = sadd.s32 1, %s38
      %s48 = scalar_select %p45, %s47, %s38
      %p49 = scmp.ge.s32.totalorder %s48, 2
      %s50 = scalar_select %p49, 0, %s48
      %s51 = ssub.s32 %s38, %s50
      %p52 = scmp.eq.s32.totalorder %s51, 0
      %s54 = sadd.s32 %s53, 1
      %s55 = scalar_select %p52, %s53, %s54
      %p58 = pneg %p52
      %p59 = scmp.eq.s32.totalorder %s31, 3
      %p60 = por %p58, %p59
      %p61 = scmp.ne.s32.totalorder %s53, %s56
      %p62 = scmp.eq.s32.totalorder %s31, 0
      %p63 = por %p61, %p62
      %p64 = scmp.ne.s32.totalorder %s53, %s56
      %p65 = scmp.eq.s32.totalorder %s36, 3
      %p66 = por %p64, %p65
      %p67 = scmp.ne.s32.totalorder %s56, %s57
      %p68 = scmp.eq.s32.totalorder %s36, 0
      %p69 = por %p67, %p68
      %p70 = scmp.ne.s32.totalorder %s56, %s57
      %p71 = scmp.eq.s32.totalorder %s37, 3
      %p72 = por %p70, %p71
      %p74 = scmp.ne.s32.totalorder %s57, %s73
      %p75 = scmp.eq.s32.totalorder %s37, 0
      %p76 = por %p74, %p75
      %s78 = sadd.s32 %s77, 1
      %p81 = scmp.eq.s32.totalorder %s31, 3
      %p82 = scmp.ne.s32.totalorder %s77, %s79
      %p83 = scmp.eq.s32.totalorder %s31, 0
      %p84 = por %p82, %p83
      %p85 = scmp.ne.s32.totalorder %s77, %s79
      %p86 = scmp.eq.s32.totalorder %s36, 3
      %p87 = por %p85, %p86
      %p88 = scmp.ne.s32.totalorder %s79, %s80
      %p89 = scmp.eq.s32.totalorder %s36, 0
      %p90 = por %p88, %p89
      %p91 = scmp.ne.s32.totalorder %s79, %s80
      %p92 = scmp.eq.s32.totalorder %s37, 3
      %p93 = por %p91, %p92
      %p95 = scmp.ne.s32.totalorder %s80, %s94
      %p96 = scmp.eq.s32.totalorder %s37, 0
      %p97 = por %p95, %p96
      %s99 = sadd.s32 %s98, 1
      %p102 = scmp.eq.s32.totalorder %s31, 3
      %p103 = scmp.ne.s32.totalorder %s98, %s100
      %p104 = scmp.eq.s32.totalorder %s31, 0
      %p105 = por %p103, %p104
      %p106 = scmp.ne.s32.totalorder %s98, %s100
      %p107 = scmp.eq.s32.totalorder %s36, 3
      %p108 = por %p106, %p107
      %p109 = scmp.ne.s32.totalorder %s100, %s101
      %p110 = scmp.eq.s32.totalorder %s36, 0
      %p111 = por %p109, %p110
      %p112 = scmp.ne.s32.totalorder %s100, %s101
      %p113 = scmp.eq.s32.totalorder %s37, 3
      %p114 = por %p112, %p113
      %p116 = scmp.ne.s32.totalorder %s101, %s115
      %p117 = scmp.eq.s32.totalorder %s37, 0
      %p118 = por %p116, %p117
      %s120 = sadd.s32 %s119, 1
      %p123 = scmp.eq.s32.totalorder %s31, 3
      %p124 = scmp.ne.s32.totalorder %s119, %s121
      %p125 = scmp.eq.s32.totalorder %s31, 0
      %p126 = por %p124, %p125
      %p127 = scmp.ne.s32.totalorder %s119, %s121
      %p128 = scmp.eq.s32.totalorder %s36, 3
      %p129 = por %p127, %p128
      %p130 = scmp.ne.s32.totalorder %s121, %s122
      %p131 = scmp.eq.s32.totalorder %s36, 0
      %p132 = por %p130, %p131
      %p133 = scmp.ne.s32.totalorder %s121, %s122
      %p134 = scmp.eq.s32.totalorder %s37, 3
      %p135 = por %p133, %p134
      %p137 = scmp.ne.s32.totalorder %s122, %s136
      %p138 = scmp.eq.s32.totalorder %s37, 0
      %p139 = por %p137, %p138
      %s141 = sadd.s32 %s140, 1
      %p144 = scmp.eq.s32.totalorder %s31, 3
      %p145 = scmp.ne.s32.totalorder %s140, %s142
      %p146 = scmp.eq.s32.totalorder %s31, 0
      %p147 = por %p145, %p146
      %p148 = scmp.ne.s32.totalorder %s140, %s142
      %p149 = scmp.eq.s32.totalorder %s36, 3
      %p150 = por %p148, %p149
      %p151 = scmp.ne.s32.totalorder %s142, %s143
      %p152 = scmp.eq.s32.totalorder %s36, 0
      %p153 = por %p151, %p152
      %p154 = scmp.ne.s32.totalorder %s142, %s143
      %p155 = scmp.eq.s32.totalorder %s37, 3
      %p156 = por %p154, %p155
      %p158 = scmp.ne.s32.totalorder %s143, %s157
      %p159 = scmp.eq.s32.totalorder %s37, 0
      %p160 = por %p158, %p159
      %s162 = sadd.s32 %s161, 1
      %p165 = scmp.eq.s32.totalorder %s31, 3
      %p166 = scmp.ne.s32.totalorder %s161, %s163
      %p167 = scmp.eq.s32.totalorder %s31, 0
      %p168 = por %p166, %p167
      %p169 = scmp.ne.s32.totalorder %s161, %s163
      %p170 = scmp.eq.s32.totalorder %s36, 3
      %p171 = por %p169, %p170
      %p172 = scmp.ne.s32.totalorder %s163, %s164
      %p173 = scmp.eq.s32.totalorder %s36, 0
      %p174 = por %p172, %p173
      %p175 = scmp.ne.s32.totalorder %s163, %s164
      %p176 = scmp.eq.s32.totalorder %s37, 3
      %p177 = por %p175, %p176
      %p179 = scmp.ne.s32.totalorder %s164, %s178
      %p180 = scmp.eq.s32.totalorder %s37, 0
      %p181 = por %p179, %p180
      %s183 = sadd.s32 %s182, 1
      %p186 = scmp.eq.s32.totalorder %s31, 3
      %p187 = scmp.ne.s32.totalorder %s182, %s184
      %p188 = scmp.eq.s32.totalorder %s31, 0
      %p189 = por %p187, %p188
      %p190 = scmp.ne.s32.totalorder %s182, %s184
      %p191 = scmp.eq.s32.totalorder %s36, 3
      %p192 = por %p190, %p191
      %p193 = scmp.ne.s32.totalorder %s184, %s185
      %p194 = scmp.eq.s32.totalorder %s36, 0
      %p195 = por %p193, %p194
      %p196 = scmp.ne.s32.totalorder %s184, %s185
      %p197 = scmp.eq.s32.totalorder %s37, 3
      %p198 = por %p196, %p197
      %p200 = scmp.ne.s32.totalorder %s185, %s199
      %p201 = scmp.eq.s32.totalorder %s37, 0
      %p202 = por %p200, %p201
      %s204 = sadd.s32 %s203, 1
      %p207 = scmp.eq.s32.totalorder %s31, 3
      %p208 = scmp.ne.s32.totalorder %s203, %s205
      %p209 = scmp.eq.s32.totalorder %s31, 0
      %p210 = por %p208, %p209
      %p211 = scmp.ne.s32.totalorder %s203, %s205
      %p212 = scmp.eq.s32.totalorder %s36, 3
      %p213 = por %p211, %p212
      %p214 = scmp.ne.s32.totalorder %s205, %s206
      %p215 = scmp.eq.s32.totalorder %s36, 0
      %p216 = por %p214, %p215
      %p217 = scmp.ne.s32.totalorder %s205, %s206
      %p218 = scmp.eq.s32.totalorder %s37, 3
      %p219 = por %p217, %p218
      %p221 = scmp.ne.s32.totalorder %s206, %s220
      %p222 = scmp.eq.s32.totalorder %s37, 0
      %p223 = por %p221, %p222
      %s225 = sadd.s32 %s224, 1
      %p228 = scmp.eq.s32.totalorder %s31, 3
      %p229 = scmp.ne.s32.totalorder %s224, %s226
      %p230 = scmp.eq.s32.totalorder %s31, 0
      %p231 = por %p229, %p230
      %p232 = scmp.ne.s32.totalorder %s224, %s226
      %p233 = scmp.eq.s32.totalorder %s36, 3
      %p234 = por %p232, %p233
      %p235 = scmp.ne.s32.totalorder %s226, %s227
      %p236 = scmp.eq.s32.totalorder %s36, 0
      %p237 = por %p235, %p236
      %p238 = scmp.ne.s32.totalorder %s226, %s227
      %p239 = scmp.eq.s32.totalorder %s37, 3
      %p240 = por %p238, %p239
      %p242 = scmp.ne.s32.totalorder %s227, %s241
      %p243 = scmp.eq.s32.totalorder %s37, 0
      %p244 = por %p242, %p243
      %s246 = sadd.s32 %s245, 1
      %p249 = scmp.eq.s32.totalorder %s31, 3
      %p250 = scmp.ne.s32.totalorder %s245, %s247
      %p251 = scmp.eq.s32.totalorder %s31, 0
      %p252 = por %p250, %p251
      %p253 = scmp.ne.s32.totalorder %s245, %s247
      %p254 = scmp.eq.s32.totalorder %s36, 3
      %p255 = por %p253, %p254
      %p256 = scmp.ne.s32.totalorder %s247, %s248
      %p257 = scmp.eq.s32.totalorder %s36, 0
      %p258 = por %p256, %p257
      %p259 = scmp.ne.s32.totalorder %s247, %s248
      %p260 = scmp.eq.s32.totalorder %s37, 3
      %p261 = por %p259, %p260
      %p263 = scmp.ne.s32.totalorder %s248, %s262
      %p264 = scmp.eq.s32.totalorder %s37, 0
      %p265 = por %p263, %p264
      %s267 = sadd.s32 %s266, 1
      %p270 = scmp.eq.s32.totalorder %s31, 3
      %p271 = scmp.ne.s32.totalorder %s266, %s268
      %p272 = scmp.eq.s32.totalorder %s31, 0
      %p273 = por %p271, %p272
      %p274 = scmp.ne.s32.totalorder %s266, %s268
      %p275 = scmp.eq.s32.totalorder %s36, 3
      %p276 = por %p274, %p275
      %p277 = scmp.ne.s32.totalorder %s268, %s269
      %p278 = scmp.eq.s32.totalorder %s36, 0
      %p279 = por %p277, %p278
      %p280 = scmp.ne.s32.totalorder %s268, %s269
      %p281 = scmp.eq.s32.totalorder %s37, 3
      %p282 = por %p280, %p281
      %p284 = scmp.ne.s32.totalorder %s269, %s283
      %p285 = scmp.eq.s32.totalorder %s37, 0
      %p286 = por %p284, %p285
      %s288 = sadd.s32 %s287, 1
      %p291 = scmp.eq.s32.totalorder %s31, 3
      %p292 = scmp.ne.s32.totalorder %s287, %s289
      %p293 = scmp.eq.s32.totalorder %s31, 0
      %p294 = por %p292, %p293
      %p295 = scmp.ne.s32.totalorder %s287, %s289
      %p296 = scmp.eq.s32.totalorder %s36, 3
      %p297 = por %p295, %p296
      %p298 = scmp.ne.s32.totalorder %s289, %s290
      %p299 = scmp.eq.s32.totalorder %s36, 0
      %p300 = por %p298, %p299
      %p301 = scmp.ne.s32.totalorder %s289, %s290
      %p302 = scmp.eq.s32.totalorder %s37, 3
      %p303 = por %p301, %p302
      %p305 = scmp.ne.s32.totalorder %s290, %s304
      %p306 = scmp.eq.s32.totalorder %s37, 0
      %p307 = por %p305, %p306
      %s309 = sadd.s32 %s308, 1
      %p312 = scmp.eq.s32.totalorder %s31, 3
      %p313 = scmp.ne.s32.totalorder %s308, %s310
      %p314 = scmp.eq.s32.totalorder %s31, 0
      %p315 = por %p313, %p314
      %p316 = scmp.ne.s32.totalorder %s308, %s310
      %p317 = scmp.eq.s32.totalorder %s36, 3
      %p318 = por %p316, %p317
      %p319 = scmp.ne.s32.totalorder %s310, %s311
      %p320 = scmp.eq.s32.totalorder %s36, 0
      %p321 = por %p319, %p320
      %p322 = scmp.ne.s32.totalorder %s310, %s311
      %p323 = scmp.eq.s32.totalorder %s37, 3
      %p324 = por %p322, %p323
      %p326 = scmp.ne.s32.totalorder %s311, %s325
      %p327 = scmp.eq.s32.totalorder %s37, 0
      %p328 = por %p326, %p327
      %s329 = ssub.s32 %s38, %s50
      %s330 = ssub.s32 %s39, %s46
      %s331 = sor.u32 %s329, %s330
      %p332 = scmp.eq.s32.totalorder %s331, 0
      %s334 = sadd.s32 %s333, 1
      %s335 = scalar_select %p332, %s333, %s334
      %p338 = pneg %p332
      %p339 = scmp.eq.s32.totalorder %s31, 3
      %p340 = por %p338, %p339
      %p341 = scmp.ne.s32.totalorder %s333, %s336
      %p342 = scmp.eq.s32.totalorder %s31, 0
      %p343 = por %p341, %p342
      %p344 = scmp.ne.s32.totalorder %s333, %s336
      %p345 = scmp.eq.s32.totalorder %s36, 3
      %p346 = por %p344, %p345
      %p347 = scmp.ne.s32.totalorder %s336, %s337
      %p348 = scmp.eq.s32.totalorder %s36, 0
      %p349 = por %p347, %p348
      %p350 = scmp.ne.s32.totalorder %s336, %s337
      %p351 = scmp.eq.s32.totalorder %s37, 3
      %p352 = por %p350, %p351
      %p354 = scmp.ne.s32.totalorder %s337, %s353
      %p355 = scmp.eq.s32.totalorder %s37, 0
      %p356 = por %p354, %p355
      %p357 = scmp.le.s32.totalorder 1, %s31
      %p358 = scmp.lt.s32.totalorder %s31, 5
      %p359 = pnand %p357, %p358
      %p360 = pneg %p359
      // Predicated region
      $region9: #{tpu_custom_call.1} parent=5 // pred_check
        _
      $region10: #{tpu_custom_call.1} parent=5 // pred_check_branch
        %362 = sbr.rel (%p359) target = $region12
      $region11: #{tpu_custom_call.1} parent=5 // pred_region
        %s363 = ssub.s32 %s31, 1
        // Predicated region
        $region13: #{tpu_custom_call.1} parent=11 // pred_check
          %p364 = pneg %p90
        $region14: #{tpu_custom_call.1} parent=11 // pred_check_branch
          %366 = sbr.rel (%p364) target = $region16
        $region15: #{tpu_custom_call.1} parent=11 // pred_region
          %s368 = ssub.s32 16, 16
          %369 = vsyncadd [#allocation9], %s368
          %s371 = sshll.u32 [#allocation8], 4
          %s372 = int_to_ptr.vmem [resolvable:$true] %s371
          %374 = dma.hbm_to_vmem [thread:$0]  %s1, 16, %s372, [#allocation9]
        $region16: #{tpu_custom_call.1} parent=11 // pred_fallthru
          _
        // Predicated region
        $region17: #{tpu_custom_call.1} parent=11 // pred_check
          %p375 = pneg %p111
        $region18: #{tpu_custom_call.1} parent=11 // pred_check_branch
          %377 = sbr.rel (%p375) target = $region20
        $region19: #{tpu_custom_call.1} parent=11 // pred_region
          %s379 = ssub.s32 16, 16
          %380 = vsyncadd [#allocation9], %s379
          %s382 = sshll.u32 [#allocation10], 4
          %s383 = int_to_ptr.vmem [resolvable:$true] %s382
          %385 = dma.hbm_to_vmem [thread:$0]  %s2, 16, %s383, [#allocation9]
        $region20: #{tpu_custom_call.1} parent=11 // pred_fallthru
          _
        // Predicated region
        $region21: #{tpu_custom_call.1} parent=11 // pred_check
          %p386 = pneg %p132
        $region22: #{tpu_custom_call.1} parent=11 // pred_check_branch
          %388 = sbr.rel (%p386) target = $region24
        $region23: #{tpu_custom_call.1} parent=11 // pred_region
          %s390 = ssub.s32 16, 16
          %391 = vsyncadd [#allocation12], %s390
          %s393 = sshll.u32 [#allocation11], 4
          %s394 = int_to_ptr.vmem [resolvable:$true] %s393
          %396 = dma.hbm_to_vmem [thread:$0]  %s3, 16, %s394, [#allocation12]
        $region24: #{tpu_custom_call.1} parent=11 // pred_fallthru
          _
        // Predicated region
        $region25: #{tpu_custom_call.1} parent=11 // pred_check
          %p397 = pneg %p153
        $region26: #{tpu_custom_call.1} parent=11 // pred_check_branch
          %399 = sbr.rel (%p397) target = $region28
        $region27: #{tpu_custom_call.1} parent=11 // pred_region
          %s401 = ssub.s32 16, 16
          %402 = vsyncadd [#allocation12], %s401
          %s404 = sshll.u32 [#allocation13], 4
          %s405 = int_to_ptr.vmem [resolvable:$true] %s404
          %407 = dma.hbm_to_vmem [thread:$0]  %s4, 16, %s405, [#allocation12]
        $region28: #{tpu_custom_call.1} parent=11 // pred_fallthru
          _
        // Predicated region
        $region29: #{tpu_custom_call.1} parent=11 // pred_check
          %p408 = pneg %p174
        $region30: #{tpu_custom_call.1} parent=11 // pred_check_branch
          %410 = sbr.rel (%p408) target = $region32
        $region31: #{tpu_custom_call.1} parent=11 // pred_region
          %s412 = ssub.s32 6144, 6144
          %413 = vsyncadd [#allocation15], %s412
          %s414 = sshll.u32 [#allocation14], 4
          %s415 = int_to_ptr.vmem [resolvable:$true] %s414
          %420 = dma.hbm_to_vmem [thread:$0]  %s5, 6144, %s415, [#allocation15], 384, 384, 24
        $region32: #{tpu_custom_call.1} parent=11 // pred_fallthru
          _
        // Predicated region
        $region33: #{tpu_custom_call.1} parent=11 // pred_check
          %p421 = pneg %p195
        $region34: #{tpu_custom_call.1} parent=11 // pred_check_branch
          %423 = sbr.rel (%p421) target = $region36
        $region35: #{tpu_custom_call.1} parent=11 // pred_region
          %s425 = ssub.s32 48, 48
          %426 = vsyncadd [#allocation15], %s425
          %s428 = sshll.u32 [#allocation16], 4
          %s429 = int_to_ptr.vmem [resolvable:$true] %s428
          %431 = dma.hbm_to_vmem [thread:$0]  %s6, 48, %s429, [#allocation15]
        $region36: #{tpu_custom_call.1} parent=11 // pred_fallthru
          _
        // Predicated region
        $region37: #{tpu_custom_call.1} parent=11 // pred_check
          %p432 = pneg %p216
        $region38: #{tpu_custom_call.1} parent=11 // pred_check_branch
          %434 = sbr.rel (%p432) target = $region40
        $region39: #{tpu_custom_call.1} parent=11 // pred_region
          %s436 = ssub.s32 2048, 2048
          %437 = vsyncadd [#allocation18], %s436
          %s438 = sshll.u32 [#allocation17], 4
          %s439 = int_to_ptr.vmem [resolvable:$true] %s438
          %444 = dma.hbm_to_vmem [thread:$0]  %s7, 2048, %s439, [#allocation18], 128, 128, 8
        $region40: #{tpu_custom_call.1} parent=11 // pred_fallthru
          _
        // Predicated region
        $region41: #{tpu_custom_call.1} parent=11 // pred_check
          %p445 = pneg %p237
        $region42: #{tpu_custom_call.1} parent=11 // pred_check_branch
          %447 = sbr.rel (%p445) target = $region44
        $region43: #{tpu_custom_call.1} parent=11 // pred_region
          %s449 = ssub.s32 16, 16
          %450 = vsyncadd [#allocation18], %s449
          %s452 = sshll.u32 [#allocation19], 4
          %s453 = int_to_ptr.vmem [resolvable:$true] %s452
          %455 = dma.hbm_to_vmem [thread:$0]  %s8, 16, %s453, [#allocation18]
        $region44: #{tpu_custom_call.1} parent=11 // pred_fallthru
          _
        // Predicated region
        $region45: #{tpu_custom_call.1} parent=11 // pred_check
          %p456 = pneg %p258
        $region46: #{tpu_custom_call.1} parent=11 // pred_check_branch
          %458 = sbr.rel (%p456) target = $region48
        $region47: #{tpu_custom_call.1} parent=11 // pred_region
          %s460 = ssub.s32 8192, 8192
          %461 = vsyncadd [#allocation21], %s460
          %s462 = sshll.u32 [#allocation20], 4
          %s463 = int_to_ptr.vmem [resolvable:$true] %s462
          %468 = dma.hbm_to_vmem [thread:$0]  %s9, 8192, %s463, [#allocation21], 512, 512, 32
        $region48: #{tpu_custom_call.1} parent=11 // pred_fallthru
          _
        // Predicated region
        $region49: #{tpu_custom_call.1} parent=11 // pred_check
          %p469 = pneg %p279
        $region50: #{tpu_custom_call.1} parent=11 // pred_check_branch
          %471 = sbr.rel (%p469) target = $region52
        $region51: #{tpu_custom_call.1} parent=11 // pred_region
          %s473 = ssub.s32 64, 64
          %474 = vsyncadd [#allocation21], %s473
          %s476 = sshll.u32 [#allocation22], 4
          %s477 = int_to_ptr.vmem [resolvable:$true] %s476
          %479 = dma.hbm_to_vmem [thread:$0]  %s10, 64, %s477, [#allocation21]
        $region52: #{tpu_custom_call.1} parent=11 // pred_fallthru
          _
        // Predicated region
        $region53: #{tpu_custom_call.1} parent=11 // pred_check
          %p480 = pneg %p300
        $region54: #{tpu_custom_call.1} parent=11 // pred_check_branch
          %482 = sbr.rel (%p480) target = $region56
        $region55: #{tpu_custom_call.1} parent=11 // pred_region
          %s484 = ssub.s32 8192, 8192
          %485 = vsyncadd [#allocation24], %s484
          %s486 = sshll.u32 [#allocation23], 4
          %s487 = int_to_ptr.vmem [resolvable:$true] %s486
          %492 = dma.hbm_to_vmem [thread:$0]  %s11, 8192, %s487, [#allocation24], 128, 128, 8
        $region56: #{tpu_custom_call.1} parent=11 // pred_fallthru
          _
        // Predicated region
        $region57: #{tpu_custom_call.1} parent=11 // pred_check
          %p493 = pneg %p321
        $region58: #{tpu_custom_call.1} parent=11 // pred_check_branch
          %495 = sbr.rel (%p493) target = $region60
        $region59: #{tpu_custom_call.1} parent=11 // pred_region
          %s497 = ssub.s32 16, 16
          %498 = vsyncadd [#allocation24], %s497
          %s500 = sshll.u32 [#allocation25], 4
          %s501 = int_to_ptr.vmem [resolvable:$true] %s500
          %503 = dma.hbm_to_vmem [thread:$0]  %s12, 16, %s501, [#allocation24]
        $region60: #{tpu_custom_call.1} parent=11 // pred_fallthru
          _
      $region12: #{tpu_custom_call.1} parent=5 // pred_fallthru
        _
      %p504 = scmp.lt.s32.totalorder %s31, 4
      // Predicated region
      $region61: #{tpu_custom_call.1} parent=5 // pred_check
        %p505 = pneg %p504
      $region62: #{tpu_custom_call.1} parent=5 // pred_check_branch
        %507 = sbr.rel (%p505) target = $region64
      $region63: #{tpu_custom_call.1} parent=5 // pred_region
        // Predicated region
        $region65: #{tpu_custom_call.1} parent=63 // pred_check
          %p508 = pneg %p63
        $region66: #{tpu_custom_call.1} parent=63 // pred_check_branch
          %510 = sbr.rel (%p508) target = $region68
        $region67: #{tpu_custom_call.1} parent=63 // pred_region
          %s511 = sand.u32 %s53, 1
          %s512 = scalar_lea.sflag [#allocation6], %s511
          %s513 = sand.u32 %s53, 1
          %s514 = smul.addr %s513, 128
          %s515 = scalar_lea.vmem [#allocation5], %s514
          %s517 = ssub.s32 2048, 2048
          %518 = vsyncadd %s512, %s517
          %s519 = smul.addr %s38, 16
          %s520 = smul.addr %s519, 128
          %s521 = scalar_lea.hbm %s0, %s520
          %s522 = sshll.u32 %s515, 4
          %s523 = int_to_ptr.vmem [resolvable:$true] %s522
          %528 = dma.hbm_to_vmem [thread:$0]  %s521, 2048, %s523, %s512, 128, 128, 8
        $region68: #{tpu_custom_call.1} parent=63 // pred_fallthru
          _
      $region64: #{tpu_custom_call.1} parent=5 // pred_fallthru
        _
      %p529 = scmp.le.s32.totalorder 1, %s31
      %p530 = scmp.lt.s32.totalorder %s31, 5
      %p531 = pnand %p529, %p530
      %p532 = pneg %p531
      // Predicated region
      $region69: #{tpu_custom_call.1} parent=5 // pred_check
        _
      $region70: #{tpu_custom_call.1} parent=5 // pred_check_branch
        %534 = sbr.rel (%p531) target = $region72
      $region71: #{tpu_custom_call.1} parent=5 // pred_region
        %s535 = ssub.s32 %s31, 1
        %s536 = sand.u32 %s56, 1
        %s537 = scalar_lea.sflag [#allocation6], %s536
        %s538 = sand.u32 %s56, 1
        %s539 = smul.addr %s538, 128
        %s540 = scalar_lea.vmem [#allocation5], %s539
        // Predicated region
        $region73: #{tpu_custom_call.1} parent=71 // pred_check
          %p541 = pneg %p69
        $region74: #{tpu_custom_call.1} parent=71 // pred_check_branch
          %543 = sbr.rel (%p541) target = $region76
        $region75: #{tpu_custom_call.1} parent=71 // pred_region
          %544 = dma.done %s537, 2048
        $region76: #{tpu_custom_call.1} parent=71 // pred_fallthru
          _
        // Predicated region
        $region77: #{tpu_custom_call.1} parent=71 // pred_check
          %p545 = pneg %p90
        $region78: #{tpu_custom_call.1} parent=71 // pred_check_branch
          %547 = sbr.rel (%p545) target = $region80
        $region79: #{tpu_custom_call.1} parent=71 // pred_region
          %548 = dma.done [#allocation9], 16
        $region80: #{tpu_custom_call.1} parent=71 // pred_fallthru
          _
        // Predicated region
        $region81: #{tpu_custom_call.1} parent=71 // pred_check
          %p549 = pneg %p111
        $region82: #{tpu_custom_call.1} parent=71 // pred_check_branch
          %551 = sbr.rel (%p549) target = $region84
        $region83: #{tpu_custom_call.1} parent=71 // pred_region
          %552 = dma.done [#allocation9], 16
        $region84: #{tpu_custom_call.1} parent=71 // pred_fallthru
          _
        // Predicated region
        $region85: #{tpu_custom_call.1} parent=71 // pred_check
          %p553 = pneg %p132
        $region86: #{tpu_custom_call.1} parent=71 // pred_check_branch
          %555 = sbr.rel (%p553) target = $region88
        $region87: #{tpu_custom_call.1} parent=71 // pred_region
          %556 = dma.done [#allocation12], 16
        $region88: #{tpu_custom_call.1} parent=71 // pred_fallthru
          _
        // Predicated region
        $region89: #{tpu_custom_call.1} parent=71 // pred_check
          %p557 = pneg %p153
        $region90: #{tpu_custom_call.1} parent=71 // pred_check_branch
          %559 = sbr.rel (%p557) target = $region92
        $region91: #{tpu_custom_call.1} parent=71 // pred_region
          %560 = dma.done [#allocation12], 16
        $region92: #{tpu_custom_call.1} parent=71 // pred_fallthru
          _
        // Predicated region
        $region93: #{tpu_custom_call.1} parent=71 // pred_check
          %p561 = pneg %p174
        $region94: #{tpu_custom_call.1} parent=71 // pred_check_branch
          %563 = sbr.rel (%p561) target = $region96
        $region95: #{tpu_custom_call.1} parent=71 // pred_region
          %564 = dma.done [#allocation15], 6144
        $region96: #{tpu_custom_call.1} parent=71 // pred_fallthru
          _
        // Predicated region
        $region97: #{tpu_custom_call.1} parent=71 // pred_check
          %p565 = pneg %p195
        $region98: #{tpu_custom_call.1} parent=71 // pred_check_branch
          %567 = sbr.rel (%p565) target = $region100
        $region99: #{tpu_custom_call.1} parent=71 // pred_region
          %568 = dma.done [#allocation15], 48
        $region100: #{tpu_custom_call.1} parent=71 // pred_fallthru
          _
        // Predicated region
        $region101: #{tpu_custom_call.1} parent=71 // pred_check
          %p569 = pneg %p216
        $region102: #{tpu_custom_call.1} parent=71 // pred_check_branch
          %571 = sbr.rel (%p569) target = $region104
        $region103: #{tpu_custom_call.1} parent=71 // pred_region
          %572 = dma.done [#allocation18], 2048
        $region104: #{tpu_custom_call.1} parent=71 // pred_fallthru
          _
        // Predicated region
        $region105: #{tpu_custom_call.1} parent=71 // pred_check
          %p573 = pneg %p237
        $region106: #{tpu_custom_call.1} parent=71 // pred_check_branch
          %575 = sbr.rel (%p573) target = $region108
        $region107: #{tpu_custom_call.1} parent=71 // pred_region
          %576 = dma.done [#allocation18], 16
        $region108: #{tpu_custom_call.1} parent=71 // pred_fallthru
          _
        // Predicated region
        $region109: #{tpu_custom_call.1} parent=71 // pred_check
          %p577 = pneg %p258
        $region110: #{tpu_custom_call.1} parent=71 // pred_check_branch
          %579 = sbr.rel (%p577) target = $region112
        $region111: #{tpu_custom_call.1} parent=71 // pred_region
          %580 = dma.done [#allocation21], 8192
        $region112: #{tpu_custom_call.1} parent=71 // pred_fallthru
          _
        // Predicated region
        $region113: #{tpu_custom_call.1} parent=71 // pred_check
          %p581 = pneg %p279
        $region114: #{tpu_custom_call.1} parent=71 // pred_check_branch
          %583 = sbr.rel (%p581) target = $region116
        $region115: #{tpu_custom_call.1} parent=71 // pred_region
          %584 = dma.done [#allocation21], 64
        $region116: #{tpu_custom_call.1} parent=71 // pred_fallthru
          _
        // Predicated region
        $region117: #{tpu_custom_call.1} parent=71 // pred_check
          %p585 = pneg %p300
        $region118: #{tpu_custom_call.1} parent=71 // pred_check_branch
          %587 = sbr.rel (%p585) target = $region120
        $region119: #{tpu_custom_call.1} parent=71 // pred_region
          %588 = dma.done [#allocation24], 8192
        $region120: #{tpu_custom_call.1} parent=71 // pred_fallthru
          _
        // Predicated region
        $region121: #{tpu_custom_call.1} parent=71 // pred_check
          %p589 = pneg %p321
        $region122: #{tpu_custom_call.1} parent=71 // pred_check_branch
          %591 = sbr.rel (%p589) target = $region124
        $region123: #{tpu_custom_call.1} parent=71 // pred_region
          %592 = dma.done [#allocation24], 16
        $region124: #{tpu_custom_call.1} parent=71 // pred_fallthru
          _
        %s593 = sand.u32 %s56, 1
        %s594 = scalar_lea.sflag [#allocation6], %s593
        %s595 = sand.u32 %s56, 1
        %s596 = smul.addr %s595, 128
        %s597 = scalar_lea.vmem [#allocation5], %s596
        %p598 = pneg %p69
        %p599 = pneg %p66
        %p600 = pneg %p90
        %p601 = pneg %p87
        %p602 = pneg %p111
        %p603 = pneg %p108
        %p604 = pneg %p132
        %p605 = pneg %p129
        %p606 = pneg %p153
        %p607 = pneg %p150
        %p608 = pneg %p174
        %p609 = pneg %p171
        %p610 = pneg %p195
        %p611 = pneg %p192
        %p612 = pneg %p216
        %p613 = pneg %p213
        %p614 = pneg %p237
        %p615 = pneg %p234
        %p616 = pneg %p258
        %p617 = pneg %p255
        %p618 = pneg %p279
        %p619 = pneg %p276
        %p620 = pneg %p300
        %p621 = pneg %p297
        %p622 = pneg %p321
        %p623 = pneg %p318
        %p624 = pneg %p349
        %p625 = pneg %p346
        %s626 = sand.u32 %s336, 1
        %s627 = scalar_lea.sflag [#allocation7], %s626
        %s628 = sand.u32 %s336, 1
        %s629 = smul.addr %s628, 64
        %s630 = scalar_lea.vmem [#allocation26], %s629
        %s631 = smul.u32 8, %s41
        %p632 = scmp.eq.s32.totalorder %s41, 0
        // Predicated region
        $region125: #{tpu_custom_call.1} parent=71 // pred_check
          %p633 = pneg %p632
        $region126: #{tpu_custom_call.1} parent=71 // pred_check_branch
          %635 = sbr.rel (%p633) target = $region128
        $region127: #{tpu_custom_call.1} parent=71 // pred_region
          %v636 = vld [vmem:[%s540] sm:$0xff]
          %v637 = vld [vmem:[%s540 + $0x8] sm:$0xff]
          %v638 = vld [vmem:[%s540 + $0x10] sm:$0xff]
          %v639 = vld [vmem:[%s540 + $0x18] sm:$0xff]
          %v640 = vld [vmem:[%s540 + $0x20] sm:$0xff]
          %v641 = vld [vmem:[%s540 + $0x28] sm:$0xff]
          %v642 = vld [vmem:[%s540 + $0x30] sm:$0xff]
          %v643 = vld [vmem:[%s540 + $0x38] sm:$0xff]
          %v644 = vld [vmem:[%s540 + $0x40] sm:$0xff]
          %v645 = vld [vmem:[%s540 + $0x48] sm:$0xff]
          %v646 = vld [vmem:[%s540 + $0x50] sm:$0xff]
          %v647 = vld [vmem:[%s540 + $0x58] sm:$0xff]
          %v648 = vld [vmem:[%s540 + $0x60] sm:$0xff]
          %v649 = vld [vmem:[%s540 + $0x68] sm:$0xff]
          %v650 = vld [vmem:[%s540 + $0x70] sm:$0xff]
          %v651 = vld [vmem:[%s540 + $0x78] sm:$0xff]
          %v652 = vld [vmem:[#allocation8] sm:$0x1]
          %v653 = vld [vmem:[#allocation10] sm:$0x1]
          %654 = vadd.xlane.f32.xlu0 %v636
          %v655 = vpop.xlane.xlu0 %654
          %656 = vadd.xlane.f32.xlu0 %v637
          %v657 = vpop.xlane.xlu0 %656
          %658 = vadd.xlane.f32.xlu0 %v638
          %v659 = vpop.xlane.xlu0 %658
          %660 = vadd.xlane.f32.xlu0 %v639
          %v661 = vpop.xlane.xlu0 %660
          %662 = vadd.xlane.f32.xlu0 %v640
          %v663 = vpop.xlane.xlu0 %662
          %664 = vadd.xlane.f32.xlu0 %v641
          %v665 = vpop.xlane.xlu0 %664
          %666 = vadd.xlane.f32.xlu0 %v642
          %v667 = vpop.xlane.xlu0 %666
          %668 = vadd.xlane.f32.xlu0 %v643
          %v669 = vpop.xlane.xlu0 %668
          %670 = vadd.xlane.f32.xlu0 %v644
          %v671 = vpop.xlane.xlu0 %670
          %672 = vadd.xlane.f32.xlu0 %v645
          %v673 = vpop.xlane.xlu0 %672
          %674 = vadd.xlane.f32.xlu0 %v646
          %v675 = vpop.xlane.xlu0 %674
          %676 = vadd.xlane.f32.xlu0 %v647
          %v677 = vpop.xlane.xlu0 %676
          %678 = vadd.xlane.f32.xlu0 %v648
          %v679 = vpop.xlane.xlu0 %678
          %680 = vadd.xlane.f32.xlu0 %v649
          %v681 = vpop.xlane.xlu0 %680
          %682 = vadd.xlane.f32.xlu0 %v650
          %v683 = vpop.xlane.xlu0 %682
          %684 = vadd.xlane.f32.xlu0 %v651
          %v685 = vpop.xlane.xlu0 %684
          %v686 = vrcp.pop 128.0
          %v687 = vmul.f32 %v655, %v686
          %v688 = vmul.f32 %v657, %v686
          %v689 = vmul.f32 %v659, %v686
          %v690 = vmul.f32 %v661, %v686
          %v691 = vmul.f32 %v663, %v686
          %v692 = vmul.f32 %v665, %v686
          %v693 = vmul.f32 %v667, %v686
          %v694 = vmul.f32 %v669, %v686
          %v695 = vmul.f32 %v671, %v686
          %v696 = vmul.f32 %v673, %v686
          %v697 = vmul.f32 %v675, %v686
          %v698 = vmul.f32 %v677, %v686
          %v699 = vmul.f32 %v679, %v686
          %v700 = vmul.f32 %v681, %v686
          %v701 = vmul.f32 %v683, %v686
          %v702 = vmul.f32 %v685, %v686
          %v703 = vsub.f32 %v636, %v687
          %v704 = vsub.f32 %v637, %v688
          %v705 = vsub.f32 %v638, %v689
          %v706 = vsub.f32 %v639, %v690
          %v707 = vsub.f32 %v640, %v691
          %v708 = vsub.f32 %v641, %v692
          %v709 = vsub.f32 %v642, %v693
          %v710 = vsub.f32 %v643, %v694
          %v711 = vsub.f32 %v644, %v695
          %v712 = vsub.f32 %v645, %v696
          %v713 = vsub.f32 %v646, %v697
          %v714 = vsub.f32 %v647, %v698
          %v715 = vsub.f32 %v648, %v699
          %v716 = vsub.f32 %v649, %v700
          %v717 = vsub.f32 %v650, %v701
          %v718 = vsub.f32 %v651, %v702
          %v719 = vmul.f32 %v703, %v703
          %v720 = vmul.f32 %v704, %v704
          %v721 = vmul.f32 %v705, %v705
          %v722 = vmul.f32 %v706, %v706
          %v723 = vmul.f32 %v707, %v707
          %v724 = vmul.f32 %v708, %v708
          %v725 = vmul.f32 %v709, %v709
          %v726 = vmul.f32 %v710, %v710
          %v727 = vmul.f32 %v711, %v711
          %v728 = vmul.f32 %v712, %v712
          %v729 = vmul.f32 %v713, %v713
          %v730 = vmul.f32 %v714, %v714
          %v731 = vmul.f32 %v715, %v715
          %v732 = vmul.f32 %v716, %v716
          %v733 = vmul.f32 %v717, %v717
          %v734 = vmul.f32 %v718, %v718
          %735 = vadd.xlane.f32.xlu0 %v719
          %v736 = vpop.xlane.xlu0 %735
          %737 = vadd.xlane.f32.xlu0 %v720
          %v738 = vpop.xlane.xlu0 %737
          %739 = vadd.xlane.f32.xlu0 %v721
          %v740 = vpop.xlane.xlu0 %739
          %741 = vadd.xlane.f32.xlu0 %v722
          %v742 = vpop.xlane.xlu0 %741
          %743 = vadd.xlane.f32.xlu0 %v723
          %v744 = vpop.xlane.xlu0 %743
          %745 = vadd.xlane.f32.xlu0 %v724
          %v746 = vpop.xlane.xlu0 %745
          %747 = vadd.xlane.f32.xlu0 %v725
          %v748 = vpop.xlane.xlu0 %747
          %749 = vadd.xlane.f32.xlu0 %v726
          %v750 = vpop.xlane.xlu0 %749
          %751 = vadd.xlane.f32.xlu0 %v727
          %v752 = vpop.xlane.xlu0 %751
          %753 = vadd.xlane.f32.xlu0 %v728
          %v754 = vpop.xlane.xlu0 %753
          %755 = vadd.xlane.f32.xlu0 %v729
          %v756 = vpop.xlane.xlu0 %755
          %757 = vadd.xlane.f32.xlu0 %v730
          %v758 = vpop.xlane.xlu0 %757
          %759 = vadd.xlane.f32.xlu0 %v731
          %v760 = vpop.xlane.xlu0 %759
          %761 = vadd.xlane.f32.xlu0 %v732
          %v762 = vpop.xlane.xlu0 %761
          %763 = vadd.xlane.f32.xlu0 %v733
          %v764 = vpop.xlane.xlu0 %763
          %765 = vadd.xlane.f32.xlu0 %v734
          %v766 = vpop.xlane.xlu0 %765
          %v767 = vmul.f32 %v736, %v686
          %v768 = vmul.f32 %v738, %v686
          %v769 = vmul.f32 %v740, %v686
          %v770 = vmul.f32 %v742, %v686
          %v771 = vmul.f32 %v744, %v686
          %v772 = vmul.f32 %v746, %v686
          %v773 = vmul.f32 %v748, %v686
          %v774 = vmul.f32 %v750, %v686
          %v775 = vmul.f32 %v752, %v686
          %v776 = vmul.f32 %v754, %v686
          %v777 = vmul.f32 %v756, %v686
          %v778 = vmul.f32 %v758, %v686
          %v779 = vmul.f32 %v760, %v686
          %v780 = vmul.f32 %v762, %v686
          %v781 = vmul.f32 %v764, %v686
          %v782 = vmul.f32 %v766, %v686
          %v783 = vadd.f32 %v767, 1e-05
          %v784 = vadd.f32 %v768, 1e-05
          %v785 = vadd.f32 %v769, 1e-05
          %v786 = vadd.f32 %v770, 1e-05
          %v787 = vadd.f32 %v771, 1e-05
          %v788 = vadd.f32 %v772, 1e-05
          %v789 = vadd.f32 %v773, 1e-05
          %v790 = vadd.f32 %v774, 1e-05
          %v791 = vadd.f32 %v775, 1e-05
          %v792 = vadd.f32 %v776, 1e-05
          %v793 = vadd.f32 %v777, 1e-05
          %v794 = vadd.f32 %v778, 1e-05
          %v795 = vadd.f32 %v779, 1e-05
          %v796 = vadd.f32 %v780, 1e-05
          %v797 = vadd.f32 %v781, 1e-05
          %v798 = vadd.f32 %v782, 1e-05
          %v799 = vrsqrt.pop %v783
          %v800 = vrsqrt.pop %v784
          %v801 = vrsqrt.pop %v785
          %v802 = vrsqrt.pop %v786
          %v803 = vrsqrt.pop %v787
          %v804 = vrsqrt.pop %v788
          %v805 = vrsqrt.pop %v789
          %v806 = vrsqrt.pop %v790
          %v807 = vrsqrt.pop %v791
          %v808 = vrsqrt.pop %v792
          %v809 = vrsqrt.pop %v793
          %v810 = vrsqrt.pop %v794
          %v811 = vrsqrt.pop %v795
          %v812 = vrsqrt.pop %v796
          %v813 = vrsqrt.pop %v797
          %v814 = vrsqrt.pop %v798
          %v815 = vmul.f32 %v703, %v799
          %v816 = vmul.f32 %v704, %v800
          %v817 = vmul.f32 %v705, %v801
          %v818 = vmul.f32 %v706, %v802
          %v819 = vmul.f32 %v707, %v803
          %v820 = vmul.f32 %v708, %v804
          %v821 = vmul.f32 %v709, %v805
          %v822 = vmul.f32 %v710, %v806
          %v823 = vmul.f32 %v711, %v807
          %v824 = vmul.f32 %v712, %v808
          %v825 = vmul.f32 %v713, %v809
          %v826 = vmul.f32 %v714, %v810
          %v827 = vmul.f32 %v715, %v811
          %v828 = vmul.f32 %v716, %v812
          %v829 = vmul.f32 %v717, %v813
          %v830 = vmul.f32 %v718, %v814
          %v832 = vlaneseq
          %v833 = vshrl.u32 %v832, 7
          %v834 = vsub.s32 0, %v833
          %v835 = vrot.slane %v652, %v834
          %v837 = vmul.f32 %v815, %v835
          %v838 = vmul.f32 %v816, %v835
          %v839 = vmul.f32 %v817, %v835
          %v840 = vmul.f32 %v818, %v835
          %v841 = vmul.f32 %v819, %v835
          %v842 = vmul.f32 %v820, %v835
          %v843 = vmul.f32 %v821, %v835
          %v844 = vmul.f32 %v822, %v835
          %v845 = vmul.f32 %v823, %v835
          %v846 = vmul.f32 %v824, %v835
          %v847 = vmul.f32 %v825, %v835
          %v848 = vmul.f32 %v826, %v835
          %v849 = vmul.f32 %v827, %v835
          %v850 = vmul.f32 %v828, %v835
          %v851 = vmul.f32 %v829, %v835
          %v852 = vmul.f32 %v830, %v835
          %v854 = vlaneseq
          %v855 = vshrl.u32 %v854, 7
          %v856 = vsub.s32 0, %v855
          %v857 = vrot.slane %v653, %v856
          %v859 = vadd.f32 %v837, %v857
          %v860 = vadd.f32 %v838, %v857
          %v861 = vadd.f32 %v839, %v857
          %v862 = vadd.f32 %v840, %v857
          %v863 = vadd.f32 %v841, %v857
          %v864 = vadd.f32 %v842, %v857
          %v865 = vadd.f32 %v843, %v857
          %v866 = vadd.f32 %v844, %v857
          %v867 = vadd.f32 %v845, %v857
          %v868 = vadd.f32 %v846, %v857
          %v869 = vadd.f32 %v847, %v857
          %v870 = vadd.f32 %v848, %v857
          %v871 = vadd.f32 %v849, %v857
          %v872 = vadd.f32 %v850, %v857
          %v873 = vadd.f32 %v851, %v857
          %v874 = vadd.f32 %v852, %v857
          %v875 = vld [vmem:[#allocation14] sm:$0xff]
          %v876 = vld [vmem:[#allocation14 + $0x8] sm:$0xff]
          %v877 = vld [vmem:[#allocation14 + $0x10] sm:$0xff]
          %v878 = vld [vmem:[#allocation14 + $0x18] sm:$0xff]
          %v879 = vld [vmem:[#allocation14 + $0x20] sm:$0xff]
          %v880 = vld [vmem:[#allocation14 + $0x28] sm:$0xff]
          %v881 = vld [vmem:[#allocation14 + $0x30] sm:$0xff]
          %v882 = vld [vmem:[#allocation14 + $0x38] sm:$0xff]
          %v883 = vld [vmem:[#allocation14 + $0x40] sm:$0xff]
          %v884 = vld [vmem:[#allocation14 + $0x48] sm:$0xff]
          %v885 = vld [vmem:[#allocation14 + $0x50] sm:$0xff]
          %v886 = vld [vmem:[#allocation14 + $0x58] sm:$0xff]
          %v887 = vld [vmem:[#allocation14 + $0x60] sm:$0xff]
          %v888 = vld [vmem:[#allocation14 + $0x68] sm:$0xff]
          %v889 = vld [vmem:[#allocation14 + $0x70] sm:$0xff]
          %v890 = vld [vmem:[#allocation14 + $0x78] sm:$0xff]
          %v891 = vld [vmem:[#allocation14 + $0x80] sm:$0xff]
          %v892 = vld [vmem:[#allocation14 + $0x88] sm:$0xff]
          %v893 = vld [vmem:[#allocation14 + $0x90] sm:$0xff]
          %v894 = vld [vmem:[#allocation14 + $0x98] sm:$0xff]
          %v895 = vld [vmem:[#allocation14 + $0xa0] sm:$0xff]
          %v896 = vld [vmem:[#allocation14 + $0xa8] sm:$0xff]
          %v897 = vld [vmem:[#allocation14 + $0xb0] sm:$0xff]
          %v898 = vld [vmem:[#allocation14 + $0xb8] sm:$0xff]
          %v899 = vld [vmem:[#allocation14 + $0xc0] sm:$0xff]
          %v900 = vld [vmem:[#allocation14 + $0xc8] sm:$0xff]
          %v901 = vld [vmem:[#allocation14 + $0xd0] sm:$0xff]
          %v902 = vld [vmem:[#allocation14 + $0xd8] sm:$0xff]
          %v903 = vld [vmem:[#allocation14 + $0xe0] sm:$0xff]
          %v904 = vld [vmem:[#allocation14 + $0xe8] sm:$0xff]
          %v905 = vld [vmem:[#allocation14 + $0xf0] sm:$0xff]
          %v906 = vld [vmem:[#allocation14 + $0xf8] sm:$0xff]
          %v907 = vld [vmem:[#allocation14 + $0x100] sm:$0xff]
          %v908 = vld [vmem:[#allocation14 + $0x108] sm:$0xff]
          %v909 = vld [vmem:[#allocation14 + $0x110] sm:$0xff]
          %v910 = vld [vmem:[#allocation14 + $0x118] sm:$0xff]
          %v911 = vld [vmem:[#allocation14 + $0x120] sm:$0xff]
          %v912 = vld [vmem:[#allocation14 + $0x128] sm:$0xff]
          %v913 = vld [vmem:[#allocation14 + $0x130] sm:$0xff]
          %v914 = vld [vmem:[#allocation14 + $0x138] sm:$0xff]
          %v915 = vld [vmem:[#allocation14 + $0x140] sm:$0xff]
          %v916 = vld [vmem:[#allocation14 + $0x148] sm:$0xff]
          %v917 = vld [vmem:[#allocation14 + $0x150] sm:$0xff]
          %v918 = vld [vmem:[#allocation14 + $0x158] sm:$0xff]
          %v919 = vld [vmem:[#allocation14 + $0x160] sm:$0xff]
          %v920 = vld [vmem:[#allocation14 + $0x168] sm:$0xff]
          %v921 = vld [vmem:[#allocation14 + $0x170] sm:$0xff]
          %v922 = vld [vmem:[#allocation14 + $0x178] sm:$0xff]
          %v923 = vld [vmem:[#allocation16] sm:$0x7]
          %v925 = vlaneseq
          %v926 = vshrl.u32 %v925, 7
          %v927 = vsub.s32 0, %v926
          %v928 = vrot.slane %v923, %v927
          %v929 = vlaneseq
          %v930 = vshrl.u32 %v929, 7
          %v931 = vsub.s32 1, %v930
          %v932 = vrot.slane %v923, %v931
          %v933 = vlaneseq
          %v934 = vshrl.u32 %v933, 7
          %v935 = vsub.s32 2, %v934
          %v936 = vrot.slane %v923, %v935
          %940 = vmatprep.subr.mxu0 %v876
          %941 = vmatpush1.msra.mxu0 %v875
          %942 = vmatprep.subr.mxu0 %v879
          %943 = vmatpush1.msra.mxu0 %v878
          %944 = vmatprep.subr.mxu0 %v882
          %945 = vmatpush1.msra.mxu0 %v881
          %946 = vmatprep.subr.mxu0 %v885
          %947 = vmatpush1.msra.mxu0 %v884
          %948 = vmatprep.subr.mxu0 %v888
          %949 = vmatpush1.msra.mxu0 %v887
          %950 = vmatprep.subr.mxu0 %v891
          %951 = vmatpush1.msra.mxu0 %v890
          %952 = vmatprep.subr.mxu0 %v894
          %953 = vmatpush1.msra.mxu0 %v893
          %954 = vmatprep.subr.mxu0 %v897
          %955 = vmatpush1.msra.mxu0 %v896
          %956 = vmatprep.subr.mxu0 %v900
          %957 = vmatpush1.msra.mxu0 %v899
          %958 = vmatprep.subr.mxu0 %v903
          %959 = vmatpush1.msra.mxu0 %v902
          %960 = vmatprep.subr.mxu0 %v906
          %961 = vmatpush1.msra.mxu0 %v905
          %962 = vmatprep.subr.mxu0 %v909
          %963 = vmatpush1.msra.mxu0 %v908
          %964 = vmatprep.subr.mxu0 %v912
          %965 = vmatpush1.msra.mxu0 %v911
          %966 = vmatprep.subr.mxu0 %v915
          %967 = vmatpush1.msra.mxu0 %v914
          %968 = vmatprep.subr.mxu0 %v918
          %969 = vmatpush1.msra.mxu0 %v917
          %970 = vmatprep.subr.mxu0 %v921
          %971 = vmatpush1.msra.mxu0 %v920
          %972 = vmatprep.subr.mxu0 0.0
          %973 = vmatpush1.msra.mxu0 0.0
          %974 = vmatprep.subr.mxu0 0.0
          %975 = vmatpush1.msra.mxu0 0.0
          %976 = vmatprep.subr.mxu0 0.0
          %977 = vmatpush1.msra.mxu0 0.0
          %978 = vmatprep.subr.mxu0 0.0
          %979 = vmatpush1.msra.mxu0 0.0
          %980 = vmatprep.subr.mxu0 0.0
          %981 = vmatpush1.msra.mxu0 0.0
          %982 = vmatprep.subr.mxu0 0.0
          %983 = vmatpush1.msra.mxu0 0.0
          %984 = vmatprep.subr.mxu0 0.0
          %985 = vmatpush1.msra.mxu0 0.0
          %986 = vmatprep.subr.mxu0 0.0
          %987 = vmatpush1.msra.mxu0 0.0
          %988 = vmatprep.subr.mxu0 0.0
          %989 = vmatpush1.msra.mxu0 0.0
          %990 = vmatprep.subr.mxu0 0.0
          %991 = vmatpush1.msra.mxu0 0.0
          %992 = vmatprep.subr.mxu0 0.0
          %993 = vmatpush1.msra.mxu0 0.0
          %994 = vmatprep.subr.mxu0 0.0
          %995 = vmatpush1.msra.mxu0 0.0
          %996 = vmatprep.subr.mxu0 0.0
          %997 = vmatpush1.msra.mxu0 0.0
          %998 = vmatprep.subr.mxu0 0.0
          %999 = vmatpush1.msra.mxu0 0.0
          %1000 = vmatprep.subr.mxu0 0.0
          %1001 = vmatpush1.msra.mxu0 0.0
          %1002 = vmatprep.subr.mxu0 0.0
          %1003 = vmatpush1.msra.mxu0 0.0
          %1004 = vmatprep.mubr.f32.mxu0 0.0
          %1005 = vmatmul.mubr.f32.gmra.mrb[0].mxu0 %v859
          %v1006 = vpop.f32.mrb[0].mxu0
          %v1007 = vadd.f32 %v928, %v1006
          %v1008 = vpop.f32.mrb[0].mxu0
          %v1009 = vadd.f32 %v932, %v1008
          %1010 = vmatprep.mubr.f32.mxu0 0.0
          %1011 = vmatmul.mubr.f32.gmra.mrb[0].mxu0 %v860
          %v1012 = vpop.f32.mrb[0].mxu0
          %v1013 = vadd.f32 %v928, %v1012
          %v1014 = vpop.f32.mrb[0].mxu0
          %v1015 = vadd.f32 %v932, %v1014
          %1016 = vmatprep.mubr.f32.mxu0 0.0
          %1017 = vmatmul.mubr.f32.gmra.mrb[0].mxu0 %v861
          %v1018 = vpop.f32.mrb[0].mxu0
          %v1019 = vadd.f32 %v928, %v1018
          %v1020 = vpop.f32.mrb[0].mxu0
          %v1021 = vadd.f32 %v932, %v1020
          %1022 = vmatprep.mubr.f32.mxu0 0.0
          %1023 = vmatmul.mubr.f32.gmra.mrb[0].mxu0 %v862
          %v1024 = vpop.f32.mrb[0].mxu0
          %v1025 = vadd.f32 %v928, %v1024
          %v1026 = vpop.f32.mrb[0].mxu0
          %v1027 = vadd.f32 %v932, %v1026
          %1028 = vmatprep.mubr.f32.mxu0 0.0
          %1029 = vmatmul.mubr.f32.gmra.mrb[0].mxu0 %v863
          %v1030 = vpop.f32.mrb[0].mxu0
          %v1031 = vadd.f32 %v928, %v1030
          %v1032 = vpop.f32.mrb[0].mxu0
          %v1033 = vadd.f32 %v932, %v1032
          %1034 = vmatprep.mubr.f32.mxu0 0.0
          %1035 = vmatmul.mubr.f32.gmra.mrb[0].mxu0 %v864
          %v1036 = vpop.f32.mrb[0].mxu0
          %v1037 = vadd.f32 %v928, %v1036
          %v1038 = vpop.f32.mrb[0].mxu0
          %v1039 = vadd.f32 %v932, %v1038
          %1040 = vmatprep.mubr.f32.mxu0 0.0
          %1041 = vmatmul.mubr.f32.gmra.mrb[0].mxu0 %v865
          %v1042 = vpop.f32.mrb[0].mxu0
          %v1043 = vadd.f32 %v928, %v1042
          %v1044 = vpop.f32.mrb[0].mxu0
          %v1045 = vadd.f32 %v932, %v1044
          %1046 = vmatprep.mubr.f32.mxu0 0.0
          %1047 = vmatmul.mubr.f32.gmra.mrb[0].mxu0 %v866
          %v1048 = vpop.f32.mrb[0].mxu0
          %v1049 = vadd.f32 %v928, %v1048
          %v1050 = vpop.f32.mrb[0].mxu0
          %v1051 = vadd.f32 %v932, %v1050
          %1052 = vmatprep.mubr.f32.mxu0 0.0
          %1053 = vmatmul.mubr.f32.gmra.mrb[0].mxu0 %v867
          %v1054 = vpop.f32.mrb[0].mxu0
          %v1055 = vadd.f32 %v928, %v1054
          %v1056 = vpop.f32.mrb[0].mxu0
          %v1057 = vadd.f32 %v932, %v1056
          %1058 = vmatprep.mubr.f32.mxu0 0.0
          %1059 = vmatmul.mubr.f32.gmra.mrb[0].mxu0 %v868
          %v1060 = vpop.f32.mrb[0].mxu0
          %v1061 = vadd.f32 %v928, %v1060
          %v1062 = vpop.f32.mrb[0].mxu0
          %v1063 = vadd.f32 %v932, %v1062
          %1064 = vmatprep.mubr.f32.mxu0 0.0
          %1065 = vmatmul.mubr.f32.gmra.mrb[0].mxu0 %v869
          %v1066 = vpop.f32.mrb[0].mxu0
          %v1067 = vadd.f32 %v928, %v1066
          %v1068 = vpop.f32.mrb[0].mxu0
          %v1069 = vadd.f32 %v932, %v1068
          %1070 = vmatprep.mubr.f32.mxu0 0.0
          %1071 = vmatmul.mubr.f32.gmra.mrb[0].mxu0 %v870
          %v1072 = vpop.f32.mrb[0].mxu0
          %v1073 = vadd.f32 %v928, %v1072
          %v1074 = vpop.f32.mrb[0].mxu0
          %v1075 = vadd.f32 %v932, %v1074
          %1076 = vmatprep.mubr.f32.mxu0 0.0
          %1077 = vmatmul.mubr.f32.gmra.mrb[0].mxu0 %v871
          %v1078 = vpop.f32.mrb[0].mxu0
          %v1079 = vadd.f32 %v928, %v1078
          %v1080 = vpop.f32.mrb[0].mxu0
          %v1081 = vadd.f32 %v932, %v1080
          %1082 = vmatprep.mubr.f32.mxu0 0.0
          %1083 = vmatmul.mubr.f32.gmra.mrb[0].mxu0 %v872
          %v1084 = vpop.f32.mrb[0].mxu0
          %v1085 = vadd.f32 %v928, %v1084
          %v1086 = vpop.f32.mrb[0].mxu0
          %v1087 = vadd.f32 %v932, %v1086
          %1088 = vmatprep.mubr.f32.mxu0 0.0
          %1089 = vmatmul.mubr.f32.gmra.mrb[0].mxu0 %v873
          %v1090 = vpop.f32.mrb[0].mxu0
          %v1091 = vadd.f32 %v928, %v1090
          %v1092 = vpop.f32.mrb[0].mxu0
          %v1093 = vadd.f32 %v932, %v1092
          %1094 = vmatprep.mubr.f32.mxu0 0.0
          %1095 = vmatmul.mubr.f32.gmra.mrb[0].mxu0 %v874
          %v1096 = vpop.f32.mrb[0].mxu0
          %v1097 = vadd.f32 %v928, %v1096
          %v1098 = vpop.f32.mrb[0].mxu0
          %v1099 = vadd.f32 %v932, %v1098
          %1100 = vdwg.mxu0
          %1101 = vmatprep.subr.mxu0 0.0
          %1102 = vmatpush1.msra.mxu0 %v877
          %1103 = vmatprep.subr.mxu0 0.0
          %1104 = vmatpush1.msra.mxu0 %v880
          %1105 = vmatprep.subr.mxu0 0.0
          %1106 = vmatpush1.msra.mxu0 %v883
          %1107 = vmatprep.subr.mxu0 0.0
          %1108 = vmatpush1.msra.mxu0 %v886
          %1109 = vmatprep.subr.mxu0 0.0
          %1110 = vmatpush1.msra.mxu0 %v889
          %1111 = vmatprep.subr.mxu0 0.0
          %1112 = vmatpush1.msra.mxu0 %v892
          %1113 = vmatprep.subr.mxu0 0.0
          %1114 = vmatpush1.msra.mxu0 %v895
          %1115 = vmatprep.subr.mxu0 0.0
          %1116 = vmatpush1.msra.mxu0 %v898
          %1117 = vmatprep.subr.mxu0 0.0
          %1118 = vmatpush1.msra.mxu0 %v901
          %1119 = vmatprep.subr.mxu0 0.0
          %1120 = vmatpush1.msra.mxu0 %v904
          %1121 = vmatprep.subr.mxu0 0.0
          %1122 = vmatpush1.msra.mxu0 %v907
          %1123 = vmatprep.subr.mxu0 0.0
          %1124 = vmatpush1.msra.mxu0 %v910
          %1125 = vmatprep.subr.mxu0 0.0
          %1126 = vmatpush1.msra.mxu0 %v913
          %1127 = vmatprep.subr.mxu0 0.0
          %1128 = vmatpush1.msra.mxu0 %v916
          %1129 = vmatprep.subr.mxu0 0.0
          %1130 = vmatpush1.msra.mxu0 %v919
          %1131 = vmatprep.subr.mxu0 0.0
          %1132 = vmatpush1.msra.mxu0 %v922
          %1133 = vmatprep.subr.mxu0 0.0
          %1134 = vmatpush1.msra.mxu0 0.0
          %1135 = vmatprep.subr.mxu0 0.0
          %1136 = vmatpush1.msra.mxu0 0.0
          %1137 = vmatprep.subr.mxu0 0.0
          %1138 = vmatpush1.msra.mxu0 0.0
          %1139 = vmatprep.subr.mxu0 0.0
          %1140 = vmatpush1.msra.mxu0 0.0
          %1141 = vmatprep.subr.mxu0 0.0
          %1142 = vmatpush1.msra.mxu0 0.0
          %1143 = vmatprep.subr.mxu0 0.0
          %1144 = vmatpush1.msra.mxu0 0.0
          %1145 = vmatprep.subr.mxu0 0.0
          %1146 = vmatpush1.msra.mxu0 0.0
          %1147 = vmatprep.subr.mxu0 0.0
          %1148 = vmatpush1.msra.mxu0 0.0
          %1149 = vmatprep.subr.mxu0 0.0
          %1150 = vmatpush1.msra.mxu0 0.0
          %1151 = vmatprep.subr.mxu0 0.0
          %1152 = vmatpush1.msra.mxu0 0.0
          %1153 = vmatprep.subr.mxu0 0.0
          %1154 = vmatpush1.msra.mxu0 0.0
          %1155 = vmatprep.subr.mxu0 0.0
          %1156 = vmatpush1.msra.mxu0 0.0
          %1157 = vmatprep.subr.mxu0 0.0
          %1158 = vmatpush1.msra.mxu0 0.0
          %1159 = vmatprep.subr.mxu0 0.0
          %1160 = vmatpush1.msra.mxu0 0.0
          %1161 = vmatprep.subr.mxu0 0.0
          %1162 = vmatpush1.msra.mxu0 0.0
          %1163 = vmatprep.subr.mxu0 0.0
          %1164 = vmatpush1.msra.mxu0 0.0
          %1165 = vmatprep.mubr.f32.mxu0 0.0
          %1166 = vmatmul.mubr.f32.gmra.mrb[0].mxu0 %v859
          %v1167 = vpop.f32.mrb[0].mxu0
          %v1168 = vadd.f32 %v936, %v1167
          %v1169 = vpop.f32.mrb[0].mxu0
          %1170 = vmatprep.mubr.f32.mxu0 0.0
          %1171 = vmatmul.mubr.f32.gmra.mrb[0].mxu0 %v860
          %v1172 = vpop.f32.mrb[0].mxu0
          %v1173 = vadd.f32 %v936, %v1172
          %v1174 = vpop.f32.mrb[0].mxu0
          %1175 = vmatprep.mubr.f32.mxu0 0.0
          %1176 = vmatmul.mubr.f32.gmra.mrb[0].mxu0 %v861
          %v1177 = vpop.f32.mrb[0].mxu0
          %v1178 = vadd.f32 %v936, %v1177
          %v1179 = vpop.f32.mrb[0].mxu0
          %1180 = vmatprep.mubr.f32.mxu0 0.0
          %1181 = vmatmul.mubr.f32.gmra.mrb[0].mxu0 %v862
          %v1182 = vpop.f32.mrb[0].mxu0
          %v1183 = vadd.f32 %v936, %v1182
          %v1184 = vpop.f32.mrb[0].mxu0
          %1185 = vmatprep.mubr.f32.mxu0 0.0
          %1186 = vmatmul.mubr.f32.gmra.mrb[0].mxu0 %v863
          %v1187 = vpop.f32.mrb[0].mxu0
          %v1188 = vadd.f32 %v936, %v1187
          %v1189 = vpop.f32.mrb[0].mxu0
          %1190 = vmatprep.mubr.f32.mxu0 0.0
          %1191 = vmatmul.mubr.f32.gmra.mrb[0].mxu0 %v864
          %v1192 = vpop.f32.mrb[0].mxu0
          %v1193 = vadd.f32 %v936, %v1192
          %v1194 = vpop.f32.mrb[0].mxu0
          %1195 = vmatprep.mubr.f32.mxu0 0.0
          %1196 = vmatmul.mubr.f32.gmra.mrb[0].mxu0 %v865
          %v1197 = vpop.f32.mrb[0].mxu0
          %v1198 = vadd.f32 %v936, %v1197
          %v1199 = vpop.f32.mrb[0].mxu0
          %1200 = vmatprep.mubr.f32.mxu0 0.0
          %1201 = vmatmul.mubr.f32.gmra.mrb[0].mxu0 %v866
          %v1202 = vpop.f32.mrb[0].mxu0
          %v1203 = vadd.f32 %v936, %v1202
          %v1204 = vpop.f32.mrb[0].mxu0
          %1205 = vmatprep.mubr.f32.mxu0 0.0
          %1206 = vmatmul.mubr.f32.gmra.mrb[0].mxu0 %v867
          %v1207 = vpop.f32.mrb[0].mxu0
          %v1208 = vadd.f32 %v936, %v1207
          %v1209 = vpop.f32.mrb[0].mxu0
          %1210 = vmatprep.mubr.f32.mxu0 0.0
          %1211 = vmatmul.mubr.f32.gmra.mrb[0].mxu0 %v868
          %v1212 = vpop.f32.mrb[0].mxu0
          %v1213 = vadd.f32 %v936, %v1212
          %v1214 = vpop.f32.mrb[0].mxu0
          %1215 = vmatprep.mubr.f32.mxu0 0.0
          %1216 = vmatmul.mubr.f32.gmra.mrb[0].mxu0 %v869
          %v1217 = vpop.f32.mrb[0].mxu0
          %v1218 = vadd.f32 %v936, %v1217
          %v1219 = vpop.f32.mrb[0].mxu0
          %1220 = vmatprep.mubr.f32.mxu0 0.0
          %1221 = vmatmul.mubr.f32.gmra.mrb[0].mxu0 %v870
          %v1222 = vpop.f32.mrb[0].mxu0
          %v1223 = vadd.f32 %v936, %v1222
          %v1224 = vpop.f32.mrb[0].mxu0
          %1225 = vmatprep.mubr.f32.mxu0 0.0
          %1226 = vmatmul.mubr.f32.gmra.mrb[0].mxu0 %v871
          %v1227 = vpop.f32.mrb[0].mxu0
          %v1228 = vadd.f32 %v936, %v1227
          %v1229 = vpop.f32.mrb[0].mxu0
          %1230 = vmatprep.mubr.f32.mxu0 0.0
          %1231 = vmatmul.mubr.f32.gmra.mrb[0].mxu0 %v872
          %v1232 = vpop.f32.mrb[0].mxu0
          %v1233 = vadd.f32 %v936, %v1232
          %v1234 = vpop.f32.mrb[0].mxu0
          %1235 = vmatprep.mubr.f32.mxu0 0.0
          %1236 = vmatmul.mubr.f32.gmra.mrb[0].mxu0 %v873
          %v1237 = vpop.f32.mrb[0].mxu0
          %v1238 = vadd.f32 %v936, %v1237
          %v1239 = vpop.f32.mrb[0].mxu0
          %1240 = vmatprep.mubr.f32.mxu0 0.0
          %1241 = vmatmul.mubr.f32.gmra.mrb[0].mxu0 %v874
          %v1242 = vpop.f32.mrb[0].mxu0
          %v1243 = vadd.f32 %v936, %v1242
          %v1244 = vpop.f32.mrb[0].mxu0
          %1245 = vdwg.mxu0
          %1246 = vst [vmem:[#allocation2] sm:$0xff] %v1007
          %1247 = vst [vmem:[#allocation2 + $0x8] sm:$0xff] %v1013
          %1248 = vst [vmem:[#allocation2 + $0x10] sm:$0xff] %v1019
          %1249 = vst [vmem:[#allocation2 + $0x18] sm:$0xff] %v1025
          %1250 = vst [vmem:[#allocation2 + $0x20] sm:$0xff] %v1031
          %1251 = vst [vmem:[#allocation2 + $0x28] sm:$0xff] %v1037
          %1252 = vst [vmem:[#allocation2 + $0x30] sm:$0xff] %v1043
          %1253 = vst [vmem:[#allocation2 + $0x38] sm:$0xff] %v1049
          %1254 = vst [vmem:[#allocation2 + $0x40] sm:$0xff] %v1055
          %1255 = vst [vmem:[#allocation2 + $0x48] sm:$0xff] %v1061
          %1256 = vst [vmem:[#allocation2 + $0x50] sm:$0xff] %v1067
          %1257 = vst [vmem:[#allocation2 + $0x58] sm:$0xff] %v1073
          %1258 = vst [vmem:[#allocation2 + $0x60] sm:$0xff] %v1079
          %1259 = vst [vmem:[#allocation2 + $0x68] sm:$0xff] %v1085
          %1260 = vst [vmem:[#allocation2 + $0x70] sm:$0xff] %v1091
          %1261 = vst [vmem:[#allocation2 + $0x78] sm:$0xff] %v1097
          %1262 = vst [vmem:[#allocation3] sm:$0xff] %v1009
          %1263 = vst [vmem:[#allocation3 + $0x8] sm:$0xff] %v1015
          %1264 = vst [vmem:[#allocation3 + $0x10] sm:$0xff] %v1021
          %1265 = vst [vmem:[#allocation3 + $0x18] sm:$0xff] %v1027
          %1266 = vst [vmem:[#allocation3 + $0x20] sm:$0xff] %v1033
          %1267 = vst [vmem:[#allocation3 + $0x28] sm:$0xff] %v1039
          %1268 = vst [vmem:[#allocation3 + $0x30] sm:$0xff] %v1045
          %1269 = vst [vmem:[#allocation3 + $0x38] sm:$0xff] %v1051
          %1270 = vst [vmem:[#allocation3 + $0x40] sm:$0xff] %v1057
          %1271 = vst [vmem:[#allocation3 + $0x48] sm:$0xff] %v1063
          %1272 = vst [vmem:[#allocation3 + $0x50] sm:$0xff] %v1069
          %1273 = vst [vmem:[#allocation3 + $0x58] sm:$0xff] %v1075
          %1274 = vst [vmem:[#allocation3 + $0x60] sm:$0xff] %v1081
          %1275 = vst [vmem:[#allocation3 + $0x68] sm:$0xff] %v1087
          %1276 = vst [vmem:[#allocation3 + $0x70] sm:$0xff] %v1093
          %1277 = vst [vmem:[#allocation3 + $0x78] sm:$0xff] %v1099
          %1278 = vst [vmem:[#allocation4] sm:$0xff] %v1168
          %1279 = vst [vmem:[#allocation4 + $0x8] sm:$0xff] %v1173
          %1280 = vst [vmem:[#allocation4 + $0x10] sm:$0xff] %v1178
          %1281 = vst [vmem:[#allocation4 + $0x18] sm:$0xff] %v1183
          %1282 = vst [vmem:[#allocation4 + $0x20] sm:$0xff] %v1188
          %1283 = vst [vmem:[#allocation4 + $0x28] sm:$0xff] %v1193
          %1284 = vst [vmem:[#allocation4 + $0x30] sm:$0xff] %v1198
          %1285 = vst [vmem:[#allocation4 + $0x38] sm:$0xff] %v1203
          %1286 = vst [vmem:[#allocation4 + $0x40] sm:$0xff] %v1208
          %1287 = vst [vmem:[#allocation4 + $0x48] sm:$0xff] %v1213
          %1288 = vst [vmem:[#allocation4 + $0x50] sm:$0xff] %v1218
          %1289 = vst [vmem:[#allocation4 + $0x58] sm:$0xff] %v1223
          %1290 = vst [vmem:[#allocation4 + $0x60] sm:$0xff] %v1228
          %1291 = vst [vmem:[#allocation4 + $0x68] sm:$0xff] %v1233
          %1292 = vst [vmem:[#allocation4 + $0x70] sm:$0xff] %v1238
          %1293 = vst [vmem:[#allocation4 + $0x78] sm:$0xff] %v1243
        $region128: #{tpu_custom_call.1} parent=71 // pred_fallthru
          _
        %s1294 = smul.u32 %s41, 64
        %s1295 = scalar_lea.vmem %s540, %s1294 [#allocation5]
        %v1296 = vld [vmem:[%s1295] sm:$0xff]
        %v1297 = vld [vmem:[%s1295 + $0x8] sm:$0xff]
        %v1298 = vld [vmem:[%s1295 + $0x10] sm:$0xff]
        %v1299 = vld [vmem:[%s1295 + $0x18] sm:$0xff]
        %v1300 = vld [vmem:[%s1295 + $0x20] sm:$0xff]
        %v1301 = vld [vmem:[%s1295 + $0x28] sm:$0xff]
        %v1302 = vld [vmem:[%s1295 + $0x30] sm:$0xff]
        %v1303 = vld [vmem:[%s1295 + $0x38] sm:$0xff]
        %s1304 = scalar_lea.vmem [#allocation2], %s1294
        %v1305 = vld [vmem:[%s1304] sm:$0xff]
        %v1306 = vld [vmem:[%s1304 + $0x8] sm:$0xff]
        %v1307 = vld [vmem:[%s1304 + $0x10] sm:$0xff]
        %v1308 = vld [vmem:[%s1304 + $0x18] sm:$0xff]
        %v1309 = vld [vmem:[%s1304 + $0x20] sm:$0xff]
        %v1310 = vld [vmem:[%s1304 + $0x28] sm:$0xff]
        %v1311 = vld [vmem:[%s1304 + $0x30] sm:$0xff]
        %v1312 = vld [vmem:[%s1304 + $0x38] sm:$0xff]
        %v1313 = vld [vmem:[#allocation3] sm:$0xff]
        %v1314 = vld [vmem:[#allocation3 + $0x8] sm:$0xff]
        %v1315 = vld [vmem:[#allocation3 + $0x10] sm:$0xff]
        %v1316 = vld [vmem:[#allocation3 + $0x18] sm:$0xff]
        %v1317 = vld [vmem:[#allocation3 + $0x20] sm:$0xff]
        %v1318 = vld [vmem:[#allocation3 + $0x28] sm:$0xff]
        %v1319 = vld [vmem:[#allocation3 + $0x30] sm:$0xff]
        %v1320 = vld [vmem:[#allocation3 + $0x38] sm:$0xff]
        %v1321 = vld [vmem:[#allocation3 + $0x40] sm:$0xff]
        %v1322 = vld [vmem:[#allocation3 + $0x48] sm:$0xff]
        %v1323 = vld [vmem:[#allocation3 + $0x50] sm:$0xff]
        %v1324 = vld [vmem:[#allocation3 + $0x58] sm:$0xff]
        %v1325 = vld [vmem:[#allocation3 + $0x60] sm:$0xff]
        %v1326 = vld [vmem:[#allocation3 + $0x68] sm:$0xff]
        %v1327 = vld [vmem:[#allocation3 + $0x70] sm:$0xff]
        %v1328 = vld [vmem:[#allocation3 + $0x78] sm:$0xff]
        %v1329 = vld [vmem:[#allocation4] sm:$0xff]
        %v1330 = vld [vmem:[#allocation4 + $0x8] sm:$0xff]
        %v1331 = vld [vmem:[#allocation4 + $0x10] sm:$0xff]
        %v1332 = vld [vmem:[#allocation4 + $0x18] sm:$0xff]
        %v1333 = vld [vmem:[#allocation4 + $0x20] sm:$0xff]
        %v1334 = vld [vmem:[#allocation4 + $0x28] sm:$0xff]
        %v1335 = vld [vmem:[#allocation4 + $0x30] sm:$0xff]
        %v1336 = vld [vmem:[#allocation4 + $0x38] sm:$0xff]
        %v1337 = vld [vmem:[#allocation4 + $0x40] sm:$0xff]
        %v1338 = vld [vmem:[#allocation4 + $0x48] sm:$0xff]
        %v1339 = vld [vmem:[#allocation4 + $0x50] sm:$0xff]
        %v1340 = vld [vmem:[#allocation4 + $0x58] sm:$0xff]
        %v1341 = vld [vmem:[#allocation4 + $0x60] sm:$0xff]
        %v1342 = vld [vmem:[#allocation4 + $0x68] sm:$0xff]
        %v1343 = vld [vmem:[#allocation4 + $0x70] sm:$0xff]
        %v1344 = vld [vmem:[#allocation4 + $0x78] sm:$0xff]
        %v1345 = vld [vmem:[#allocation17] sm:$0xff]
        %v1346 = vld [vmem:[#allocation17 + $0x8] sm:$0xff]
        %v1347 = vld [vmem:[#allocation17 + $0x10] sm:$0xff]
        %v1348 = vld [vmem:[#allocation17 + $0x18] sm:$0xff]
        %v1349 = vld [vmem:[#allocation17 + $0x20] sm:$0xff]
        %v1350 = vld [vmem:[#allocation17 + $0x28] sm:$0xff]
        %v1351 = vld [vmem:[#allocation17 + $0x30] sm:$0xff]
        %v1352 = vld [vmem:[#allocation17 + $0x38] sm:$0xff]
        %v1353 = vld [vmem:[#allocation17 + $0x40] sm:$0xff]
        %v1354 = vld [vmem:[#allocation17 + $0x48] sm:$0xff]
        %v1355 = vld [vmem:[#allocation17 + $0x50] sm:$0xff]
        %v1356 = vld [vmem:[#allocation17 + $0x58] sm:$0xff]
        %v1357 = vld [vmem:[#allocation17 + $0x60] sm:$0xff]
        %v1358 = vld [vmem:[#allocation17 + $0x68] sm:$0xff]
        %v1359 = vld [vmem:[#allocation17 + $0x70] sm:$0xff]
        %v1360 = vld [vmem:[#allocation17 + $0x78] sm:$0xff]
        %vm1361 = vcmask 261120
        %v1363 = vsel %vm1361, %v1305, 0
        %v1366 = vsel %vm1361, %v1306, 0
        %v1369 = vsel %vm1361, %v1307, 0
        %v1372 = vsel %vm1361, %v1308, 0
        %v1375 = vsel %vm1361, %v1309, 0
        %v1378 = vsel %vm1361, %v1310, 0
        %v1381 = vsel %vm1361, %v1311, 0
        %v1384 = vsel %vm1361, %v1312, 0
        %v1387 = vsel %vm1361, %v1313, 0
        %v1390 = vsel %vm1361, %v1314, 0
        %v1393 = vsel %vm1361, %v1315, 0
        %v1396 = vsel %vm1361, %v1316, 0
        %v1399 = vsel %vm1361, %v1317, 0
        %v1402 = vsel %vm1361, %v1318, 0
        %v1405 = vsel %vm1361, %v1319, 0
        %v1408 = vsel %vm1361, %v1320, 0
        %v1411 = vsel %vm1361, %v1321, 0
        %v1414 = vsel %vm1361, %v1322, 0
        %v1417 = vsel %vm1361, %v1323, 0
        %v1420 = vsel %vm1361, %v1324, 0
        %v1423 = vsel %vm1361, %v1325, 0
        %v1426 = vsel %vm1361, %v1326, 0
        %v1429 = vsel %vm1361, %v1327, 0
        %v1432 = vsel %vm1361, %v1328, 0
        %1434 = vmatprep.subr.mxu0 0.0
        %1435 = vmatpush1.xpose.msra.mxu0 %v1387
        %1436 = vmatprep.subr.mxu0 0.0
        %1437 = vmatpush1.xpose.msra.mxu0 %v1390
        %1438 = vmatprep.subr.mxu0 0.0
        %1439 = vmatpush1.xpose.msra.mxu0 %v1393
        %1440 = vmatprep.subr.mxu0 0.0
        %1441 = vmatpush1.xpose.msra.mxu0 %v1396
        %1442 = vmatprep.subr.mxu0 0.0
        %1443 = vmatpush1.xpose.msra.mxu0 %v1399
        %1444 = vmatprep.subr.mxu0 0.0
        %1445 = vmatpush1.xpose.msra.mxu0 %v1402
        %1446 = vmatprep.subr.mxu0 0.0
        %1447 = vmatpush1.xpose.msra.mxu0 %v1405
        %1448 = vmatprep.subr.mxu0 0.0
        %1449 = vmatpush1.xpose.msra.mxu0 %v1408
        %1450 = vmatprep.subr.mxu0 0.0
        %1451 = vmatpush1.xpose.msra.mxu0 %v1411
        %1452 = vmatprep.subr.mxu0 0.0
        %1453 = vmatpush1.xpose.msra.mxu0 %v1414
        %1454 = vmatprep.subr.mxu0 0.0
        %1455 = vmatpush1.xpose.msra.mxu0 %v1417
        %1456 = vmatprep.subr.mxu0 0.0
        %1457 = vmatpush1.xpose.msra.mxu0 %v1420
        %1458 = vmatprep.subr.mxu0 0.0
        %1459 = vmatpush1.xpose.msra.mxu0 %v1423
        %1460 = vmatprep.subr.mxu0 0.0
        %1461 = vmatpush1.xpose.msra.mxu0 %v1426
        %1462 = vmatprep.subr.mxu0 0.0
        %1463 = vmatpush1.xpose.msra.mxu0 %v1429
        %1464 = vmatprep.subr.mxu0 0.0
        %1465 = vmatpush1.xpose.msra.mxu0 %v1432
        %1466 = vmatprep.subr.mxu0 0.0
        %1467 = vmatpush1.xpose.msra.mxu0 0.0
        %1468 = vmatprep.subr.mxu0 0.0
        %1469 = vmatpush1.xpose.msra.mxu0 0.0
        %1470 = vmatprep.subr.mxu0 0.0
        %1471 = vmatpush1.xpose.msra.mxu0 0.0
        %1472 = vmatprep.subr.mxu0 0.0
        %1473 = vmatpush1.xpose.msra.mxu0 0.0
        %1474 = vmatprep.subr.mxu0 0.0
        %1475 = vmatpush1.xpose.msra.mxu0 0.0
        %1476 = vmatprep.subr.mxu0 0.0
        %1477 = vmatpush1.xpose.msra.mxu0 0.0
        %1478 = vmatprep.subr.mxu0 0.0
        %1479 = vmatpush1.xpose.msra.mxu0 0.0
        %1480 = vmatprep.subr.mxu0 0.0
        %1481 = vmatpush1.xpose.msra.mxu0 0.0
        %1482 = vmatprep.subr.mxu0 0.0
        %1483 = vmatpush1.xpose.msra.mxu0 0.0
        %1484 = vmatprep.subr.mxu0 0.0
        %1485 = vmatpush1.xpose.msra.mxu0 0.0
        %1486 = vmatprep.subr.mxu0 0.0
        %1487 = vmatpush1.xpose.msra.mxu0 0.0
        %1488 = vmatprep.subr.mxu0 0.0
        %1489 = vmatpush1.xpose.msra.mxu0 0.0
        %1490 = vmatprep.subr.mxu0 0.0
        %1491 = vmatpush1.xpose.msra.mxu0 0.0
        %1492 = vmatprep.subr.mxu0 0.0
        %1493 = vmatpush1.xpose.msra.mxu0 0.0
        %1494 = vmatprep.subr.mxu0 0.0
        %1495 = vmatpush1.xpose.msra.mxu0 0.0
        %1496 = vmatprep.subr.mxu0 0.0
        %1497 = vmatpush1.xpose.msra.mxu0 0.0
        %1498 = vmatprep.mubr.f32.mxu0 0.0
        %1499 = vmatmul.mubr.f32.gmra.mrb[0].mxu0 %v1363
        %v1500 = vpop.f32.mrb[0].mxu0
        %v1501 = vadd.f32 0.0, %v1500
        %v1502 = vpop.f32.mrb[0].mxu0
        %1503 = vmatprep.mubr.f32.mxu0 0.0
        %1504 = vmatmul.mubr.f32.gmra.mrb[0].mxu0 %v1366
        %v1505 = vpop.f32.mrb[0].mxu0
        %v1506 = vadd.f32 0.0, %v1505
        %v1507 = vpop.f32.mrb[0].mxu0
        %1508 = vmatprep.mubr.f32.mxu0 0.0
        %1509 = vmatmul.mubr.f32.gmra.mrb[0].mxu0 %v1369
        %v1510 = vpop.f32.mrb[0].mxu0
        %v1511 = vadd.f32 0.0, %v1510
        %v1512 = vpop.f32.mrb[0].mxu0
        %1513 = vmatprep.mubr.f32.mxu0 0.0
        %1514 = vmatmul.mubr.f32.gmra.mrb[0].mxu0 %v1372
        %v1515 = vpop.f32.mrb[0].mxu0
        %v1516 = vadd.f32 0.0, %v1515
        %v1517 = vpop.f32.mrb[0].mxu0
        %1518 = vmatprep.mubr.f32.mxu0 0.0
        %1519 = vmatmul.mubr.f32.gmra.mrb[0].mxu0 %v1375
        %v1520 = vpop.f32.mrb[0].mxu0
        %v1521 = vadd.f32 0.0, %v1520
        %v1522 = vpop.f32.mrb[0].mxu0
        %1523 = vmatprep.mubr.f32.mxu0 0.0
        %1524 = vmatmul.mubr.f32.gmra.mrb[0].mxu0 %v1378
        %v1525 = vpop.f32.mrb[0].mxu0
        %v1526 = vadd.f32 0.0, %v1525
        %v1527 = vpop.f32.mrb[0].mxu0
        %1528 = vmatprep.mubr.f32.mxu0 0.0
        %1529 = vmatmul.mubr.f32.gmra.mrb[0].mxu0 %v1381
        %v1530 = vpop.f32.mrb[0].mxu0
        %v1531 = vadd.f32 0.0, %v1530
        %v1532 = vpop.f32.mrb[0].mxu0
        %1533 = vmatprep.mubr.f32.mxu0 0.0
        %1534 = vmatmul.mubr.f32.gmra.mrb[0].mxu0 %v1384
        %v1535 = vpop.f32.mrb[0].mxu0
        %v1536 = vadd.f32 0.0, %v1535
        %v1537 = vpop.f32.mrb[0].mxu0
        %1538 = vdwg.mxu0
        %v1539 = vmul.f32 %v1501, 0.17677669
        %v1540 = vmul.f32 %v1506, 0.17677669
        %v1541 = vmul.f32 %v1511, 0.17677669
        %v1542 = vmul.f32 %v1516, 0.17677669
        %v1543 = vmul.f32 %v1521, 0.17677669
        %v1544 = vmul.f32 %v1526, 0.17677669
        %v1545 = vmul.f32 %v1531, 0.17677669
        %v1546 = vmul.f32 %v1536, 0.17677669
        %1547 = vmax.xlane.f32.xlu0 %v1539
        %v1548 = vpop.xlane.xlu0 %1547
        %1549 = vmax.xlane.f32.xlu0 %v1540
        %v1550 = vpop.xlane.xlu0 %1549
        %1551 = vmax.xlane.f32.xlu0 %v1541
        %v1552 = vpop.xlane.xlu0 %1551
        %1553 = vmax.xlane.f32.xlu0 %v1542
        %v1554 = vpop.xlane.xlu0 %1553
        %1555 = vmax.xlane.f32.xlu0 %v1543
        %v1556 = vpop.xlane.xlu0 %1555
        %1557 = vmax.xlane.f32.xlu0 %v1544
        %v1558 = vpop.xlane.xlu0 %1557
        %1559 = vmax.xlane.f32.xlu0 %v1545
        %v1560 = vpop.xlane.xlu0 %1559
        %1561 = vmax.xlane.f32.xlu0 %v1546
        %v1562 = vpop.xlane.xlu0 %1561
        %v1563 = vsub.f32 %v1539, %v1548
        %v1564 = vsub.f32 %v1540, %v1550
        %v1565 = vsub.f32 %v1541, %v1552
        %v1566 = vsub.f32 %v1542, %v1554
        %v1567 = vsub.f32 %v1543, %v1556
        %v1568 = vsub.f32 %v1544, %v1558
        %v1569 = vsub.f32 %v1545, %v1560
        %v1570 = vsub.f32 %v1546, %v1562
        %v1571 = vmul.f32 %v1563, 1.442695
        %v1572 = vpow.pop %v1571
        %v1573 = vmul.f32 %v1564, 1.442695
        %v1574 = vpow.pop %v1573
        %v1575 = vmul.f32 %v1565, 1.442695
        %v1576 = vpow.pop %v1575
        %v1577 = vmul.f32 %v1566, 1.442695
        %v1578 = vpow.pop %v1577
        %v1579 = vmul.f32 %v1567, 1.442695
        %v1580 = vpow.pop %v1579
        %v1581 = vmul.f32 %v1568, 1.442695
        %v1582 = vpow.pop %v1581
        %v1583 = vmul.f32 %v1569, 1.442695
        %v1584 = vpow.pop %v1583
        %v1585 = vmul.f32 %v1570, 1.442695
        %v1586 = vpow.pop %v1585
        %1587 = vadd.xlane.f32.xlu0 %v1572
        %v1588 = vpop.xlane.xlu0 %1587
        %1589 = vadd.xlane.f32.xlu0 %v1574
        %v1590 = vpop.xlane.xlu0 %1589
        %1591 = vadd.xlane.f32.xlu0 %v1576
        %v1592 = vpop.xlane.xlu0 %1591
        %1593 = vadd.xlane.f32.xlu0 %v1578
        %v1594 = vpop.xlane.xlu0 %1593
        %1595 = vadd.xlane.f32.xlu0 %v1580
        %v1596 = vpop.xlane.xlu0 %1595
        %1597 = vadd.xlane.f32.xlu0 %v1582
        %v1598 = vpop.xlane.xlu0 %1597
        %1599 = vadd.xlane.f32.xlu0 %v1584
        %v1600 = vpop.xlane.xlu0 %1599
        %1601 = vadd.xlane.f32.xlu0 %v1586
        %v1602 = vpop.xlane.xlu0 %1601
        %1603 = vmatprep.subr.mxu0 0.0
        %1604 = vmatpush1.msra.mxu0 %v1329
        %1605 = vmatprep.subr.mxu0 0.0
        %1606 = vmatpush1.msra.mxu0 %v1330
        %1607 = vmatprep.subr.mxu0 0.0
        %1608 = vmatpush1.msra.mxu0 %v1331
        %1609 = vmatprep.subr.mxu0 0.0
        %1610 = vmatpush1.msra.mxu0 %v1332
        %1611 = vmatprep.subr.mxu0 0.0
        %1612 = vmatpush1.msra.mxu0 %v1333
        %1613 = vmatprep.subr.mxu0 0.0
        %1614 = vmatpush1.msra.mxu0 %v1334
        %1615 = vmatprep.subr.mxu0 0.0
        %1616 = vmatpush1.msra.mxu0 %v1335
        %1617 = vmatprep.subr.mxu0 0.0
        %1618 = vmatpush1.msra.mxu0 %v1336
        %1619 = vmatprep.subr.mxu0 0.0
        %1620 = vmatpush1.msra.mxu0 %v1337
        %1621 = vmatprep.subr.mxu0 0.0
        %1622 = vmatpush1.msra.mxu0 %v1338
        %1623 = vmatprep.subr.mxu0 0.0
        %1624 = vmatpush1.msra.mxu0 %v1339
        %1625 = vmatprep.subr.mxu0 0.0
        %1626 = vmatpush1.msra.mxu0 %v1340
        %1627 = vmatprep.subr.mxu0 0.0
        %1628 = vmatpush1.msra.mxu0 %v1341
        %1629 = vmatprep.subr.mxu0 0.0
        %1630 = vmatpush1.msra.mxu0 %v1342
        %1631 = vmatprep.subr.mxu0 0.0
        %1632 = vmatpush1.msra.mxu0 %v1343
        %1633 = vmatprep.subr.mxu0 0.0
        %1634 = vmatpush1.msra.mxu0 %v1344
        %1635 = vmatprep.subr.mxu0 0.0
        %1636 = vmatpush1.msra.mxu0 0.0
        %1637 = vmatprep.subr.mxu0 0.0
        %1638 = vmatpush1.msra.mxu0 0.0
        %1639 = vmatprep.subr.mxu0 0.0
        %1640 = vmatpush1.msra.mxu0 0.0
        %1641 = vmatprep.subr.mxu0 0.0
        %1642 = vmatpush1.msra.mxu0 0.0
        %1643 = vmatprep.subr.mxu0 0.0
        %1644 = vmatpush1.msra.mxu0 0.0
        %1645 = vmatprep.subr.mxu0 0.0
        %1646 = vmatpush1.msra.mxu0 0.0
        %1647 = vmatprep.subr.mxu0 0.0
        %1648 = vmatpush1.msra.mxu0 0.0
        %1649 = vmatprep.subr.mxu0 0.0
        %1650 = vmatpush1.msra.mxu0 0.0
        %1651 = vmatprep.subr.mxu0 0.0
        %1652 = vmatpush1.msra.mxu0 0.0
        %1653 = vmatprep.subr.mxu0 0.0
        %1654 = vmatpush1.msra.mxu0 0.0
        %1655 = vmatprep.subr.mxu0 0.0
        %1656 = vmatpush1.msra.mxu0 0.0
        %1657 = vmatprep.subr.mxu0 0.0
        %1658 = vmatpush1.msra.mxu0 0.0
        %1659 = vmatprep.subr.mxu0 0.0
        %1660 = vmatpush1.msra.mxu0 0.0
        %1661 = vmatprep.subr.mxu0 0.0
        %1662 = vmatpush1.msra.mxu0 0.0
        %1663 = vmatprep.subr.mxu0 0.0
        %1664 = vmatpush1.msra.mxu0 0.0
        %1665 = vmatprep.subr.mxu0 0.0
        %1666 = vmatpush1.msra.mxu0 0.0
        %1667 = vmatprep.mubr.f32.mxu0 0.0
        %1668 = vmatmul.mubr.f32.gmra.mrb[0].mxu0 %v1572
        %v1669 = vpop.f32.mrb[0].mxu0
        %v1670 = vadd.f32 0.0, %v1669
        %v1671 = vpop.f32.mrb[0].mxu0
        %1672 = vmatprep.mubr.f32.mxu0 0.0
        %1673 = vmatmul.mubr.f32.gmra.mrb[0].mxu0 %v1574
        %v1674 = vpop.f32.mrb[0].mxu0
        %v1675 = vadd.f32 0.0, %v1674
        %v1676 = vpop.f32.mrb[0].mxu0
        %1677 = vmatprep.mubr.f32.mxu0 0.0
        %1678 = vmatmul.mubr.f32.gmra.mrb[0].mxu0 %v1576
        %v1679 = vpop.f32.mrb[0].mxu0
        %v1680 = vadd.f32 0.0, %v1679
        %v1681 = vpop.f32.mrb[0].mxu0
        %1682 = vmatprep.mubr.f32.mxu0 0.0
        %1683 = vmatmul.mubr.f32.gmra.mrb[0].mxu0 %v1578
        %v1684 = vpop.f32.mrb[0].mxu0
        %v1685 = vadd.f32 0.0, %v1684
        %v1686 = vpop.f32.mrb[0].mxu0
        %1687 = vmatprep.mubr.f32.mxu0 0.0
        %1688 = vmatmul.mubr.f32.gmra.mrb[0].mxu0 %v1580
        %v1689 = vpop.f32.mrb[0].mxu0
        %v1690 = vadd.f32 0.0, %v1689
        %v1691 = vpop.f32.mrb[0].mxu0
        %1692 = vmatprep.mubr.f32.mxu0 0.0
        %1693 = vmatmul.mubr.f32.gmra.mrb[0].mxu0 %v1582
        %v1694 = vpop.f32.mrb[0].mxu0
        %v1695 = vadd.f32 0.0, %v1694
        %v1696 = vpop.f32.mrb[0].mxu0
        %1697 = vmatprep.mubr.f32.mxu0 0.0
        %1698 = vmatmul.mubr.f32.gmra.mrb[0].mxu0 %v1584
        %v1699 = vpop.f32.mrb[0].mxu0
        %v1700 = vadd.f32 0.0, %v1699
        %v1701 = vpop.f32.mrb[0].mxu0
        %1702 = vmatprep.mubr.f32.mxu0 0.0
        %1703 = vmatmul.mubr.f32.gmra.mrb[0].mxu0 %v1586
        %v1704 = vpop.f32.mrb[0].mxu0
        %v1705 = vadd.f32 0.0, %v1704
        %v1706 = vpop.f32.mrb[0].mxu0
        %1707 = vdwg.mxu0
        %v1708 = vrcp.pop %v1588
        %v1709 = vrcp.pop %v1590
        %v1710 = vrcp.pop %v1592
        %v1711 = vrcp.pop %v1594
        %v1712 = vrcp.pop %v1596
        %v1713 = vrcp.pop %v1598
        %v1714 = vrcp.pop %v1600
        %v1715 = vrcp.pop %v1602
        %v1716 = vmul.f32 %v1670, %v1708
        %v1717 = vmul.f32 %v1675, %v1709
        %v1718 = vmul.f32 %v1680, %v1710
        %v1719 = vmul.f32 %v1685, %v1711
        %v1720 = vmul.f32 %v1690, %v1712
        %v1721 = vmul.f32 %v1695, %v1713
        %v1722 = vmul.f32 %v1700, %v1714
        %v1723 = vmul.f32 %v1705, %v1715
        %1724 = vrot.lane.b32.xlu0 %v1305, 96
        %v1725 = vpop.permute.xlu0 %1724
        %1726 = vrot.lane.b32.xlu0 %v1306, 96
        %v1727 = vpop.permute.xlu0 %1726
        %1728 = vrot.lane.b32.xlu0 %v1307, 96
        %v1729 = vpop.permute.xlu0 %1728
        %1730 = vrot.lane.b32.xlu0 %v1308, 96
        %v1731 = vpop.permute.xlu0 %1730
        %1732 = vrot.lane.b32.xlu0 %v1309, 96
        %v1733 = vpop.permute.xlu0 %1732
        %1734 = vrot.lane.b32.xlu0 %v1310, 96
        %v1735 = vpop.permute.xlu0 %1734
        %1736 = vrot.lane.b32.xlu0 %v1311, 96
        %v1737 = vpop.permute.xlu0 %1736
        %1738 = vrot.lane.b32.xlu0 %v1312, 96
        %v1739 = vpop.permute.xlu0 %1738
        %1740 = vrot.lane.b32.xlu0 %v1313, 96
        %v1741 = vpop.permute.xlu0 %1740
        %1742 = vrot.lane.b32.xlu0 %v1314, 96
        %v1743 = vpop.permute.xlu0 %1742
        %1744 = vrot.lane.b32.xlu0 %v1315, 96
        %v1745 = vpop.permute.xlu0 %1744
        %1746 = vrot.lane.b32.xlu0 %v1316, 96
        %v1747 = vpop.permute.xlu0 %1746
        %1748 = vrot.lane.b32.xlu0 %v1317, 96
        %v1749 = vpop.permute.xlu0 %1748
        %1750 = vrot.lane.b32.xlu0 %v1318, 96
        %v1751 = vpop.permute.xlu0 %1750
        %1752 = vrot.lane.b32.xlu0 %v1319, 96
        %v1753 = vpop.permute.xlu0 %1752
        %1754 = vrot.lane.b32.xlu0 %v1320, 96
        %v1755 = vpop.permute.xlu0 %1754
        %1756 = vrot.lane.b32.xlu0 %v1321, 96
        %v1757 = vpop.permute.xlu0 %1756
        %1758 = vrot.lane.b32.xlu0 %v1322, 96
        %v1759 = vpop.permute.xlu0 %1758
        %1760 = vrot.lane.b32.xlu0 %v1323, 96
        %v1761 = vpop.permute.xlu0 %1760
        %1762 = vrot.lane.b32.xlu0 %v1324, 96
        %v1763 = vpop.permute.xlu0 %1762
        %1764 = vrot.lane.b32.xlu0 %v1325, 96
        %v1765 = vpop.permute.xlu0 %1764
        %1766 = vrot.lane.b32.xlu0 %v1326, 96
        %v1767 = vpop.permute.xlu0 %1766
        %1768 = vrot.lane.b32.xlu0 %v1327, 96
        %v1769 = vpop.permute.xlu0 %1768
        %1770 = vrot.lane.b32.xlu0 %v1328, 96
        %v1771 = vpop.permute.xlu0 %1770
        %v1772 = vsel %vm1361, %v1725, 0
        %v1774 = vsel %vm1361, %v1727, 0
        %v1776 = vsel %vm1361, %v1729, 0
        %v1778 = vsel %vm1361, %v1731, 0
        %v1780 = vsel %vm1361, %v1733, 0
        %v1782 = vsel %vm1361, %v1735, 0
        %v1784 = vsel %vm1361, %v1737, 0
        %v1786 = vsel %vm1361, %v1739, 0
        %v1788 = vsel %vm1361, %v1741, 0
        %v1790 = vsel %vm1361, %v1743, 0
        %v1792 = vsel %vm1361, %v1745, 0
        %v1794 = vsel %vm1361, %v1747, 0
        %v1796 = vsel %vm1361, %v1749, 0
        %v1798 = vsel %vm1361, %v1751, 0
        %v1800 = vsel %vm1361, %v1753, 0
        %v1802 = vsel %vm1361, %v1755, 0
        %v1804 = vsel %vm1361, %v1757, 0
        %v1806 = vsel %vm1361, %v1759, 0
        %v1808 = vsel %vm1361, %v1761, 0
        %v1810 = vsel %vm1361, %v1763, 0
        %v1812 = vsel %vm1361, %v1765, 0
        %v1814 = vsel %vm1361, %v1767, 0
        %v1816 = vsel %vm1361, %v1769, 0
        %v1818 = vsel %vm1361, %v1771, 0
        %1820 = vmatprep.subr.mxu0 0.0
        %1821 = vmatpush1.xpose.msra.mxu0 %v1788
        %1822 = vmatprep.subr.mxu0 0.0
        %1823 = vmatpush1.xpose.msra.mxu0 %v1790
        %1824 = vmatprep.subr.mxu0 0.0
        %1825 = vmatpush1.xpose.msra.mxu0 %v1792
        %1826 = vmatprep.subr.mxu0 0.0
        %1827 = vmatpush1.xpose.msra.mxu0 %v1794
        %1828 = vmatprep.subr.mxu0 0.0
        %1829 = vmatpush1.xpose.msra.mxu0 %v1796
        %1830 = vmatprep.subr.mxu0 0.0
        %1831 = vmatpush1.xpose.msra.mxu0 %v1798
        %1832 = vmatprep.subr.mxu0 0.0
        %1833 = vmatpush1.xpose.msra.mxu0 %v1800
        %1834 = vmatprep.subr.mxu0 0.0
        %1835 = vmatpush1.xpose.msra.mxu0 %v1802
        %1836 = vmatprep.subr.mxu0 0.0
        %1837 = vmatpush1.xpose.msra.mxu0 %v1804
        %1838 = vmatprep.subr.mxu0 0.0
        %1839 = vmatpush1.xpose.msra.mxu0 %v1806
        %1840 = vmatprep.subr.mxu0 0.0
        %1841 = vmatpush1.xpose.msra.mxu0 %v1808
        %1842 = vmatprep.subr.mxu0 0.0
        %1843 = vmatpush1.xpose.msra.mxu0 %v1810
        %1844 = vmatprep.subr.mxu0 0.0
        %1845 = vmatpush1.xpose.msra.mxu0 %v1812
        %1846 = vmatprep.subr.mxu0 0.0
        %1847 = vmatpush1.xpose.msra.mxu0 %v1814
        %1848 = vmatprep.subr.mxu0 0.0
        %1849 = vmatpush1.xpose.msra.mxu0 %v1816
        %1850 = vmatprep.subr.mxu0 0.0
        %1851 = vmatpush1.xpose.msra.mxu0 %v1818
        %1852 = vmatprep.subr.mxu0 0.0
        %1853 = vmatpush1.xpose.msra.mxu0 0.0
        %1854 = vmatprep.subr.mxu0 0.0
        %1855 = vmatpush1.xpose.msra.mxu0 0.0
        %1856 = vmatprep.subr.mxu0 0.0
        %1857 = vmatpush1.xpose.msra.mxu0 0.0
        %1858 = vmatprep.subr.mxu0 0.0
        %1859 = vmatpush1.xpose.msra.mxu0 0.0
        %1860 = vmatprep.subr.mxu0 0.0
        %1861 = vmatpush1.xpose.msra.mxu0 0.0
        %1862 = vmatprep.subr.mxu0 0.0
        %1863 = vmatpush1.xpose.msra.mxu0 0.0
        %1864 = vmatprep.subr.mxu0 0.0
        %1865 = vmatpush1.xpose.msra.mxu0 0.0
        %1866 = vmatprep.subr.mxu0 0.0
        %1867 = vmatpush1.xpose.msra.mxu0 0.0
        %1868 = vmatprep.subr.mxu0 0.0
        %1869 = vmatpush1.xpose.msra.mxu0 0.0
        %1870 = vmatprep.subr.mxu0 0.0
        %1871 = vmatpush1.xpose.msra.mxu0 0.0
        %1872 = vmatprep.subr.mxu0 0.0
        %1873 = vmatpush1.xpose.msra.mxu0 0.0
        %1874 = vmatprep.subr.mxu0 0.0
        %1875 = vmatpush1.xpose.msra.mxu0 0.0
        %1876 = vmatprep.subr.mxu0 0.0
        %1877 = vmatpush1.xpose.msra.mxu0 0.0
        %1878 = vmatprep.subr.mxu0 0.0
        %1879 = vmatpush1.xpose.msra.mxu0 0.0
        %1880 = vmatprep.subr.mxu0 0.0
        %1881 = vmatpush1.xpose.msra.mxu0 0.0
        %1882 = vmatprep.subr.mxu0 0.0
        %1883 = vmatpush1.xpose.msra.mxu0 0.0
        %1884 = vmatprep.mubr.f32.mxu0 0.0
        %1885 = vmatmul.mubr.f32.gmra.mrb[0].mxu0 %v1772
        %v1886 = vpop.f32.mrb[0].mxu0
        %v1887 = vadd.f32 0.0, %v1886
        %v1888 = vpop.f32.mrb[0].mxu0
        %1889 = vmatprep.mubr.f32.mxu0 0.0
        %1890 = vmatmul.mubr.f32.gmra.mrb[0].mxu0 %v1774
        %v1891 = vpop.f32.mrb[0].mxu0
        %v1892 = vadd.f32 0.0, %v1891
        %v1893 = vpop.f32.mrb[0].mxu0
        %1894 = vmatprep.mubr.f32.mxu0 0.0
        %1895 = vmatmul.mubr.f32.gmra.mrb[0].mxu0 %v1776
        %v1896 = vpop.f32.mrb[0].mxu0
        %v1897 = vadd.f32 0.0, %v1896
        %v1898 = vpop.f32.mrb[0].mxu0
        %1899 = vmatprep.mubr.f32.mxu0 0.0
        %1900 = vmatmul.mubr.f32.gmra.mrb[0].mxu0 %v1778
        %v1901 = vpop.f32.mrb[0].mxu0
        %v1902 = vadd.f32 0.0, %v1901
        %v1903 = vpop.f32.mrb[0].mxu0
        %1904 = vmatprep.mubr.f32.mxu0 0.0
        %1905 = vmatmul.mubr.f32.gmra.mrb[0].mxu0 %v1780
        %v1906 = vpop.f32.mrb[0].mxu0
        %v1907 = vadd.f32 0.0, %v1906
        %v1908 = vpop.f32.mrb[0].mxu0
        %1909 = vmatprep.mubr.f32.mxu0 0.0
        %1910 = vmatmul.mubr.f32.gmra.mrb[0].mxu0 %v1782
        %v1911 = vpop.f32.mrb[0].mxu0
        %v1912 = vadd.f32 0.0, %v1911
        %v1913 = vpop.f32.mrb[0].mxu0
        %1914 = vmatprep.mubr.f32.mxu0 0.0
        %1915 = vmatmul.mubr.f32.gmra.mrb[0].mxu0 %v1784
        %v1916 = vpop.f32.mrb[0].mxu0
        %v1917 = vadd.f32 0.0, %v1916
        %v1918 = vpop.f32.mrb[0].mxu0
        %1919 = vmatprep.mubr.f32.mxu0 0.0
        %1920 = vmatmul.mubr.f32.gmra.mrb[0].mxu0 %v1786
        %v1921 = vpop.f32.mrb[0].mxu0
        %v1922 = vadd.f32 0.0, %v1921
        %v1923 = vpop.f32.mrb[0].mxu0
        %1924 = vdwg.mxu0
        %v1925 = vmul.f32 %v1887, 0.17677669
        %v1926 = vmul.f32 %v1892, 0.17677669
        %v1927 = vmul.f32 %v1897, 0.17677669
        %v1928 = vmul.f32 %v1902, 0.17677669
        %v1929 = vmul.f32 %v1907, 0.17677669
        %v1930 = vmul.f32 %v1912, 0.17677669
        %v1931 = vmul.f32 %v1917, 0.17677669
        %v1932 = vmul.f32 %v1922, 0.17677669
        %1933 = vmax.xlane.f32.xlu0 %v1925
        %v1934 = vpop.xlane.xlu0 %1933
        %1935 = vmax.xlane.f32.xlu0 %v1926
        %v1936 = vpop.xlane.xlu0 %1935
        %1937 = vmax.xlane.f32.xlu0 %v1927
        %v1938 = vpop.xlane.xlu0 %1937
        %1939 = vmax.xlane.f32.xlu0 %v1928
        %v1940 = vpop.xlane.xlu0 %1939
        %1941 = vmax.xlane.f32.xlu0 %v1929
        %v1942 = vpop.xlane.xlu0 %1941
        %1943 = vmax.xlane.f32.xlu0 %v1930
        %v1944 = vpop.xlane.xlu0 %1943
        %1945 = vmax.xlane.f32.xlu0 %v1931
        %v1946 = vpop.xlane.xlu0 %1945
        %1947 = vmax.xlane.f32.xlu0 %v1932
        %v1948 = vpop.xlane.xlu0 %1947
        %v1949 = vsub.f32 %v1925, %v1934
        %v1950 = vsub.f32 %v1926, %v1936
        %v1951 = vsub.f32 %v1927, %v1938
        %v1952 = vsub.f32 %v1928, %v1940
        %v1953 = vsub.f32 %v1929, %v1942
        %v1954 = vsub.f32 %v1930, %v1944
        %v1955 = vsub.f32 %v1931, %v1946
        %v1956 = vsub.f32 %v1932, %v1948
        %v1957 = vmul.f32 %v1949, 1.442695
        %v1958 = vpow.pop %v1957
        %v1959 = vmul.f32 %v1950, 1.442695
        %v1960 = vpow.pop %v1959
        %v1961 = vmul.f32 %v1951, 1.442695
        %v1962 = vpow.pop %v1961
        %v1963 = vmul.f32 %v1952, 1.442695
        %v1964 = vpow.pop %v1963
        %v1965 = vmul.f32 %v1953, 1.442695
        %v1966 = vpow.pop %v1965
        %v1967 = vmul.f32 %v1954, 1.442695
        %v1968 = vpow.pop %v1967
        %v1969 = vmul.f32 %v1955, 1.442695
        %v1970 = vpow.pop %v1969
        %v1971 = vmul.f32 %v1956, 1.442695
        %v1972 = vpow.pop %v1971
        %1973 = vadd.xlane.f32.xlu0 %v1958
        %v1974 = vpop.xlane.xlu0 %1973
        %1975 = vadd.xlane.f32.xlu0 %v1960
        %v1976 = vpop.xlane.xlu0 %1975
        %1977 = vadd.xlane.f32.xlu0 %v1962
        %v1978 = vpop.xlane.xlu0 %1977
        %1979 = vadd.xlane.f32.xlu0 %v1964
        %v1980 = vpop.xlane.xlu0 %1979
        %1981 = vadd.xlane.f32.xlu0 %v1966
        %v1982 = vpop.xlane.xlu0 %1981
        %1983 = vadd.xlane.f32.xlu0 %v1968
        %v1984 = vpop.xlane.xlu0 %1983
        %1985 = vadd.xlane.f32.xlu0 %v1970
        %v1986 = vpop.xlane.xlu0 %1985
        %1987 = vadd.xlane.f32.xlu0 %v1972
        %v1988 = vpop.xlane.xlu0 %1987
        %2005 = vrot.lane.b32.xlu0 %v1329, 96
        %v2006 = vpop.permute.xlu0 %2005
        %2007 = vrot.lane.b32.xlu0 %v1330, 96
        %v2008 = vpop.permute.xlu0 %2007
        %2009 = vrot.lane.b32.xlu0 %v1331, 96
        %v2010 = vpop.permute.xlu0 %2009
        %2011 = vrot.lane.b32.xlu0 %v1332, 96
        %v2012 = vpop.permute.xlu0 %2011
        %2013 = vrot.lane.b32.xlu0 %v1333, 96
        %v2014 = vpop.permute.xlu0 %2013
        %2015 = vrot.lane.b32.xlu0 %v1334, 96
        %v2016 = vpop.permute.xlu0 %2015
        %2017 = vrot.lane.b32.xlu0 %v1335, 96
        %v2018 = vpop.permute.xlu0 %2017
        %2019 = vrot.lane.b32.xlu0 %v1336, 96
        %v2020 = vpop.permute.xlu0 %2019
        %2021 = vrot.lane.b32.xlu0 %v1337, 96
        %v2022 = vpop.permute.xlu0 %2021
        %2023 = vrot.lane.b32.xlu0 %v1338, 96
        %v2024 = vpop.permute.xlu0 %2023
        %2025 = vrot.lane.b32.xlu0 %v1339, 96
        %v2026 = vpop.permute.xlu0 %2025
        %2027 = vrot.lane.b32.xlu0 %v1340, 96
        %v2028 = vpop.permute.xlu0 %2027
        %2029 = vrot.lane.b32.xlu0 %v1341, 96
        %v2030 = vpop.permute.xlu0 %2029
        %2031 = vrot.lane.b32.xlu0 %v1342, 96
        %v2032 = vpop.permute.xlu0 %2031
        %2033 = vrot.lane.b32.xlu0 %v1343, 96
        %v2034 = vpop.permute.xlu0 %2033
        %2035 = vrot.lane.b32.xlu0 %v1344, 96
        %v2036 = vpop.permute.xlu0 %2035
        %2053 = vmatprep.subr.mxu0 0.0
        %2054 = vmatpush1.msra.mxu0 %v2006
        %2055 = vmatprep.subr.mxu0 0.0
        %2056 = vmatpush1.msra.mxu0 %v2008
        %2057 = vmatprep.subr.mxu0 0.0
        %2058 = vmatpush1.msra.mxu0 %v2010
        %2059 = vmatprep.subr.mxu0 0.0
        %2060 = vmatpush1.msra.mxu0 %v2012
        %2061 = vmatprep.subr.mxu0 0.0
        %2062 = vmatpush1.msra.mxu0 %v2014
        %2063 = vmatprep.subr.mxu0 0.0
        %2064 = vmatpush1.msra.mxu0 %v2016
        %2065 = vmatprep.subr.mxu0 0.0
        %2066 = vmatpush1.msra.mxu0 %v2018
        %2067 = vmatprep.subr.mxu0 0.0
        %2068 = vmatpush1.msra.mxu0 %v2020
        %2069 = vmatprep.subr.mxu0 0.0
        %2070 = vmatpush1.msra.mxu0 %v2022
        %2071 = vmatprep.subr.mxu0 0.0
        %2072 = vmatpush1.msra.mxu0 %v2024
        %2073 = vmatprep.subr.mxu0 0.0
        %2074 = vmatpush1.msra.mxu0 %v2026
        %2075 = vmatprep.subr.mxu0 0.0
        %2076 = vmatpush1.msra.mxu0 %v2028
        %2077 = vmatprep.subr.mxu0 0.0
        %2078 = vmatpush1.msra.mxu0 %v2030
        %2079 = vmatprep.subr.mxu0 0.0
        %2080 = vmatpush1.msra.mxu0 %v2032
        %2081 = vmatprep.subr.mxu0 0.0
        %2082 = vmatpush1.msra.mxu0 %v2034
        %2083 = vmatprep.subr.mxu0 0.0
        %2084 = vmatpush1.msra.mxu0 %v2036
        %2085 = vmatprep.subr.mxu0 0.0
        %2086 = vmatpush1.msra.mxu0 0.0
        %2087 = vmatprep.subr.mxu0 0.0
        %2088 = vmatpush1.msra.mxu0 0.0
        %2089 = vmatprep.subr.mxu0 0.0
        %2090 = vmatpush1.msra.mxu0 0.0
        %2091 = vmatprep.subr.mxu0 0.0
        %2092 = vmatpush1.msra.mxu0 0.0
        %2093 = vmatprep.subr.mxu0 0.0
        %2094 = vmatpush1.msra.mxu0 0.0
        %2095 = vmatprep.subr.mxu0 0.0
        %2096 = vmatpush1.msra.mxu0 0.0
        %2097 = vmatprep.subr.mxu0 0.0
        %2098 = vmatpush1.msra.mxu0 0.0
        %2099 = vmatprep.subr.mxu0 0.0
        %2100 = vmatpush1.msra.mxu0 0.0
        %2101 = vmatprep.subr.mxu0 0.0
        %2102 = vmatpush1.msra.mxu0 0.0
        %2103 = vmatprep.subr.mxu0 0.0
        %2104 = vmatpush1.msra.mxu0 0.0
        %2105 = vmatprep.subr.mxu0 0.0
        %2106 = vmatpush1.msra.mxu0 0.0
        %2107 = vmatprep.subr.mxu0 0.0
        %2108 = vmatpush1.msra.mxu0 0.0
        %2109 = vmatprep.subr.mxu0 0.0
        %2110 = vmatpush1.msra.mxu0 0.0
        %2111 = vmatprep.subr.mxu0 0.0
        %2112 = vmatpush1.msra.mxu0 0.0
        %2113 = vmatprep.subr.mxu0 0.0
        %2114 = vmatpush1.msra.mxu0 0.0
        %2115 = vmatprep.subr.mxu0 0.0
        %2116 = vmatpush1.msra.mxu0 0.0
        %2117 = vmatprep.mubr.f32.mxu0 0.0
        %2118 = vmatmul.mubr.f32.gmra.mrb[0].mxu0 %v1958
        %v2119 = vpop.f32.mrb[0].mxu0
        %v2120 = vadd.f32 0.0, %v2119
        %v2121 = vpop.f32.mrb[0].mxu0
        %2122 = vmatprep.mubr.f32.mxu0 0.0
        %2123 = vmatmul.mubr.f32.gmra.mrb[0].mxu0 %v1960
        %v2124 = vpop.f32.mrb[0].mxu0
        %v2125 = vadd.f32 0.0, %v2124
        %v2126 = vpop.f32.mrb[0].mxu0
        %2127 = vmatprep.mubr.f32.mxu0 0.0
        %2128 = vmatmul.mubr.f32.gmra.mrb[0].mxu0 %v1962
        %v2129 = vpop.f32.mrb[0].mxu0
        %v2130 = vadd.f32 0.0, %v2129
        %v2131 = vpop.f32.mrb[0].mxu0
        %2132 = vmatprep.mubr.f32.mxu0 0.0
        %2133 = vmatmul.mubr.f32.gmra.mrb[0].mxu0 %v1964
        %v2134 = vpop.f32.mrb[0].mxu0
        %v2135 = vadd.f32 0.0, %v2134
        %v2136 = vpop.f32.mrb[0].mxu0
        %2137 = vmatprep.mubr.f32.mxu0 0.0
        %2138 = vmatmul.mubr.f32.gmra.mrb[0].mxu0 %v1966
        %v2139 = vpop.f32.mrb[0].mxu0
        %v2140 = vadd.f32 0.0, %v2139
        %v2141 = vpop.f32.mrb[0].mxu0
        %2142 = vmatprep.mubr.f32.mxu0 0.0
        %2143 = vmatmul.mubr.f32.gmra.mrb[0].mxu0 %v1968
        %v2144 = vpop.f32.mrb[0].mxu0
        %v2145 = vadd.f32 0.0, %v2144
        %v2146 = vpop.f32.mrb[0].mxu0
        %2147 = vmatprep.mubr.f32.mxu0 0.0
        %2148 = vmatmul.mubr.f32.gmra.mrb[0].mxu0 %v1970
        %v2149 = vpop.f32.mrb[0].mxu0
        %v2150 = vadd.f32 0.0, %v2149
        %v2151 = vpop.f32.mrb[0].mxu0
        %2152 = vmatprep.mubr.f32.mxu0 0.0
        %2153 = vmatmul.mubr.f32.gmra.mrb[0].mxu0 %v1972
        %v2154 = vpop.f32.mrb[0].mxu0
        %v2155 = vadd.f32 0.0, %v2154
        %v2156 = vpop.f32.mrb[0].mxu0
        %2157 = vdwg.mxu0
        %v2158 = vrcp.pop %v1974
        %v2159 = vrcp.pop %v1976
        %v2160 = vrcp.pop %v1978
        %v2161 = vrcp.pop %v1980
        %v2162 = vrcp.pop %v1982
        %v2163 = vrcp.pop %v1984
        %v2164 = vrcp.pop %v1986
        %v2165 = vrcp.pop %v1988
        %v2166 = vmul.f32 %v2120, %v2158
        %v2167 = vmul.f32 %v2125, %v2159
        %v2168 = vmul.f32 %v2130, %v2160
        %v2169 = vmul.f32 %v2135, %v2161
        %v2170 = vmul.f32 %v2140, %v2162
        %v2171 = vmul.f32 %v2145, %v2163
        %v2172 = vmul.f32 %v2150, %v2164
        %v2173 = vmul.f32 %v2155, %v2165
        %v2175 = vsel %vm1361, %v2166, 0
        %v2178 = vsel %vm1361, %v2167, 0
        %v2181 = vsel %vm1361, %v2168, 0
        %v2184 = vsel %vm1361, %v2169, 0
        %v2187 = vsel %vm1361, %v2170, 0
        %v2190 = vsel %vm1361, %v2171, 0
        %v2193 = vsel %vm1361, %v2172, 0
        %v2196 = vsel %vm1361, %v2173, 0
        %2198 = vmatprep.subr.mxu0 0.0
        %2199 = vmatpush1.msra.mxu0 %v1349
        %2200 = vmatprep.subr.mxu0 0.0
        %2201 = vmatpush1.msra.mxu0 %v1350
        %2202 = vmatprep.subr.mxu0 0.0
        %2203 = vmatpush1.msra.mxu0 %v1351
        %2204 = vmatprep.subr.mxu0 0.0
        %2205 = vmatpush1.msra.mxu0 %v1352
        %2206 = vmatprep.subr.mxu0 0.0
        %2207 = vmatpush1.msra.mxu0 0.0
        %2208 = vmatprep.subr.mxu0 0.0
        %2209 = vmatpush1.msra.mxu0 0.0
        %2210 = vmatprep.subr.mxu0 0.0
        %2211 = vmatpush1.msra.mxu0 0.0
        %2212 = vmatprep.subr.mxu0 0.0
        %2213 = vmatpush1.msra.mxu0 0.0
        %2214 = vmatprep.subr.mxu0 0.0
        %2215 = vmatpush1.msra.mxu0 0.0
        %2216 = vmatprep.subr.mxu0 0.0
        %2217 = vmatpush1.msra.mxu0 0.0
        %2218 = vmatprep.subr.mxu0 0.0
        %2219 = vmatpush1.msra.mxu0 0.0
        %2220 = vmatprep.subr.mxu0 0.0
        %2221 = vmatpush1.msra.mxu0 0.0
        %2222 = vmatprep.subr.mxu0 0.0
        %2223 = vmatpush1.msra.mxu0 0.0
        %2224 = vmatprep.subr.mxu0 0.0
        %2225 = vmatpush1.msra.mxu0 0.0
        %2226 = vmatprep.subr.mxu0 0.0
        %2227 = vmatpush1.msra.mxu0 0.0
        %2228 = vmatprep.subr.mxu0 0.0
        %2229 = vmatpush1.msra.mxu0 0.0
        %2230 = vmatprep.subr.mxu0 0.0
        %2231 = vmatpush1.msra.mxu0 0.0
        %2232 = vmatprep.subr.mxu0 0.0
        %2233 = vmatpush1.msra.mxu0 0.0
        %2234 = vmatprep.subr.mxu0 0.0
        %2235 = vmatpush1.msra.mxu0 0.0
        %2236 = vmatprep.subr.mxu0 0.0
        %2237 = vmatpush1.msra.mxu0 0.0
        %2238 = vmatprep.subr.mxu0 0.0
        %2239 = vmatpush1.msra.mxu0 0.0
        %2240 = vmatprep.subr.mxu0 0.0
        %2241 = vmatpush1.msra.mxu0 0.0
        %2242 = vmatprep.subr.mxu0 0.0
        %2243 = vmatpush1.msra.mxu0 0.0
        %2244 = vmatprep.subr.mxu0 0.0
        %2245 = vmatpush1.msra.mxu0 0.0
        %2246 = vmatprep.subr.mxu0 0.0
        %2247 = vmatpush1.msra.mxu0 0.0
        %2248 = vmatprep.subr.mxu0 0.0
        %2249 = vmatpush1.msra.mxu0 0.0
        %2250 = vmatprep.subr.mxu0 0.0
        %2251 = vmatpush1.msra.mxu0 0.0
        %2252 = vmatprep.subr.mxu0 0.0
        %2253 = vmatpush1.msra.mxu0 0.0
        %2254 = vmatprep.subr.mxu0 0.0
        %2255 = vmatpush1.msra.mxu0 0.0
        %2256 = vmatprep.subr.mxu0 0.0
        %2257 = vmatpush1.msra.mxu0 0.0
        %2258 = vmatprep.subr.mxu0 0.0
        %2259 = vmatpush1.msra.mxu0 0.0
        %2260 = vmatprep.subr.mxu0 0.0
        %2261 = vmatpush1.msra.mxu0 0.0
        %2262 = vmatprep.mubr.f32.mxu0 0.0
        %2263 = vmatmul.mubr.f32.gmra.mrb[0].mxu0 %v2175
        %v2264 = vpop.f32.mrb[0].mxu0
        %v2265 = vadd.f32 0.0, %v2264
        %v2266 = vpop.f32.mrb[0].mxu0
        %2267 = vmatprep.mubr.f32.mxu0 0.0
        %2268 = vmatmul.mubr.f32.gmra.mrb[0].mxu0 %v2178
        %v2269 = vpop.f32.mrb[0].mxu0
        %v2270 = vadd.f32 0.0, %v2269
        %v2271 = vpop.f32.mrb[0].mxu0
        %2272 = vmatprep.mubr.f32.mxu0 0.0
        %2273 = vmatmul.mubr.f32.gmra.mrb[0].mxu0 %v2181
        %v2274 = vpop.f32.mrb[0].mxu0
        %v2275 = vadd.f32 0.0, %v2274
        %v2276 = vpop.f32.mrb[0].mxu0
        %2277 = vmatprep.mubr.f32.mxu0 0.0
        %2278 = vmatmul.mubr.f32.gmra.mrb[0].mxu0 %v2184
        %v2279 = vpop.f32.mrb[0].mxu0
        %v2280 = vadd.f32 0.0, %v2279
        %v2281 = vpop.f32.mrb[0].mxu0
        %2282 = vmatprep.mubr.f32.mxu0 0.0
        %2283 = vmatmul.mubr.f32.gmra.mrb[0].mxu0 %v2187
        %v2284 = vpop.f32.mrb[0].mxu0
        %v2285 = vadd.f32 0.0, %v2284
        %v2286 = vpop.f32.mrb[0].mxu0
        %2287 = vmatprep.mubr.f32.mxu0 0.0
        %2288 = vmatmul.mubr.f32.gmra.mrb[0].mxu0 %v2190
        %v2289 = vpop.f32.mrb[0].mxu0
        %v2290 = vadd.f32 0.0, %v2289
        %v2291 = vpop.f32.mrb[0].mxu0
        %2292 = vmatprep.mubr.f32.mxu0 0.0
        %2293 = vmatmul.mubr.f32.gmra.mrb[0].mxu0 %v2193
        %v2294 = vpop.f32.mrb[0].mxu0
        %v2295 = vadd.f32 0.0, %v2294
        %v2296 = vpop.f32.mrb[0].mxu0
        %2297 = vmatprep.mubr.f32.mxu0 0.0
        %2298 = vmatmul.mubr.f32.gmra.mrb[0].mxu0 %v2196
        %v2299 = vpop.f32.mrb[0].mxu0
        %v2300 = vadd.f32 0.0, %v2299
        %v2301 = vpop.f32.mrb[0].mxu0
        %2302 = vdwg.mxu0
        %v2304 = vsel %vm1361, %v1716, 0
        %v2307 = vsel %vm1361, %v1717, 0
        %v2310 = vsel %vm1361, %v1718, 0
        %v2313 = vsel %vm1361, %v1719, 0
        %v2316 = vsel %vm1361, %v1720, 0
        %v2319 = vsel %vm1361, %v1721, 0
        %v2322 = vsel %vm1361, %v1722, 0
        %v2325 = vsel %vm1361, %v1723, 0
        %2327 = vmatprep.subr.mxu0 0.0
        %2328 = vmatpush1.msra.mxu0 %v1345
        %2329 = vmatprep.subr.mxu0 0.0
        %2330 = vmatpush1.msra.mxu0 %v1346
        %2331 = vmatprep.subr.mxu0 0.0
        %2332 = vmatpush1.msra.mxu0 %v1347
        %2333 = vmatprep.subr.mxu0 0.0
        %2334 = vmatpush1.msra.mxu0 %v1348
        %2335 = vmatprep.subr.mxu0 0.0
        %2336 = vmatpush1.msra.mxu0 0.0
        %2337 = vmatprep.subr.mxu0 0.0
        %2338 = vmatpush1.msra.mxu0 0.0
        %2339 = vmatprep.subr.mxu0 0.0
        %2340 = vmatpush1.msra.mxu0 0.0
        %2341 = vmatprep.subr.mxu0 0.0
        %2342 = vmatpush1.msra.mxu0 0.0
        %2343 = vmatprep.subr.mxu0 0.0
        %2344 = vmatpush1.msra.mxu0 0.0
        %2345 = vmatprep.subr.mxu0 0.0
        %2346 = vmatpush1.msra.mxu0 0.0
        %2347 = vmatprep.subr.mxu0 0.0
        %2348 = vmatpush1.msra.mxu0 0.0
        %2349 = vmatprep.subr.mxu0 0.0
        %2350 = vmatpush1.msra.mxu0 0.0
        %2351 = vmatprep.subr.mxu0 0.0
        %2352 = vmatpush1.msra.mxu0 0.0
        %2353 = vmatprep.subr.mxu0 0.0
        %2354 = vmatpush1.msra.mxu0 0.0
        %2355 = vmatprep.subr.mxu0 0.0
        %2356 = vmatpush1.msra.mxu0 0.0
        %2357 = vmatprep.subr.mxu0 0.0
        %2358 = vmatpush1.msra.mxu0 0.0
        %2359 = vmatprep.subr.mxu0 0.0
        %2360 = vmatpush1.msra.mxu0 0.0
        %2361 = vmatprep.subr.mxu0 0.0
        %2362 = vmatpush1.msra.mxu0 0.0
        %2363 = vmatprep.subr.mxu0 0.0
        %2364 = vmatpush1.msra.mxu0 0.0
        %2365 = vmatprep.subr.mxu0 0.0
        %2366 = vmatpush1.msra.mxu0 0.0
        %2367 = vmatprep.subr.mxu0 0.0
        %2368 = vmatpush1.msra.mxu0 0.0
        %2369 = vmatprep.subr.mxu0 0.0
        %2370 = vmatpush1.msra.mxu0 0.0
        %2371 = vmatprep.subr.mxu0 0.0
        %2372 = vmatpush1.msra.mxu0 0.0
        %2373 = vmatprep.subr.mxu0 0.0
        %2374 = vmatpush1.msra.mxu0 0.0
        %2375 = vmatprep.subr.mxu0 0.0
        %2376 = vmatpush1.msra.mxu0 0.0
        %2377 = vmatprep.subr.mxu0 0.0
        %2378 = vmatpush1.msra.mxu0 0.0
        %2379 = vmatprep.subr.mxu0 0.0
        %2380 = vmatpush1.msra.mxu0 0.0
        %2381 = vmatprep.subr.mxu0 0.0
        %2382 = vmatpush1.msra.mxu0 0.0
        %2383 = vmatprep.subr.mxu0 0.0
        %2384 = vmatpush1.msra.mxu0 0.0
        %2385 = vmatprep.subr.mxu0 0.0
        %2386 = vmatpush1.msra.mxu0 0.0
        %2387 = vmatprep.subr.mxu0 0.0
        %2388 = vmatpush1.msra.mxu0 0.0
        %2389 = vmatprep.subr.mxu0 0.0
        %2390 = vmatpush1.msra.mxu0 0.0
        %2391 = vmatprep.mubr.f32.mxu0 0.0
        %2392 = vmatmul.mubr.f32.gmra.mrb[0].mxu0 %v2304
        %v2393 = vpop.f32.mrb[0].mxu0
        %v2394 = vadd.f32 %v2265, %v2393
        %v2395 = vpop.f32.mrb[0].mxu0
        %2396 = vmatprep.mubr.f32.mxu0 0.0
        %2397 = vmatmul.mubr.f32.gmra.mrb[0].mxu0 %v2307
        %v2398 = vpop.f32.mrb[0].mxu0
        %v2399 = vadd.f32 %v2270, %v2398
        %v2400 = vpop.f32.mrb[0].mxu0
        %2401 = vmatprep.mubr.f32.mxu0 0.0
        %2402 = vmatmul.mubr.f32.gmra.mrb[0].mxu0 %v2310
        %v2403 = vpop.f32.mrb[0].mxu0
        %v2404 = vadd.f32 %v2275, %v2403
        %v2405 = vpop.f32.mrb[0].mxu0
        %2406 = vmatprep.mubr.f32.mxu0 0.0
        %2407 = vmatmul.mubr.f32.gmra.mrb[0].mxu0 %v2313
        %v2408 = vpop.f32.mrb[0].mxu0
        %v2409 = vadd.f32 %v2280, %v2408
        %v2410 = vpop.f32.mrb[0].mxu0
        %2411 = vmatprep.mubr.f32.mxu0 0.0
        %2412 = vmatmul.mubr.f32.gmra.mrb[0].mxu0 %v2316
        %v2413 = vpop.f32.mrb[0].mxu0
        %v2414 = vadd.f32 %v2285, %v2413
        %v2415 = vpop.f32.mrb[0].mxu0
        %2416 = vmatprep.mubr.f32.mxu0 0.0
        %2417 = vmatmul.mubr.f32.gmra.mrb[0].mxu0 %v2319
        %v2418 = vpop.f32.mrb[0].mxu0
        %v2419 = vadd.f32 %v2290, %v2418
        %v2420 = vpop.f32.mrb[0].mxu0
        %2421 = vmatprep.mubr.f32.mxu0 0.0
        %2422 = vmatmul.mubr.f32.gmra.mrb[0].mxu0 %v2322
        %v2423 = vpop.f32.mrb[0].mxu0
        %v2424 = vadd.f32 %v2295, %v2423
        %v2425 = vpop.f32.mrb[0].mxu0
        %2426 = vmatprep.mubr.f32.mxu0 0.0
        %2427 = vmatmul.mubr.f32.gmra.mrb[0].mxu0 %v2325
        %v2428 = vpop.f32.mrb[0].mxu0
        %v2429 = vadd.f32 %v2300, %v2428
        %v2430 = vpop.f32.mrb[0].mxu0
        %2431 = vdwg.mxu0
        %2432 = vrot.lane.b32.xlu0 %v1305, 64
        %v2433 = vpop.permute.xlu0 %2432
        %2434 = vrot.lane.b32.xlu0 %v1306, 64
        %v2435 = vpop.permute.xlu0 %2434
        %2436 = vrot.lane.b32.xlu0 %v1307, 64
        %v2437 = vpop.permute.xlu0 %2436
        %2438 = vrot.lane.b32.xlu0 %v1308, 64
        %v2439 = vpop.permute.xlu0 %2438
        %2440 = vrot.lane.b32.xlu0 %v1309, 64
        %v2441 = vpop.permute.xlu0 %2440
        %2442 = vrot.lane.b32.xlu0 %v1310, 64
        %v2443 = vpop.permute.xlu0 %2442
        %2444 = vrot.lane.b32.xlu0 %v1311, 64
        %v2445 = vpop.permute.xlu0 %2444
        %2446 = vrot.lane.b32.xlu0 %v1312, 64
        %v2447 = vpop.permute.xlu0 %2446
        %2448 = vrot.lane.b32.xlu0 %v1313, 64
        %v2449 = vpop.permute.xlu0 %2448
        %2450 = vrot.lane.b32.xlu0 %v1314, 64
        %v2451 = vpop.permute.xlu0 %2450
        %2452 = vrot.lane.b32.xlu0 %v1315, 64
        %v2453 = vpop.permute.xlu0 %2452
        %2454 = vrot.lane.b32.xlu0 %v1316, 64
        %v2455 = vpop.permute.xlu0 %2454
        %2456 = vrot.lane.b32.xlu0 %v1317, 64
        %v2457 = vpop.permute.xlu0 %2456
        %2458 = vrot.lane.b32.xlu0 %v1318, 64
        %v2459 = vpop.permute.xlu0 %2458
        %2460 = vrot.lane.b32.xlu0 %v1319, 64
        %v2461 = vpop.permute.xlu0 %2460
        %2462 = vrot.lane.b32.xlu0 %v1320, 64
        %v2463 = vpop.permute.xlu0 %2462
        %2464 = vrot.lane.b32.xlu0 %v1321, 64
        %v2465 = vpop.permute.xlu0 %2464
        %2466 = vrot.lane.b32.xlu0 %v1322, 64
        %v2467 = vpop.permute.xlu0 %2466
        %2468 = vrot.lane.b32.xlu0 %v1323, 64
        %v2469 = vpop.permute.xlu0 %2468
        %2470 = vrot.lane.b32.xlu0 %v1324, 64
        %v2471 = vpop.permute.xlu0 %2470
        %2472 = vrot.lane.b32.xlu0 %v1325, 64
        %v2473 = vpop.permute.xlu0 %2472
        %2474 = vrot.lane.b32.xlu0 %v1326, 64
        %v2475 = vpop.permute.xlu0 %2474
        %2476 = vrot.lane.b32.xlu0 %v1327, 64
        %v2477 = vpop.permute.xlu0 %2476
        %2478 = vrot.lane.b32.xlu0 %v1328, 64
        %v2479 = vpop.permute.xlu0 %2478
        %v2480 = vsel %vm1361, %v2433, 0
        %v2482 = vsel %vm1361, %v2435, 0
        %v2484 = vsel %vm1361, %v2437, 0
        %v2486 = vsel %vm1361, %v2439, 0
        %v2488 = vsel %vm1361, %v2441, 0
        %v2490 = vsel %vm1361, %v2443, 0
        %v2492 = vsel %vm1361, %v2445, 0
        %v2494 = vsel %vm1361, %v2447, 0
        %v2496 = vsel %vm1361, %v2449, 0
        %v2498 = vsel %vm1361, %v2451, 0
        %v2500 = vsel %vm1361, %v2453, 0
        %v2502 = vsel %vm1361, %v2455, 0
        %v2504 = vsel %vm1361, %v2457, 0
        %v2506 = vsel %vm1361, %v2459, 0
        %v2508 = vsel %vm1361, %v2461, 0
        %v2510 = vsel %vm1361, %v2463, 0
        %v2512 = vsel %vm1361, %v2465, 0
        %v2514 = vsel %vm1361, %v2467, 0
        %v2516 = vsel %vm1361, %v2469, 0
        %v2518 = vsel %vm1361, %v2471, 0
        %v2520 = vsel %vm1361, %v2473, 0
        %v2522 = vsel %vm1361, %v2475, 0
        %v2524 = vsel %vm1361, %v2477, 0
        %v2526 = vsel %vm1361, %v2479, 0
        %2528 = vmatprep.subr.mxu0 0.0
        %2529 = vmatpush1.xpose.msra.mxu0 %v2496
        %2530 = vmatprep.subr.mxu0 0.0
        %2531 = vmatpush1.xpose.msra.mxu0 %v2498
        %2532 = vmatprep.subr.mxu0 0.0
        %2533 = vmatpush1.xpose.msra.mxu0 %v2500
        %2534 = vmatprep.subr.mxu0 0.0
        %2535 = vmatpush1.xpose.msra.mxu0 %v2502
        %2536 = vmatprep.subr.mxu0 0.0
        %2537 = vmatpush1.xpose.msra.mxu0 %v2504
        %2538 = vmatprep.subr.mxu0 0.0
        %2539 = vmatpush1.xpose.msra.mxu0 %v2506
        %2540 = vmatprep.subr.mxu0 0.0
        %2541 = vmatpush1.xpose.msra.mxu0 %v2508
        %2542 = vmatprep.subr.mxu0 0.0
        %2543 = vmatpush1.xpose.msra.mxu0 %v2510
        %2544 = vmatprep.subr.mxu0 0.0
        %2545 = vmatpush1.xpose.msra.mxu0 %v2512
        %2546 = vmatprep.subr.mxu0 0.0
        %2547 = vmatpush1.xpose.msra.mxu0 %v2514
        %2548 = vmatprep.subr.mxu0 0.0
        %2549 = vmatpush1.xpose.msra.mxu0 %v2516
        %2550 = vmatprep.subr.mxu0 0.0
        %2551 = vmatpush1.xpose.msra.mxu0 %v2518
        %2552 = vmatprep.subr.mxu0 0.0
        %2553 = vmatpush1.xpose.msra.mxu0 %v2520
        %2554 = vmatprep.subr.mxu0 0.0
        %2555 = vmatpush1.xpose.msra.mxu0 %v2522
        %2556 = vmatprep.subr.mxu0 0.0
        %2557 = vmatpush1.xpose.msra.mxu0 %v2524
        %2558 = vmatprep.subr.mxu0 0.0
        %2559 = vmatpush1.xpose.msra.mxu0 %v2526
        %2560 = vmatprep.subr.mxu0 0.0
        %2561 = vmatpush1.xpose.msra.mxu0 0.0
        %2562 = vmatprep.subr.mxu0 0.0
        %2563 = vmatpush1.xpose.msra.mxu0 0.0
        %2564 = vmatprep.subr.mxu0 0.0
        %2565 = vmatpush1.xpose.msra.mxu0 0.0
        %2566 = vmatprep.subr.mxu0 0.0
        %2567 = vmatpush1.xpose.msra.mxu0 0.0
        %2568 = vmatprep.subr.mxu0 0.0
        %2569 = vmatpush1.xpose.msra.mxu0 0.0
        %2570 = vmatprep.subr.mxu0 0.0
        %2571 = vmatpush1.xpose.msra.mxu0 0.0
        %2572 = vmatprep.subr.mxu0 0.0
        %2573 = vmatpush1.xpose.msra.mxu0 0.0
        %2574 = vmatprep.subr.mxu0 0.0
        %2575 = vmatpush1.xpose.msra.mxu0 0.0
        %2576 = vmatprep.subr.mxu0 0.0
        %2577 = vmatpush1.xpose.msra.mxu0 0.0
        %2578 = vmatprep.subr.mxu0 0.0
        %2579 = vmatpush1.xpose.msra.mxu0 0.0
        %2580 = vmatprep.subr.mxu0 0.0
        %2581 = vmatpush1.xpose.msra.mxu0 0.0
        %2582 = vmatprep.subr.mxu0 0.0
        %2583 = vmatpush1.xpose.msra.mxu0 0.0
        %2584 = vmatprep.subr.mxu0 0.0
        %2585 = vmatpush1.xpose.msra.mxu0 0.0
        %2586 = vmatprep.subr.mxu0 0.0
        %2587 = vmatpush1.xpose.msra.mxu0 0.0
        %2588 = vmatprep.subr.mxu0 0.0
        %2589 = vmatpush1.xpose.msra.mxu0 0.0
        %2590 = vmatprep.subr.mxu0 0.0
        %2591 = vmatpush1.xpose.msra.mxu0 0.0
        %2592 = vmatprep.mubr.f32.mxu0 0.0
        %2593 = vmatmul.mubr.f32.gmra.mrb[0].mxu0 %v2480
        %v2594 = vpop.f32.mrb[0].mxu0
        %v2595 = vadd.f32 0.0, %v2594
        %v2596 = vpop.f32.mrb[0].mxu0
        %2597 = vmatprep.mubr.f32.mxu0 0.0
        %2598 = vmatmul.mubr.f32.gmra.mrb[0].mxu0 %v2482
        %v2599 = vpop.f32.mrb[0].mxu0
        %v2600 = vadd.f32 0.0, %v2599
        %v2601 = vpop.f32.mrb[0].mxu0
        %2602 = vmatprep.mubr.f32.mxu0 0.0
        %2603 = vmatmul.mubr.f32.gmra.mrb[0].mxu0 %v2484
        %v2604 = vpop.f32.mrb[0].mxu0
        %v2605 = vadd.f32 0.0, %v2604
        %v2606 = vpop.f32.mrb[0].mxu0
        %2607 = vmatprep.mubr.f32.mxu0 0.0
        %2608 = vmatmul.mubr.f32.gmra.mrb[0].mxu0 %v2486
        %v2609 = vpop.f32.mrb[0].mxu0
        %v2610 = vadd.f32 0.0, %v2609
        %v2611 = vpop.f32.mrb[0].mxu0
        %2612 = vmatprep.mubr.f32.mxu0 0.0
        %2613 = vmatmul.mubr.f32.gmra.mrb[0].mxu0 %v2488
        %v2614 = vpop.f32.mrb[0].mxu0
        %v2615 = vadd.f32 0.0, %v2614
        %v2616 = vpop.f32.mrb[0].mxu0
        %2617 = vmatprep.mubr.f32.mxu0 0.0
        %2618 = vmatmul.mubr.f32.gmra.mrb[0].mxu0 %v2490
        %v2619 = vpop.f32.mrb[0].mxu0
        %v2620 = vadd.f32 0.0, %v2619
        %v2621 = vpop.f32.mrb[0].mxu0
        %2622 = vmatprep.mubr.f32.mxu0 0.0
        %2623 = vmatmul.mubr.f32.gmra.mrb[0].mxu0 %v2492
        %v2624 = vpop.f32.mrb[0].mxu0
        %v2625 = vadd.f32 0.0, %v2624
        %v2626 = vpop.f32.mrb[0].mxu0
        %2627 = vmatprep.mubr.f32.mxu0 0.0
        %2628 = vmatmul.mubr.f32.gmra.mrb[0].mxu0 %v2494
        %v2629 = vpop.f32.mrb[0].mxu0
        %v2630 = vadd.f32 0.0, %v2629
        %v2631 = vpop.f32.mrb[0].mxu0
        %2632 = vdwg.mxu0
        %v2633 = vmul.f32 %v2595, 0.17677669
        %v2634 = vmul.f32 %v2600, 0.17677669
        %v2635 = vmul.f32 %v2605, 0.17677669
        %v2636 = vmul.f32 %v2610, 0.17677669
        %v2637 = vmul.f32 %v2615, 0.17677669
        %v2638 = vmul.f32 %v2620, 0.17677669
        %v2639 = vmul.f32 %v2625, 0.17677669
        %v2640 = vmul.f32 %v2630, 0.17677669
        %2641 = vmax.xlane.f32.xlu0 %v2633
        %v2642 = vpop.xlane.xlu0 %2641
        %2643 = vmax.xlane.f32.xlu0 %v2634
        %v2644 = vpop.xlane.xlu0 %2643
        %2645 = vmax.xlane.f32.xlu0 %v2635
        %v2646 = vpop.xlane.xlu0 %2645
        %2647 = vmax.xlane.f32.xlu0 %v2636
        %v2648 = vpop.xlane.xlu0 %2647
        %2649 = vmax.xlane.f32.xlu0 %v2637
        %v2650 = vpop.xlane.xlu0 %2649
        %2651 = vmax.xlane.f32.xlu0 %v2638
        %v2652 = vpop.xlane.xlu0 %2651
        %2653 = vmax.xlane.f32.xlu0 %v2639
        %v2654 = vpop.xlane.xlu0 %2653
        %2655 = vmax.xlane.f32.xlu0 %v2640
        %v2656 = vpop.xlane.xlu0 %2655
        %v2657 = vsub.f32 %v2633, %v2642
        %v2658 = vsub.f32 %v2634, %v2644
        %v2659 = vsub.f32 %v2635, %v2646
        %v2660 = vsub.f32 %v2636, %v2648
        %v2661 = vsub.f32 %v2637, %v2650
        %v2662 = vsub.f32 %v2638, %v2652
        %v2663 = vsub.f32 %v2639, %v2654
        %v2664 = vsub.f32 %v2640, %v2656
        %v2665 = vmul.f32 %v2657, 1.442695
        %v2666 = vpow.pop %v2665
        %v2667 = vmul.f32 %v2658, 1.442695
        %v2668 = vpow.pop %v2667
        %v2669 = vmul.f32 %v2659, 1.442695
        %v2670 = vpow.pop %v2669
        %v2671 = vmul.f32 %v2660, 1.442695
        %v2672 = vpow.pop %v2671
        %v2673 = vmul.f32 %v2661, 1.442695
        %v2674 = vpow.pop %v2673
        %v2675 = vmul.f32 %v2662, 1.442695
        %v2676 = vpow.pop %v2675
        %v2677 = vmul.f32 %v2663, 1.442695
        %v2678 = vpow.pop %v2677
        %v2679 = vmul.f32 %v2664, 1.442695
        %v2680 = vpow.pop %v2679
        %2681 = vadd.xlane.f32.xlu0 %v2666
        %v2682 = vpop.xlane.xlu0 %2681
        %2683 = vadd.xlane.f32.xlu0 %v2668
        %v2684 = vpop.xlane.xlu0 %2683
        %2685 = vadd.xlane.f32.xlu0 %v2670
        %v2686 = vpop.xlane.xlu0 %2685
        %2687 = vadd.xlane.f32.xlu0 %v2672
        %v2688 = vpop.xlane.xlu0 %2687
        %2689 = vadd.xlane.f32.xlu0 %v2674
        %v2690 = vpop.xlane.xlu0 %2689
        %2691 = vadd.xlane.f32.xlu0 %v2676
        %v2692 = vpop.xlane.xlu0 %2691
        %2693 = vadd.xlane.f32.xlu0 %v2678
        %v2694 = vpop.xlane.xlu0 %2693
        %2695 = vadd.xlane.f32.xlu0 %v2680
        %v2696 = vpop.xlane.xlu0 %2695
        %2697 = vrot.lane.b32.xlu0 %v1329, 64
        %v2698 = vpop.permute.xlu0 %2697
        %2699 = vrot.lane.b32.xlu0 %v1330, 64
        %v2700 = vpop.permute.xlu0 %2699
        %2701 = vrot.lane.b32.xlu0 %v1331, 64
        %v2702 = vpop.permute.xlu0 %2701
        %2703 = vrot.lane.b32.xlu0 %v1332, 64
        %v2704 = vpop.permute.xlu0 %2703
        %2705 = vrot.lane.b32.xlu0 %v1333, 64
        %v2706 = vpop.permute.xlu0 %2705
        %2707 = vrot.lane.b32.xlu0 %v1334, 64
        %v2708 = vpop.permute.xlu0 %2707
        %2709 = vrot.lane.b32.xlu0 %v1335, 64
        %v2710 = vpop.permute.xlu0 %2709
        %2711 = vrot.lane.b32.xlu0 %v1336, 64
        %v2712 = vpop.permute.xlu0 %2711
        %2713 = vrot.lane.b32.xlu0 %v1337, 64
        %v2714 = vpop.permute.xlu0 %2713
        %2715 = vrot.lane.b32.xlu0 %v1338, 64
        %v2716 = vpop.permute.xlu0 %2715
        %2717 = vrot.lane.b32.xlu0 %v1339, 64
        %v2718 = vpop.permute.xlu0 %2717
        %2719 = vrot.lane.b32.xlu0 %v1340, 64
        %v2720 = vpop.permute.xlu0 %2719
        %2721 = vrot.lane.b32.xlu0 %v1341, 64
        %v2722 = vpop.permute.xlu0 %2721
        %2723 = vrot.lane.b32.xlu0 %v1342, 64
        %v2724 = vpop.permute.xlu0 %2723
        %2725 = vrot.lane.b32.xlu0 %v1343, 64
        %v2726 = vpop.permute.xlu0 %2725
        %2727 = vrot.lane.b32.xlu0 %v1344, 64
        %v2728 = vpop.permute.xlu0 %2727
        %2745 = vmatprep.subr.mxu0 0.0
        %2746 = vmatpush1.msra.mxu0 %v2698
        %2747 = vmatprep.subr.mxu0 0.0
        %2748 = vmatpush1.msra.mxu0 %v2700
        %2749 = vmatprep.subr.mxu0 0.0
        %2750 = vmatpush1.msra.mxu0 %v2702
        %2751 = vmatprep.subr.mxu0 0.0
        %2752 = vmatpush1.msra.mxu0 %v2704
        %2753 = vmatprep.subr.mxu0 0.0
        %2754 = vmatpush1.msra.mxu0 %v2706
        %2755 = vmatprep.subr.mxu0 0.0
        %2756 = vmatpush1.msra.mxu0 %v2708
        %2757 = vmatprep.subr.mxu0 0.0
        %2758 = vmatpush1.msra.mxu0 %v2710
        %2759 = vmatprep.subr.mxu0 0.0
        %2760 = vmatpush1.msra.mxu0 %v2712
        %2761 = vmatprep.subr.mxu0 0.0
        %2762 = vmatpush1.msra.mxu0 %v2714
        %2763 = vmatprep.subr.mxu0 0.0
        %2764 = vmatpush1.msra.mxu0 %v2716
        %2765 = vmatprep.subr.mxu0 0.0
        %2766 = vmatpush1.msra.mxu0 %v2718
        %2767 = vmatprep.subr.mxu0 0.0
        %2768 = vmatpush1.msra.mxu0 %v2720
        %2769 = vmatprep.subr.mxu0 0.0
        %2770 = vmatpush1.msra.mxu0 %v2722
        %2771 = vmatprep.subr.mxu0 0.0
        %2772 = vmatpush1.msra.mxu0 %v2724
        %2773 = vmatprep.subr.mxu0 0.0
        %2774 = vmatpush1.msra.mxu0 %v2726
        %2775 = vmatprep.subr.mxu0 0.0
        %2776 = vmatpush1.msra.mxu0 %v2728
        %2777 = vmatprep.subr.mxu0 0.0
        %2778 = vmatpush1.msra.mxu0 0.0
        %2779 = vmatprep.subr.mxu0 0.0
        %2780 = vmatpush1.msra.mxu0 0.0
        %2781 = vmatprep.subr.mxu0 0.0
        %2782 = vmatpush1.msra.mxu0 0.0
        %2783 = vmatprep.subr.mxu0 0.0
        %2784 = vmatpush1.msra.mxu0 0.0
        %2785 = vmatprep.subr.mxu0 0.0
        %2786 = vmatpush1.msra.mxu0 0.0
        %2787 = vmatprep.subr.mxu0 0.0
        %2788 = vmatpush1.msra.mxu0 0.0
        %2789 = vmatprep.subr.mxu0 0.0
        %2790 = vmatpush1.msra.mxu0 0.0
        %2791 = vmatprep.subr.mxu0 0.0
        %2792 = vmatpush1.msra.mxu0 0.0
        %2793 = vmatprep.subr.mxu0 0.0
        %2794 = vmatpush1.msra.mxu0 0.0
        %2795 = vmatprep.subr.mxu0 0.0
        %2796 = vmatpush1.msra.mxu0 0.0
        %2797 = vmatprep.subr.mxu0 0.0
        %2798 = vmatpush1.msra.mxu0 0.0
        %2799 = vmatprep.subr.mxu0 0.0
        %2800 = vmatpush1.msra.mxu0 0.0
        %2801 = vmatprep.subr.mxu0 0.0
        %2802 = vmatpush1.msra.mxu0 0.0
        %2803 = vmatprep.subr.mxu0 0.0
        %2804 = vmatpush1.msra.mxu0 0.0
        %2805 = vmatprep.subr.mxu0 0.0
        %2806 = vmatpush1.msra.mxu0 0.0
        %2807 = vmatprep.subr.mxu0 0.0
        %2808 = vmatpush1.msra.mxu0 0.0
        %2809 = vmatprep.mubr.f32.mxu0 0.0
        %2810 = vmatmul.mubr.f32.gmra.mrb[0].mxu0 %v2666
        %v2811 = vpop.f32.mrb[0].mxu0
        %v2812 = vadd.f32 0.0, %v2811
        %v2813 = vpop.f32.mrb[0].mxu0
        %2814 = vmatprep.mubr.f32.mxu0 0.0
        %2815 = vmatmul.mubr.f32.gmra.mrb[0].mxu0 %v2668
        %v2816 = vpop.f32.mrb[0].mxu0
        %v2817 = vadd.f32 0.0, %v2816
        %v2818 = vpop.f32.mrb[0].mxu0
        %2819 = vmatprep.mubr.f32.mxu0 0.0
        %2820 = vmatmul.mubr.f32.gmra.mrb[0].mxu0 %v2670
        %v2821 = vpop.f32.mrb[0].mxu0
        %v2822 = vadd.f32 0.0, %v2821
        %v2823 = vpop.f32.mrb[0].mxu0
        %2824 = vmatprep.mubr.f32.mxu0 0.0
        %2825 = vmatmul.mubr.f32.gmra.mrb[0].mxu0 %v2672
        %v2826 = vpop.f32.mrb[0].mxu0
        %v2827 = vadd.f32 0.0, %v2826
        %v2828 = vpop.f32.mrb[0].mxu0
        %2829 = vmatprep.mubr.f32.mxu0 0.0
        %2830 = vmatmul.mubr.f32.gmra.mrb[0].mxu0 %v2674
        %v2831 = vpop.f32.mrb[0].mxu0
        %v2832 = vadd.f32 0.0, %v2831
        %v2833 = vpop.f32.mrb[0].mxu0
        %2834 = vmatprep.mubr.f32.mxu0 0.0
        %2835 = vmatmul.mubr.f32.gmra.mrb[0].mxu0 %v2676
        %v2836 = vpop.f32.mrb[0].mxu0
        %v2837 = vadd.f32 0.0, %v2836
        %v2838 = vpop.f32.mrb[0].mxu0
        %2839 = vmatprep.mubr.f32.mxu0 0.0
        %2840 = vmatmul.mubr.f32.gmra.mrb[0].mxu0 %v2678
        %v2841 = vpop.f32.mrb[0].mxu0
        %v2842 = vadd.f32 0.0, %v2841
        %v2843 = vpop.f32.mrb[0].mxu0
        %2844 = vmatprep.mubr.f32.mxu0 0.0
        %2845 = vmatmul.mubr.f32.gmra.mrb[0].mxu0 %v2680
        %v2846 = vpop.f32.mrb[0].mxu0
        %v2847 = vadd.f32 0.0, %v2846
        %v2848 = vpop.f32.mrb[0].mxu0
        %2849 = vdwg.mxu0
        %v2850 = vrcp.pop %v2682
        %v2851 = vrcp.pop %v2684
        %v2852 = vrcp.pop %v2686
        %v2853 = vrcp.pop %v2688
        %v2854 = vrcp.pop %v2690
        %v2855 = vrcp.pop %v2692
        %v2856 = vrcp.pop %v2694
        %v2857 = vrcp.pop %v2696
        %v2858 = vmul.f32 %v2812, %v2850
        %v2859 = vmul.f32 %v2817, %v2851
        %v2860 = vmul.f32 %v2822, %v2852
        %v2861 = vmul.f32 %v2827, %v2853
        %v2862 = vmul.f32 %v2832, %v2854
        %v2863 = vmul.f32 %v2837, %v2855
        %v2864 = vmul.f32 %v2842, %v2856
        %v2865 = vmul.f32 %v2847, %v2857
        %v2867 = vsel %vm1361, %v2858, 0
        %v2870 = vsel %vm1361, %v2859, 0
        %v2873 = vsel %vm1361, %v2860, 0
        %v2876 = vsel %vm1361, %v2861, 0
        %v2879 = vsel %vm1361, %v2862, 0
        %v2882 = vsel %vm1361, %v2863, 0
        %v2885 = vsel %vm1361, %v2864, 0
        %v2888 = vsel %vm1361, %v2865, 0
        %2890 = vmatprep.subr.mxu0 0.0
        %2891 = vmatpush1.msra.mxu0 %v1353
        %2892 = vmatprep.subr.mxu0 0.0
        %2893 = vmatpush1.msra.mxu0 %v1354
        %2894 = vmatprep.subr.mxu0 0.0
        %2895 = vmatpush1.msra.mxu0 %v1355
        %2896 = vmatprep.subr.mxu0 0.0
        %2897 = vmatpush1.msra.mxu0 %v1356
        %2898 = vmatprep.subr.mxu0 0.0
        %2899 = vmatpush1.msra.mxu0 0.0
        %2900 = vmatprep.subr.mxu0 0.0
        %2901 = vmatpush1.msra.mxu0 0.0
        %2902 = vmatprep.subr.mxu0 0.0
        %2903 = vmatpush1.msra.mxu0 0.0
        %2904 = vmatprep.subr.mxu0 0.0
        %2905 = vmatpush1.msra.mxu0 0.0
        %2906 = vmatprep.subr.mxu0 0.0
        %2907 = vmatpush1.msra.mxu0 0.0
        %2908 = vmatprep.subr.mxu0 0.0
        %2909 = vmatpush1.msra.mxu0 0.0
        %2910 = vmatprep.subr.mxu0 0.0
        %2911 = vmatpush1.msra.mxu0 0.0
        %2912 = vmatprep.subr.mxu0 0.0
        %2913 = vmatpush1.msra.mxu0 0.0
        %2914 = vmatprep.subr.mxu0 0.0
        %2915 = vmatpush1.msra.mxu0 0.0
        %2916 = vmatprep.subr.mxu0 0.0
        %2917 = vmatpush1.msra.mxu0 0.0
        %2918 = vmatprep.subr.mxu0 0.0
        %2919 = vmatpush1.msra.mxu0 0.0
        %2920 = vmatprep.subr.mxu0 0.0
        %2921 = vmatpush1.msra.mxu0 0.0
        %2922 = vmatprep.subr.mxu0 0.0
        %2923 = vmatpush1.msra.mxu0 0.0
        %2924 = vmatprep.subr.mxu0 0.0
        %2925 = vmatpush1.msra.mxu0 0.0
        %2926 = vmatprep.subr.mxu0 0.0
        %2927 = vmatpush1.msra.mxu0 0.0
        %2928 = vmatprep.subr.mxu0 0.0
        %2929 = vmatpush1.msra.mxu0 0.0
        %2930 = vmatprep.subr.mxu0 0.0
        %2931 = vmatpush1.msra.mxu0 0.0
        %2932 = vmatprep.subr.mxu0 0.0
        %2933 = vmatpush1.msra.mxu0 0.0
        %2934 = vmatprep.subr.mxu0 0.0
        %2935 = vmatpush1.msra.mxu0 0.0
        %2936 = vmatprep.subr.mxu0 0.0
        %2937 = vmatpush1.msra.mxu0 0.0
        %2938 = vmatprep.subr.mxu0 0.0
        %2939 = vmatpush1.msra.mxu0 0.0
        %2940 = vmatprep.subr.mxu0 0.0
        %2941 = vmatpush1.msra.mxu0 0.0
        %2942 = vmatprep.subr.mxu0 0.0
        %2943 = vmatpush1.msra.mxu0 0.0
        %2944 = vmatprep.subr.mxu0 0.0
        %2945 = vmatpush1.msra.mxu0 0.0
        %2946 = vmatprep.subr.mxu0 0.0
        %2947 = vmatpush1.msra.mxu0 0.0
        %2948 = vmatprep.subr.mxu0 0.0
        %2949 = vmatpush1.msra.mxu0 0.0
        %2950 = vmatprep.subr.mxu0 0.0
        %2951 = vmatpush1.msra.mxu0 0.0
        %2952 = vmatprep.subr.mxu0 0.0
        %2953 = vmatpush1.msra.mxu0 0.0
        %2954 = vmatprep.mubr.f32.mxu0 0.0
        %2955 = vmatmul.mubr.f32.gmra.mrb[0].mxu0 %v2867
        %v2956 = vpop.f32.mrb[0].mxu0
        %v2957 = vadd.f32 0.0, %v2956
        %v2958 = vpop.f32.mrb[0].mxu0
        %2959 = vmatprep.mubr.f32.mxu0 0.0
        %2960 = vmatmul.mubr.f32.gmra.mrb[0].mxu0 %v2870
        %v2961 = vpop.f32.mrb[0].mxu0
        %v2962 = vadd.f32 0.0, %v2961
        %v2963 = vpop.f32.mrb[0].mxu0
        %2964 = vmatprep.mubr.f32.mxu0 0.0
        %2965 = vmatmul.mubr.f32.gmra.mrb[0].mxu0 %v2873
        %v2966 = vpop.f32.mrb[0].mxu0
        %v2967 = vadd.f32 0.0, %v2966
        %v2968 = vpop.f32.mrb[0].mxu0
        %2969 = vmatprep.mubr.f32.mxu0 0.0
        %2970 = vmatmul.mubr.f32.gmra.mrb[0].mxu0 %v2876
        %v2971 = vpop.f32.mrb[0].mxu0
        %v2972 = vadd.f32 0.0, %v2971
        %v2973 = vpop.f32.mrb[0].mxu0
        %2974 = vmatprep.mubr.f32.mxu0 0.0
        %2975 = vmatmul.mubr.f32.gmra.mrb[0].mxu0 %v2879
        %v2976 = vpop.f32.mrb[0].mxu0
        %v2977 = vadd.f32 0.0, %v2976
        %v2978 = vpop.f32.mrb[0].mxu0
        %2979 = vmatprep.mubr.f32.mxu0 0.0
        %2980 = vmatmul.mubr.f32.gmra.mrb[0].mxu0 %v2882
        %v2981 = vpop.f32.mrb[0].mxu0
        %v2982 = vadd.f32 0.0, %v2981
        %v2983 = vpop.f32.mrb[0].mxu0
        %2984 = vmatprep.mubr.f32.mxu0 0.0
        %2985 = vmatmul.mubr.f32.gmra.mrb[0].mxu0 %v2885
        %v2986 = vpop.f32.mrb[0].mxu0
        %v2987 = vadd.f32 0.0, %v2986
        %v2988 = vpop.f32.mrb[0].mxu0
        %2989 = vmatprep.mubr.f32.mxu0 0.0
        %2990 = vmatmul.mubr.f32.gmra.mrb[0].mxu0 %v2888
        %v2991 = vpop.f32.mrb[0].mxu0
        %v2992 = vadd.f32 0.0, %v2991
        %v2993 = vpop.f32.mrb[0].mxu0
        %2994 = vdwg.mxu0
        %v2995 = vadd.f32 %v2394, %v2957
        %v2996 = vadd.f32 %v2399, %v2962
        %v2997 = vadd.f32 %v2404, %v2967
        %v2998 = vadd.f32 %v2409, %v2972
        %v2999 = vadd.f32 %v2414, %v2977
        %v3000 = vadd.f32 %v2419, %v2982
        %v3001 = vadd.f32 %v2424, %v2987
        %v3002 = vadd.f32 %v2429, %v2992
        %3003 = vrot.lane.b32.xlu0 %v1305, 32
        %v3004 = vpop.permute.xlu0 %3003
        %3005 = vrot.lane.b32.xlu0 %v1306, 32
        %v3006 = vpop.permute.xlu0 %3005
        %3007 = vrot.lane.b32.xlu0 %v1307, 32
        %v3008 = vpop.permute.xlu0 %3007
        %3009 = vrot.lane.b32.xlu0 %v1308, 32
        %v3010 = vpop.permute.xlu0 %3009
        %3011 = vrot.lane.b32.xlu0 %v1309, 32
        %v3012 = vpop.permute.xlu0 %3011
        %3013 = vrot.lane.b32.xlu0 %v1310, 32
        %v3014 = vpop.permute.xlu0 %3013
        %3015 = vrot.lane.b32.xlu0 %v1311, 32
        %v3016 = vpop.permute.xlu0 %3015
        %3017 = vrot.lane.b32.xlu0 %v1312, 32
        %v3018 = vpop.permute.xlu0 %3017
        %3019 = vrot.lane.b32.xlu0 %v1313, 32
        %v3020 = vpop.permute.xlu0 %3019
        %3021 = vrot.lane.b32.xlu0 %v1314, 32
        %v3022 = vpop.permute.xlu0 %3021
        %3023 = vrot.lane.b32.xlu0 %v1315, 32
        %v3024 = vpop.permute.xlu0 %3023
        %3025 = vrot.lane.b32.xlu0 %v1316, 32
        %v3026 = vpop.permute.xlu0 %3025
        %3027 = vrot.lane.b32.xlu0 %v1317, 32
        %v3028 = vpop.permute.xlu0 %3027
        %3029 = vrot.lane.b32.xlu0 %v1318, 32
        %v3030 = vpop.permute.xlu0 %3029
        %3031 = vrot.lane.b32.xlu0 %v1319, 32
        %v3032 = vpop.permute.xlu0 %3031
        %3033 = vrot.lane.b32.xlu0 %v1320, 32
        %v3034 = vpop.permute.xlu0 %3033
        %3035 = vrot.lane.b32.xlu0 %v1321, 32
        %v3036 = vpop.permute.xlu0 %3035
        %3037 = vrot.lane.b32.xlu0 %v1322, 32
        %v3038 = vpop.permute.xlu0 %3037
        %3039 = vrot.lane.b32.xlu0 %v1323, 32
        %v3040 = vpop.permute.xlu0 %3039
        %3041 = vrot.lane.b32.xlu0 %v1324, 32
        %v3042 = vpop.permute.xlu0 %3041
        %3043 = vrot.lane.b32.xlu0 %v1325, 32
        %v3044 = vpop.permute.xlu0 %3043
        %3045 = vrot.lane.b32.xlu0 %v1326, 32
        %v3046 = vpop.permute.xlu0 %3045
        %3047 = vrot.lane.b32.xlu0 %v1327, 32
        %v3048 = vpop.permute.xlu0 %3047
        %3049 = vrot.lane.b32.xlu0 %v1328, 32
        %v3050 = vpop.permute.xlu0 %3049
        %v3051 = vsel %vm1361, %v3004, 0
        %v3053 = vsel %vm1361, %v3006, 0
        %v3055 = vsel %vm1361, %v3008, 0
        %v3057 = vsel %vm1361, %v3010, 0
        %v3059 = vsel %vm1361, %v3012, 0
        %v3061 = vsel %vm1361, %v3014, 0
        %v3063 = vsel %vm1361, %v3016, 0
        %v3065 = vsel %vm1361, %v3018, 0
        %v3067 = vsel %vm1361, %v3020, 0
        %v3069 = vsel %vm1361, %v3022, 0
        %v3071 = vsel %vm1361, %v3024, 0
        %v3073 = vsel %vm1361, %v3026, 0
        %v3075 = vsel %vm1361, %v3028, 0
        %v3077 = vsel %vm1361, %v3030, 0
        %v3079 = vsel %vm1361, %v3032, 0
        %v3081 = vsel %vm1361, %v3034, 0
        %v3083 = vsel %vm1361, %v3036, 0
        %v3085 = vsel %vm1361, %v3038, 0
        %v3087 = vsel %vm1361, %v3040, 0
        %v3089 = vsel %vm1361, %v3042, 0
        %v3091 = vsel %vm1361, %v3044, 0
        %v3093 = vsel %vm1361, %v3046, 0
        %v3095 = vsel %vm1361, %v3048, 0
        %v3097 = vsel %vm1361, %v3050, 0
        %3099 = vmatprep.subr.mxu0 0.0
        %3100 = vmatpush1.xpose.msra.mxu0 %v3067
        %3101 = vmatprep.subr.mxu0 0.0
        %3102 = vmatpush1.xpose.msra.mxu0 %v3069
        %3103 = vmatprep.subr.mxu0 0.0
        %3104 = vmatpush1.xpose.msra.mxu0 %v3071
        %3105 = vmatprep.subr.mxu0 0.0
        %3106 = vmatpush1.xpose.msra.mxu0 %v3073
        %3107 = vmatprep.subr.mxu0 0.0
        %3108 = vmatpush1.xpose.msra.mxu0 %v3075
        %3109 = vmatprep.subr.mxu0 0.0
        %3110 = vmatpush1.xpose.msra.mxu0 %v3077
        %3111 = vmatprep.subr.mxu0 0.0
        %3112 = vmatpush1.xpose.msra.mxu0 %v3079
        %3113 = vmatprep.subr.mxu0 0.0
        %3114 = vmatpush1.xpose.msra.mxu0 %v3081
        %3115 = vmatprep.subr.mxu0 0.0
        %3116 = vmatpush1.xpose.msra.mxu0 %v3083
        %3117 = vmatprep.subr.mxu0 0.0
        %3118 = vmatpush1.xpose.msra.mxu0 %v3085
        %3119 = vmatprep.subr.mxu0 0.0
        %3120 = vmatpush1.xpose.msra.mxu0 %v3087
        %3121 = vmatprep.subr.mxu0 0.0
        %3122 = vmatpush1.xpose.msra.mxu0 %v3089
        %3123 = vmatprep.subr.mxu0 0.0
        %3124 = vmatpush1.xpose.msra.mxu0 %v3091
        %3125 = vmatprep.subr.mxu0 0.0
        %3126 = vmatpush1.xpose.msra.mxu0 %v3093
        %3127 = vmatprep.subr.mxu0 0.0
        %3128 = vmatpush1.xpose.msra.mxu0 %v3095
        %3129 = vmatprep.subr.mxu0 0.0
        %3130 = vmatpush1.xpose.msra.mxu0 %v3097
        %3131 = vmatprep.subr.mxu0 0.0
        %3132 = vmatpush1.xpose.msra.mxu0 0.0
        %3133 = vmatprep.subr.mxu0 0.0
        %3134 = vmatpush1.xpose.msra.mxu0 0.0
        %3135 = vmatprep.subr.mxu0 0.0
        %3136 = vmatpush1.xpose.msra.mxu0 0.0
        %3137 = vmatprep.subr.mxu0 0.0
        %3138 = vmatpush1.xpose.msra.mxu0 0.0
        %3139 = vmatprep.subr.mxu0 0.0
        %3140 = vmatpush1.xpose.msra.mxu0 0.0
        %3141 = vmatprep.subr.mxu0 0.0
        %3142 = vmatpush1.xpose.msra.mxu0 0.0
        %3143 = vmatprep.subr.mxu0 0.0
        %3144 = vmatpush1.xpose.msra.mxu0 0.0
        %3145 = vmatprep.subr.mxu0 0.0
        %3146 = vmatpush1.xpose.msra.mxu0 0.0
        %3147 = vmatprep.subr.mxu0 0.0
        %3148 = vmatpush1.xpose.msra.mxu0 0.0
        %3149 = vmatprep.subr.mxu0 0.0
        %3150 = vmatpush1.xpose.msra.mxu0 0.0
        %3151 = vmatprep.subr.mxu0 0.0
        %3152 = vmatpush1.xpose.msra.mxu0 0.0
        %3153 = vmatprep.subr.mxu0 0.0
        %3154 = vmatpush1.xpose.msra.mxu0 0.0
        %3155 = vmatprep.subr.mxu0 0.0
        %3156 = vmatpush1.xpose.msra.mxu0 0.0
        %3157 = vmatprep.subr.mxu0 0.0
        %3158 = vmatpush1.xpose.msra.mxu0 0.0
        %3159 = vmatprep.subr.mxu0 0.0
        %3160 = vmatpush1.xpose.msra.mxu0 0.0
        %3161 = vmatprep.subr.mxu0 0.0
        %3162 = vmatpush1.xpose.msra.mxu0 0.0
        %3163 = vmatprep.mubr.f32.mxu0 0.0
        %3164 = vmatmul.mubr.f32.gmra.mrb[0].mxu0 %v3051
        %v3165 = vpop.f32.mrb[0].mxu0
        %v3166 = vadd.f32 0.0, %v3165
        %v3167 = vpop.f32.mrb[0].mxu0
        %3168 = vmatprep.mubr.f32.mxu0 0.0
        %3169 = vmatmul.mubr.f32.gmra.mrb[0].mxu0 %v3053
        %v3170 = vpop.f32.mrb[0].mxu0
        %v3171 = vadd.f32 0.0, %v3170
        %v3172 = vpop.f32.mrb[0].mxu0
        %3173 = vmatprep.mubr.f32.mxu0 0.0
        %3174 = vmatmul.mubr.f32.gmra.mrb[0].mxu0 %v3055
        %v3175 = vpop.f32.mrb[0].mxu0
        %v3176 = vadd.f32 0.0, %v3175
        %v3177 = vpop.f32.mrb[0].mxu0
        %3178 = vmatprep.mubr.f32.mxu0 0.0
        %3179 = vmatmul.mubr.f32.gmra.mrb[0].mxu0 %v3057
        %v3180 = vpop.f32.mrb[0].mxu0
        %v3181 = vadd.f32 0.0, %v3180
        %v3182 = vpop.f32.mrb[0].mxu0
        %3183 = vmatprep.mubr.f32.mxu0 0.0
        %3184 = vmatmul.mubr.f32.gmra.mrb[0].mxu0 %v3059
        %v3185 = vpop.f32.mrb[0].mxu0
        %v3186 = vadd.f32 0.0, %v3185
        %v3187 = vpop.f32.mrb[0].mxu0
        %3188 = vmatprep.mubr.f32.mxu0 0.0
        %3189 = vmatmul.mubr.f32.gmra.mrb[0].mxu0 %v3061
        %v3190 = vpop.f32.mrb[0].mxu0
        %v3191 = vadd.f32 0.0, %v3190
        %v3192 = vpop.f32.mrb[0].mxu0
        %3193 = vmatprep.mubr.f32.mxu0 0.0
        %3194 = vmatmul.mubr.f32.gmra.mrb[0].mxu0 %v3063
        %v3195 = vpop.f32.mrb[0].mxu0
        %v3196 = vadd.f32 0.0, %v3195
        %v3197 = vpop.f32.mrb[0].mxu0
        %3198 = vmatprep.mubr.f32.mxu0 0.0
        %3199 = vmatmul.mubr.f32.gmra.mrb[0].mxu0 %v3065
        %v3200 = vpop.f32.mrb[0].mxu0
        %v3201 = vadd.f32 0.0, %v3200
        %v3202 = vpop.f32.mrb[0].mxu0
        %3203 = vdwg.mxu0
        %v3204 = vmul.f32 %v3166, 0.17677669
        %v3205 = vmul.f32 %v3171, 0.17677669
        %v3206 = vmul.f32 %v3176, 0.17677669
        %v3207 = vmul.f32 %v3181, 0.17677669
        %v3208 = vmul.f32 %v3186, 0.17677669
        %v3209 = vmul.f32 %v3191, 0.17677669
        %v3210 = vmul.f32 %v3196, 0.17677669
        %v3211 = vmul.f32 %v3201, 0.17677669
        %3212 = vmax.xlane.f32.xlu0 %v3204
        %v3213 = vpop.xlane.xlu0 %3212
        %3214 = vmax.xlane.f32.xlu0 %v3205
        %v3215 = vpop.xlane.xlu0 %3214
        %3216 = vmax.xlane.f32.xlu0 %v3206
        %v3217 = vpop.xlane.xlu0 %3216
        %3218 = vmax.xlane.f32.xlu0 %v3207
        %v3219 = vpop.xlane.xlu0 %3218
        %3220 = vmax.xlane.f32.xlu0 %v3208
        %v3221 = vpop.xlane.xlu0 %3220
        %3222 = vmax.xlane.f32.xlu0 %v3209
        %v3223 = vpop.xlane.xlu0 %3222
        %3224 = vmax.xlane.f32.xlu0 %v3210
        %v3225 = vpop.xlane.xlu0 %3224
        %3226 = vmax.xlane.f32.xlu0 %v3211
        %v3227 = vpop.xlane.xlu0 %3226
        %v3228 = vsub.f32 %v3204, %v3213
        %v3229 = vsub.f32 %v3205, %v3215
        %v3230 = vsub.f32 %v3206, %v3217
        %v3231 = vsub.f32 %v3207, %v3219
        %v3232 = vsub.f32 %v3208, %v3221
        %v3233 = vsub.f32 %v3209, %v3223
        %v3234 = vsub.f32 %v3210, %v3225
        %v3235 = vsub.f32 %v3211, %v3227
        %v3236 = vmul.f32 %v3228, 1.442695
        %v3237 = vpow.pop %v3236
        %v3238 = vmul.f32 %v3229, 1.442695
        %v3239 = vpow.pop %v3238
        %v3240 = vmul.f32 %v3230, 1.442695
        %v3241 = vpow.pop %v3240
        %v3242 = vmul.f32 %v3231, 1.442695
        %v3243 = vpow.pop %v3242
        %v3244 = vmul.f32 %v3232, 1.442695
        %v3245 = vpow.pop %v3244
        %v3246 = vmul.f32 %v3233, 1.442695
        %v3247 = vpow.pop %v3246
        %v3248 = vmul.f32 %v3234, 1.442695
        %v3249 = vpow.pop %v3248
        %v3250 = vmul.f32 %v3235, 1.442695
        %v3251 = vpow.pop %v3250
        %3252 = vadd.xlane.f32.xlu0 %v3237
        %v3253 = vpop.xlane.xlu0 %3252
        %3254 = vadd.xlane.f32.xlu0 %v3239
        %v3255 = vpop.xlane.xlu0 %3254
        %3256 = vadd.xlane.f32.xlu0 %v3241
        %v3257 = vpop.xlane.xlu0 %3256
        %3258 = vadd.xlane.f32.xlu0 %v3243
        %v3259 = vpop.xlane.xlu0 %3258
        %3260 = vadd.xlane.f32.xlu0 %v3245
        %v3261 = vpop.xlane.xlu0 %3260
        %3262 = vadd.xlane.f32.xlu0 %v3247
        %v3263 = vpop.xlane.xlu0 %3262
        %3264 = vadd.xlane.f32.xlu0 %v3249
        %v3265 = vpop.xlane.xlu0 %3264
        %3266 = vadd.xlane.f32.xlu0 %v3251
        %v3267 = vpop.xlane.xlu0 %3266
        %3268 = vrot.lane.b32.xlu0 %v1329, 32
        %v3269 = vpop.permute.xlu0 %3268
        %3270 = vrot.lane.b32.xlu0 %v1330, 32
        %v3271 = vpop.permute.xlu0 %3270
        %3272 = vrot.lane.b32.xlu0 %v1331, 32
        %v3273 = vpop.permute.xlu0 %3272
        %3274 = vrot.lane.b32.xlu0 %v1332, 32
        %v3275 = vpop.permute.xlu0 %3274
        %3276 = vrot.lane.b32.xlu0 %v1333, 32
        %v3277 = vpop.permute.xlu0 %3276
        %3278 = vrot.lane.b32.xlu0 %v1334, 32
        %v3279 = vpop.permute.xlu0 %3278
        %3280 = vrot.lane.b32.xlu0 %v1335, 32
        %v3281 = vpop.permute.xlu0 %3280
        %3282 = vrot.lane.b32.xlu0 %v1336, 32
        %v3283 = vpop.permute.xlu0 %3282
        %3284 = vrot.lane.b32.xlu0 %v1337, 32
        %v3285 = vpop.permute.xlu0 %3284
        %3286 = vrot.lane.b32.xlu0 %v1338, 32
        %v3287 = vpop.permute.xlu0 %3286
        %3288 = vrot.lane.b32.xlu0 %v1339, 32
        %v3289 = vpop.permute.xlu0 %3288
        %3290 = vrot.lane.b32.xlu0 %v1340, 32
        %v3291 = vpop.permute.xlu0 %3290
        %3292 = vrot.lane.b32.xlu0 %v1341, 32
        %v3293 = vpop.permute.xlu0 %3292
        %3294 = vrot.lane.b32.xlu0 %v1342, 32
        %v3295 = vpop.permute.xlu0 %3294
        %3296 = vrot.lane.b32.xlu0 %v1343, 32
        %v3297 = vpop.permute.xlu0 %3296
        %3298 = vrot.lane.b32.xlu0 %v1344, 32
        %v3299 = vpop.permute.xlu0 %3298
        %3316 = vmatprep.subr.mxu0 0.0
        %3317 = vmatpush1.msra.mxu0 %v3269
        %3318 = vmatprep.subr.mxu0 0.0
        %3319 = vmatpush1.msra.mxu0 %v3271
        %3320 = vmatprep.subr.mxu0 0.0
        %3321 = vmatpush1.msra.mxu0 %v3273
        %3322 = vmatprep.subr.mxu0 0.0
        %3323 = vmatpush1.msra.mxu0 %v3275
        %3324 = vmatprep.subr.mxu0 0.0
        %3325 = vmatpush1.msra.mxu0 %v3277
        %3326 = vmatprep.subr.mxu0 0.0
        %3327 = vmatpush1.msra.mxu0 %v3279
        %3328 = vmatprep.subr.mxu0 0.0
        %3329 = vmatpush1.msra.mxu0 %v3281
        %3330 = vmatprep.subr.mxu0 0.0
        %3331 = vmatpush1.msra.mxu0 %v3283
        %3332 = vmatprep.subr.mxu0 0.0
        %3333 = vmatpush1.msra.mxu0 %v3285
        %3334 = vmatprep.subr.mxu0 0.0
        %3335 = vmatpush1.msra.mxu0 %v3287
        %3336 = vmatprep.subr.mxu0 0.0
        %3337 = vmatpush1.msra.mxu0 %v3289
        %3338 = vmatprep.subr.mxu0 0.0
        %3339 = vmatpush1.msra.mxu0 %v3291
        %3340 = vmatprep.subr.mxu0 0.0
        %3341 = vmatpush1.msra.mxu0 %v3293
        %3342 = vmatprep.subr.mxu0 0.0
        %3343 = vmatpush1.msra.mxu0 %v3295
        %3344 = vmatprep.subr.mxu0 0.0
        %3345 = vmatpush1.msra.mxu0 %v3297
        %3346 = vmatprep.subr.mxu0 0.0
        %3347 = vmatpush1.msra.mxu0 %v3299
        %3348 = vmatprep.subr.mxu0 0.0
        %3349 = vmatpush1.msra.mxu0 0.0
        %3350 = vmatprep.subr.mxu0 0.0
        %3351 = vmatpush1.msra.mxu0 0.0
        %3352 = vmatprep.subr.mxu0 0.0
        %3353 = vmatpush1.msra.mxu0 0.0
        %3354 = vmatprep.subr.mxu0 0.0
        %3355 = vmatpush1.msra.mxu0 0.0
        %3356 = vmatprep.subr.mxu0 0.0
        %3357 = vmatpush1.msra.mxu0 0.0
        %3358 = vmatprep.subr.mxu0 0.0
        %3359 = vmatpush1.msra.mxu0 0.0
        %3360 = vmatprep.subr.mxu0 0.0
        %3361 = vmatpush1.msra.mxu0 0.0
        %3362 = vmatprep.subr.mxu0 0.0
        %3363 = vmatpush1.msra.mxu0 0.0
        %3364 = vmatprep.subr.mxu0 0.0
        %3365 = vmatpush1.msra.mxu0 0.0
        %3366 = vmatprep.subr.mxu0 0.0
        %3367 = vmatpush1.msra.mxu0 0.0
        %3368 = vmatprep.subr.mxu0 0.0
        %3369 = vmatpush1.msra.mxu0 0.0
        %3370 = vmatprep.subr.mxu0 0.0
        %3371 = vmatpush1.msra.mxu0 0.0
        %3372 = vmatprep.subr.mxu0 0.0
        %3373 = vmatpush1.msra.mxu0 0.0
        %3374 = vmatprep.subr.mxu0 0.0
        %3375 = vmatpush1.msra.mxu0 0.0
        %3376 = vmatprep.subr.mxu0 0.0
        %3377 = vmatpush1.msra.mxu0 0.0
        %3378 = vmatprep.subr.mxu0 0.0
        %3379 = vmatpush1.msra.mxu0 0.0
        %3380 = vmatprep.mubr.f32.mxu0 0.0
        %3381 = vmatmul.mubr.f32.gmra.mrb[0].mxu0 %v3237
        %v3382 = vpop.f32.mrb[0].mxu0
        %v3383 = vadd.f32 0.0, %v3382
        %v3384 = vpop.f32.mrb[0].mxu0
        %3385 = vmatprep.mubr.f32.mxu0 0.0
        %3386 = vmatmul.mubr.f32.gmra.mrb[0].mxu0 %v3239
        %v3387 = vpop.f32.mrb[0].mxu0
        %v3388 = vadd.f32 0.0, %v3387
        %v3389 = vpop.f32.mrb[0].mxu0
        %3390 = vmatprep.mubr.f32.mxu0 0.0
        %3391 = vmatmul.mubr.f32.gmra.mrb[0].mxu0 %v3241
        %v3392 = vpop.f32.mrb[0].mxu0
        %v3393 = vadd.f32 0.0, %v3392
        %v3394 = vpop.f32.mrb[0].mxu0
        %3395 = vmatprep.mubr.f32.mxu0 0.0
        %3396 = vmatmul.mubr.f32.gmra.mrb[0].mxu0 %v3243
        %v3397 = vpop.f32.mrb[0].mxu0
        %v3398 = vadd.f32 0.0, %v3397
        %v3399 = vpop.f32.mrb[0].mxu0
        %3400 = vmatprep.mubr.f32.mxu0 0.0
        %3401 = vmatmul.mubr.f32.gmra.mrb[0].mxu0 %v3245
        %v3402 = vpop.f32.mrb[0].mxu0
        %v3403 = vadd.f32 0.0, %v3402
        %v3404 = vpop.f32.mrb[0].mxu0
        %3405 = vmatprep.mubr.f32.mxu0 0.0
        %3406 = vmatmul.mubr.f32.gmra.mrb[0].mxu0 %v3247
        %v3407 = vpop.f32.mrb[0].mxu0
        %v3408 = vadd.f32 0.0, %v3407
        %v3409 = vpop.f32.mrb[0].mxu0
        %3410 = vmatprep.mubr.f32.mxu0 0.0
        %3411 = vmatmul.mubr.f32.gmra.mrb[0].mxu0 %v3249
        %v3412 = vpop.f32.mrb[0].mxu0
        %v3413 = vadd.f32 0.0, %v3412
        %v3414 = vpop.f32.mrb[0].mxu0
        %3415 = vmatprep.mubr.f32.mxu0 0.0
        %3416 = vmatmul.mubr.f32.gmra.mrb[0].mxu0 %v3251
        %v3417 = vpop.f32.mrb[0].mxu0
        %v3418 = vadd.f32 0.0, %v3417
        %v3419 = vpop.f32.mrb[0].mxu0
        %3420 = vdwg.mxu0
        %v3421 = vrcp.pop %v3253
        %v3422 = vrcp.pop %v3255
        %v3423 = vrcp.pop %v3257
        %v3424 = vrcp.pop %v3259
        %v3425 = vrcp.pop %v3261
        %v3426 = vrcp.pop %v3263
        %v3427 = vrcp.pop %v3265
        %v3428 = vrcp.pop %v3267
        %v3429 = vmul.f32 %v3383, %v3421
        %v3430 = vmul.f32 %v3388, %v3422
        %v3431 = vmul.f32 %v3393, %v3423
        %v3432 = vmul.f32 %v3398, %v3424
        %v3433 = vmul.f32 %v3403, %v3425
        %v3434 = vmul.f32 %v3408, %v3426
        %v3435 = vmul.f32 %v3413, %v3427
        %v3436 = vmul.f32 %v3418, %v3428
        %v3438 = vsel %vm1361, %v3429, 0
        %v3441 = vsel %vm1361, %v3430, 0
        %v3444 = vsel %vm1361, %v3431, 0
        %v3447 = vsel %vm1361, %v3432, 0
        %v3450 = vsel %vm1361, %v3433, 0
        %v3453 = vsel %vm1361, %v3434, 0
        %v3456 = vsel %vm1361, %v3435, 0
        %v3459 = vsel %vm1361, %v3436, 0
        %3461 = vmatprep.subr.mxu0 0.0
        %3462 = vmatpush1.msra.mxu0 %v1357
        %3463 = vmatprep.subr.mxu0 0.0
        %3464 = vmatpush1.msra.mxu0 %v1358
        %3465 = vmatprep.subr.mxu0 0.0
        %3466 = vmatpush1.msra.mxu0 %v1359
        %3467 = vmatprep.subr.mxu0 0.0
        %3468 = vmatpush1.msra.mxu0 %v1360
        %3469 = vmatprep.subr.mxu0 0.0
        %3470 = vmatpush1.msra.mxu0 0.0
        %3471 = vmatprep.subr.mxu0 0.0
        %3472 = vmatpush1.msra.mxu0 0.0
        %3473 = vmatprep.subr.mxu0 0.0
        %3474 = vmatpush1.msra.mxu0 0.0
        %3475 = vmatprep.subr.mxu0 0.0
        %3476 = vmatpush1.msra.mxu0 0.0
        %3477 = vmatprep.subr.mxu0 0.0
        %3478 = vmatpush1.msra.mxu0 0.0
        %3479 = vmatprep.subr.mxu0 0.0
        %3480 = vmatpush1.msra.mxu0 0.0
        %3481 = vmatprep.subr.mxu0 0.0
        %3482 = vmatpush1.msra.mxu0 0.0
        %3483 = vmatprep.subr.mxu0 0.0
        %3484 = vmatpush1.msra.mxu0 0.0
        %3485 = vmatprep.subr.mxu0 0.0
        %3486 = vmatpush1.msra.mxu0 0.0
        %3487 = vmatprep.subr.mxu0 0.0
        %3488 = vmatpush1.msra.mxu0 0.0
        %3489 = vmatprep.subr.mxu0 0.0
        %3490 = vmatpush1.msra.mxu0 0.0
        %3491 = vmatprep.subr.mxu0 0.0
        %3492 = vmatpush1.msra.mxu0 0.0
        %3493 = vmatprep.subr.mxu0 0.0
        %3494 = vmatpush1.msra.mxu0 0.0
        %3495 = vmatprep.subr.mxu0 0.0
        %3496 = vmatpush1.msra.mxu0 0.0
        %3497 = vmatprep.subr.mxu0 0.0
        %3498 = vmatpush1.msra.mxu0 0.0
        %3499 = vmatprep.subr.mxu0 0.0
        %3500 = vmatpush1.msra.mxu0 0.0
        %3501 = vmatprep.subr.mxu0 0.0
        %3502 = vmatpush1.msra.mxu0 0.0
        %3503 = vmatprep.subr.mxu0 0.0
        %3504 = vmatpush1.msra.mxu0 0.0
        %3505 = vmatprep.subr.mxu0 0.0
        %3506 = vmatpush1.msra.mxu0 0.0
        %3507 = vmatprep.subr.mxu0 0.0
        %3508 = vmatpush1.msra.mxu0 0.0
        %3509 = vmatprep.subr.mxu0 0.0
        %3510 = vmatpush1.msra.mxu0 0.0
        %3511 = vmatprep.subr.mxu0 0.0
        %3512 = vmatpush1.msra.mxu0 0.0
        %3513 = vmatprep.subr.mxu0 0.0
        %3514 = vmatpush1.msra.mxu0 0.0
        %3515 = vmatprep.subr.mxu0 0.0
        %3516 = vmatpush1.msra.mxu0 0.0
        %3517 = vmatprep.subr.mxu0 0.0
        %3518 = vmatpush1.msra.mxu0 0.0
        %3519 = vmatprep.subr.mxu0 0.0
        %3520 = vmatpush1.msra.mxu0 0.0
        %3521 = vmatprep.subr.mxu0 0.0
        %3522 = vmatpush1.msra.mxu0 0.0
        %3523 = vmatprep.subr.mxu0 0.0
        %3524 = vmatpush1.msra.mxu0 0.0
        %3525 = vmatprep.mubr.f32.mxu0 0.0
        %3526 = vmatmul.mubr.f32.gmra.mrb[0].mxu0 %v3438
        %v3527 = vpop.f32.mrb[0].mxu0
        %v3528 = vadd.f32 0.0, %v3527
        %v3529 = vpop.f32.mrb[0].mxu0
        %3530 = vmatprep.mubr.f32.mxu0 0.0
        %3531 = vmatmul.mubr.f32.gmra.mrb[0].mxu0 %v3441
        %v3532 = vpop.f32.mrb[0].mxu0
        %v3533 = vadd.f32 0.0, %v3532
        %v3534 = vpop.f32.mrb[0].mxu0
        %3535 = vmatprep.mubr.f32.mxu0 0.0
        %3536 = vmatmul.mubr.f32.gmra.mrb[0].mxu0 %v3444
        %v3537 = vpop.f32.mrb[0].mxu0
        %v3538 = vadd.f32 0.0, %v3537
        %v3539 = vpop.f32.mrb[0].mxu0
        %3540 = vmatprep.mubr.f32.mxu0 0.0
        %3541 = vmatmul.mubr.f32.gmra.mrb[0].mxu0 %v3447
        %v3542 = vpop.f32.mrb[0].mxu0
        %v3543 = vadd.f32 0.0, %v3542
        %v3544 = vpop.f32.mrb[0].mxu0
        %3545 = vmatprep.mubr.f32.mxu0 0.0
        %3546 = vmatmul.mubr.f32.gmra.mrb[0].mxu0 %v3450
        %v3547 = vpop.f32.mrb[0].mxu0
        %v3548 = vadd.f32 0.0, %v3547
        %v3549 = vpop.f32.mrb[0].mxu0
        %3550 = vmatprep.mubr.f32.mxu0 0.0
        %3551 = vmatmul.mubr.f32.gmra.mrb[0].mxu0 %v3453
        %v3552 = vpop.f32.mrb[0].mxu0
        %v3553 = vadd.f32 0.0, %v3552
        %v3554 = vpop.f32.mrb[0].mxu0
        %3555 = vmatprep.mubr.f32.mxu0 0.0
        %3556 = vmatmul.mubr.f32.gmra.mrb[0].mxu0 %v3456
        %v3557 = vpop.f32.mrb[0].mxu0
        %v3558 = vadd.f32 0.0, %v3557
        %v3559 = vpop.f32.mrb[0].mxu0
        %3560 = vmatprep.mubr.f32.mxu0 0.0
        %3561 = vmatmul.mubr.f32.gmra.mrb[0].mxu0 %v3459
        %v3562 = vpop.f32.mrb[0].mxu0
        %v3563 = vadd.f32 0.0, %v3562
        %v3564 = vpop.f32.mrb[0].mxu0
        %3565 = vdwg.mxu0
        %v3566 = vadd.f32 %v2995, %v3528
        %v3567 = vadd.f32 %v2996, %v3533
        %v3568 = vadd.f32 %v2997, %v3538
        %v3569 = vadd.f32 %v2998, %v3543
        %v3570 = vadd.f32 %v2999, %v3548
        %v3571 = vadd.f32 %v3000, %v3553
        %v3572 = vadd.f32 %v3001, %v3558
        %v3573 = vadd.f32 %v3002, %v3563
        %v3574 = vld [vmem:[#allocation19] sm:$0x1]
        %v3576 = vlaneseq
        %v3577 = vshrl.u32 %v3576, 7
        %v3578 = vsub.s32 0, %v3577
        %v3579 = vrot.slane %v3574, %v3578
        %v3581 = vadd.f32 %v3566, %v3579
        %v3582 = vadd.f32 %v3567, %v3579
        %v3583 = vadd.f32 %v3568, %v3579
        %v3584 = vadd.f32 %v3569, %v3579
        %v3585 = vadd.f32 %v3570, %v3579
        %v3586 = vadd.f32 %v3571, %v3579
        %v3587 = vadd.f32 %v3572, %v3579
        %v3588 = vadd.f32 %v3573, %v3579
        %v3589 = vadd.f32 %v1296, %v3581
        %v3590 = vadd.f32 %v1297, %v3582
        %v3591 = vadd.f32 %v1298, %v3583
        %v3592 = vadd.f32 %v1299, %v3584
        %v3593 = vadd.f32 %v1300, %v3585
        %v3594 = vadd.f32 %v1301, %v3586
        %v3595 = vadd.f32 %v1302, %v3587
        %v3596 = vadd.f32 %v1303, %v3588
        %v3597 = vld [vmem:[#allocation11] sm:$0x1]
        %v3598 = vld [vmem:[#allocation13] sm:$0x1]
        %3599 = vadd.xlane.f32.xlu0 %v3589
        %v3600 = vpop.xlane.xlu0 %3599
        %3601 = vadd.xlane.f32.xlu0 %v3590
        %v3602 = vpop.xlane.xlu0 %3601
        %3603 = vadd.xlane.f32.xlu0 %v3591
        %v3604 = vpop.xlane.xlu0 %3603
        %3605 = vadd.xlane.f32.xlu0 %v3592
        %v3606 = vpop.xlane.xlu0 %3605
        %3607 = vadd.xlane.f32.xlu0 %v3593
        %v3608 = vpop.xlane.xlu0 %3607
        %3609 = vadd.xlane.f32.xlu0 %v3594
        %v3610 = vpop.xlane.xlu0 %3609
        %3611 = vadd.xlane.f32.xlu0 %v3595
        %v3612 = vpop.xlane.xlu0 %3611
        %3613 = vadd.xlane.f32.xlu0 %v3596
        %v3614 = vpop.xlane.xlu0 %3613
        %v3615 = vrcp.pop 128.0
        %v3616 = vmul.f32 %v3600, %v3615
        %v3617 = vmul.f32 %v3602, %v3615
        %v3618 = vmul.f32 %v3604, %v3615
        %v3619 = vmul.f32 %v3606, %v3615
        %v3620 = vmul.f32 %v3608, %v3615
        %v3621 = vmul.f32 %v3610, %v3615
        %v3622 = vmul.f32 %v3612, %v3615
        %v3623 = vmul.f32 %v3614, %v3615
        %v3624 = vsub.f32 %v3589, %v3616
        %v3625 = vsub.f32 %v3590, %v3617
        %v3626 = vsub.f32 %v3591, %v3618
        %v3627 = vsub.f32 %v3592, %v3619
        %v3628 = vsub.f32 %v3593, %v3620
        %v3629 = vsub.f32 %v3594, %v3621
        %v3630 = vsub.f32 %v3595, %v3622
        %v3631 = vsub.f32 %v3596, %v3623
        %v3632 = vmul.f32 %v3624, %v3624
        %v3633 = vmul.f32 %v3625, %v3625
        %v3634 = vmul.f32 %v3626, %v3626
        %v3635 = vmul.f32 %v3627, %v3627
        %v3636 = vmul.f32 %v3628, %v3628
        %v3637 = vmul.f32 %v3629, %v3629
        %v3638 = vmul.f32 %v3630, %v3630
        %v3639 = vmul.f32 %v3631, %v3631
        %3640 = vadd.xlane.f32.xlu0 %v3632
        %v3641 = vpop.xlane.xlu0 %3640
        %3642 = vadd.xlane.f32.xlu0 %v3633
        %v3643 = vpop.xlane.xlu0 %3642
        %3644 = vadd.xlane.f32.xlu0 %v3634
        %v3645 = vpop.xlane.xlu0 %3644
        %3646 = vadd.xlane.f32.xlu0 %v3635
        %v3647 = vpop.xlane.xlu0 %3646
        %3648 = vadd.xlane.f32.xlu0 %v3636
        %v3649 = vpop.xlane.xlu0 %3648
        %3650 = vadd.xlane.f32.xlu0 %v3637
        %v3651 = vpop.xlane.xlu0 %3650
        %3652 = vadd.xlane.f32.xlu0 %v3638
        %v3653 = vpop.xlane.xlu0 %3652
        %3654 = vadd.xlane.f32.xlu0 %v3639
        %v3655 = vpop.xlane.xlu0 %3654
        %v3656 = vmul.f32 %v3641, %v3615
        %v3657 = vmul.f32 %v3643, %v3615
        %v3658 = vmul.f32 %v3645, %v3615
        %v3659 = vmul.f32 %v3647, %v3615
        %v3660 = vmul.f32 %v3649, %v3615
        %v3661 = vmul.f32 %v3651, %v3615
        %v3662 = vmul.f32 %v3653, %v3615
        %v3663 = vmul.f32 %v3655, %v3615
        %v3664 = vadd.f32 %v3656, 1e-05
        %v3665 = vadd.f32 %v3657, 1e-05
        %v3666 = vadd.f32 %v3658, 1e-05
        %v3667 = vadd.f32 %v3659, 1e-05
        %v3668 = vadd.f32 %v3660, 1e-05
        %v3669 = vadd.f32 %v3661, 1e-05
        %v3670 = vadd.f32 %v3662, 1e-05
        %v3671 = vadd.f32 %v3663, 1e-05
        %v3672 = vrsqrt.pop %v3664
        %v3673 = vrsqrt.pop %v3665
        %v3674 = vrsqrt.pop %v3666
        %v3675 = vrsqrt.pop %v3667
        %v3676 = vrsqrt.pop %v3668
        %v3677 = vrsqrt.pop %v3669
        %v3678 = vrsqrt.pop %v3670
        %v3679 = vrsqrt.pop %v3671
        %v3680 = vmul.f32 %v3624, %v3672
        %v3681 = vmul.f32 %v3625, %v3673
        %v3682 = vmul.f32 %v3626, %v3674
        %v3683 = vmul.f32 %v3627, %v3675
        %v3684 = vmul.f32 %v3628, %v3676
        %v3685 = vmul.f32 %v3629, %v3677
        %v3686 = vmul.f32 %v3630, %v3678
        %v3687 = vmul.f32 %v3631, %v3679
        %v3689 = vlaneseq
        %v3690 = vshrl.u32 %v3689, 7
        %v3691 = vsub.s32 0, %v3690
        %v3692 = vrot.slane %v3597, %v3691
        %v3694 = vmul.f32 %v3680, %v3692
        %v3695 = vmul.f32 %v3681, %v3692
        %v3696 = vmul.f32 %v3682, %v3692
        %v3697 = vmul.f32 %v3683, %v3692
        %v3698 = vmul.f32 %v3684, %v3692
        %v3699 = vmul.f32 %v3685, %v3692
        %v3700 = vmul.f32 %v3686, %v3692
        %v3701 = vmul.f32 %v3687, %v3692
        %v3703 = vlaneseq
        %v3704 = vshrl.u32 %v3703, 7
        %v3705 = vsub.s32 0, %v3704
        %v3706 = vrot.slane %v3598, %v3705
        %v3708 = vadd.f32 %v3694, %v3706
        %v3709 = vadd.f32 %v3695, %v3706
        %v3710 = vadd.f32 %v3696, %v3706
        %v3711 = vadd.f32 %v3697, %v3706
        %v3712 = vadd.f32 %v3698, %v3706
        %v3713 = vadd.f32 %v3699, %v3706
        %v3714 = vadd.f32 %v3700, %v3706
        %v3715 = vadd.f32 %v3701, %v3706
        %v3716 = vld [vmem:[#allocation20] sm:$0xff]
        %v3717 = vld [vmem:[#allocation20 + $0x8] sm:$0xff]
        %v3718 = vld [vmem:[#allocation20 + $0x10] sm:$0xff]
        %v3719 = vld [vmem:[#allocation20 + $0x18] sm:$0xff]
        %v3720 = vld [vmem:[#allocation20 + $0x20] sm:$0xff]
        %v3721 = vld [vmem:[#allocation20 + $0x28] sm:$0xff]
        %v3722 = vld [vmem:[#allocation20 + $0x30] sm:$0xff]
        %v3723 = vld [vmem:[#allocation20 + $0x38] sm:$0xff]
        %v3724 = vld [vmem:[#allocation20 + $0x40] sm:$0xff]
        %v3725 = vld [vmem:[#allocation20 + $0x48] sm:$0xff]
        %v3726 = vld [vmem:[#allocation20 + $0x50] sm:$0xff]
        %v3727 = vld [vmem:[#allocation20 + $0x58] sm:$0xff]
        %v3728 = vld [vmem:[#allocation20 + $0x60] sm:$0xff]
        %v3729 = vld [vmem:[#allocation20 + $0x68] sm:$0xff]
        %v3730 = vld [vmem:[#allocation20 + $0x70] sm:$0xff]
        %v3731 = vld [vmem:[#allocation20 + $0x78] sm:$0xff]
        %v3732 = vld [vmem:[#allocation20 + $0x80] sm:$0xff]
        %v3733 = vld [vmem:[#allocation20 + $0x88] sm:$0xff]
        %v3734 = vld [vmem:[#allocation20 + $0x90] sm:$0xff]
        %v3735 = vld [vmem:[#allocation20 + $0x98] sm:$0xff]
        %v3736 = vld [vmem:[#allocation20 + $0xa0] sm:$0xff]
        %v3737 = vld [vmem:[#allocation20 + $0xa8] sm:$0xff]
        %v3738 = vld [vmem:[#allocation20 + $0xb0] sm:$0xff]
        %v3739 = vld [vmem:[#allocation20 + $0xb8] sm:$0xff]
        %v3740 = vld [vmem:[#allocation20 + $0xc0] sm:$0xff]
        %v3741 = vld [vmem:[#allocation20 + $0xc8] sm:$0xff]
        %v3742 = vld [vmem:[#allocation20 + $0xd0] sm:$0xff]
        %v3743 = vld [vmem:[#allocation20 + $0xd8] sm:$0xff]
        %v3744 = vld [vmem:[#allocation20 + $0xe0] sm:$0xff]
        %v3745 = vld [vmem:[#allocation20 + $0xe8] sm:$0xff]
        %v3746 = vld [vmem:[#allocation20 + $0xf0] sm:$0xff]
        %v3747 = vld [vmem:[#allocation20 + $0xf8] sm:$0xff]
        %v3748 = vld [vmem:[#allocation20 + $0x100] sm:$0xff]
        %v3749 = vld [vmem:[#allocation20 + $0x108] sm:$0xff]
        %v3750 = vld [vmem:[#allocation20 + $0x110] sm:$0xff]
        %v3751 = vld [vmem:[#allocation20 + $0x118] sm:$0xff]
        %v3752 = vld [vmem:[#allocation20 + $0x120] sm:$0xff]
        %v3753 = vld [vmem:[#allocation20 + $0x128] sm:$0xff]
        %v3754 = vld [vmem:[#allocation20 + $0x130] sm:$0xff]
        %v3755 = vld [vmem:[#allocation20 + $0x138] sm:$0xff]
        %v3756 = vld [vmem:[#allocation20 + $0x140] sm:$0xff]
        %v3757 = vld [vmem:[#allocation20 + $0x148] sm:$0xff]
        %v3758 = vld [vmem:[#allocation20 + $0x150] sm:$0xff]
        %v3759 = vld [vmem:[#allocation20 + $0x158] sm:$0xff]
        %v3760 = vld [vmem:[#allocation20 + $0x160] sm:$0xff]
        %v3761 = vld [vmem:[#allocation20 + $0x168] sm:$0xff]
        %v3762 = vld [vmem:[#allocation20 + $0x170] sm:$0xff]
        %v3763 = vld [vmem:[#allocation20 + $0x178] sm:$0xff]
        %v3764 = vld [vmem:[#allocation20 + $0x180] sm:$0xff]
        %v3765 = vld [vmem:[#allocation20 + $0x188] sm:$0xff]
        %v3766 = vld [vmem:[#allocation20 + $0x190] sm:$0xff]
        %v3767 = vld [vmem:[#allocation20 + $0x198] sm:$0xff]
        %v3768 = vld [vmem:[#allocation20 + $0x1a0] sm:$0xff]
        %v3769 = vld [vmem:[#allocation20 + $0x1a8] sm:$0xff]
        %v3770 = vld [vmem:[#allocation20 + $0x1b0] sm:$0xff]
        %v3771 = vld [vmem:[#allocation20 + $0x1b8] sm:$0xff]
        %v3772 = vld [vmem:[#allocation20 + $0x1c0] sm:$0xff]
        %v3773 = vld [vmem:[#allocation20 + $0x1c8] sm:$0xff]
        %v3774 = vld [vmem:[#allocation20 + $0x1d0] sm:$0xff]
        %v3775 = vld [vmem:[#allocation20 + $0x1d8] sm:$0xff]
        %v3776 = vld [vmem:[#allocation20 + $0x1e0] sm:$0xff]
        %v3777 = vld [vmem:[#allocation20 + $0x1e8] sm:$0xff]
        %v3778 = vld [vmem:[#allocation20 + $0x1f0] sm:$0xff]
        %v3779 = vld [vmem:[#allocation20 + $0x1f8] sm:$0xff]
        %v3780 = vld [vmem:[#allocation22] sm:$0xf]
        %v3782 = vlaneseq
        %v3783 = vshrl.u32 %v3782, 7
        %v3784 = vsub.s32 0, %v3783
        %v3785 = vrot.slane %v3780, %v3784
        %v3786 = vlaneseq
        %v3787 = vshrl.u32 %v3786, 7
        %v3788 = vsub.s32 1, %v3787
        %v3789 = vrot.slane %v3780, %v3788
        %v3790 = vlaneseq
        %v3791 = vshrl.u32 %v3790, 7
        %v3792 = vsub.s32 2, %v3791
        %v3793 = vrot.slane %v3780, %v3792
        %v3794 = vlaneseq
        %v3795 = vshrl.u32 %v3794, 7
        %v3796 = vsub.s32 3, %v3795
        %v3797 = vrot.slane %v3780, %v3796
        %3802 = vmatprep.subr.mxu0 %v3717
        %3803 = vmatpush1.msra.mxu0 %v3716
        %3804 = vmatprep.subr.mxu0 %v3721
        %3805 = vmatpush1.msra.mxu0 %v3720
        %3806 = vmatprep.subr.mxu0 %v3725
        %3807 = vmatpush1.msra.mxu0 %v3724
        %3808 = vmatprep.subr.mxu0 %v3729
        %3809 = vmatpush1.msra.mxu0 %v3728
        %3810 = vmatprep.subr.mxu0 %v3733
        %3811 = vmatpush1.msra.mxu0 %v3732
        %3812 = vmatprep.subr.mxu0 %v3737
        %3813 = vmatpush1.msra.mxu0 %v3736
        %3814 = vmatprep.subr.mxu0 %v3741
        %3815 = vmatpush1.msra.mxu0 %v3740
        %3816 = vmatprep.subr.mxu0 %v3745
        %3817 = vmatpush1.msra.mxu0 %v3744
        %3818 = vmatprep.subr.mxu0 %v3749
        %3819 = vmatpush1.msra.mxu0 %v3748
        %3820 = vmatprep.subr.mxu0 %v3753
        %3821 = vmatpush1.msra.mxu0 %v3752
        %3822 = vmatprep.subr.mxu0 %v3757
        %3823 = vmatpush1.msra.mxu0 %v3756
        %3824 = vmatprep.subr.mxu0 %v3761
        %3825 = vmatpush1.msra.mxu0 %v3760
        %3826 = vmatprep.subr.mxu0 %v3765
        %3827 = vmatpush1.msra.mxu0 %v3764
        %3828 = vmatprep.subr.mxu0 %v3769
        %3829 = vmatpush1.msra.mxu0 %v3768
        %3830 = vmatprep.subr.mxu0 %v3773
        %3831 = vmatpush1.msra.mxu0 %v3772
        %3832 = vmatprep.subr.mxu0 %v3777
        %3833 = vmatpush1.msra.mxu0 %v3776
        %3834 = vmatprep.subr.mxu0 0.0
        %3835 = vmatpush1.msra.mxu0 0.0
        %3836 = vmatprep.subr.mxu0 0.0
        %3837 = vmatpush1.msra.mxu0 0.0
        %3838 = vmatprep.subr.mxu0 0.0
        %3839 = vmatpush1.msra.mxu0 0.0
        %3840 = vmatprep.subr.mxu0 0.0
        %3841 = vmatpush1.msra.mxu0 0.0
        %3842 = vmatprep.subr.mxu0 0.0
        %3843 = vmatpush1.msra.mxu0 0.0
        %3844 = vmatprep.subr.mxu0 0.0
        %3845 = vmatpush1.msra.mxu0 0.0
        %3846 = vmatprep.subr.mxu0 0.0
        %3847 = vmatpush1.msra.mxu0 0.0
        %3848 = vmatprep.subr.mxu0 0.0
        %3849 = vmatpush1.msra.mxu0 0.0
        %3850 = vmatprep.subr.mxu0 0.0
        %3851 = vmatpush1.msra.mxu0 0.0
        %3852 = vmatprep.subr.mxu0 0.0
        %3853 = vmatpush1.msra.mxu0 0.0
        %3854 = vmatprep.subr.mxu0 0.0
        %3855 = vmatpush1.msra.mxu0 0.0
        %3856 = vmatprep.subr.mxu0 0.0
        %3857 = vmatpush1.msra.mxu0 0.0
        %3858 = vmatprep.subr.mxu0 0.0
        %3859 = vmatpush1.msra.mxu0 0.0
        %3860 = vmatprep.subr.mxu0 0.0
        %3861 = vmatpush1.msra.mxu0 0.0
        %3862 = vmatprep.subr.mxu0 0.0
        %3863 = vmatpush1.msra.mxu0 0.0
        %3864 = vmatprep.subr.mxu0 0.0
        %3865 = vmatpush1.msra.mxu0 0.0
        %3866 = vmatprep.mubr.f32.mxu0 0.0
        %3867 = vmatmul.mubr.f32.gmra.mrb[0].mxu0 %v3708
        %v3868 = vpop.f32.mrb[0].mxu0
        %v3869 = vadd.f32 %v3785, %v3868
        %v3870 = vpop.f32.mrb[0].mxu0
        %v3871 = vadd.f32 %v3789, %v3870
        %3872 = vmatprep.mubr.f32.mxu0 0.0
        %3873 = vmatmul.mubr.f32.gmra.mrb[0].mxu0 %v3709
        %v3874 = vpop.f32.mrb[0].mxu0
        %v3875 = vadd.f32 %v3785, %v3874
        %v3876 = vpop.f32.mrb[0].mxu0
        %v3877 = vadd.f32 %v3789, %v3876
        %3878 = vmatprep.mubr.f32.mxu0 0.0
        %3879 = vmatmul.mubr.f32.gmra.mrb[0].mxu0 %v3710
        %v3880 = vpop.f32.mrb[0].mxu0
        %v3881 = vadd.f32 %v3785, %v3880
        %v3882 = vpop.f32.mrb[0].mxu0
        %v3883 = vadd.f32 %v3789, %v3882
        %3884 = vmatprep.mubr.f32.mxu0 0.0
        %3885 = vmatmul.mubr.f32.gmra.mrb[0].mxu0 %v3711
        %v3886 = vpop.f32.mrb[0].mxu0
        %v3887 = vadd.f32 %v3785, %v3886
        %v3888 = vpop.f32.mrb[0].mxu0
        %v3889 = vadd.f32 %v3789, %v3888
        %3890 = vmatprep.mubr.f32.mxu0 0.0
        %3891 = vmatmul.mubr.f32.gmra.mrb[0].mxu0 %v3712
        %v3892 = vpop.f32.mrb[0].mxu0
        %v3893 = vadd.f32 %v3785, %v3892
        %v3894 = vpop.f32.mrb[0].mxu0
        %v3895 = vadd.f32 %v3789, %v3894
        %3896 = vmatprep.mubr.f32.mxu0 0.0
        %3897 = vmatmul.mubr.f32.gmra.mrb[0].mxu0 %v3713
        %v3898 = vpop.f32.mrb[0].mxu0
        %v3899 = vadd.f32 %v3785, %v3898
        %v3900 = vpop.f32.mrb[0].mxu0
        %v3901 = vadd.f32 %v3789, %v3900
        %3902 = vmatprep.mubr.f32.mxu0 0.0
        %3903 = vmatmul.mubr.f32.gmra.mrb[0].mxu0 %v3714
        %v3904 = vpop.f32.mrb[0].mxu0
        %v3905 = vadd.f32 %v3785, %v3904
        %v3906 = vpop.f32.mrb[0].mxu0
        %v3907 = vadd.f32 %v3789, %v3906
        %3908 = vmatprep.mubr.f32.mxu0 0.0
        %3909 = vmatmul.mubr.f32.gmra.mrb[0].mxu0 %v3715
        %v3910 = vpop.f32.mrb[0].mxu0
        %v3911 = vadd.f32 %v3785, %v3910
        %v3912 = vpop.f32.mrb[0].mxu0
        %v3913 = vadd.f32 %v3789, %v3912
        %3914 = vdwg.mxu0
        %3915 = vmatprep.subr.mxu0 %v3719
        %3916 = vmatpush1.msra.mxu0 %v3718
        %3917 = vmatprep.subr.mxu0 %v3723
        %3918 = vmatpush1.msra.mxu0 %v3722
        %3919 = vmatprep.subr.mxu0 %v3727
        %3920 = vmatpush1.msra.mxu0 %v3726
        %3921 = vmatprep.subr.mxu0 %v3731
        %3922 = vmatpush1.msra.mxu0 %v3730
        %3923 = vmatprep.subr.mxu0 %v3735
        %3924 = vmatpush1.msra.mxu0 %v3734
        %3925 = vmatprep.subr.mxu0 %v3739
        %3926 = vmatpush1.msra.mxu0 %v3738
        %3927 = vmatprep.subr.mxu0 %v3743
        %3928 = vmatpush1.msra.mxu0 %v3742
        %3929 = vmatprep.subr.mxu0 %v3747
        %3930 = vmatpush1.msra.mxu0 %v3746
        %3931 = vmatprep.subr.mxu0 %v3751
        %3932 = vmatpush1.msra.mxu0 %v3750
        %3933 = vmatprep.subr.mxu0 %v3755
        %3934 = vmatpush1.msra.mxu0 %v3754
        %3935 = vmatprep.subr.mxu0 %v3759
        %3936 = vmatpush1.msra.mxu0 %v3758
        %3937 = vmatprep.subr.mxu0 %v3763
        %3938 = vmatpush1.msra.mxu0 %v3762
        %3939 = vmatprep.subr.mxu0 %v3767
        %3940 = vmatpush1.msra.mxu0 %v3766
        %3941 = vmatprep.subr.mxu0 %v3771
        %3942 = vmatpush1.msra.mxu0 %v3770
        %3943 = vmatprep.subr.mxu0 %v3775
        %3944 = vmatpush1.msra.mxu0 %v3774
        %3945 = vmatprep.subr.mxu0 %v3779
        %3946 = vmatpush1.msra.mxu0 %v3778
        %3947 = vmatprep.subr.mxu0 0.0
        %3948 = vmatpush1.msra.mxu0 0.0
        %3949 = vmatprep.subr.mxu0 0.0
        %3950 = vmatpush1.msra.mxu0 0.0
        %3951 = vmatprep.subr.mxu0 0.0
        %3952 = vmatpush1.msra.mxu0 0.0
        %3953 = vmatprep.subr.mxu0 0.0
        %3954 = vmatpush1.msra.mxu0 0.0
        %3955 = vmatprep.subr.mxu0 0.0
        %3956 = vmatpush1.msra.mxu0 0.0
        %3957 = vmatprep.subr.mxu0 0.0
        %3958 = vmatpush1.msra.mxu0 0.0
        %3959 = vmatprep.subr.mxu0 0.0
        %3960 = vmatpush1.msra.mxu0 0.0
        %3961 = vmatprep.subr.mxu0 0.0
        %3962 = vmatpush1.msra.mxu0 0.0
        %3963 = vmatprep.subr.mxu0 0.0
        %3964 = vmatpush1.msra.mxu0 0.0
        %3965 = vmatprep.subr.mxu0 0.0
        %3966 = vmatpush1.msra.mxu0 0.0
        %3967 = vmatprep.subr.mxu0 0.0
        %3968 = vmatpush1.msra.mxu0 0.0
        %3969 = vmatprep.subr.mxu0 0.0
        %3970 = vmatpush1.msra.mxu0 0.0
        %3971 = vmatprep.subr.mxu0 0.0
        %3972 = vmatpush1.msra.mxu0 0.0
        %3973 = vmatprep.subr.mxu0 0.0
        %3974 = vmatpush1.msra.mxu0 0.0
        %3975 = vmatprep.subr.mxu0 0.0
        %3976 = vmatpush1.msra.mxu0 0.0
        %3977 = vmatprep.subr.mxu0 0.0
        %3978 = vmatpush1.msra.mxu0 0.0
        %3979 = vmatprep.mubr.f32.mxu0 0.0
        %3980 = vmatmul.mubr.f32.gmra.mrb[0].mxu0 %v3708
        %v3981 = vpop.f32.mrb[0].mxu0
        %v3982 = vadd.f32 %v3793, %v3981
        %v3983 = vpop.f32.mrb[0].mxu0
        %v3984 = vadd.f32 %v3797, %v3983
        %3985 = vmatprep.mubr.f32.mxu0 0.0
        %3986 = vmatmul.mubr.f32.gmra.mrb[0].mxu0 %v3709
        %v3987 = vpop.f32.mrb[0].mxu0
        %v3988 = vadd.f32 %v3793, %v3987
        %v3989 = vpop.f32.mrb[0].mxu0
        %v3990 = vadd.f32 %v3797, %v3989
        %3991 = vmatprep.mubr.f32.mxu0 0.0
        %3992 = vmatmul.mubr.f32.gmra.mrb[0].mxu0 %v3710
        %v3993 = vpop.f32.mrb[0].mxu0
        %v3994 = vadd.f32 %v3793, %v3993
        %v3995 = vpop.f32.mrb[0].mxu0
        %v3996 = vadd.f32 %v3797, %v3995
        %3997 = vmatprep.mubr.f32.mxu0 0.0
        %3998 = vmatmul.mubr.f32.gmra.mrb[0].mxu0 %v3711
        %v3999 = vpop.f32.mrb[0].mxu0
        %v4000 = vadd.f32 %v3793, %v3999
        %v4001 = vpop.f32.mrb[0].mxu0
        %v4002 = vadd.f32 %v3797, %v4001
        %4003 = vmatprep.mubr.f32.mxu0 0.0
        %4004 = vmatmul.mubr.f32.gmra.mrb[0].mxu0 %v3712
        %v4005 = vpop.f32.mrb[0].mxu0
        %v4006 = vadd.f32 %v3793, %v4005
        %v4007 = vpop.f32.mrb[0].mxu0
        %v4008 = vadd.f32 %v3797, %v4007
        %4009 = vmatprep.mubr.f32.mxu0 0.0
        %4010 = vmatmul.mubr.f32.gmra.mrb[0].mxu0 %v3713
        %v4011 = vpop.f32.mrb[0].mxu0
        %v4012 = vadd.f32 %v3793, %v4011
        %v4013 = vpop.f32.mrb[0].mxu0
        %v4014 = vadd.f32 %v3797, %v4013
        %4015 = vmatprep.mubr.f32.mxu0 0.0
        %4016 = vmatmul.mubr.f32.gmra.mrb[0].mxu0 %v3714
        %v4017 = vpop.f32.mrb[0].mxu0
        %v4018 = vadd.f32 %v3793, %v4017
        %v4019 = vpop.f32.mrb[0].mxu0
        %v4020 = vadd.f32 %v3797, %v4019
        %4021 = vmatprep.mubr.f32.mxu0 0.0
        %4022 = vmatmul.mubr.f32.gmra.mrb[0].mxu0 %v3715
        %v4023 = vpop.f32.mrb[0].mxu0
        %v4024 = vadd.f32 %v3793, %v4023
        %v4025 = vpop.f32.mrb[0].mxu0
        %v4026 = vadd.f32 %v3797, %v4025
        %4027 = vdwg.mxu0
        %v4028 = vmul.f32 %v3869, 0.5
        %v4029 = vmul.f32 %v3871, 0.5
        %v4030 = vmul.f32 %v3982, 0.5
        %v4031 = vmul.f32 %v3984, 0.5
        %v4032 = vmul.f32 %v3875, 0.5
        %v4033 = vmul.f32 %v3877, 0.5
        %v4034 = vmul.f32 %v3988, 0.5
        %v4035 = vmul.f32 %v3990, 0.5
        %v4036 = vmul.f32 %v3881, 0.5
        %v4037 = vmul.f32 %v3883, 0.5
        %v4038 = vmul.f32 %v3994, 0.5
        %v4039 = vmul.f32 %v3996, 0.5
        %v4040 = vmul.f32 %v3887, 0.5
        %v4041 = vmul.f32 %v3889, 0.5
        %v4042 = vmul.f32 %v4000, 0.5
        %v4043 = vmul.f32 %v4002, 0.5
        %v4044 = vmul.f32 %v3893, 0.5
        %v4045 = vmul.f32 %v3895, 0.5
        %v4046 = vmul.f32 %v4006, 0.5
        %v4047 = vmul.f32 %v4008, 0.5
        %v4048 = vmul.f32 %v3899, 0.5
        %v4049 = vmul.f32 %v3901, 0.5
        %v4050 = vmul.f32 %v4012, 0.5
        %v4051 = vmul.f32 %v4014, 0.5
        %v4052 = vmul.f32 %v3905, 0.5
        %v4053 = vmul.f32 %v3907, 0.5
        %v4054 = vmul.f32 %v4018, 0.5
        %v4055 = vmul.f32 %v4020, 0.5
        %v4056 = vmul.f32 %v3911, 0.5
        %v4057 = vmul.f32 %v3913, 0.5
        %v4058 = vmul.f32 %v4024, 0.5
        %v4059 = vmul.f32 %v4026, 0.5
        %v4060 = vmul.f32 %v3869, 0.70710677
        %v4061 = vmul.f32 %v3871, 0.70710677
        %v4062 = vmul.f32 %v3982, 0.70710677
        %v4063 = vmul.f32 %v3984, 0.70710677
        %v4064 = vmul.f32 %v3875, 0.70710677
        %v4065 = vmul.f32 %v3877, 0.70710677
        %v4066 = vmul.f32 %v3988, 0.70710677
        %v4067 = vmul.f32 %v3990, 0.70710677
        %v4068 = vmul.f32 %v3881, 0.70710677
        %v4069 = vmul.f32 %v3883, 0.70710677
        %v4070 = vmul.f32 %v3994, 0.70710677
        %v4071 = vmul.f32 %v3996, 0.70710677
        %v4072 = vmul.f32 %v3887, 0.70710677
        %v4073 = vmul.f32 %v3889, 0.70710677
        %v4074 = vmul.f32 %v4000, 0.70710677
        %v4075 = vmul.f32 %v4002, 0.70710677
        %v4076 = vmul.f32 %v3893, 0.70710677
        %v4077 = vmul.f32 %v3895, 0.70710677
        %v4078 = vmul.f32 %v4006, 0.70710677
        %v4079 = vmul.f32 %v4008, 0.70710677
        %v4080 = vmul.f32 %v3899, 0.70710677
        %v4081 = vmul.f32 %v3901, 0.70710677
        %v4082 = vmul.f32 %v4012, 0.70710677
        %v4083 = vmul.f32 %v4014, 0.70710677
        %v4084 = vmul.f32 %v3905, 0.70710677
        %v4085 = vmul.f32 %v3907, 0.70710677
        %v4086 = vmul.f32 %v4018, 0.70710677
        %v4087 = vmul.f32 %v4020, 0.70710677
        %v4088 = vmul.f32 %v3911, 0.70710677
        %v4089 = vmul.f32 %v3913, 0.70710677
        %v4090 = vmul.f32 %v4024, 0.70710677
        %v4091 = vmul.f32 %v4026, 0.70710677
        %v4092 = verf.f32.pop %v4060
        %v4093 = verf.f32.pop %v4061
        %v4094 = verf.f32.pop %v4062
        %v4095 = verf.f32.pop %v4063
        %v4096 = verf.f32.pop %v4064
        %v4097 = verf.f32.pop %v4065
        %v4098 = verf.f32.pop %v4066
        %v4099 = verf.f32.pop %v4067
        %v4100 = verf.f32.pop %v4068
        %v4101 = verf.f32.pop %v4069
        %v4102 = verf.f32.pop %v4070
        %v4103 = verf.f32.pop %v4071
        %v4104 = verf.f32.pop %v4072
        %v4105 = verf.f32.pop %v4073
        %v4106 = verf.f32.pop %v4074
        %v4107 = verf.f32.pop %v4075
        %v4108 = verf.f32.pop %v4076
        %v4109 = verf.f32.pop %v4077
        %v4110 = verf.f32.pop %v4078
        %v4111 = verf.f32.pop %v4079
        %v4112 = verf.f32.pop %v4080
        %v4113 = verf.f32.pop %v4081
        %v4114 = verf.f32.pop %v4082
        %v4115 = verf.f32.pop %v4083
        %v4116 = verf.f32.pop %v4084
        %v4117 = verf.f32.pop %v4085
        %v4118 = verf.f32.pop %v4086
        %v4119 = verf.f32.pop %v4087
        %v4120 = verf.f32.pop %v4088
        %v4121 = verf.f32.pop %v4089
        %v4122 = verf.f32.pop %v4090
        %v4123 = verf.f32.pop %v4091
        %v4124 = vadd.f32 %v4092, 1.0
        %v4125 = vadd.f32 %v4093, 1.0
        %v4126 = vadd.f32 %v4094, 1.0
        %v4127 = vadd.f32 %v4095, 1.0
        %v4128 = vadd.f32 %v4096, 1.0
        %v4129 = vadd.f32 %v4097, 1.0
        %v4130 = vadd.f32 %v4098, 1.0
        %v4131 = vadd.f32 %v4099, 1.0
        %v4132 = vadd.f32 %v4100, 1.0
        %v4133 = vadd.f32 %v4101, 1.0
        %v4134 = vadd.f32 %v4102, 1.0
        %v4135 = vadd.f32 %v4103, 1.0
        %v4136 = vadd.f32 %v4104, 1.0
        %v4137 = vadd.f32 %v4105, 1.0
        %v4138 = vadd.f32 %v4106, 1.0
        %v4139 = vadd.f32 %v4107, 1.0
        %v4140 = vadd.f32 %v4108, 1.0
        %v4141 = vadd.f32 %v4109, 1.0
        %v4142 = vadd.f32 %v4110, 1.0
        %v4143 = vadd.f32 %v4111, 1.0
        %v4144 = vadd.f32 %v4112, 1.0
        %v4145 = vadd.f32 %v4113, 1.0
        %v4146 = vadd.f32 %v4114, 1.0
        %v4147 = vadd.f32 %v4115, 1.0
        %v4148 = vadd.f32 %v4116, 1.0
        %v4149 = vadd.f32 %v4117, 1.0
        %v4150 = vadd.f32 %v4118, 1.0
        %v4151 = vadd.f32 %v4119, 1.0
        %v4152 = vadd.f32 %v4120, 1.0
        %v4153 = vadd.f32 %v4121, 1.0
        %v4154 = vadd.f32 %v4122, 1.0
        %v4155 = vadd.f32 %v4123, 1.0
        %v4156 = vmul.f32 %v4028, %v4124
        %v4157 = vmul.f32 %v4029, %v4125
        %v4158 = vmul.f32 %v4030, %v4126
        %v4159 = vmul.f32 %v4031, %v4127
        %v4160 = vmul.f32 %v4032, %v4128
        %v4161 = vmul.f32 %v4033, %v4129
        %v4162 = vmul.f32 %v4034, %v4130
        %v4163 = vmul.f32 %v4035, %v4131
        %v4164 = vmul.f32 %v4036, %v4132
        %v4165 = vmul.f32 %v4037, %v4133
        %v4166 = vmul.f32 %v4038, %v4134
        %v4167 = vmul.f32 %v4039, %v4135
        %v4168 = vmul.f32 %v4040, %v4136
        %v4169 = vmul.f32 %v4041, %v4137
        %v4170 = vmul.f32 %v4042, %v4138
        %v4171 = vmul.f32 %v4043, %v4139
        %v4172 = vmul.f32 %v4044, %v4140
        %v4173 = vmul.f32 %v4045, %v4141
        %v4174 = vmul.f32 %v4046, %v4142
        %v4175 = vmul.f32 %v4047, %v4143
        %v4176 = vmul.f32 %v4048, %v4144
        %v4177 = vmul.f32 %v4049, %v4145
        %v4178 = vmul.f32 %v4050, %v4146
        %v4179 = vmul.f32 %v4051, %v4147
        %v4180 = vmul.f32 %v4052, %v4148
        %v4181 = vmul.f32 %v4053, %v4149
        %v4182 = vmul.f32 %v4054, %v4150
        %v4183 = vmul.f32 %v4055, %v4151
        %v4184 = vmul.f32 %v4056, %v4152
        %v4185 = vmul.f32 %v4057, %v4153
        %v4186 = vmul.f32 %v4058, %v4154
        %v4187 = vmul.f32 %v4059, %v4155
        %v4188 = vld [vmem:[#allocation23] sm:$0xff]
        %v4189 = vld [vmem:[#allocation23 + $0x8] sm:$0xff]
        %v4190 = vld [vmem:[#allocation23 + $0x10] sm:$0xff]
        %v4191 = vld [vmem:[#allocation23 + $0x18] sm:$0xff]
        %v4192 = vld [vmem:[#allocation23 + $0x20] sm:$0xff]
        %v4193 = vld [vmem:[#allocation23 + $0x28] sm:$0xff]
        %v4194 = vld [vmem:[#allocation23 + $0x30] sm:$0xff]
        %v4195 = vld [vmem:[#allocation23 + $0x38] sm:$0xff]
        %v4196 = vld [vmem:[#allocation23 + $0x40] sm:$0xff]
        %v4197 = vld [vmem:[#allocation23 + $0x48] sm:$0xff]
        %v4198 = vld [vmem:[#allocation23 + $0x50] sm:$0xff]
        %v4199 = vld [vmem:[#allocation23 + $0x58] sm:$0xff]
        %v4200 = vld [vmem:[#allocation23 + $0x60] sm:$0xff]
        %v4201 = vld [vmem:[#allocation23 + $0x68] sm:$0xff]
        %v4202 = vld [vmem:[#allocation23 + $0x70] sm:$0xff]
        %v4203 = vld [vmem:[#allocation23 + $0x78] sm:$0xff]
        %v4204 = vld [vmem:[#allocation23 + $0x80] sm:$0xff]
        %v4205 = vld [vmem:[#allocation23 + $0x88] sm:$0xff]
        %v4206 = vld [vmem:[#allocation23 + $0x90] sm:$0xff]
        %v4207 = vld [vmem:[#allocation23 + $0x98] sm:$0xff]
        %v4208 = vld [vmem:[#allocation23 + $0xa0] sm:$0xff]
        %v4209 = vld [vmem:[#allocation23 + $0xa8] sm:$0xff]
        %v4210 = vld [vmem:[#allocation23 + $0xb0] sm:$0xff]
        %v4211 = vld [vmem:[#allocation23 + $0xb8] sm:$0xff]
        %v4212 = vld [vmem:[#allocation23 + $0xc0] sm:$0xff]
        %v4213 = vld [vmem:[#allocation23 + $0xc8] sm:$0xff]
        %v4214 = vld [vmem:[#allocation23 + $0xd0] sm:$0xff]
        %v4215 = vld [vmem:[#allocation23 + $0xd8] sm:$0xff]
        %v4216 = vld [vmem:[#allocation23 + $0xe0] sm:$0xff]
        %v4217 = vld [vmem:[#allocation23 + $0xe8] sm:$0xff]
        %v4218 = vld [vmem:[#allocation23 + $0xf0] sm:$0xff]
        %v4219 = vld [vmem:[#allocation23 + $0xf8] sm:$0xff]
        %v4220 = vld [vmem:[#allocation23 + $0x100] sm:$0xff]
        %v4221 = vld [vmem:[#allocation23 + $0x108] sm:$0xff]
        %v4222 = vld [vmem:[#allocation23 + $0x110] sm:$0xff]
        %v4223 = vld [vmem:[#allocation23 + $0x118] sm:$0xff]
        %v4224 = vld [vmem:[#allocation23 + $0x120] sm:$0xff]
        %v4225 = vld [vmem:[#allocation23 + $0x128] sm:$0xff]
        %v4226 = vld [vmem:[#allocation23 + $0x130] sm:$0xff]
        %v4227 = vld [vmem:[#allocation23 + $0x138] sm:$0xff]
        %v4228 = vld [vmem:[#allocation23 + $0x140] sm:$0xff]
        %v4229 = vld [vmem:[#allocation23 + $0x148] sm:$0xff]
        %v4230 = vld [vmem:[#allocation23 + $0x150] sm:$0xff]
        %v4231 = vld [vmem:[#allocation23 + $0x158] sm:$0xff]
        %v4232 = vld [vmem:[#allocation23 + $0x160] sm:$0xff]
        %v4233 = vld [vmem:[#allocation23 + $0x168] sm:$0xff]
        %v4234 = vld [vmem:[#allocation23 + $0x170] sm:$0xff]
        %v4235 = vld [vmem:[#allocation23 + $0x178] sm:$0xff]
        %v4236 = vld [vmem:[#allocation23 + $0x180] sm:$0xff]
        %v4237 = vld [vmem:[#allocation23 + $0x188] sm:$0xff]
        %v4238 = vld [vmem:[#allocation23 + $0x190] sm:$0xff]
        %v4239 = vld [vmem:[#allocation23 + $0x198] sm:$0xff]
        %v4240 = vld [vmem:[#allocation23 + $0x1a0] sm:$0xff]
        %v4241 = vld [vmem:[#allocation23 + $0x1a8] sm:$0xff]
        %v4242 = vld [vmem:[#allocation23 + $0x1b0] sm:$0xff]
        %v4243 = vld [vmem:[#allocation23 + $0x1b8] sm:$0xff]
        %v4244 = vld [vmem:[#allocation23 + $0x1c0] sm:$0xff]
        %v4245 = vld [vmem:[#allocation23 + $0x1c8] sm:$0xff]
        %v4246 = vld [vmem:[#allocation23 + $0x1d0] sm:$0xff]
        %v4247 = vld [vmem:[#allocation23 + $0x1d8] sm:$0xff]
        %v4248 = vld [vmem:[#allocation23 + $0x1e0] sm:$0xff]
        %v4249 = vld [vmem:[#allocation23 + $0x1e8] sm:$0xff]
        %v4250 = vld [vmem:[#allocation23 + $0x1f0] sm:$0xff]
        %v4251 = vld [vmem:[#allocation23 + $0x1f8] sm:$0xff]
        %v4252 = vld [vmem:[#allocation25] sm:$0x1]
        %v4254 = vlaneseq
        %v4255 = vshrl.u32 %v4254, 7
        %v4256 = vsub.s32 0, %v4255
        %v4257 = vrot.slane %v4252, %v4256
        %4259 = vmatprep.subr.mxu0 0.0
        %4260 = vmatpush1.msra.mxu0 %v4188
        %4261 = vmatprep.subr.mxu0 0.0
        %4262 = vmatpush1.msra.mxu0 %v4189
        %4263 = vmatprep.subr.mxu0 0.0
        %4264 = vmatpush1.msra.mxu0 %v4190
        %4265 = vmatprep.subr.mxu0 0.0
        %4266 = vmatpush1.msra.mxu0 %v4191
        %4267 = vmatprep.subr.mxu0 0.0
        %4268 = vmatpush1.msra.mxu0 %v4192
        %4269 = vmatprep.subr.mxu0 0.0
        %4270 = vmatpush1.msra.mxu0 %v4193
        %4271 = vmatprep.subr.mxu0 0.0
        %4272 = vmatpush1.msra.mxu0 %v4194
        %4273 = vmatprep.subr.mxu0 0.0
        %4274 = vmatpush1.msra.mxu0 %v4195
        %4275 = vmatprep.subr.mxu0 0.0
        %4276 = vmatpush1.msra.mxu0 %v4196
        %4277 = vmatprep.subr.mxu0 0.0
        %4278 = vmatpush1.msra.mxu0 %v4197
        %4279 = vmatprep.subr.mxu0 0.0
        %4280 = vmatpush1.msra.mxu0 %v4198
        %4281 = vmatprep.subr.mxu0 0.0
        %4282 = vmatpush1.msra.mxu0 %v4199
        %4283 = vmatprep.subr.mxu0 0.0
        %4284 = vmatpush1.msra.mxu0 %v4200
        %4285 = vmatprep.subr.mxu0 0.0
        %4286 = vmatpush1.msra.mxu0 %v4201
        %4287 = vmatprep.subr.mxu0 0.0
        %4288 = vmatpush1.msra.mxu0 %v4202
        %4289 = vmatprep.subr.mxu0 0.0
        %4290 = vmatpush1.msra.mxu0 %v4203
        %4291 = vmatprep.subr.mxu0 0.0
        %4292 = vmatpush1.msra.mxu0 %v4204
        %4293 = vmatprep.subr.mxu0 0.0
        %4294 = vmatpush1.msra.mxu0 %v4205
        %4295 = vmatprep.subr.mxu0 0.0
        %4296 = vmatpush1.msra.mxu0 %v4206
        %4297 = vmatprep.subr.mxu0 0.0
        %4298 = vmatpush1.msra.mxu0 %v4207
        %4299 = vmatprep.subr.mxu0 0.0
        %4300 = vmatpush1.msra.mxu0 %v4208
        %4301 = vmatprep.subr.mxu0 0.0
        %4302 = vmatpush1.msra.mxu0 %v4209
        %4303 = vmatprep.subr.mxu0 0.0
        %4304 = vmatpush1.msra.mxu0 %v4210
        %4305 = vmatprep.subr.mxu0 0.0
        %4306 = vmatpush1.msra.mxu0 %v4211
        %4307 = vmatprep.subr.mxu0 0.0
        %4308 = vmatpush1.msra.mxu0 %v4212
        %4309 = vmatprep.subr.mxu0 0.0
        %4310 = vmatpush1.msra.mxu0 %v4213
        %4311 = vmatprep.subr.mxu0 0.0
        %4312 = vmatpush1.msra.mxu0 %v4214
        %4313 = vmatprep.subr.mxu0 0.0
        %4314 = vmatpush1.msra.mxu0 %v4215
        %4315 = vmatprep.subr.mxu0 0.0
        %4316 = vmatpush1.msra.mxu0 %v4216
        %4317 = vmatprep.subr.mxu0 0.0
        %4318 = vmatpush1.msra.mxu0 %v4217
        %4319 = vmatprep.subr.mxu0 0.0
        %4320 = vmatpush1.msra.mxu0 %v4218
        %4321 = vmatprep.subr.mxu0 0.0
        %4322 = vmatpush1.msra.mxu0 %v4219
        %4323 = vmatprep.mubr.f32.mxu0 %v4157
        %4324 = vmatmul.mubr.f32.gmra.mrb[0].mxu0 %v4156
        %v4325 = vpop.f32.mrb[0].mxu0
        %v4326 = vadd.f32 %v4257, %v4325
        %v4327 = vpop.f32.mrb[0].mxu0
        %4328 = vmatprep.mubr.f32.mxu0 %v4161
        %4329 = vmatmul.mubr.f32.gmra.mrb[0].mxu0 %v4160
        %v4330 = vpop.f32.mrb[0].mxu0
        %v4331 = vadd.f32 %v4257, %v4330
        %v4332 = vpop.f32.mrb[0].mxu0
        %4333 = vmatprep.mubr.f32.mxu0 %v4165
        %4334 = vmatmul.mubr.f32.gmra.mrb[0].mxu0 %v4164
        %v4335 = vpop.f32.mrb[0].mxu0
        %v4336 = vadd.f32 %v4257, %v4335
        %v4337 = vpop.f32.mrb[0].mxu0
        %4338 = vmatprep.mubr.f32.mxu0 %v4169
        %4339 = vmatmul.mubr.f32.gmra.mrb[0].mxu0 %v4168
        %v4340 = vpop.f32.mrb[0].mxu0
        %v4341 = vadd.f32 %v4257, %v4340
        %v4342 = vpop.f32.mrb[0].mxu0
        %4343 = vmatprep.mubr.f32.mxu0 %v4173
        %4344 = vmatmul.mubr.f32.gmra.mrb[0].mxu0 %v4172
        %v4345 = vpop.f32.mrb[0].mxu0
        %v4346 = vadd.f32 %v4257, %v4345
        %v4347 = vpop.f32.mrb[0].mxu0
        %4348 = vmatprep.mubr.f32.mxu0 %v4177
        %4349 = vmatmul.mubr.f32.gmra.mrb[0].mxu0 %v4176
        %v4350 = vpop.f32.mrb[0].mxu0
        %v4351 = vadd.f32 %v4257, %v4350
        %v4352 = vpop.f32.mrb[0].mxu0
        %4353 = vmatprep.mubr.f32.mxu0 %v4181
        %4354 = vmatmul.mubr.f32.gmra.mrb[0].mxu0 %v4180
        %v4355 = vpop.f32.mrb[0].mxu0
        %v4356 = vadd.f32 %v4257, %v4355
        %v4357 = vpop.f32.mrb[0].mxu0
        %4358 = vmatprep.mubr.f32.mxu0 %v4185
        %4359 = vmatmul.mubr.f32.gmra.mrb[0].mxu0 %v4184
        %v4360 = vpop.f32.mrb[0].mxu0
        %v4361 = vadd.f32 %v4257, %v4360
        %v4362 = vpop.f32.mrb[0].mxu0
        %4363 = vdwg.mxu0
        %4364 = vmatprep.subr.mxu0 0.0
        %4365 = vmatpush1.msra.mxu0 %v4220
        %4366 = vmatprep.subr.mxu0 0.0
        %4367 = vmatpush1.msra.mxu0 %v4221
        %4368 = vmatprep.subr.mxu0 0.0
        %4369 = vmatpush1.msra.mxu0 %v4222
        %4370 = vmatprep.subr.mxu0 0.0
        %4371 = vmatpush1.msra.mxu0 %v4223
        %4372 = vmatprep.subr.mxu0 0.0
        %4373 = vmatpush1.msra.mxu0 %v4224
        %4374 = vmatprep.subr.mxu0 0.0
        %4375 = vmatpush1.msra.mxu0 %v4225
        %4376 = vmatprep.subr.mxu0 0.0
        %4377 = vmatpush1.msra.mxu0 %v4226
        %4378 = vmatprep.subr.mxu0 0.0
        %4379 = vmatpush1.msra.mxu0 %v4227
        %4380 = vmatprep.subr.mxu0 0.0
        %4381 = vmatpush1.msra.mxu0 %v4228
        %4382 = vmatprep.subr.mxu0 0.0
        %4383 = vmatpush1.msra.mxu0 %v4229
        %4384 = vmatprep.subr.mxu0 0.0
        %4385 = vmatpush1.msra.mxu0 %v4230
        %4386 = vmatprep.subr.mxu0 0.0
        %4387 = vmatpush1.msra.mxu0 %v4231
        %4388 = vmatprep.subr.mxu0 0.0
        %4389 = vmatpush1.msra.mxu0 %v4232
        %4390 = vmatprep.subr.mxu0 0.0
        %4391 = vmatpush1.msra.mxu0 %v4233
        %4392 = vmatprep.subr.mxu0 0.0
        %4393 = vmatpush1.msra.mxu0 %v4234
        %4394 = vmatprep.subr.mxu0 0.0
        %4395 = vmatpush1.msra.mxu0 %v4235
        %4396 = vmatprep.subr.mxu0 0.0
        %4397 = vmatpush1.msra.mxu0 %v4236
        %4398 = vmatprep.subr.mxu0 0.0
        %4399 = vmatpush1.msra.mxu0 %v4237
        %4400 = vmatprep.subr.mxu0 0.0
        %4401 = vmatpush1.msra.mxu0 %v4238
        %4402 = vmatprep.subr.mxu0 0.0
        %4403 = vmatpush1.msra.mxu0 %v4239
        %4404 = vmatprep.subr.mxu0 0.0
        %4405 = vmatpush1.msra.mxu0 %v4240
        %4406 = vmatprep.subr.mxu0 0.0
        %4407 = vmatpush1.msra.mxu0 %v4241
        %4408 = vmatprep.subr.mxu0 0.0
        %4409 = vmatpush1.msra.mxu0 %v4242
        %4410 = vmatprep.subr.mxu0 0.0
        %4411 = vmatpush1.msra.mxu0 %v4243
        %4412 = vmatprep.subr.mxu0 0.0
        %4413 = vmatpush1.msra.mxu0 %v4244
        %4414 = vmatprep.subr.mxu0 0.0
        %4415 = vmatpush1.msra.mxu0 %v4245
        %4416 = vmatprep.subr.mxu0 0.0
        %4417 = vmatpush1.msra.mxu0 %v4246
        %4418 = vmatprep.subr.mxu0 0.0
        %4419 = vmatpush1.msra.mxu0 %v4247
        %4420 = vmatprep.subr.mxu0 0.0
        %4421 = vmatpush1.msra.mxu0 %v4248
        %4422 = vmatprep.subr.mxu0 0.0
        %4423 = vmatpush1.msra.mxu0 %v4249
        %4424 = vmatprep.subr.mxu0 0.0
        %4425 = vmatpush1.msra.mxu0 %v4250
        %4426 = vmatprep.subr.mxu0 0.0
        %4427 = vmatpush1.msra.mxu0 %v4251
        %4428 = vmatprep.mubr.f32.mxu0 %v4159
        %4429 = vmatmul.mubr.f32.gmra.mrb[0].mxu0 %v4158
        %v4430 = vpop.f32.mrb[0].mxu0
        %v4431 = vadd.f32 %v4326, %v4430
        %v4432 = vpop.f32.mrb[0].mxu0
        %4433 = vmatprep.mubr.f32.mxu0 %v4163
        %4434 = vmatmul.mubr.f32.gmra.mrb[0].mxu0 %v4162
        %v4435 = vpop.f32.mrb[0].mxu0
        %v4436 = vadd.f32 %v4331, %v4435
        %v4437 = vpop.f32.mrb[0].mxu0
        %4438 = vmatprep.mubr.f32.mxu0 %v4167
        %4439 = vmatmul.mubr.f32.gmra.mrb[0].mxu0 %v4166
        %v4440 = vpop.f32.mrb[0].mxu0
        %v4441 = vadd.f32 %v4336, %v4440
        %v4442 = vpop.f32.mrb[0].mxu0
        %4443 = vmatprep.mubr.f32.mxu0 %v4171
        %4444 = vmatmul.mubr.f32.gmra.mrb[0].mxu0 %v4170
        %v4445 = vpop.f32.mrb[0].mxu0
        %v4446 = vadd.f32 %v4341, %v4445
        %v4447 = vpop.f32.mrb[0].mxu0
        %4448 = vmatprep.mubr.f32.mxu0 %v4175
        %4449 = vmatmul.mubr.f32.gmra.mrb[0].mxu0 %v4174
        %v4450 = vpop.f32.mrb[0].mxu0
        %v4451 = vadd.f32 %v4346, %v4450
        %v4452 = vpop.f32.mrb[0].mxu0
        %4453 = vmatprep.mubr.f32.mxu0 %v4179
        %4454 = vmatmul.mubr.f32.gmra.mrb[0].mxu0 %v4178
        %v4455 = vpop.f32.mrb[0].mxu0
        %v4456 = vadd.f32 %v4351, %v4455
        %v4457 = vpop.f32.mrb[0].mxu0
        %4458 = vmatprep.mubr.f32.mxu0 %v4183
        %4459 = vmatmul.mubr.f32.gmra.mrb[0].mxu0 %v4182
        %v4460 = vpop.f32.mrb[0].mxu0
        %v4461 = vadd.f32 %v4356, %v4460
        %v4462 = vpop.f32.mrb[0].mxu0
        %4463 = vmatprep.mubr.f32.mxu0 %v4187
        %4464 = vmatmul.mubr.f32.gmra.mrb[0].mxu0 %v4186
        %v4465 = vpop.f32.mrb[0].mxu0
        %v4466 = vadd.f32 %v4361, %v4465
        %v4467 = vpop.f32.mrb[0].mxu0
        %4468 = vdwg.mxu0
        %v4469 = vadd.f32 %v3589, %v4431
        %v4470 = vadd.f32 %v3590, %v4436
        %v4471 = vadd.f32 %v3591, %v4441
        %v4472 = vadd.f32 %v3592, %v4446
        %v4473 = vadd.f32 %v3593, %v4451
        %v4474 = vadd.f32 %v3594, %v4456
        %v4475 = vadd.f32 %v3595, %v4461
        %v4476 = vadd.f32 %v3596, %v4466
        %4477 = vst [vmem:[%s630] sm:$0xff] %v4469
        %4478 = vst [vmem:[%s630 + $0x8] sm:$0xff] %v4470
        %4479 = vst [vmem:[%s630 + $0x10] sm:$0xff] %v4471
        %4480 = vst [vmem:[%s630 + $0x18] sm:$0xff] %v4472
        %4481 = vst [vmem:[%s630 + $0x20] sm:$0xff] %v4473
        %4482 = vst [vmem:[%s630 + $0x28] sm:$0xff] %v4474
        %4483 = vst [vmem:[%s630 + $0x30] sm:$0xff] %v4475
        %4484 = vst [vmem:[%s630 + $0x38] sm:$0xff] %v4476
        %s4485 = sand.u32 %s336, 1
        %s4486 = scalar_lea.sflag [#allocation7], %s4485
        %s4487 = sand.u32 %s336, 1
        %s4488 = smul.addr %s4487, 64
        %s4489 = scalar_lea.vmem [#allocation26], %s4488
        // Predicated region
        $region129: #{tpu_custom_call.1} parent=71 // pred_check
          %p4490 = pneg %p346
        $region130: #{tpu_custom_call.1} parent=71 // pred_check_branch
          %4492 = sbr.rel (%p4490) target = $region132
        $region131: #{tpu_custom_call.1} parent=71 // pred_region
          %s4493 = smul.u32 8, %s41
          %s4495 = ssub.s32 1024, 1024
          %4496 = vsyncadd %s4486, %s4495
          %s4497 = smul.addr %s40, 16
          %s4498 = sadd.s32 %s4493, %s4497
          %s4499 = smul.addr %s4498, 128
          %s4500 = scalar_lea.hbm %s13, %s4499
          %s4501 = sshll.u32 %s4489, 4
          %s4502 = int_to_ptr.vmem [resolvable:$true] %s4501
          %4507 = dma.vmem_to_hbm [thread:$0]  %s4502, 1024, %s4500, %s4486, 128, 128, 8
        $region132: #{tpu_custom_call.1} parent=71 // pred_fallthru
          _
      $region72: #{tpu_custom_call.1} parent=5 // pred_fallthru
        _
      %p4508 = scmp.le.s32.totalorder 2, %s31
      // Predicated region
      $region133: #{tpu_custom_call.1} parent=5 // pred_check
        %p4509 = pneg %p4508
      $region134: #{tpu_custom_call.1} parent=5 // pred_check_branch
        %4511 = sbr.rel (%p4509) target = $region136
      $region135: #{tpu_custom_call.1} parent=5 // pred_region
        %s4512 = ssub.s32 %s31, 2
        // Predicated region
        $region137: #{tpu_custom_call.1} parent=135 // pred_check
          %p4513 = pneg %p352
        $region138: #{tpu_custom_call.1} parent=135 // pred_check_branch
          %4515 = sbr.rel (%p4513) target = $region140
        $region139: #{tpu_custom_call.1} parent=135 // pred_region
          %s4516 = sand.u32 %s337, 1
          %s4517 = scalar_lea.sflag [#allocation7], %s4516
          %s4518 = sand.u32 %s337, 1
          %s4519 = smul.addr %s4518, 64
          %s4520 = scalar_lea.vmem [#allocation26], %s4519
          %4521 = dma.done %s4517, 1024
        $region140: #{tpu_custom_call.1} parent=135 // pred_fallthru
          _
      $region136: #{tpu_custom_call.1} parent=5 // pred_fallthru
        _
    $region6: #{tpu_custom_call.1} parent=1 // loop_footer
      %s35 = sadd.s32 1, %s31
    $region7: #{tpu_custom_call.1} parent=1 // loop_footer_branch
      %30 = sbr.rel target = $region3
    $region8: #{tpu_custom_call.1} parent=1 // loop_exit
      _
    %4522 = vsyncpa [#allocation6], 1
    %s4523 = scalar_lea.sflag [#allocation6], 1
    %4524 = vsyncpa %s4523, 1
    %4525 = vsyncpa [#allocation9], 1
    %4526 = vsyncpa [#allocation12], 1
    %4527 = vsyncpa [#allocation15], 1
    %4528 = vsyncpa [#allocation18], 1
    %4529 = vsyncpa [#allocation21], 1
    %4530 = vsyncpa [#allocation24], 1
    %4531 = vsyncpa [#allocation7], 1
    %s4532 = scalar_lea.sflag [#allocation7], 1
    %4533 = vsyncpa %s4532, 1

</llo_original>
